<compile_context>
chip_gen: v6e
topology: v6e:2x2x1
jax: 0.10.0
libtpu: 0.0.40
codegen_flags: <defaults>
</compile_context>

<pallas_src>
import jax
import jax.numpy as jnp
from jax.experimental import pallas as pl
from jax.experimental.pallas import tpu as pltpu


# ----------------------------------------------------------------------------
# Fused kernel body
# ----------------------------------------------------------------------------
def _make_fused_kernel(*, B, T, Cin, window_sizes, F, H_prog, HC, C,
                       feature_mode):
    """Builds the fused TCN forward kernel with all static config baked in."""
    Pmax = max(window_sizes) - 1
    n_win = len(window_sizes)
    n_chunks = H_prog // HC

    def conv_relu_maxpool(xp_ref, wconv_ref, bconv_ref):
        # xp_ref: (B, T + 2*Pmax, Cin) zero-padded input, resident in VMEM.
        # Returns one (B, F) pooled activation per window size.
        xb = [xp_ref[b] for b in range(B)]             # B loads of (Tpad, Cin)
        pooled = []
        woff = 0
        for w_idx, ws in enumerate(window_sizes):
            Tout = T + ws - 1                          # Conv2d padding=(ws-1, 0)
            off = Pmax - (ws - 1)                      # window ws needs ws-1 pad
            bias = bconv_ref[w_idx:w_idx + 1, :]       # (1, F)
            rows = []
            for b in range(B):
                s = None
                for k in range(ws):                    # conv as a sum over taps
                    xk = xb[b][off + k:off + k + Tout, :]                   # (Tout, Cin)
                    wk = wconv_ref[woff + k * Cin:woff + (k + 1) * Cin, :]  # (Cin, F)
                    p = jnp.dot(xk, wk, preferred_element_type=jnp.float32)
                    s = p if s is None else s + p
                # relu(max_t(conv) + b) == max_t(relu(conv + b)): bias is const in t
                m = jnp.max(s, axis=0, keepdims=True) + bias
                rows.append(jnp.maximum(m, 0.0))       # (1, F)
            pooled.append(jnp.concatenate(rows, axis=0))   # (B, F)
            woff += ws * Cin
        return pooled

    def head_chunk(pooled, w1_ref, b1_ref, g_ref, bt_ref, j):
        # fc1 + BatchNorm1d (training-mode batch stats) + ReLU for one HC-wide
        # slice of the hidden dim.  Exact: BN stats are per-feature over batch.
        sl = slice(j * HC, (j + 1) * HC)               # static, lane-aligned
        h = None
        for w_idx in range(n_win):                     # fc1 distributed over windows
            w1_rows = w1_ref[w_idx * F:(w_idx + 1) * F, sl]        # (F, HC)
            part = jnp.dot(pooled[w_idx], w1_rows,
                           preferred_element_type=jnp.float32)     # (B, HC)
            h = part if h is None else h + part
        h = h + b1_ref[:, sl]
        mean = jnp.mean(h, axis=0, keepdims=True)
        var = jnp.mean(jnp.square(h - mean), axis=0, keepdims=True)  # biased var
        hn = (h - mean) * jax.lax.rsqrt(var + 1e-5)
        hn = hn * g_ref[:, sl] + bt_ref[:, sl]
        return jnp.maximum(hn, 0.0)                    # (B, HC)

    if feature_mode:
        def kernel(xp_ref, wconv_ref, bconv_ref, w1_ref, b1_ref, g_ref, bt_ref,
                   feat_ref):
            pooled = conv_relu_maxpool(xp_ref, wconv_ref, bconv_ref)
            for j in range(n_chunks):
                feat_ref[:, j * HC:(j + 1) * HC] = head_chunk(
                    pooled, w1_ref, b1_ref, g_ref, bt_ref, j)
    else:
        def kernel(xp_ref, wconv_ref, bconv_ref, w1_ref, b1_ref, g_ref, bt_ref,
                   w2_ref, out_ref):
            pooled = conv_relu_maxpool(xp_ref, wconv_ref, bconv_ref)
            acc = jnp.zeros((B, C), jnp.float32)
            for j in range(n_chunks):
                hn = head_chunk(pooled, w1_ref, b1_ref, g_ref, bt_ref, j)
                acc = acc + jnp.dot(hn, w2_ref[j * HC:(j + 1) * HC, :],
                                    preferred_element_type=jnp.float32)
            out_ref[0, :, :] = acc     # partial logits (fc2 bias added in wrapper)

    return kernel


# ----------------------------------------------------------------------------
# pallas_call builder
# ----------------------------------------------------------------------------
def _build_fused_call(opt, *, B, T, Cin, H, HC=512, n_split=2):
    window_sizes = tuple(opt['window_sizes'])
    F = int(opt['num_filters'])
    C = int(opt['num_classes'])
    n_win = len(window_sizes)
    feature_mode = bool(opt['is_feature_extractor'])
    Pmax = max(window_sizes) - 1
    Tpad = T + 2 * Pmax
    K_total = Cin * sum(window_sizes)
    D = F * n_win
    assert H % n_split == 0, "hidden dim must split evenly across grid programs"
    H_prog = H // n_split
    assert H_prog % HC == 0, "hidden chunk must divide the per-program slice"

    kernel = _make_fused_kernel(B=B, T=T, Cin=Cin, window_sizes=window_sizes,
                                F=F, H_prog=H_prog, HC=HC, C=C,
                                feature_mode=feature_mode)

    in_specs = [
        pl.BlockSpec((B, Tpad, Cin), lambda i: (0, 0, 0)),   # padded x (full)
        pl.BlockSpec((K_total, F), lambda i: (0, 0)),        # packed conv weights
        pl.BlockSpec((n_win, F), lambda i: (0, 0)),          # packed conv biases
        pl.BlockSpec((D, H_prog), lambda i: (0, i)),         # w1 half (window-major rows)
        pl.BlockSpec((1, H_prog), lambda i: (0, i)),         # b1 half
        pl.BlockSpec((1, H_prog), lambda i: (0, i)),         # BN gamma half
        pl.BlockSpec((1, H_prog), lambda i: (0, i)),         # BN beta half
    ]
    if feature_mode:
        out_specs = pl.BlockSpec((B, H_prog), lambda i: (0, i))
        out_shape = jax.ShapeDtypeStruct((B, H), jnp.float32)
    else:
        in_specs.append(pl.BlockSpec((H_prog, C), lambda i: (i, 0)))   # w2 half
        out_specs = pl.BlockSpec((1, B, C), lambda i: (i, 0, 0))       # partial logits
        out_shape = jax.ShapeDtypeStruct((n_split, B, C), jnp.float32)

    return pl.pallas_call(
        kernel,
        out_shape=out_shape,
        grid=(n_split,),
        in_specs=in_specs,
        out_specs=out_specs,
        compiler_params=pltpu.CompilerParams(
            dimension_semantics=("parallel",)),   # v7x: one H-half per TensorCore
    )


# ----------------------------------------------------------------------------
# Parameters (PyTorch layouts converted once, at init time)
# ----------------------------------------------------------------------------
def init_params(key, opt, in_width=4, hidden=4096):
    F = int(opt['num_filters'])
    window_sizes = list(opt['window_sizes'])
    C = int(opt['num_classes'])
    n_win = len(window_sizes)
    D = F * n_win
    keys = jax.random.split(key, 2 * n_win + 4)

    # Conv2d(1, F, [ws, 4]): torch weight (F, 1, ws, 4), bias (F,).
    # Packed kernel layout: rows stacked per window, row index = k*in_width + c.
    wconv_blocks, bconv_rows = [], []
    for i, ws in enumerate(window_sizes):
        w = jax.random.normal(keys[2 * i], (F, 1, ws, in_width), jnp.float32) * 0.1
        b = jax.random.normal(keys[2 * i + 1], (F,), jnp.float32) * 0.1
        wconv_blocks.append(w.reshape(F, ws * in_width).T)   # (ws*in_width, F)
        bconv_rows.append(b.reshape(1, F))
    wconv = jnp.concatenate(wconv_blocks, axis=0)            # (sum ws*Cin, F)
    bconv = jnp.concatenate(bconv_rows, axis=0)              # (n_win, F)

    k0 = 2 * n_win
    # fc1: torch Linear(D, hidden) weight (hidden, D); torch cat/view flatten
    # order indexes features as f*n_win + w.  Kernel wants (D, hidden) with rows
    # window-major (w*F + f) so each window's F rows are a contiguous slice.
    w1_t = jax.random.normal(keys[k0 + 0], (hidden, D), jnp.float32) * 0.05
    w1_k = w1_t.T.reshape(F, n_win, hidden).transpose(1, 0, 2).reshape(D, hidden)
    b1 = jax.random.normal(keys[k0 + 1], (1, hidden), jnp.float32) * 0.05
    gamma = jnp.ones((1, hidden), jnp.float32)    # BatchNorm1d default affine init
    beta = jnp.zeros((1, hidden), jnp.float32)
    # fc2: torch Linear(hidden, C) weight (C, hidden) -> kernel layout (hidden, C)
    w2_t = jax.random.normal(keys[k0 + 2], (C, hidden), jnp.float32) * 0.05
    b2 = jax.random.normal(keys[k0 + 3], (1, C), jnp.float32) * 0.05

    return {'wconv': wconv, 'bconv': bconv, 'w1': w1_k, 'b1': b1,
            'gamma': gamma, 'beta': beta, 'w2': w2_t.T, 'b2': b2}


# ----------------------------------------------------------------------------
# Forward
# ----------------------------------------------------------------------------
def tcn_forward(x, params, opt, *, hc=512, n_split=2):
    """x: (B, T, 4) float32 -> logits (B, C) or features (B, 4096)."""
    B, T, Cin = x.shape
    H = params['b1'].shape[1]
    Pmax = max(opt['window_sizes']) - 1
    # Single resident zero-padded copy of x (symmetric time pad = Conv2d pad).
    xp = jnp.pad(x, ((0, 0), (Pmax, Pmax), (0, 0)))
    call = _build_fused_call(opt, B=B, T=T, Cin=Cin, H=H, HC=hc, n_split=n_split)
    args = (xp, params['wconv'], params['bconv'], params['w1'],
            params['b1'], params['gamma'], params['beta'])
    if opt['is_feature_extractor']:
        return call(*args)                                   # (B, H)
    partials = call(*args, params['w2'])                     # (n_split, B, C)
    return jnp.sum(partials, axis=0) + params['b2']          # tiny epilogue


if __name__ == "__main__":
    opt = {
        'is_feature_extractor': False,
        'num_filters': 8,
        'window_sizes': [3, 4, 5],
        'num_classes': 10,
    }
    key = jax.random.PRNGKey(0)
    kx, kp = jax.random.split(key)

    B, T, Cin = 2, 16, 4
    hidden = 4096
    x = jax.random.normal(kx, (B, T, Cin), dtype=jnp.float32)
    params = init_params(kp, opt, in_width=Cin, hidden=hidden)

    # Classifier path (matches opt).
    logits_fn = jax.jit(lambda xx, pp: tcn_forward(xx, pp, opt))
    logits = logits_fn(x, params)
    jax.block_until_ready(logits)
    assert logits.shape == (B, opt['num_classes'])

    # Feature-extractor path (second compiled variant).
    opt_feat = dict(opt, is_feature_extractor=True)
    feat_fn = jax.jit(lambda xx, pp: tcn_forward(xx, pp, opt_feat))
    feats = feat_fn(x, params)
    jax.block_until_ready(feats)
    assert feats.shape == (B, hidden)

    print("KERNEL_OK")
</pallas_src>

<mosaic_0001>
module attributes {stable_mosaic.version = 11 : i64} {
  func.func @kernel(%arg0: i32, %arg1: memref<2x24x4xf32, #tpu.memory_space<vmem>>, %arg2: memref<48x8xf32, #tpu.memory_space<vmem>>, %arg3: memref<3x8xf32, #tpu.memory_space<vmem>>, %arg4: memref<24x2048xf32, #tpu.memory_space<vmem>>, %arg5: memref<1x2048xf32, #tpu.memory_space<vmem>>, %arg6: memref<1x2048xf32, #tpu.memory_space<vmem>>, %arg7: memref<1x2048xf32, #tpu.memory_space<vmem>>, %arg8: memref<2048x10xf32, #tpu.memory_space<vmem>>, %arg9: memref<1x2x10xf32, #tpu.memory_space<vmem>>) attributes {dimension_semantics = [#tpu.dimension_semantics<parallel>], iteration_bounds = array<i64: 2>, scalar_prefetch = 0 : i64, scratch_operands = 0 : i64, tpu.core_type = #tpu.core_type<tc>, window_params = [{pipeline_mode = #tpu.pipeline_mode<synchronous>, transform_indices = @transform_0, window_bounds = array<i64: 2, 24, 4>}, {pipeline_mode = #tpu.pipeline_mode<synchronous>, transform_indices = @transform_1, window_bounds = array<i64: 48, 8>}, {pipeline_mode = #tpu.pipeline_mode<synchronous>, transform_indices = @transform_2, window_bounds = array<i64: 3, 8>}, {transform_indices = @transform_3, window_bounds = array<i64: 24, 2048>}, {transform_indices = @transform_4, window_bounds = array<i64: 1, 2048>}, {transform_indices = @transform_5, window_bounds = array<i64: 1, 2048>}, {transform_indices = @transform_6, window_bounds = array<i64: 1, 2048>}, {transform_indices = @transform_7, window_bounds = array<i64: 2048, 10>}, {transform_indices = @transform_8, window_bounds = array<i64: 1, 2, 10>}]} {
    %c0 = arith.constant 0 : index
    %c0_0 = arith.constant 0 : index
    %c0_1 = arith.constant 0 : index
    %0 = vector.load %arg1[%c0, %c0_0, %c0_1] : memref<2x24x4xf32, #tpu.memory_space<vmem>>, vector<1x24x4xf32>
    %1 = vector.shape_cast %0 : vector<1x24x4xf32> to vector<24x4xf32>
    %c1 = arith.constant 1 : index
    %c0_2 = arith.constant 0 : index
    %c0_3 = arith.constant 0 : index
    %2 = vector.load %arg1[%c1, %c0_2, %c0_3] : memref<2x24x4xf32, #tpu.memory_space<vmem>>, vector<1x24x4xf32>
    %3 = vector.shape_cast %2 : vector<1x24x4xf32> to vector<24x4xf32>
    %c0_4 = arith.constant 0 : index
    %c0_5 = arith.constant 0 : index
    %4 = vector.load %arg3[%c0_4, %c0_5] : memref<3x8xf32, #tpu.memory_space<vmem>>, vector<1x8xf32>
    %5 = vector.extract_strided_slice %1 {offsets = [2, 0], sizes = [18, 4], strides = [1, 1]} : vector<24x4xf32> to vector<18x4xf32>
    %c0_6 = arith.constant 0 : index
    %c0_7 = arith.constant 0 : index
    %6 = vector.load %arg2[%c0_6, %c0_7] : memref<48x8xf32, #tpu.memory_space<vmem>>, vector<4x8xf32>
    %cst = arith.constant dense<0.000000e+00> : vector<18x8xf32>
    %7 = tpu.matmul %5, %6, %cst {dimension_numbers = #tpu.dot_dimension_numbers<[1], [0], [0], [1], [0, 0, 1, 1], [], []>} : vector<18x4xf32>, vector<4x8xf32>, vector<18x8xf32> -> vector<18x8xf32>
    %8 = vector.extract_strided_slice %1 {offsets = [3, 0], sizes = [18, 4], strides = [1, 1]} : vector<24x4xf32> to vector<18x4xf32>
    %c4 = arith.constant 4 : index
    %c0_8 = arith.constant 0 : index
    %9 = vector.load %arg2[%c4, %c0_8] : memref<48x8xf32, #tpu.memory_space<vmem>>, vector<4x8xf32>
    %cst_9 = arith.constant dense<0.000000e+00> : vector<18x8xf32>
    %10 = tpu.matmul %8, %9, %cst_9 {dimension_numbers = #tpu.dot_dimension_numbers<[1], [0], [0], [1], [0, 0, 1, 1], [], []>} : vector<18x4xf32>, vector<4x8xf32>, vector<18x8xf32> -> vector<18x8xf32>
    %11 = arith.addf %7, %10 : vector<18x8xf32>
    %12 = vector.extract_strided_slice %1 {offsets = [4, 0], sizes = [18, 4], strides = [1, 1]} : vector<24x4xf32> to vector<18x4xf32>
    %c8 = arith.constant 8 : index
    %c0_10 = arith.constant 0 : index
    %13 = vector.load %arg2[%c8, %c0_10] : memref<48x8xf32, #tpu.memory_space<vmem>>, vector<4x8xf32>
    %cst_11 = arith.constant dense<0.000000e+00> : vector<18x8xf32>
    %14 = tpu.matmul %12, %13, %cst_11 {dimension_numbers = #tpu.dot_dimension_numbers<[1], [0], [0], [1], [0, 0, 1, 1], [], []>} : vector<18x4xf32>, vector<4x8xf32>, vector<18x8xf32> -> vector<18x8xf32>
    %15 = arith.addf %11, %14 : vector<18x8xf32>
    %cst_12 = arith.constant dense<0xFF800000> : vector<8xf32>
    %16 = vector.multi_reduction <maximumf>, %15, %cst_12 [0] : vector<18x8xf32> to vector<8xf32>
    %17 = vector.shape_cast %16 : vector<8xf32> to vector<1x8xf32>
    %18 = arith.addf %17, %4 : vector<1x8xf32>
    %cst_13 = arith.constant 0.000000e+00 : f32
    %19 = vector.broadcast %cst_13 : f32 to vector<1x8xf32>
    %20 = arith.maximumf %18, %19 : vector<1x8xf32>
    %21 = vector.extract_strided_slice %3 {offsets = [2, 0], sizes = [18, 4], strides = [1, 1]} : vector<24x4xf32> to vector<18x4xf32>
    %c0_14 = arith.constant 0 : index
    %c0_15 = arith.constant 0 : index
    %22 = vector.load %arg2[%c0_14, %c0_15] : memref<48x8xf32, #tpu.memory_space<vmem>>, vector<4x8xf32>
    %cst_16 = arith.constant dense<0.000000e+00> : vector<18x8xf32>
    %23 = tpu.matmul %21, %22, %cst_16 {dimension_numbers = #tpu.dot_dimension_numbers<[1], [0], [0], [1], [0, 0, 1, 1], [], []>} : vector<18x4xf32>, vector<4x8xf32>, vector<18x8xf32> -> vector<18x8xf32>
    %24 = vector.extract_strided_slice %3 {offsets = [3, 0], sizes = [18, 4], strides = [1, 1]} : vector<24x4xf32> to vector<18x4xf32>
    %c4_17 = arith.constant 4 : index
    %c0_18 = arith.constant 0 : index
    %25 = vector.load %arg2[%c4_17, %c0_18] : memref<48x8xf32, #tpu.memory_space<vmem>>, vector<4x8xf32>
    %cst_19 = arith.constant dense<0.000000e+00> : vector<18x8xf32>
    %26 = tpu.matmul %24, %25, %cst_19 {dimension_numbers = #tpu.dot_dimension_numbers<[1], [0], [0], [1], [0, 0, 1, 1], [], []>} : vector<18x4xf32>, vector<4x8xf32>, vector<18x8xf32> -> vector<18x8xf32>
    %27 = arith.addf %23, %26 : vector<18x8xf32>
    %28 = vector.extract_strided_slice %3 {offsets = [4, 0], sizes = [18, 4], strides = [1, 1]} : vector<24x4xf32> to vector<18x4xf32>
    %c8_20 = arith.constant 8 : index
    %c0_21 = arith.constant 0 : index
    %29 = vector.load %arg2[%c8_20, %c0_21] : memref<48x8xf32, #tpu.memory_space<vmem>>, vector<4x8xf32>
    %cst_22 = arith.constant dense<0.000000e+00> : vector<18x8xf32>
    %30 = tpu.matmul %28, %29, %cst_22 {dimension_numbers = #tpu.dot_dimension_numbers<[1], [0], [0], [1], [0, 0, 1, 1], [], []>} : vector<18x4xf32>, vector<4x8xf32>, vector<18x8xf32> -> vector<18x8xf32>
    %31 = arith.addf %27, %30 : vector<18x8xf32>
    %cst_23 = arith.constant dense<0xFF800000> : vector<8xf32>
    %32 = vector.multi_reduction <maximumf>, %31, %cst_23 [0] : vector<18x8xf32> to vector<8xf32>
    %33 = vector.shape_cast %32 : vector<8xf32> to vector<1x8xf32>
    %34 = arith.addf %33, %4 : vector<1x8xf32>
    %cst_24 = arith.constant 0.000000e+00 : f32
    %35 = vector.broadcast %cst_24 : f32 to vector<1x8xf32>
    %36 = arith.maximumf %34, %35 : vector<1x8xf32>
    %37 = tpu.concatenate %20, %36 in 0 : vector<1x8xf32>, vector<1x8xf32> -> vector<2x8xf32>
    %c1_25 = arith.constant 1 : index
    %c0_26 = arith.constant 0 : index
    %38 = vector.load %arg3[%c1_25, %c0_26] : memref<3x8xf32, #tpu.memory_space<vmem>>, vector<1x8xf32>
    %39 = vector.extract_strided_slice %1 {offsets = [1, 0], sizes = [19, 4], strides = [1, 1]} : vector<24x4xf32> to vector<19x4xf32>
    %c12 = arith.constant 12 : index
    %c0_27 = arith.constant 0 : index
    %40 = vector.load %arg2[%c12, %c0_27] : memref<48x8xf32, #tpu.memory_space<vmem>>, vector<4x8xf32>
    %cst_28 = arith.constant dense<0.000000e+00> : vector<19x8xf32>
    %41 = tpu.matmul %39, %40, %cst_28 {dimension_numbers = #tpu.dot_dimension_numbers<[1], [0], [0], [1], [0, 0, 1, 1], [], []>} : vector<19x4xf32>, vector<4x8xf32>, vector<19x8xf32> -> vector<19x8xf32>
    %42 = vector.extract_strided_slice %1 {offsets = [2, 0], sizes = [19, 4], strides = [1, 1]} : vector<24x4xf32> to vector<19x4xf32>
    %c16 = arith.constant 16 : index
    %c0_29 = arith.constant 0 : index
    %43 = vector.load %arg2[%c16, %c0_29] : memref<48x8xf32, #tpu.memory_space<vmem>>, vector<4x8xf32>
    %cst_30 = arith.constant dense<0.000000e+00> : vector<19x8xf32>
    %44 = tpu.matmul %42, %43, %cst_30 {dimension_numbers = #tpu.dot_dimension_numbers<[1], [0], [0], [1], [0, 0, 1, 1], [], []>} : vector<19x4xf32>, vector<4x8xf32>, vector<19x8xf32> -> vector<19x8xf32>
    %45 = arith.addf %41, %44 : vector<19x8xf32>
    %46 = vector.extract_strided_slice %1 {offsets = [3, 0], sizes = [19, 4], strides = [1, 1]} : vector<24x4xf32> to vector<19x4xf32>
    %c20 = arith.constant 20 : index
    %c0_31 = arith.constant 0 : index
    %47 = vector.load %arg2[%c20, %c0_31] : memref<48x8xf32, #tpu.memory_space<vmem>>, vector<4x8xf32>
    %cst_32 = arith.constant dense<0.000000e+00> : vector<19x8xf32>
    %48 = tpu.matmul %46, %47, %cst_32 {dimension_numbers = #tpu.dot_dimension_numbers<[1], [0], [0], [1], [0, 0, 1, 1], [], []>} : vector<19x4xf32>, vector<4x8xf32>, vector<19x8xf32> -> vector<19x8xf32>
    %49 = arith.addf %45, %48 : vector<19x8xf32>
    %50 = vector.extract_strided_slice %1 {offsets = [4, 0], sizes = [19, 4], strides = [1, 1]} : vector<24x4xf32> to vector<19x4xf32>
    %c24 = arith.constant 24 : index
    %c0_33 = arith.constant 0 : index
    %51 = vector.load %arg2[%c24, %c0_33] : memref<48x8xf32, #tpu.memory_space<vmem>>, vector<4x8xf32>
    %cst_34 = arith.constant dense<0.000000e+00> : vector<19x8xf32>
    %52 = tpu.matmul %50, %51, %cst_34 {dimension_numbers = #tpu.dot_dimension_numbers<[1], [0], [0], [1], [0, 0, 1, 1], [], []>} : vector<19x4xf32>, vector<4x8xf32>, vector<19x8xf32> -> vector<19x8xf32>
    %53 = arith.addf %49, %52 : vector<19x8xf32>
    %cst_35 = arith.constant dense<0xFF800000> : vector<8xf32>
    %54 = vector.multi_reduction <maximumf>, %53, %cst_35 [0] : vector<19x8xf32> to vector<8xf32>
    %55 = vector.shape_cast %54 : vector<8xf32> to vector<1x8xf32>
    %56 = arith.addf %55, %38 : vector<1x8xf32>
    %cst_36 = arith.constant 0.000000e+00 : f32
    %57 = vector.broadcast %cst_36 : f32 to vector<1x8xf32>
    %58 = arith.maximumf %56, %57 : vector<1x8xf32>
    %59 = vector.extract_strided_slice %3 {offsets = [1, 0], sizes = [19, 4], strides = [1, 1]} : vector<24x4xf32> to vector<19x4xf32>
    %c12_37 = arith.constant 12 : index
    %c0_38 = arith.constant 0 : index
    %60 = vector.load %arg2[%c12_37, %c0_38] : memref<48x8xf32, #tpu.memory_space<vmem>>, vector<4x8xf32>
    %cst_39 = arith.constant dense<0.000000e+00> : vector<19x8xf32>
    %61 = tpu.matmul %59, %60, %cst_39 {dimension_numbers = #tpu.dot_dimension_numbers<[1], [0], [0], [1], [0, 0, 1, 1], [], []>} : vector<19x4xf32>, vector<4x8xf32>, vector<19x8xf32> -> vector<19x8xf32>
    %62 = vector.extract_strided_slice %3 {offsets = [2, 0], sizes = [19, 4], strides = [1, 1]} : vector<24x4xf32> to vector<19x4xf32>
    %c16_40 = arith.constant 16 : index
    %c0_41 = arith.constant 0 : index
    %63 = vector.load %arg2[%c16_40, %c0_41] : memref<48x8xf32, #tpu.memory_space<vmem>>, vector<4x8xf32>
    %cst_42 = arith.constant dense<0.000000e+00> : vector<19x8xf32>
    %64 = tpu.matmul %62, %63, %cst_42 {dimension_numbers = #tpu.dot_dimension_numbers<[1], [0], [0], [1], [0, 0, 1, 1], [], []>} : vector<19x4xf32>, vector<4x8xf32>, vector<19x8xf32> -> vector<19x8xf32>
    %65 = arith.addf %61, %64 : vector<19x8xf32>
    %66 = vector.extract_strided_slice %3 {offsets = [3, 0], sizes = [19, 4], strides = [1, 1]} : vector<24x4xf32> to vector<19x4xf32>
    %c20_43 = arith.constant 20 : index
    %c0_44 = arith.constant 0 : index
    %67 = vector.load %arg2[%c20_43, %c0_44] : memref<48x8xf32, #tpu.memory_space<vmem>>, vector<4x8xf32>
    %cst_45 = arith.constant dense<0.000000e+00> : vector<19x8xf32>
    %68 = tpu.matmul %66, %67, %cst_45 {dimension_numbers = #tpu.dot_dimension_numbers<[1], [0], [0], [1], [0, 0, 1, 1], [], []>} : vector<19x4xf32>, vector<4x8xf32>, vector<19x8xf32> -> vector<19x8xf32>
    %69 = arith.addf %65, %68 : vector<19x8xf32>
    %70 = vector.extract_strided_slice %3 {offsets = [4, 0], sizes = [19, 4], strides = [1, 1]} : vector<24x4xf32> to vector<19x4xf32>
    %c24_46 = arith.constant 24 : index
    %c0_47 = arith.constant 0 : index
    %71 = vector.load %arg2[%c24_46, %c0_47] : memref<48x8xf32, #tpu.memory_space<vmem>>, vector<4x8xf32>
    %cst_48 = arith.constant dense<0.000000e+00> : vector<19x8xf32>
    %72 = tpu.matmul %70, %71, %cst_48 {dimension_numbers = #tpu.dot_dimension_numbers<[1], [0], [0], [1], [0, 0, 1, 1], [], []>} : vector<19x4xf32>, vector<4x8xf32>, vector<19x8xf32> -> vector<19x8xf32>
    %73 = arith.addf %69, %72 : vector<19x8xf32>
    %cst_49 = arith.constant dense<0xFF800000> : vector<8xf32>
    %74 = vector.multi_reduction <maximumf>, %73, %cst_49 [0] : vector<19x8xf32> to vector<8xf32>
    %75 = vector.shape_cast %74 : vector<8xf32> to vector<1x8xf32>
    %76 = arith.addf %75, %38 : vector<1x8xf32>
    %cst_50 = arith.constant 0.000000e+00 : f32
    %77 = vector.broadcast %cst_50 : f32 to vector<1x8xf32>
    %78 = arith.maximumf %76, %77 : vector<1x8xf32>
    %79 = tpu.concatenate %58, %78 in 0 : vector<1x8xf32>, vector<1x8xf32> -> vector<2x8xf32>
    %c2 = arith.constant 2 : index
    %c0_51 = arith.constant 0 : index
    %80 = vector.load %arg3[%c2, %c0_51] : memref<3x8xf32, #tpu.memory_space<vmem>>, vector<1x8xf32>
    %81 = vector.extract_strided_slice %1 {offsets = [0, 0], sizes = [20, 4], strides = [1, 1]} : vector<24x4xf32> to vector<20x4xf32>
    %c28 = arith.constant 28 : index
    %c0_52 = arith.constant 0 : index
    %82 = vector.load %arg2[%c28, %c0_52] : memref<48x8xf32, #tpu.memory_space<vmem>>, vector<4x8xf32>
    %cst_53 = arith.constant dense<0.000000e+00> : vector<20x8xf32>
    %83 = tpu.matmul %81, %82, %cst_53 {dimension_numbers = #tpu.dot_dimension_numbers<[1], [0], [0], [1], [0, 0, 1, 1], [], []>} : vector<20x4xf32>, vector<4x8xf32>, vector<20x8xf32> -> vector<20x8xf32>
    %84 = vector.extract_strided_slice %1 {offsets = [1, 0], sizes = [20, 4], strides = [1, 1]} : vector<24x4xf32> to vector<20x4xf32>
    %c32 = arith.constant 32 : index
    %c0_54 = arith.constant 0 : index
    %85 = vector.load %arg2[%c32, %c0_54] : memref<48x8xf32, #tpu.memory_space<vmem>>, vector<4x8xf32>
    %cst_55 = arith.constant dense<0.000000e+00> : vector<20x8xf32>
    %86 = tpu.matmul %84, %85, %cst_55 {dimension_numbers = #tpu.dot_dimension_numbers<[1], [0], [0], [1], [0, 0, 1, 1], [], []>} : vector<20x4xf32>, vector<4x8xf32>, vector<20x8xf32> -> vector<20x8xf32>
    %87 = arith.addf %83, %86 : vector<20x8xf32>
    %88 = vector.extract_strided_slice %1 {offsets = [2, 0], sizes = [20, 4], strides = [1, 1]} : vector<24x4xf32> to vector<20x4xf32>
    %c36 = arith.constant 36 : index
    %c0_56 = arith.constant 0 : index
    %89 = vector.load %arg2[%c36, %c0_56] : memref<48x8xf32, #tpu.memory_space<vmem>>, vector<4x8xf32>
    %cst_57 = arith.constant dense<0.000000e+00> : vector<20x8xf32>
    %90 = tpu.matmul %88, %89, %cst_57 {dimension_numbers = #tpu.dot_dimension_numbers<[1], [0], [0], [1], [0, 0, 1, 1], [], []>} : vector<20x4xf32>, vector<4x8xf32>, vector<20x8xf32> -> vector<20x8xf32>
    %91 = arith.addf %87, %90 : vector<20x8xf32>
    %92 = vector.extract_strided_slice %1 {offsets = [3, 0], sizes = [20, 4], strides = [1, 1]} : vector<24x4xf32> to vector<20x4xf32>
    %c40 = arith.constant 40 : index
    %c0_58 = arith.constant 0 : index
    %93 = vector.load %arg2[%c40, %c0_58] : memref<48x8xf32, #tpu.memory_space<vmem>>, vector<4x8xf32>
    %cst_59 = arith.constant dense<0.000000e+00> : vector<20x8xf32>
    %94 = tpu.matmul %92, %93, %cst_59 {dimension_numbers = #tpu.dot_dimension_numbers<[1], [0], [0], [1], [0, 0, 1, 1], [], []>} : vector<20x4xf32>, vector<4x8xf32>, vector<20x8xf32> -> vector<20x8xf32>
    %95 = arith.addf %91, %94 : vector<20x8xf32>
    %96 = vector.extract_strided_slice %1 {offsets = [4, 0], sizes = [20, 4], strides = [1, 1]} : vector<24x4xf32> to vector<20x4xf32>
    %c44 = arith.constant 44 : index
    %c0_60 = arith.constant 0 : index
    %97 = vector.load %arg2[%c44, %c0_60] : memref<48x8xf32, #tpu.memory_space<vmem>>, vector<4x8xf32>
    %cst_61 = arith.constant dense<0.000000e+00> : vector<20x8xf32>
    %98 = tpu.matmul %96, %97, %cst_61 {dimension_numbers = #tpu.dot_dimension_numbers<[1], [0], [0], [1], [0, 0, 1, 1], [], []>} : vector<20x4xf32>, vector<4x8xf32>, vector<20x8xf32> -> vector<20x8xf32>
    %99 = arith.addf %95, %98 : vector<20x8xf32>
    %cst_62 = arith.constant dense<0xFF800000> : vector<8xf32>
    %100 = vector.multi_reduction <maximumf>, %99, %cst_62 [0] : vector<20x8xf32> to vector<8xf32>
    %101 = vector.shape_cast %100 : vector<8xf32> to vector<1x8xf32>
    %102 = arith.addf %101, %80 : vector<1x8xf32>
    %cst_63 = arith.constant 0.000000e+00 : f32
    %103 = vector.broadcast %cst_63 : f32 to vector<1x8xf32>
    %104 = arith.maximumf %102, %103 : vector<1x8xf32>
    %105 = vector.extract_strided_slice %3 {offsets = [0, 0], sizes = [20, 4], strides = [1, 1]} : vector<24x4xf32> to vector<20x4xf32>
    %c28_64 = arith.constant 28 : index
    %c0_65 = arith.constant 0 : index
    %106 = vector.load %arg2[%c28_64, %c0_65] : memref<48x8xf32, #tpu.memory_space<vmem>>, vector<4x8xf32>
    %cst_66 = arith.constant dense<0.000000e+00> : vector<20x8xf32>
    %107 = tpu.matmul %105, %106, %cst_66 {dimension_numbers = #tpu.dot_dimension_numbers<[1], [0], [0], [1], [0, 0, 1, 1], [], []>} : vector<20x4xf32>, vector<4x8xf32>, vector<20x8xf32> -> vector<20x8xf32>
    %108 = vector.extract_strided_slice %3 {offsets = [1, 0], sizes = [20, 4], strides = [1, 1]} : vector<24x4xf32> to vector<20x4xf32>
    %c32_67 = arith.constant 32 : index
    %c0_68 = arith.constant 0 : index
    %109 = vector.load %arg2[%c32_67, %c0_68] : memref<48x8xf32, #tpu.memory_space<vmem>>, vector<4x8xf32>
    %cst_69 = arith.constant dense<0.000000e+00> : vector<20x8xf32>
    %110 = tpu.matmul %108, %109, %cst_69 {dimension_numbers = #tpu.dot_dimension_numbers<[1], [0], [0], [1], [0, 0, 1, 1], [], []>} : vector<20x4xf32>, vector<4x8xf32>, vector<20x8xf32> -> vector<20x8xf32>
    %111 = arith.addf %107, %110 : vector<20x8xf32>
    %112 = vector.extract_strided_slice %3 {offsets = [2, 0], sizes = [20, 4], strides = [1, 1]} : vector<24x4xf32> to vector<20x4xf32>
    %c36_70 = arith.constant 36 : index
    %c0_71 = arith.constant 0 : index
    %113 = vector.load %arg2[%c36_70, %c0_71] : memref<48x8xf32, #tpu.memory_space<vmem>>, vector<4x8xf32>
    %cst_72 = arith.constant dense<0.000000e+00> : vector<20x8xf32>
    %114 = tpu.matmul %112, %113, %cst_72 {dimension_numbers = #tpu.dot_dimension_numbers<[1], [0], [0], [1], [0, 0, 1, 1], [], []>} : vector<20x4xf32>, vector<4x8xf32>, vector<20x8xf32> -> vector<20x8xf32>
    %115 = arith.addf %111, %114 : vector<20x8xf32>
    %116 = vector.extract_strided_slice %3 {offsets = [3, 0], sizes = [20, 4], strides = [1, 1]} : vector<24x4xf32> to vector<20x4xf32>
    %c40_73 = arith.constant 40 : index
    %c0_74 = arith.constant 0 : index
    %117 = vector.load %arg2[%c40_73, %c0_74] : memref<48x8xf32, #tpu.memory_space<vmem>>, vector<4x8xf32>
    %cst_75 = arith.constant dense<0.000000e+00> : vector<20x8xf32>
    %118 = tpu.matmul %116, %117, %cst_75 {dimension_numbers = #tpu.dot_dimension_numbers<[1], [0], [0], [1], [0, 0, 1, 1], [], []>} : vector<20x4xf32>, vector<4x8xf32>, vector<20x8xf32> -> vector<20x8xf32>
    %119 = arith.addf %115, %118 : vector<20x8xf32>
    %120 = vector.extract_strided_slice %3 {offsets = [4, 0], sizes = [20, 4], strides = [1, 1]} : vector<24x4xf32> to vector<20x4xf32>
    %c44_76 = arith.constant 44 : index
    %c0_77 = arith.constant 0 : index
    %121 = vector.load %arg2[%c44_76, %c0_77] : memref<48x8xf32, #tpu.memory_space<vmem>>, vector<4x8xf32>
    %cst_78 = arith.constant dense<0.000000e+00> : vector<20x8xf32>
    %122 = tpu.matmul %120, %121, %cst_78 {dimension_numbers = #tpu.dot_dimension_numbers<[1], [0], [0], [1], [0, 0, 1, 1], [], []>} : vector<20x4xf32>, vector<4x8xf32>, vector<20x8xf32> -> vector<20x8xf32>
    %123 = arith.addf %119, %122 : vector<20x8xf32>
    %cst_79 = arith.constant dense<0xFF800000> : vector<8xf32>
    %124 = vector.multi_reduction <maximumf>, %123, %cst_79 [0] : vector<20x8xf32> to vector<8xf32>
    %125 = vector.shape_cast %124 : vector<8xf32> to vector<1x8xf32>
    %126 = arith.addf %125, %80 : vector<1x8xf32>
    %cst_80 = arith.constant 0.000000e+00 : f32
    %127 = vector.broadcast %cst_80 : f32 to vector<1x8xf32>
    %128 = arith.maximumf %126, %127 : vector<1x8xf32>
    %129 = tpu.concatenate %104, %128 in 0 : vector<1x8xf32>, vector<1x8xf32> -> vector<2x8xf32>
    %cst_81 = arith.constant 0.000000e+00 : f32
    %130 = vector.broadcast %cst_81 : f32 to vector<2x10xf32>
    %c0_82 = arith.constant 0 : index
    %c0_83 = arith.constant 0 : index
    %131 = vector.load %arg4[%c0_82, %c0_83] : memref<24x2048xf32, #tpu.memory_space<vmem>>, vector<8x512xf32>
    %cst_84 = arith.constant dense<0.000000e+00> : vector<2x512xf32>
    %132 = tpu.matmul %37, %131, %cst_84 {dimension_numbers = #tpu.dot_dimension_numbers<[1], [0], [0], [1], [0, 0, 1, 1], [], []>} : vector<2x8xf32>, vector<8x512xf32>, vector<2x512xf32> -> vector<2x512xf32>
    %c8_85 = arith.constant 8 : index
    %c0_86 = arith.constant 0 : index
    %133 = vector.load %arg4[%c8_85, %c0_86] : memref<24x2048xf32, #tpu.memory_space<vmem>>, vector<8x512xf32>
    %cst_87 = arith.constant dense<0.000000e+00> : vector<2x512xf32>
    %134 = tpu.matmul %79, %133, %cst_87 {dimension_numbers = #tpu.dot_dimension_numbers<[1], [0], [0], [1], [0, 0, 1, 1], [], []>} : vector<2x8xf32>, vector<8x512xf32>, vector<2x512xf32> -> vector<2x512xf32>
    %135 = arith.addf %132, %134 : vector<2x512xf32>
    %c16_88 = arith.constant 16 : index
    %c0_89 = arith.constant 0 : index
    %136 = vector.load %arg4[%c16_88, %c0_89] : memref<24x2048xf32, #tpu.memory_space<vmem>>, vector<8x512xf32>
    %cst_90 = arith.constant dense<0.000000e+00> : vector<2x512xf32>
    %137 = tpu.matmul %129, %136, %cst_90 {dimension_numbers = #tpu.dot_dimension_numbers<[1], [0], [0], [1], [0, 0, 1, 1], [], []>} : vector<2x8xf32>, vector<8x512xf32>, vector<2x512xf32> -> vector<2x512xf32>
    %138 = arith.addf %135, %137 : vector<2x512xf32>
    %c0_91 = arith.constant 0 : index
    %c0_92 = arith.constant 0 : index
    %139 = vector.load %arg5[%c0_91, %c0_92] : memref<1x2048xf32, #tpu.memory_space<vmem>>, vector<1x512xf32>
    %140 = vector.broadcast %139 : vector<1x512xf32> to vector<2x512xf32>
    %141 = arith.addf %138, %140 : vector<2x512xf32>
    %cst_93 = arith.constant dense<0.000000e+00> : vector<512xf32>
    %142 = vector.multi_reduction <add>, %141, %cst_93 [0] : vector<2x512xf32> to vector<512xf32>
    %143 = vector.shape_cast %142 : vector<512xf32> to vector<1x512xf32>
    %cst_94 = arith.constant 2.000000e+00 : f32
    %144 = vector.broadcast %cst_94 : f32 to vector<1x512xf32>
    %145 = arith.divf %143, %144 : vector<1x512xf32>
    %146 = vector.broadcast %145 : vector<1x512xf32> to vector<2x512xf32>
    %147 = arith.subf %141, %146 : vector<2x512xf32>
    %148 = arith.mulf %147, %147 : vector<2x512xf32>
    %cst_95 = arith.constant dense<0.000000e+00> : vector<512xf32>
    %149 = vector.multi_reduction <add>, %148, %cst_95 [0] : vector<2x512xf32> to vector<512xf32>
    %150 = vector.shape_cast %149 : vector<512xf32> to vector<1x512xf32>
    %cst_96 = arith.constant 2.000000e+00 : f32
    %151 = vector.broadcast %cst_96 : f32 to vector<1x512xf32>
    %152 = arith.divf %150, %151 : vector<1x512xf32>
    %153 = vector.broadcast %145 : vector<1x512xf32> to vector<2x512xf32>
    %154 = arith.subf %141, %153 : vector<2x512xf32>
    %cst_97 = arith.constant 9.99999974E-6 : f32
    %155 = vector.broadcast %cst_97 : f32 to vector<1x512xf32>
    %156 = arith.addf %152, %155 : vector<1x512xf32>
    %157 = math.rsqrt %156 : vector<1x512xf32>
    %158 = vector.broadcast %157 : vector<1x512xf32> to vector<2x512xf32>
    %159 = arith.mulf %154, %158 : vector<2x512xf32>
    %c0_98 = arith.constant 0 : index
    %c0_99 = arith.constant 0 : index
    %160 = vector.load %arg6[%c0_98, %c0_99] : memref<1x2048xf32, #tpu.memory_space<vmem>>, vector<1x512xf32>
    %161 = vector.broadcast %160 : vector<1x512xf32> to vector<2x512xf32>
    %162 = arith.mulf %159, %161 : vector<2x512xf32>
    %c0_100 = arith.constant 0 : index
    %c0_101 = arith.constant 0 : index
    %163 = vector.load %arg7[%c0_100, %c0_101] : memref<1x2048xf32, #tpu.memory_space<vmem>>, vector<1x512xf32>
    %164 = vector.broadcast %163 : vector<1x512xf32> to vector<2x512xf32>
    %165 = arith.addf %162, %164 : vector<2x512xf32>
    %cst_102 = arith.constant 0.000000e+00 : f32
    %166 = vector.broadcast %cst_102 : f32 to vector<2x512xf32>
    %167 = arith.maximumf %165, %166 : vector<2x512xf32>
    %c0_103 = arith.constant 0 : index
    %c0_104 = arith.constant 0 : index
    %168 = vector.load %arg8[%c0_103, %c0_104] : memref<2048x10xf32, #tpu.memory_space<vmem>>, vector<512x10xf32>
    %cst_105 = arith.constant dense<0.000000e+00> : vector<2x10xf32>
    %169 = tpu.matmul %167, %168, %cst_105 {dimension_numbers = #tpu.dot_dimension_numbers<[1], [0], [0], [1], [0, 0, 1, 1], [], []>} : vector<2x512xf32>, vector<512x10xf32>, vector<2x10xf32> -> vector<2x10xf32>
    %170 = arith.addf %130, %169 : vector<2x10xf32>
    %c0_106 = arith.constant 0 : index
    %c512 = arith.constant 512 : index
    %171 = vector.load %arg4[%c0_106, %c512] : memref<24x2048xf32, #tpu.memory_space<vmem>>, vector<8x512xf32>
    %cst_107 = arith.constant dense<0.000000e+00> : vector<2x512xf32>
    %172 = tpu.matmul %37, %171, %cst_107 {dimension_numbers = #tpu.dot_dimension_numbers<[1], [0], [0], [1], [0, 0, 1, 1], [], []>} : vector<2x8xf32>, vector<8x512xf32>, vector<2x512xf32> -> vector<2x512xf32>
    %c8_108 = arith.constant 8 : index
    %c512_109 = arith.constant 512 : index
    %173 = vector.load %arg4[%c8_108, %c512_109] : memref<24x2048xf32, #tpu.memory_space<vmem>>, vector<8x512xf32>
    %cst_110 = arith.constant dense<0.000000e+00> : vector<2x512xf32>
    %174 = tpu.matmul %79, %173, %cst_110 {dimension_numbers = #tpu.dot_dimension_numbers<[1], [0], [0], [1], [0, 0, 1, 1], [], []>} : vector<2x8xf32>, vector<8x512xf32>, vector<2x512xf32> -> vector<2x512xf32>
    %175 = arith.addf %172, %174 : vector<2x512xf32>
    %c16_111 = arith.constant 16 : index
    %c512_112 = arith.constant 512 : index
    %176 = vector.load %arg4[%c16_111, %c512_112] : memref<24x2048xf32, #tpu.memory_space<vmem>>, vector<8x512xf32>
    %cst_113 = arith.constant dense<0.000000e+00> : vector<2x512xf32>
    %177 = tpu.matmul %129, %176, %cst_113 {dimension_numbers = #tpu.dot_dimension_numbers<[1], [0], [0], [1], [0, 0, 1, 1], [], []>} : vector<2x8xf32>, vector<8x512xf32>, vector<2x512xf32> -> vector<2x512xf32>
    %178 = arith.addf %175, %177 : vector<2x512xf32>
    %c0_114 = arith.constant 0 : index
    %c512_115 = arith.constant 512 : index
    %179 = vector.load %arg5[%c0_114, %c512_115] : memref<1x2048xf32, #tpu.memory_space<vmem>>, vector<1x512xf32>
    %180 = vector.broadcast %179 : vector<1x512xf32> to vector<2x512xf32>
    %181 = arith.addf %178, %180 : vector<2x512xf32>
    %cst_116 = arith.constant dense<0.000000e+00> : vector<512xf32>
    %182 = vector.multi_reduction <add>, %181, %cst_116 [0] : vector<2x512xf32> to vector<512xf32>
    %183 = vector.shape_cast %182 : vector<512xf32> to vector<1x512xf32>
    %cst_117 = arith.constant 2.000000e+00 : f32
    %184 = vector.broadcast %cst_117 : f32 to vector<1x512xf32>
    %185 = arith.divf %183, %184 : vector<1x512xf32>
    %186 = vector.broadcast %185 : vector<1x512xf32> to vector<2x512xf32>
    %187 = arith.subf %181, %186 : vector<2x512xf32>
    %188 = arith.mulf %187, %187 : vector<2x512xf32>
    %cst_118 = arith.constant dense<0.000000e+00> : vector<512xf32>
    %189 = vector.multi_reduction <add>, %188, %cst_118 [0] : vector<2x512xf32> to vector<512xf32>
    %190 = vector.shape_cast %189 : vector<512xf32> to vector<1x512xf32>
    %cst_119 = arith.constant 2.000000e+00 : f32
    %191 = vector.broadcast %cst_119 : f32 to vector<1x512xf32>
    %192 = arith.divf %190, %191 : vector<1x512xf32>
    %193 = vector.broadcast %185 : vector<1x512xf32> to vector<2x512xf32>
    %194 = arith.subf %181, %193 : vector<2x512xf32>
    %cst_120 = arith.constant 9.99999974E-6 : f32
    %195 = vector.broadcast %cst_120 : f32 to vector<1x512xf32>
    %196 = arith.addf %192, %195 : vector<1x512xf32>
    %197 = math.rsqrt %196 : vector<1x512xf32>
    %198 = vector.broadcast %197 : vector<1x512xf32> to vector<2x512xf32>
    %199 = arith.mulf %194, %198 : vector<2x512xf32>
    %c0_121 = arith.constant 0 : index
    %c512_122 = arith.constant 512 : index
    %200 = vector.load %arg6[%c0_121, %c512_122] : memref<1x2048xf32, #tpu.memory_space<vmem>>, vector<1x512xf32>
    %201 = vector.broadcast %200 : vector<1x512xf32> to vector<2x512xf32>
    %202 = arith.mulf %199, %201 : vector<2x512xf32>
    %c0_123 = arith.constant 0 : index
    %c512_124 = arith.constant 512 : index
    %203 = vector.load %arg7[%c0_123, %c512_124] : memref<1x2048xf32, #tpu.memory_space<vmem>>, vector<1x512xf32>
    %204 = vector.broadcast %203 : vector<1x512xf32> to vector<2x512xf32>
    %205 = arith.addf %202, %204 : vector<2x512xf32>
    %cst_125 = arith.constant 0.000000e+00 : f32
    %206 = vector.broadcast %cst_125 : f32 to vector<2x512xf32>
    %207 = arith.maximumf %205, %206 : vector<2x512xf32>
    %c512_126 = arith.constant 512 : index
    %c0_127 = arith.constant 0 : index
    %208 = vector.load %arg8[%c512_126, %c0_127] : memref<2048x10xf32, #tpu.memory_space<vmem>>, vector<512x10xf32>
    %cst_128 = arith.constant dense<0.000000e+00> : vector<2x10xf32>
    %209 = tpu.matmul %207, %208, %cst_128 {dimension_numbers = #tpu.dot_dimension_numbers<[1], [0], [0], [1], [0, 0, 1, 1], [], []>} : vector<2x512xf32>, vector<512x10xf32>, vector<2x10xf32> -> vector<2x10xf32>
    %210 = arith.addf %170, %209 : vector<2x10xf32>
    %c0_129 = arith.constant 0 : index
    %c1024 = arith.constant 1024 : index
    %211 = vector.load %arg4[%c0_129, %c1024] : memref<24x2048xf32, #tpu.memory_space<vmem>>, vector<8x512xf32>
    %cst_130 = arith.constant dense<0.000000e+00> : vector<2x512xf32>
    %212 = tpu.matmul %37, %211, %cst_130 {dimension_numbers = #tpu.dot_dimension_numbers<[1], [0], [0], [1], [0, 0, 1, 1], [], []>} : vector<2x8xf32>, vector<8x512xf32>, vector<2x512xf32> -> vector<2x512xf32>
    %c8_131 = arith.constant 8 : index
    %c1024_132 = arith.constant 1024 : index
    %213 = vector.load %arg4[%c8_131, %c1024_132] : memref<24x2048xf32, #tpu.memory_space<vmem>>, vector<8x512xf32>
    %cst_133 = arith.constant dense<0.000000e+00> : vector<2x512xf32>
    %214 = tpu.matmul %79, %213, %cst_133 {dimension_numbers = #tpu.dot_dimension_numbers<[1], [0], [0], [1], [0, 0, 1, 1], [], []>} : vector<2x8xf32>, vector<8x512xf32>, vector<2x512xf32> -> vector<2x512xf32>
    %215 = arith.addf %212, %214 : vector<2x512xf32>
    %c16_134 = arith.constant 16 : index
    %c1024_135 = arith.constant 1024 : index
    %216 = vector.load %arg4[%c16_134, %c1024_135] : memref<24x2048xf32, #tpu.memory_space<vmem>>, vector<8x512xf32>
    %cst_136 = arith.constant dense<0.000000e+00> : vector<2x512xf32>
    %217 = tpu.matmul %129, %216, %cst_136 {dimension_numbers = #tpu.dot_dimension_numbers<[1], [0], [0], [1], [0, 0, 1, 1], [], []>} : vector<2x8xf32>, vector<8x512xf32>, vector<2x512xf32> -> vector<2x512xf32>
    %218 = arith.addf %215, %217 : vector<2x512xf32>
    %c0_137 = arith.constant 0 : index
    %c1024_138 = arith.constant 1024 : index
    %219 = vector.load %arg5[%c0_137, %c1024_138] : memref<1x2048xf32, #tpu.memory_space<vmem>>, vector<1x512xf32>
    %220 = vector.broadcast %219 : vector<1x512xf32> to vector<2x512xf32>
    %221 = arith.addf %218, %220 : vector<2x512xf32>
    %cst_139 = arith.constant dense<0.000000e+00> : vector<512xf32>
    %222 = vector.multi_reduction <add>, %221, %cst_139 [0] : vector<2x512xf32> to vector<512xf32>
    %223 = vector.shape_cast %222 : vector<512xf32> to vector<1x512xf32>
    %cst_140 = arith.constant 2.000000e+00 : f32
    %224 = vector.broadcast %cst_140 : f32 to vector<1x512xf32>
    %225 = arith.divf %223, %224 : vector<1x512xf32>
    %226 = vector.broadcast %225 : vector<1x512xf32> to vector<2x512xf32>
    %227 = arith.subf %221, %226 : vector<2x512xf32>
    %228 = arith.mulf %227, %227 : vector<2x512xf32>
    %cst_141 = arith.constant dense<0.000000e+00> : vector<512xf32>
    %229 = vector.multi_reduction <add>, %228, %cst_141 [0] : vector<2x512xf32> to vector<512xf32>
    %230 = vector.shape_cast %229 : vector<512xf32> to vector<1x512xf32>
    %cst_142 = arith.constant 2.000000e+00 : f32
    %231 = vector.broadcast %cst_142 : f32 to vector<1x512xf32>
    %232 = arith.divf %230, %231 : vector<1x512xf32>
    %233 = vector.broadcast %225 : vector<1x512xf32> to vector<2x512xf32>
    %234 = arith.subf %221, %233 : vector<2x512xf32>
    %cst_143 = arith.constant 9.99999974E-6 : f32
    %235 = vector.broadcast %cst_143 : f32 to vector<1x512xf32>
    %236 = arith.addf %232, %235 : vector<1x512xf32>
    %237 = math.rsqrt %236 : vector<1x512xf32>
    %238 = vector.broadcast %237 : vector<1x512xf32> to vector<2x512xf32>
    %239 = arith.mulf %234, %238 : vector<2x512xf32>
    %c0_144 = arith.constant 0 : index
    %c1024_145 = arith.constant 1024 : index
    %240 = vector.load %arg6[%c0_144, %c1024_145] : memref<1x2048xf32, #tpu.memory_space<vmem>>, vector<1x512xf32>
    %241 = vector.broadcast %240 : vector<1x512xf32> to vector<2x512xf32>
    %242 = arith.mulf %239, %241 : vector<2x512xf32>
    %c0_146 = arith.constant 0 : index
    %c1024_147 = arith.constant 1024 : index
    %243 = vector.load %arg7[%c0_146, %c1024_147] : memref<1x2048xf32, #tpu.memory_space<vmem>>, vector<1x512xf32>
    %244 = vector.broadcast %243 : vector<1x512xf32> to vector<2x512xf32>
    %245 = arith.addf %242, %244 : vector<2x512xf32>
    %cst_148 = arith.constant 0.000000e+00 : f32
    %246 = vector.broadcast %cst_148 : f32 to vector<2x512xf32>
    %247 = arith.maximumf %245, %246 : vector<2x512xf32>
    %c1024_149 = arith.constant 1024 : index
    %c0_150 = arith.constant 0 : index
    %248 = vector.load %arg8[%c1024_149, %c0_150] : memref<2048x10xf32, #tpu.memory_space<vmem>>, vector<512x10xf32>
    %cst_151 = arith.constant dense<0.000000e+00> : vector<2x10xf32>
    %249 = tpu.matmul %247, %248, %cst_151 {dimension_numbers = #tpu.dot_dimension_numbers<[1], [0], [0], [1], [0, 0, 1, 1], [], []>} : vector<2x512xf32>, vector<512x10xf32>, vector<2x10xf32> -> vector<2x10xf32>
    %250 = arith.addf %210, %249 : vector<2x10xf32>
    %c0_152 = arith.constant 0 : index
    %c1536 = arith.constant 1536 : index
    %251 = vector.load %arg4[%c0_152, %c1536] : memref<24x2048xf32, #tpu.memory_space<vmem>>, vector<8x512xf32>
    %cst_153 = arith.constant dense<0.000000e+00> : vector<2x512xf32>
    %252 = tpu.matmul %37, %251, %cst_153 {dimension_numbers = #tpu.dot_dimension_numbers<[1], [0], [0], [1], [0, 0, 1, 1], [], []>} : vector<2x8xf32>, vector<8x512xf32>, vector<2x512xf32> -> vector<2x512xf32>
    %c8_154 = arith.constant 8 : index
    %c1536_155 = arith.constant 1536 : index
    %253 = vector.load %arg4[%c8_154, %c1536_155] : memref<24x2048xf32, #tpu.memory_space<vmem>>, vector<8x512xf32>
    %cst_156 = arith.constant dense<0.000000e+00> : vector<2x512xf32>
    %254 = tpu.matmul %79, %253, %cst_156 {dimension_numbers = #tpu.dot_dimension_numbers<[1], [0], [0], [1], [0, 0, 1, 1], [], []>} : vector<2x8xf32>, vector<8x512xf32>, vector<2x512xf32> -> vector<2x512xf32>
    %255 = arith.addf %252, %254 : vector<2x512xf32>
    %c16_157 = arith.constant 16 : index
    %c1536_158 = arith.constant 1536 : index
    %256 = vector.load %arg4[%c16_157, %c1536_158] : memref<24x2048xf32, #tpu.memory_space<vmem>>, vector<8x512xf32>
    %cst_159 = arith.constant dense<0.000000e+00> : vector<2x512xf32>
    %257 = tpu.matmul %129, %256, %cst_159 {dimension_numbers = #tpu.dot_dimension_numbers<[1], [0], [0], [1], [0, 0, 1, 1], [], []>} : vector<2x8xf32>, vector<8x512xf32>, vector<2x512xf32> -> vector<2x512xf32>
    %258 = arith.addf %255, %257 : vector<2x512xf32>
    %c0_160 = arith.constant 0 : index
    %c1536_161 = arith.constant 1536 : index
    %259 = vector.load %arg5[%c0_160, %c1536_161] : memref<1x2048xf32, #tpu.memory_space<vmem>>, vector<1x512xf32>
    %260 = vector.broadcast %259 : vector<1x512xf32> to vector<2x512xf32>
    %261 = arith.addf %258, %260 : vector<2x512xf32>
    %cst_162 = arith.constant dense<0.000000e+00> : vector<512xf32>
    %262 = vector.multi_reduction <add>, %261, %cst_162 [0] : vector<2x512xf32> to vector<512xf32>
    %263 = vector.shape_cast %262 : vector<512xf32> to vector<1x512xf32>
    %cst_163 = arith.constant 2.000000e+00 : f32
    %264 = vector.broadcast %cst_163 : f32 to vector<1x512xf32>
    %265 = arith.divf %263, %264 : vector<1x512xf32>
    %266 = vector.broadcast %265 : vector<1x512xf32> to vector<2x512xf32>
    %267 = arith.subf %261, %266 : vector<2x512xf32>
    %268 = arith.mulf %267, %267 : vector<2x512xf32>
    %cst_164 = arith.constant dense<0.000000e+00> : vector<512xf32>
    %269 = vector.multi_reduction <add>, %268, %cst_164 [0] : vector<2x512xf32> to vector<512xf32>
    %270 = vector.shape_cast %269 : vector<512xf32> to vector<1x512xf32>
    %cst_165 = arith.constant 2.000000e+00 : f32
    %271 = vector.broadcast %cst_165 : f32 to vector<1x512xf32>
    %272 = arith.divf %270, %271 : vector<1x512xf32>
    %273 = vector.broadcast %265 : vector<1x512xf32> to vector<2x512xf32>
    %274 = arith.subf %261, %273 : vector<2x512xf32>
    %cst_166 = arith.constant 9.99999974E-6 : f32
    %275 = vector.broadcast %cst_166 : f32 to vector<1x512xf32>
    %276 = arith.addf %272, %275 : vector<1x512xf32>
    %277 = math.rsqrt %276 : vector<1x512xf32>
    %278 = vector.broadcast %277 : vector<1x512xf32> to vector<2x512xf32>
    %279 = arith.mulf %274, %278 : vector<2x512xf32>
    %c0_167 = arith.constant 0 : index
    %c1536_168 = arith.constant 1536 : index
    %280 = vector.load %arg6[%c0_167, %c1536_168] : memref<1x2048xf32, #tpu.memory_space<vmem>>, vector<1x512xf32>
    %281 = vector.broadcast %280 : vector<1x512xf32> to vector<2x512xf32>
    %282 = arith.mulf %279, %281 : vector<2x512xf32>
    %c0_169 = arith.constant 0 : index
    %c1536_170 = arith.constant 1536 : index
    %283 = vector.load %arg7[%c0_169, %c1536_170] : memref<1x2048xf32, #tpu.memory_space<vmem>>, vector<1x512xf32>
    %284 = vector.broadcast %283 : vector<1x512xf32> to vector<2x512xf32>
    %285 = arith.addf %282, %284 : vector<2x512xf32>
    %cst_171 = arith.constant 0.000000e+00 : f32
    %286 = vector.broadcast %cst_171 : f32 to vector<2x512xf32>
    %287 = arith.maximumf %285, %286 : vector<2x512xf32>
    %c1536_172 = arith.constant 1536 : index
    %c0_173 = arith.constant 0 : index
    %288 = vector.load %arg8[%c1536_172, %c0_173] : memref<2048x10xf32, #tpu.memory_space<vmem>>, vector<512x10xf32>
    %cst_174 = arith.constant dense<0.000000e+00> : vector<2x10xf32>
    %289 = tpu.matmul %287, %288, %cst_174 {dimension_numbers = #tpu.dot_dimension_numbers<[1], [0], [0], [1], [0, 0, 1, 1], [], []>} : vector<2x512xf32>, vector<512x10xf32>, vector<2x10xf32> -> vector<2x10xf32>
    %290 = arith.addf %250, %289 : vector<2x10xf32>
    %c0_175 = arith.constant 0 : index
    %c0_176 = arith.constant 0 : index
    %c0_177 = arith.constant 0 : index
    %291 = vector.load %arg9[%c0_175, %c0_176, %c0_177] : memref<1x2x10xf32, #tpu.memory_space<vmem>>, vector<1x2x10xf32>
    %292 = vector.shape_cast %291 : vector<1x2x10xf32> to vector<2x10xf32>
    %293 = vector.shape_cast %290 : vector<2x10xf32> to vector<1x2x10xf32>
    tpu.vector_store %arg9[%c0_175, %c0_176, %c0_177], %293 {strides = array<i32>} : memref<1x2x10xf32, #tpu.memory_space<vmem>>, vector<1x2x10xf32>,
    return
  }
  func.func @transform_0(%arg0: i32) -> (i32, i32, i32) {
    %c0_i32 = arith.constant 0 : i32
    %c0_i32_0 = arith.constant 0 : i32
    %c0_i32_1 = arith.constant 0 : i32
    %c0_i32_2 = arith.constant 0 : i32
    return %c0_i32, %c0_i32_0, %c0_i32_1 : i32, i32, i32
  }
  func.func @transform_1(%arg0: i32) -> (i32, i32) {
    %c0_i32 = arith.constant 0 : i32
    %c0_i32_0 = arith.constant 0 : i32
    %c0_i32_1 = arith.constant 0 : i32
    return %c0_i32, %c0_i32_0 : i32, i32
  }
  func.func @transform_2(%arg0: i32) -> (i32, i32) {
    %c0_i32 = arith.constant 0 : i32
    %c0_i32_0 = arith.constant 0 : i32
    %c0_i32_1 = arith.constant 0 : i32
    return %c0_i32, %c0_i32_0 : i32, i32
  }
  func.func @transform_3(%arg0: i32) -> (i32, i32) {
    %c0_i32 = arith.constant 0 : i32
    %c0_i32_0 = arith.constant 0 : i32
    return %c0_i32, %arg0 : i32, i32
  }
  func.func @transform_4(%arg0: i32) -> (i32, i32) {
    %c0_i32 = arith.constant 0 : i32
    %c0_i32_0 = arith.constant 0 : i32
    return %c0_i32, %arg0 : i32, i32
  }
  func.func @transform_5(%arg0: i32) -> (i32, i32) {
    %c0_i32 = arith.constant 0 : i32
    %c0_i32_0 = arith.constant 0 : i32
    return %c0_i32, %arg0 : i32, i32
  }
  func.func @transform_6(%arg0: i32) -> (i32, i32) {
    %c0_i32 = arith.constant 0 : i32
    %c0_i32_0 = arith.constant 0 : i32
    return %c0_i32, %arg0 : i32, i32
  }
  func.func @transform_7(%arg0: i32) -> (i32, i32) {
    %c0_i32 = arith.constant 0 : i32
    %c0_i32_0 = arith.constant 0 : i32
    return %arg0, %c0_i32 : i32, i32
  }
  func.func @transform_8(%arg0: i32) -> (i32, i32, i32) {
    %c0_i32 = arith.constant 0 : i32
    %c0_i32_0 = arith.constant 0 : i32
    %c0_i32_1 = arith.constant 0 : i32
    return %arg0, %c0_i32, %c0_i32_0 : i32, i32, i32
  }
}

</mosaic_0001>

<llo_original>
// kernel: _lambda_.1
$region0: #{_lambda_.1}
  #allocation0 [shape = 'u32[]', space=smem, size = 0x4, offset = 0x4, fixed_abs, tag = 'smem constant byte address 0x4 - core index']
  #allocation1 [shape = 'u32[144,128]{1,0:T(1,128)}', space=vmem, size = 0x12000, scoped, tag = 'internal scratch']
  %s0 = inlined_call_operand.vmem [shape: f32[2,24,4], index: 0, kind: input, shape index: {}]
  %s1 = inlined_call_operand.vmem [shape: f32[48,8], index: 1, kind: input, shape index: {}]
  %s2 = inlined_call_operand.vmem [shape: f32[3,8], index: 2, kind: input, shape index: {}]
  %s3 = inlined_call_operand.vmem [shape: f32[24,4096], index: 3, kind: input, shape index: {}]
  %s4 = inlined_call_operand.vmem [shape: f32[1,4096], index: 4, kind: input, shape index: {}]
  %s5 = inlined_call_operand.vmem [shape: f32[1,4096], index: 5, kind: input, shape index: {}]
  %s6 = inlined_call_operand.vmem [shape: f32[1,4096], index: 6, kind: input, shape index: {}]
  %s7 = inlined_call_operand.vmem [shape: f32[4096,10], index: 7, kind: input, shape index: {}]
  %s8 = inlined_call_operand.vmem [shape: f32[2,2,10], index: 8, kind: output, shape index: {}]
  %s9 = sld [smem:[#allocation0]]
  $region88: #{_lambda_.1} parent=0
    _
  %s11 = ssub.s32 1, %s9
  %s12 = scalar_select 0, %s11, %s9
  $region1: #{_lambda_.1} parent=0
    #allocation2 [shape = 'u8[393216]{0}', space=vmem, size = 0x60000, scoped, tag = 'input window, operand 3']
    loop: start=0, step=1, limit=4
    $region2: #{_lambda_.1} parent=1 // loop_pre_header
      _
    $region3: #{_lambda_.1} parent=1 // loop_header
      %s14 = sphi 0, %s18
      %p15 = scmp.ge.s32.totalorder %s14, 4
      %s22 = sphi 0, %s22
      %s24 = sphi 0, %s22
      %s25 = sphi 0, %s24
      %s39 = sphi 0, %s25
      %s43 = sphi 0, %s43
      %s45 = sphi 0, %s43
      %s46 = sphi 0, %s45
      %s60 = sphi 0, %s46
      %s64 = sphi 0, %s64
      %s66 = sphi 0, %s64
      %s67 = sphi 0, %s66
      %s81 = sphi 0, %s67
      %s87 = sphi 0, %s89
      %s90 = sphi 0, %s87
      %s91 = sphi 0, %s90
      %s107 = sphi 0, %s91
      %s113 = sphi 0, %s115
      %s116 = sphi 0, %s113
      %s117 = sphi 0, %s116
      %s133 = sphi 0, %s117
      %s139 = sphi 0, %s141
      %s142 = sphi 0, %s139
      %s143 = sphi 0, %s142
      %s159 = sphi 0, %s143
      %s165 = sphi 0, %s167
      %s168 = sphi 0, %s165
      %s169 = sphi 0, %s168
      %s185 = sphi 0, %s169
      %s191 = sphi 0, %s193
      %s194 = sphi 0, %s191
      %s195 = sphi 0, %s194
      %s211 = sphi 0, %s195
      %s217 = sphi 0, %s219
      %s220 = sphi 0, %s217
      %s221 = sphi 0, %s220
      %s237 = sphi 0, %s221
    $region4: #{_lambda_.1} parent=1 // loop_header_branch
      %17 = sbr.rel (%p15) target = $region8
    $region5: #{_lambda_.1} parent=1 // loop_body
      %s19 = ssub.s32 %s14, 1
      %s20 = ssub.s32 %s14, 2
      %s21 = sadd.s32 %s14, 1
      %s23 = sadd.s32 %s22, 1
      %p26 = scmp.eq.s32.totalorder %s14, 1
      %p27 = scmp.ne.s32.totalorder %s22, %s24
      %p28 = scmp.eq.s32.totalorder %s14, 0
      %p29 = por %p27, %p28
      %p30 = scmp.ne.s32.totalorder %s22, %s24
      %p31 = scmp.eq.s32.totalorder %s19, 1
      %p32 = por %p30, %p31
      %p33 = scmp.ne.s32.totalorder %s24, %s25
      %p34 = scmp.eq.s32.totalorder %s19, 0
      %p35 = por %p33, %p34
      %p36 = scmp.ne.s32.totalorder %s24, %s25
      %p37 = scmp.eq.s32.totalorder %s20, 1
      %p38 = por %p36, %p37
      %p40 = scmp.ne.s32.totalorder %s25, %s39
      %p41 = scmp.eq.s32.totalorder %s20, 0
      %p42 = por %p40, %p41
      %s44 = sadd.s32 %s43, 1
      %p47 = scmp.eq.s32.totalorder %s14, 1
      %p48 = scmp.ne.s32.totalorder %s43, %s45
      %p49 = scmp.eq.s32.totalorder %s14, 0
      %p50 = por %p48, %p49
      %p51 = scmp.ne.s32.totalorder %s43, %s45
      %p52 = scmp.eq.s32.totalorder %s19, 1
      %p53 = por %p51, %p52
      %p54 = scmp.ne.s32.totalorder %s45, %s46
      %p55 = scmp.eq.s32.totalorder %s19, 0
      %p56 = por %p54, %p55
      %p57 = scmp.ne.s32.totalorder %s45, %s46
      %p58 = scmp.eq.s32.totalorder %s20, 1
      %p59 = por %p57, %p58
      %p61 = scmp.ne.s32.totalorder %s46, %s60
      %p62 = scmp.eq.s32.totalorder %s20, 0
      %p63 = por %p61, %p62
      %s65 = sadd.s32 %s64, 1
      %p68 = scmp.eq.s32.totalorder %s14, 1
      %p69 = scmp.ne.s32.totalorder %s64, %s66
      %p70 = scmp.eq.s32.totalorder %s14, 0
      %p71 = por %p69, %p70
      %p72 = scmp.ne.s32.totalorder %s64, %s66
      %p73 = scmp.eq.s32.totalorder %s19, 1
      %p74 = por %p72, %p73
      %p75 = scmp.ne.s32.totalorder %s66, %s67
      %p76 = scmp.eq.s32.totalorder %s19, 0
      %p77 = por %p75, %p76
      %p78 = scmp.ne.s32.totalorder %s66, %s67
      %p79 = scmp.eq.s32.totalorder %s20, 1
      %p80 = por %p78, %p79
      %p82 = scmp.ne.s32.totalorder %s67, %s81
      %p83 = scmp.eq.s32.totalorder %s20, 0
      %p84 = por %p82, %p83
      %s85 = ssub.s32 %s14, %s21
      %p86 = scmp.eq.s32.totalorder %s85, 0
      %s88 = sadd.s32 %s87, 1
      %s89 = scalar_select %p86, %s87, %s88
      %p92 = pneg %p86
      %p93 = scmp.eq.s32.totalorder %s14, 1
      %p94 = por %p92, %p93
      %p95 = scmp.ne.s32.totalorder %s87, %s90
      %p96 = scmp.eq.s32.totalorder %s14, 0
      %p97 = por %p95, %p96
      %p98 = scmp.ne.s32.totalorder %s87, %s90
      %p99 = scmp.eq.s32.totalorder %s19, 1
      %p100 = por %p98, %p99
      %p101 = scmp.ne.s32.totalorder %s90, %s91
      %p102 = scmp.eq.s32.totalorder %s19, 0
      %p103 = por %p101, %p102
      %p104 = scmp.ne.s32.totalorder %s90, %s91
      %p105 = scmp.eq.s32.totalorder %s20, 1
      %p106 = por %p104, %p105
      %p108 = scmp.ne.s32.totalorder %s91, %s107
      %p109 = scmp.eq.s32.totalorder %s20, 0
      %p110 = por %p108, %p109
      %s111 = ssub.s32 %s14, %s21
      %p112 = scmp.eq.s32.totalorder %s111, 0
      %s114 = sadd.s32 %s113, 1
      %s115 = scalar_select %p112, %s113, %s114
      %p118 = pneg %p112
      %p119 = scmp.eq.s32.totalorder %s14, 1
      %p120 = por %p118, %p119
      %p121 = scmp.ne.s32.totalorder %s113, %s116
      %p122 = scmp.eq.s32.totalorder %s14, 0
      %p123 = por %p121, %p122
      %p124 = scmp.ne.s32.totalorder %s113, %s116
      %p125 = scmp.eq.s32.totalorder %s19, 1
      %p126 = por %p124, %p125
      %p127 = scmp.ne.s32.totalorder %s116, %s117
      %p128 = scmp.eq.s32.totalorder %s19, 0
      %p129 = por %p127, %p128
      %p130 = scmp.ne.s32.totalorder %s116, %s117
      %p131 = scmp.eq.s32.totalorder %s20, 1
      %p132 = por %p130, %p131
      %p134 = scmp.ne.s32.totalorder %s117, %s133
      %p135 = scmp.eq.s32.totalorder %s20, 0
      %p136 = por %p134, %p135
      %s137 = ssub.s32 %s14, %s21
      %p138 = scmp.eq.s32.totalorder %s137, 0
      %s140 = sadd.s32 %s139, 1
      %s141 = scalar_select %p138, %s139, %s140
      %p144 = pneg %p138
      %p145 = scmp.eq.s32.totalorder %s14, 1
      %p146 = por %p144, %p145
      %p147 = scmp.ne.s32.totalorder %s139, %s142
      %p148 = scmp.eq.s32.totalorder %s14, 0
      %p149 = por %p147, %p148
      %p150 = scmp.ne.s32.totalorder %s139, %s142
      %p151 = scmp.eq.s32.totalorder %s19, 1
      %p152 = por %p150, %p151
      %p153 = scmp.ne.s32.totalorder %s142, %s143
      %p154 = scmp.eq.s32.totalorder %s19, 0
      %p155 = por %p153, %p154
      %p156 = scmp.ne.s32.totalorder %s142, %s143
      %p157 = scmp.eq.s32.totalorder %s20, 1
      %p158 = por %p156, %p157
      %p160 = scmp.ne.s32.totalorder %s143, %s159
      %p161 = scmp.eq.s32.totalorder %s20, 0
      %p162 = por %p160, %p161
      %s163 = ssub.s32 %s14, %s21
      %p164 = scmp.eq.s32.totalorder %s163, 0
      %s166 = sadd.s32 %s165, 1
      %s167 = scalar_select %p164, %s165, %s166
      %p170 = pneg %p164
      %p171 = scmp.eq.s32.totalorder %s14, 1
      %p172 = por %p170, %p171
      %p173 = scmp.ne.s32.totalorder %s165, %s168
      %p174 = scmp.eq.s32.totalorder %s14, 0
      %p175 = por %p173, %p174
      %p176 = scmp.ne.s32.totalorder %s165, %s168
      %p177 = scmp.eq.s32.totalorder %s19, 1
      %p178 = por %p176, %p177
      %p179 = scmp.ne.s32.totalorder %s168, %s169
      %p180 = scmp.eq.s32.totalorder %s19, 0
      %p181 = por %p179, %p180
      %p182 = scmp.ne.s32.totalorder %s168, %s169
      %p183 = scmp.eq.s32.totalorder %s20, 1
      %p184 = por %p182, %p183
      %p186 = scmp.ne.s32.totalorder %s169, %s185
      %p187 = scmp.eq.s32.totalorder %s20, 0
      %p188 = por %p186, %p187
      %s189 = ssub.s32 %s14, %s21
      %p190 = scmp.eq.s32.totalorder %s189, 0
      %s192 = sadd.s32 %s191, 1
      %s193 = scalar_select %p190, %s191, %s192
      %p196 = pneg %p190
      %p197 = scmp.eq.s32.totalorder %s14, 1
      %p198 = por %p196, %p197
      %p199 = scmp.ne.s32.totalorder %s191, %s194
      %p200 = scmp.eq.s32.totalorder %s14, 0
      %p201 = por %p199, %p200
      %p202 = scmp.ne.s32.totalorder %s191, %s194
      %p203 = scmp.eq.s32.totalorder %s19, 1
      %p204 = por %p202, %p203
      %p205 = scmp.ne.s32.totalorder %s194, %s195
      %p206 = scmp.eq.s32.totalorder %s19, 0
      %p207 = por %p205, %p206
      %p208 = scmp.ne.s32.totalorder %s194, %s195
      %p209 = scmp.eq.s32.totalorder %s20, 1
      %p210 = por %p208, %p209
      %p212 = scmp.ne.s32.totalorder %s195, %s211
      %p213 = scmp.eq.s32.totalorder %s20, 0
      %p214 = por %p212, %p213
      %s215 = ssub.s32 %s14, %s21
      %p216 = scmp.eq.s32.totalorder %s215, 0
      %s218 = sadd.s32 %s217, 1
      %s219 = scalar_select %p216, %s217, %s218
      %p222 = pneg %p216
      %p223 = scmp.eq.s32.totalorder %s14, 1
      %p224 = por %p222, %p223
      %p225 = scmp.ne.s32.totalorder %s217, %s220
      %p226 = scmp.eq.s32.totalorder %s14, 0
      %p227 = por %p225, %p226
      %p228 = scmp.ne.s32.totalorder %s217, %s220
      %p229 = scmp.eq.s32.totalorder %s19, 1
      %p230 = por %p228, %p229
      %p231 = scmp.ne.s32.totalorder %s220, %s221
      %p232 = scmp.eq.s32.totalorder %s19, 0
      %p233 = por %p231, %p232
      %p234 = scmp.ne.s32.totalorder %s220, %s221
      %p235 = scmp.eq.s32.totalorder %s20, 1
      %p236 = por %p234, %p235
      %p238 = scmp.ne.s32.totalorder %s221, %s237
      %p239 = scmp.eq.s32.totalorder %s20, 0
      %p240 = por %p238, %p239
      %p241 = scmp.le.s32.totalorder 1, %s14
      %p242 = scmp.lt.s32.totalorder %s14, 3
      %p243 = pnand %p241, %p242
      %p244 = pneg %p243
      // Predicated region
      $region9: #{_lambda_.1} parent=5 // pred_check
        _
      $region10: #{_lambda_.1} parent=5 // pred_check_branch
        %246 = sbr.rel (%p243) target = $region12
      $region11: #{_lambda_.1} parent=5 // pred_region
        %s247 = ssub.s32 %s14, 1
        // Predicated region
        $region13: #{_lambda_.1} parent=11 // pred_check
          %p248 = pneg %p35
        $region14: #{_lambda_.1} parent=11 // pred_check_branch
          %250 = sbr.rel (%p248) target = $region16
        $region15: #{_lambda_.1} parent=11 // pred_region
          _
        $region16: #{_lambda_.1} parent=11 // pred_fallthru
          _
        // Predicated region
        $region17: #{_lambda_.1} parent=11 // pred_check
          %p251 = pneg %p56
        $region18: #{_lambda_.1} parent=11 // pred_check_branch
          %253 = sbr.rel (%p251) target = $region20
        $region19: #{_lambda_.1} parent=11 // pred_region
          _
        $region20: #{_lambda_.1} parent=11 // pred_fallthru
          _
        // Predicated region
        $region21: #{_lambda_.1} parent=11 // pred_check
          %p254 = pneg %p77
        $region22: #{_lambda_.1} parent=11 // pred_check_branch
          %256 = sbr.rel (%p254) target = $region24
        $region23: #{_lambda_.1} parent=11 // pred_region
          _
        $region24: #{_lambda_.1} parent=11 // pred_fallthru
          _
      $region12: #{_lambda_.1} parent=5 // pred_fallthru
        _
      %p257 = scmp.lt.s32.totalorder %s14, 2
      // Predicated region
      $region25: #{_lambda_.1} parent=5 // pred_check
        %p258 = pneg %p257
      $region26: #{_lambda_.1} parent=5 // pred_check_branch
        %260 = sbr.rel (%p258) target = $region28
      $region27: #{_lambda_.1} parent=5 // pred_region
        // Predicated region
        $region29: #{_lambda_.1} parent=27 // pred_check
          %p261 = pneg %p97
        $region30: #{_lambda_.1} parent=27 // pred_check_branch
          %263 = sbr.rel (%p261) target = $region32
        $region31: #{_lambda_.1} parent=27 // pred_region
          %s264 = sand.u32 %s87, 1
          %s265 = sand.u32 %s87, 1
          %s266 = smul.addr %s265, 384
          %s267 = scalar_lea.vmem [#allocation2], %s266
          %s268 = smul.u32 16, %s14
          %s269 = smul.addr %s268, 8
          %s270 = scalar_lea.vmem %s3, %s269
          // Predicated region
          $region33: #{_lambda_.1} parent=31 // pred_check
            _
          $region34: #{_lambda_.1} parent=31 // pred_check_branch
            %272 = sbr.rel (0) target = $region36
          $region35: #{_lambda_.1} parent=31 // pred_region
            // Predicated region
            $region37: #{_lambda_.1} parent=35 // pred_check
              _
            $region38: #{_lambda_.1} parent=35 // pred_check_branch
              %274 = sbr.rel (0) target = $region40
            $region39: #{_lambda_.1} parent=35 // pred_region
              loop: start=0, step=1, limit=1
              $region41: #{_lambda_.1} parent=39 // loop_pre_header
                _
              $region42: #{_lambda_.1} parent=39 // loop_header
                %s276 = sphi 0, %s280
                %p277 = scmp.ge.s32.totalorder %s276, 1
                %s281 = sphi %s270, %s270
                %s282 = sphi %s267, %s267
              $region43: #{_lambda_.1} parent=39 // loop_header_branch
                %279 = sbr.rel (%p277) target = $region47
              $region44: #{_lambda_.1} parent=39 // loop_body
                %v283 = vld [vmem:[%s281] sm:$0xff]
                %284 = vst [vmem:[%s282] sm:$0xff] %v283
                %v285 = vld [vmem:[%s281 + $0x8] sm:$0xff]
                %286 = vst [vmem:[%s282 + $0x8] sm:$0xff] %v285
                %v287 = vld [vmem:[%s281 + $0x10] sm:$0xff]
                %288 = vst [vmem:[%s282 + $0x10] sm:$0xff] %v287
                %v289 = vld [vmem:[%s281 + $0x18] sm:$0xff]
                %290 = vst [vmem:[%s282 + $0x18] sm:$0xff] %v289
                %v291 = vld [vmem:[%s281 + $0x20] sm:$0xff]
                %292 = vst [vmem:[%s282 + $0x20] sm:$0xff] %v291
                %v293 = vld [vmem:[%s281 + $0x28] sm:$0xff]
                %294 = vst [vmem:[%s282 + $0x28] sm:$0xff] %v293
                %v295 = vld [vmem:[%s281 + $0x30] sm:$0xff]
                %296 = vst [vmem:[%s282 + $0x30] sm:$0xff] %v295
                %v297 = vld [vmem:[%s281 + $0x38] sm:$0xff]
                %298 = vst [vmem:[%s282 + $0x38] sm:$0xff] %v297
                %v299 = vld [vmem:[%s281 + $0x40] sm:$0xff]
                %300 = vst [vmem:[%s282 + $0x40] sm:$0xff] %v299
                %v301 = vld [vmem:[%s281 + $0x48] sm:$0xff]
                %302 = vst [vmem:[%s282 + $0x48] sm:$0xff] %v301
                %v303 = vld [vmem:[%s281 + $0x50] sm:$0xff]
                %304 = vst [vmem:[%s282 + $0x50] sm:$0xff] %v303
                %v305 = vld [vmem:[%s281 + $0x58] sm:$0xff]
                %306 = vst [vmem:[%s282 + $0x58] sm:$0xff] %v305
                %v307 = vld [vmem:[%s281 + $0x60] sm:$0xff]
                %308 = vst [vmem:[%s282 + $0x60] sm:$0xff] %v307
                %v309 = vld [vmem:[%s281 + $0x68] sm:$0xff]
                %310 = vst [vmem:[%s282 + $0x68] sm:$0xff] %v309
                %v311 = vld [vmem:[%s281 + $0x70] sm:$0xff]
                %312 = vst [vmem:[%s282 + $0x70] sm:$0xff] %v311
                %v313 = vld [vmem:[%s281 + $0x78] sm:$0xff]
                %314 = vst [vmem:[%s282 + $0x78] sm:$0xff] %v313
                %v315 = vld [vmem:[%s281 + $0x100] sm:$0xff]
                %316 = vst [vmem:[%s282 + $0x80] sm:$0xff] %v315
                %v317 = vld [vmem:[%s281 + $0x108] sm:$0xff]
                %318 = vst [vmem:[%s282 + $0x88] sm:$0xff] %v317
                %v319 = vld [vmem:[%s281 + $0x110] sm:$0xff]
                %320 = vst [vmem:[%s282 + $0x90] sm:$0xff] %v319
                %v321 = vld [vmem:[%s281 + $0x118] sm:$0xff]
                %322 = vst [vmem:[%s282 + $0x98] sm:$0xff] %v321
                %v323 = vld [vmem:[%s281 + $0x120] sm:$0xff]
                %324 = vst [vmem:[%s282 + $0xa0] sm:$0xff] %v323
                %v325 = vld [vmem:[%s281 + $0x128] sm:$0xff]
                %326 = vst [vmem:[%s282 + $0xa8] sm:$0xff] %v325
                %v327 = vld [vmem:[%s281 + $0x130] sm:$0xff]
                %328 = vst [vmem:[%s282 + $0xb0] sm:$0xff] %v327
                %v329 = vld [vmem:[%s281 + $0x138] sm:$0xff]
                %330 = vst [vmem:[%s282 + $0xb8] sm:$0xff] %v329
                %v331 = vld [vmem:[%s281 + $0x140] sm:$0xff]
                %332 = vst [vmem:[%s282 + $0xc0] sm:$0xff] %v331
                %v333 = vld [vmem:[%s281 + $0x148] sm:$0xff]
                %334 = vst [vmem:[%s282 + $0xc8] sm:$0xff] %v333
                %v335 = vld [vmem:[%s281 + $0x150] sm:$0xff]
                %336 = vst [vmem:[%s282 + $0xd0] sm:$0xff] %v335
                %v337 = vld [vmem:[%s281 + $0x158] sm:$0xff]
                %338 = vst [vmem:[%s282 + $0xd8] sm:$0xff] %v337
                %v339 = vld [vmem:[%s281 + $0x160] sm:$0xff]
                %340 = vst [vmem:[%s282 + $0xe0] sm:$0xff] %v339
                %v341 = vld [vmem:[%s281 + $0x168] sm:$0xff]
                %342 = vst [vmem:[%s282 + $0xe8] sm:$0xff] %v341
                %v343 = vld [vmem:[%s281 + $0x170] sm:$0xff]
                %344 = vst [vmem:[%s282 + $0xf0] sm:$0xff] %v343
                %v345 = vld [vmem:[%s281 + $0x178] sm:$0xff]
                %346 = vst [vmem:[%s282 + $0xf8] sm:$0xff] %v345
                %v347 = vld [vmem:[%s281 + $0x200] sm:$0xff]
                %348 = vst [vmem:[%s282 + $0x100] sm:$0xff] %v347
                %v349 = vld [vmem:[%s281 + $0x208] sm:$0xff]
                %350 = vst [vmem:[%s282 + $0x108] sm:$0xff] %v349
                %v351 = vld [vmem:[%s281 + $0x210] sm:$0xff]
                %352 = vst [vmem:[%s282 + $0x110] sm:$0xff] %v351
                %v353 = vld [vmem:[%s281 + $0x218] sm:$0xff]
                %354 = vst [vmem:[%s282 + $0x118] sm:$0xff] %v353
                %v355 = vld [vmem:[%s281 + $0x220] sm:$0xff]
                %356 = vst [vmem:[%s282 + $0x120] sm:$0xff] %v355
                %v357 = vld [vmem:[%s281 + $0x228] sm:$0xff]
                %358 = vst [vmem:[%s282 + $0x128] sm:$0xff] %v357
                %v359 = vld [vmem:[%s281 + $0x230] sm:$0xff]
                %360 = vst [vmem:[%s282 + $0x130] sm:$0xff] %v359
                %v361 = vld [vmem:[%s281 + $0x238] sm:$0xff]
                %362 = vst [vmem:[%s282 + $0x138] sm:$0xff] %v361
                %v363 = vld [vmem:[%s281 + $0x240] sm:$0xff]
                %364 = vst [vmem:[%s282 + $0x140] sm:$0xff] %v363
                %v365 = vld [vmem:[%s281 + $0x248] sm:$0xff]
                %366 = vst [vmem:[%s282 + $0x148] sm:$0xff] %v365
                %v367 = vld [vmem:[%s281 + $0x250] sm:$0xff]
                %368 = vst [vmem:[%s282 + $0x150] sm:$0xff] %v367
                %v369 = vld [vmem:[%s281 + $0x258] sm:$0xff]
                %370 = vst [vmem:[%s282 + $0x158] sm:$0xff] %v369
                %v371 = vld [vmem:[%s281 + $0x260] sm:$0xff]
                %372 = vst [vmem:[%s282 + $0x160] sm:$0xff] %v371
                %v373 = vld [vmem:[%s281 + $0x268] sm:$0xff]
                %374 = vst [vmem:[%s282 + $0x168] sm:$0xff] %v373
                %v375 = vld [vmem:[%s281 + $0x270] sm:$0xff]
                %376 = vst [vmem:[%s282 + $0x170] sm:$0xff] %v375
                %v377 = vld [vmem:[%s281 + $0x278] sm:$0xff]
                %378 = vst [vmem:[%s282 + $0x178] sm:$0xff] %v377
              $region45: #{_lambda_.1} parent=39 // loop_footer
                %s280 = sadd.s32 1, %s276
              $region46: #{_lambda_.1} parent=39 // loop_footer_branch
                %275 = sbr.rel target = $region42
              $region47: #{_lambda_.1} parent=39 // loop_exit
                _
            $region40: #{_lambda_.1} parent=35 // pred_fallthru
              _
            // Predicated region
            $region48: #{_lambda_.1} parent=35 // pred_check
              _
            $region49: #{_lambda_.1} parent=35 // pred_check_branch
              %380 = sbr.rel target = $region51
            $region50: #{_lambda_.1} parent=35 // pred_region
              _
            $region51: #{_lambda_.1} parent=35 // pred_fallthru
              _
          $region36: #{_lambda_.1} parent=31 // pred_fallthru
            _
          %381 = vnop
        $region32: #{_lambda_.1} parent=27 // pred_fallthru
          _
        // Predicated region
        $region52: #{_lambda_.1} parent=27 // pred_check
          %p382 = pneg %p123
        $region53: #{_lambda_.1} parent=27 // pred_check_branch
          %384 = sbr.rel (%p382) target = $region55
        $region54: #{_lambda_.1} parent=27 // pred_region
          %s385 = smul.u32 16, %s14
          %p386 = scmp.lt.s32.totalorder %s385, 31
          %s387 = scalar_select %p386, %s385, 31
          %s388 = scalar_lea.vmem %s4, %s387
          %s389 = smul.u32 16, %s14
        $region55: #{_lambda_.1} parent=27 // pred_fallthru
          _
        // Predicated region
        $region56: #{_lambda_.1} parent=27 // pred_check
          %p390 = pneg %p149
        $region57: #{_lambda_.1} parent=27 // pred_check_branch
          %392 = sbr.rel (%p390) target = $region59
        $region58: #{_lambda_.1} parent=27 // pred_region
          %s393 = smul.u32 16, %s14
          %p394 = scmp.lt.s32.totalorder %s393, 31
          %s395 = scalar_select %p394, %s393, 31
          %s396 = scalar_lea.vmem %s5, %s395
          %s397 = smul.u32 16, %s14
        $region59: #{_lambda_.1} parent=27 // pred_fallthru
          _
        // Predicated region
        $region60: #{_lambda_.1} parent=27 // pred_check
          %p398 = pneg %p175
        $region61: #{_lambda_.1} parent=27 // pred_check_branch
          %400 = sbr.rel (%p398) target = $region63
        $region62: #{_lambda_.1} parent=27 // pred_region
          %s401 = smul.u32 16, %s14
          %p402 = scmp.lt.s32.totalorder %s401, 31
          %s403 = scalar_select %p402, %s401, 31
          %s404 = scalar_lea.vmem %s6, %s403
          %s405 = smul.u32 16, %s14
        $region63: #{_lambda_.1} parent=27 // pred_fallthru
          _
        // Predicated region
        $region64: #{_lambda_.1} parent=27 // pred_check
          %p406 = pneg %p201
        $region65: #{_lambda_.1} parent=27 // pred_check_branch
          %408 = sbr.rel (%p406) target = $region67
        $region66: #{_lambda_.1} parent=27 // pred_region
          %s409 = smul.u32 256, %s14
          %p410 = scmp.lt.s32.totalorder %s409, 511
          %s411 = scalar_select %p410, %s409, 511
          %s412 = smul.addr %s411, 8
          %s413 = scalar_lea.vmem %s7, %s412
          %s414 = smul.u32 256, %s14
        $region67: #{_lambda_.1} parent=27 // pred_fallthru
          _
      $region28: #{_lambda_.1} parent=5 // pred_fallthru
        _
      %p415 = scmp.le.s32.totalorder 1, %s14
      %p416 = scmp.lt.s32.totalorder %s14, 3
      %p417 = pnand %p415, %p416
      %p418 = pneg %p417
      // Predicated region
      $region68: #{_lambda_.1} parent=5 // pred_check
        _
      $region69: #{_lambda_.1} parent=5 // pred_check_branch
        %420 = sbr.rel (%p417) target = $region71
      $region70: #{_lambda_.1} parent=5 // pred_region
        %s421 = ssub.s32 %s14, 1
        %s422 = sand.u32 %s90, 1
        %s423 = sand.u32 %s90, 1
        %s424 = smul.addr %s423, 384
        %s425 = scalar_lea.vmem [#allocation2], %s424
        // Predicated region
        $region72: #{_lambda_.1} parent=70 // pred_check
          %p426 = pneg %p103
        $region73: #{_lambda_.1} parent=70 // pred_check_branch
          %428 = sbr.rel (%p426) target = $region75
        $region74: #{_lambda_.1} parent=70 // pred_region
          _
        $region75: #{_lambda_.1} parent=70 // pred_fallthru
          _
        %p429 = pneg %p35
        %p430 = pneg %p32
        %p431 = pneg %p56
        %p432 = pneg %p53
        %p433 = pneg %p77
        %p434 = pneg %p74
        %s435 = sand.u32 %s90, 1
        %s436 = sand.u32 %s90, 1
        %s437 = smul.addr %s436, 384
        %s438 = scalar_lea.vmem [#allocation2], %s437
        %p439 = pneg %p103
        %p440 = pneg %p100
        %s441 = smul.u32 16, %s19
        %p442 = scmp.lt.s32.totalorder %s441, 31
        %s443 = scalar_select %p442, %s441, 31
        %s444 = scalar_lea.vmem %s4, %s443
        %p445 = pneg %p129
        %p446 = pneg %p126
        %s447 = smul.u32 16, %s19
        %p448 = scmp.lt.s32.totalorder %s447, 31
        %s449 = scalar_select %p448, %s447, 31
        %s450 = scalar_lea.vmem %s5, %s449
        %p451 = pneg %p155
        %p452 = pneg %p152
        %s453 = smul.u32 16, %s19
        %p454 = scmp.lt.s32.totalorder %s453, 31
        %s455 = scalar_select %p454, %s453, 31
        %s456 = scalar_lea.vmem %s6, %s455
        %p457 = pneg %p181
        %p458 = pneg %p178
        %s459 = smul.u32 256, %s19
        %p460 = scmp.lt.s32.totalorder %s459, 511
        %s461 = scalar_select %p460, %s459, 511
        %s462 = smul.addr %s461, 8
        %s463 = scalar_lea.vmem %s7, %s462
        %p464 = pneg %p207
        %p465 = pneg %p204
        %p466 = pneg %p233
        %p467 = pneg %p230
        %p468 = scmp.lt.s32.totalorder %s19, 1
        %s469 = scalar_select %p468, %s19, 1
        %s470 = smul.addr %s469, 2
        %s471 = scalar_lea.vmem %s8, %s470
        %s472 = smul.u32 16, %s19
        %s473 = smul.u32 16, %s19
        %p474 = scmp.lt.s32.totalorder %s473, 31
        %s475 = scalar_select %p474, %s473, 31
        %s476 = scalar_lea.vmem %s4, %s475
        %s477 = smul.u32 16, %s19
        %s478 = smul.u32 16, %s19
        %p479 = scmp.lt.s32.totalorder %s478, 31
        %s480 = scalar_select %p479, %s478, 31
        %s481 = scalar_lea.vmem %s5, %s480
        %s482 = smul.u32 16, %s19
        %s483 = smul.u32 16, %s19
        %p484 = scmp.lt.s32.totalorder %s483, 31
        %s485 = scalar_select %p484, %s483, 31
        %s486 = scalar_lea.vmem %s6, %s485
        %s487 = smul.u32 16, %s19
        %s488 = smul.u32 256, %s19
        %p489 = scmp.lt.s32.totalorder %s488, 511
        %s490 = scalar_select %p489, %s488, 511
        %s491 = smul.addr %s490, 8
        %s492 = scalar_lea.vmem %s7, %s491
        %s493 = smul.u32 256, %s19
        %p494 = scmp.lt.s32.totalorder %s19, 1
        %s495 = scalar_select %p494, %s19, 1
        %s496 = smul.addr %s495, 2
        %s497 = scalar_lea.vmem %s8, %s496
        %v498 = vld [vmem:[%s0] sm:$0xff]
        %v499 = vld [vmem:[%s0 + $0x8] sm:$0xff]
        %v500 = vld [vmem:[%s0 + $0x10] sm:$0xff]
        %s501 = scalar_lea.vmem %s0, 24
        %v502 = vld [vmem:[%s501] sm:$0xff]
        %v503 = vld [vmem:[%s501 + $0x8] sm:$0xff]
        %v504 = vld [vmem:[%s501 + $0x10] sm:$0xff]
        %v505 = vld [vmem:[%s2] sm:$0x1]
        %v506 = vld [vmem:[%s1] sm:$0xf]
        %v507 = vld [vmem:[%s1 + $0x4] sm:$0xf]
        %vm511 = vcmask 1044480
        %v512 = vrot.slane %v498, 3
        %v513 = vrot.slane %v499, 3
        %v514 = vsel %vm511, %v512, %v513
        %v515 = vrot.slane %v500, 3
        %v516 = vsel %vm511, %v513, %v515
        %vm517 = vcmask 31744
        %v518 = vsel %vm517, %v514, 0
        %v520 = vsel %vm517, %v516, 0
        %v522 = vsel %vm517, %v515, 0
        %vm524 = vcmask 1043456
        %v526 = vsel %vm524, %v507, 0
        %528 = vmatprep.subr.mxu0 0.0
        %529 = vmatpush1.msra.mxu0 0.0
        %530 = vmatprep.subr.mxu0 0.0
        %531 = vmatpush1.msra.mxu0 0.0
        %532 = vmatprep.subr.mxu0 0.0
        %533 = vmatpush1.msra.mxu0 0.0
        %534 = vmatprep.subr.mxu0 0.0
        %535 = vmatpush1.msra.mxu0 0.0
        %536 = vmatprep.subr.mxu0 0.0
        %537 = vmatpush1.msra.mxu0 0.0
        %538 = vmatprep.subr.mxu0 0.0
        %539 = vmatpush1.msra.mxu0 0.0
        %540 = vmatprep.subr.mxu0 0.0
        %541 = vmatpush1.msra.mxu0 0.0
        %542 = vmatprep.subr.mxu0 0.0
        %543 = vmatpush1.msra.mxu0 0.0
        %544 = vmatprep.subr.mxu0 0.0
        %545 = vmatpush1.msra.mxu0 0.0
        %546 = vmatprep.subr.mxu0 0.0
        %547 = vmatpush1.msra.mxu0 0.0
        %548 = vmatprep.subr.mxu0 0.0
        %549 = vmatpush1.msra.mxu0 0.0
        %550 = vmatprep.subr.mxu0 0.0
        %551 = vmatpush1.msra.mxu0 0.0
        %552 = vmatprep.subr.mxu0 0.0
        %553 = vmatpush1.msra.mxu0 0.0
        %554 = vmatprep.subr.mxu0 0.0
        %555 = vmatpush1.msra.mxu0 0.0
        %556 = vmatprep.subr.mxu0 0.0
        %557 = vmatpush1.msra.mxu0 0.0
        %558 = vmatprep.subr.mxu0 0.0
        %559 = vmatpush1.msra.mxu0 %v526
        %560 = vmatprep.subr.mxu0 0.0
        %561 = vmatpush2.msra.mxu0 0.0
        %562 = vmatprep.subr.mxu0 0.0
        %563 = vmatpush2.msra.mxu0 0.0
        %564 = vmatprep.subr.mxu0 0.0
        %565 = vmatpush2.msra.mxu0 0.0
        %566 = vmatprep.subr.mxu0 0.0
        %567 = vmatpush2.msra.mxu0 0.0
        %568 = vmatprep.subr.mxu0 0.0
        %569 = vmatpush2.msra.mxu0 0.0
        %570 = vmatprep.subr.mxu0 0.0
        %571 = vmatpush2.msra.mxu0 0.0
        %572 = vmatprep.subr.mxu0 0.0
        %573 = vmatpush2.msra.mxu0 0.0
        %574 = vmatprep.subr.mxu0 0.0
        %575 = vmatpush2.msra.mxu0 0.0
        %576 = vmatprep.subr.mxu0 0.0
        %577 = vmatpush2.msra.mxu0 0.0
        %578 = vmatprep.subr.mxu0 0.0
        %579 = vmatpush2.msra.mxu0 0.0
        %580 = vmatprep.subr.mxu0 0.0
        %581 = vmatpush2.msra.mxu0 0.0
        %582 = vmatprep.subr.mxu0 0.0
        %583 = vmatpush2.msra.mxu0 0.0
        %584 = vmatprep.subr.mxu0 0.0
        %585 = vmatpush2.msra.mxu0 0.0
        %586 = vmatprep.subr.mxu0 0.0
        %587 = vmatpush2.msra.mxu0 0.0
        %588 = vmatprep.subr.mxu0 0.0
        %589 = vmatpush2.msra.mxu0 0.0
        %590 = vmatprep.subr.mxu0 0.0
        %591 = vmatpush2.msra.mxu0 0.0
        %592 = vmatprep.mubr.f32.mxu0 0.0
        %593 = vmatmul.mubr.f32.gmra.mxu0 %v518
        %v594 = vpop.f32.mrf.mxu0
        %v595 = vadd.f32 0.0, %v594
        %v596 = vpop.f32.mrf.mxu0
        %597 = vmatprep.mubr.f32.mxu0 0.0
        %598 = vmatmul.mubr.f32.gmra.mxu0 %v520
        %v599 = vpop.f32.mrf.mxu0
        %v600 = vadd.f32 0.0, %v599
        %v601 = vpop.f32.mrf.mxu0
        %602 = vmatprep.mubr.f32.mxu0 0.0
        %603 = vmatmul.mubr.f32.gmra.mxu0 %v522
        %v604 = vpop.f32.mrf.mxu0
        %v605 = vadd.f32 0.0, %v604
        %v606 = vpop.f32.mrf.mxu0
        %607 = vdwg.mxu0
        %vm608 = vcmask 1045504
        %v609 = vrot.slane %v498, 2
        %v610 = vrot.slane %v499, 2
        %v611 = vsel %vm608, %v609, %v610
        %v612 = vrot.slane %v500, 2
        %v613 = vsel %vm608, %v610, %v612
        %v614 = vsel %vm517, %v611, 0
        %v616 = vsel %vm517, %v613, 0
        %v618 = vsel %vm517, %v612, 0
        %v621 = vsel %vm524, %v506, 0
        %623 = vmatprep.subr.mxu0 0.0
        %624 = vmatpush1.msra.mxu0 0.0
        %625 = vmatprep.subr.mxu0 0.0
        %626 = vmatpush1.msra.mxu0 0.0
        %627 = vmatprep.subr.mxu0 0.0
        %628 = vmatpush1.msra.mxu0 0.0
        %629 = vmatprep.subr.mxu0 0.0
        %630 = vmatpush1.msra.mxu0 0.0
        %631 = vmatprep.subr.mxu0 0.0
        %632 = vmatpush1.msra.mxu0 0.0
        %633 = vmatprep.subr.mxu0 0.0
        %634 = vmatpush1.msra.mxu0 0.0
        %635 = vmatprep.subr.mxu0 0.0
        %636 = vmatpush1.msra.mxu0 0.0
        %637 = vmatprep.subr.mxu0 0.0
        %638 = vmatpush1.msra.mxu0 0.0
        %639 = vmatprep.subr.mxu0 0.0
        %640 = vmatpush1.msra.mxu0 0.0
        %641 = vmatprep.subr.mxu0 0.0
        %642 = vmatpush1.msra.mxu0 0.0
        %643 = vmatprep.subr.mxu0 0.0
        %644 = vmatpush1.msra.mxu0 0.0
        %645 = vmatprep.subr.mxu0 0.0
        %646 = vmatpush1.msra.mxu0 0.0
        %647 = vmatprep.subr.mxu0 0.0
        %648 = vmatpush1.msra.mxu0 0.0
        %649 = vmatprep.subr.mxu0 0.0
        %650 = vmatpush1.msra.mxu0 0.0
        %651 = vmatprep.subr.mxu0 0.0
        %652 = vmatpush1.msra.mxu0 0.0
        %653 = vmatprep.subr.mxu0 0.0
        %654 = vmatpush1.msra.mxu0 %v621
        %655 = vmatprep.subr.mxu0 0.0
        %656 = vmatpush2.msra.mxu0 0.0
        %657 = vmatprep.subr.mxu0 0.0
        %658 = vmatpush2.msra.mxu0 0.0
        %659 = vmatprep.subr.mxu0 0.0
        %660 = vmatpush2.msra.mxu0 0.0
        %661 = vmatprep.subr.mxu0 0.0
        %662 = vmatpush2.msra.mxu0 0.0
        %663 = vmatprep.subr.mxu0 0.0
        %664 = vmatpush2.msra.mxu0 0.0
        %665 = vmatprep.subr.mxu0 0.0
        %666 = vmatpush2.msra.mxu0 0.0
        %667 = vmatprep.subr.mxu0 0.0
        %668 = vmatpush2.msra.mxu0 0.0
        %669 = vmatprep.subr.mxu0 0.0
        %670 = vmatpush2.msra.mxu0 0.0
        %671 = vmatprep.subr.mxu0 0.0
        %672 = vmatpush2.msra.mxu0 0.0
        %673 = vmatprep.subr.mxu0 0.0
        %674 = vmatpush2.msra.mxu0 0.0
        %675 = vmatprep.subr.mxu0 0.0
        %676 = vmatpush2.msra.mxu0 0.0
        %677 = vmatprep.subr.mxu0 0.0
        %678 = vmatpush2.msra.mxu0 0.0
        %679 = vmatprep.subr.mxu0 0.0
        %680 = vmatpush2.msra.mxu0 0.0
        %681 = vmatprep.subr.mxu0 0.0
        %682 = vmatpush2.msra.mxu0 0.0
        %683 = vmatprep.subr.mxu0 0.0
        %684 = vmatpush2.msra.mxu0 0.0
        %685 = vmatprep.subr.mxu0 0.0
        %686 = vmatpush2.msra.mxu0 0.0
        %687 = vmatprep.mubr.f32.mxu0 0.0
        %688 = vmatmul.mubr.f32.gmra.mxu0 %v614
        %v689 = vpop.f32.mrf.mxu0
        %v690 = vadd.f32 %v595, %v689
        %v691 = vpop.f32.mrf.mxu0
        %692 = vmatprep.mubr.f32.mxu0 0.0
        %693 = vmatmul.mubr.f32.gmra.mxu0 %v616
        %v694 = vpop.f32.mrf.mxu0
        %v695 = vadd.f32 %v600, %v694
        %v696 = vpop.f32.mrf.mxu0
        %697 = vmatprep.mubr.f32.mxu0 0.0
        %698 = vmatmul.mubr.f32.gmra.mxu0 %v618
        %v699 = vpop.f32.mrf.mxu0
        %v700 = vadd.f32 %v605, %v699
        %v701 = vpop.f32.mrf.mxu0
        %702 = vdwg.mxu0
        %v703 = vld [vmem:[%s1 + $0x8] sm:$0xf]
        %v704 = vrot.slane %v498, 4
        %v705 = vrot.slane %v499, 4
        %v706 = vsel %vm524, %v704, %v705
        %v707 = vrot.slane %v500, 4
        %v708 = vsel %vm524, %v705, %v707
        %v709 = vsel %vm517, %v706, 0
        %v711 = vsel %vm517, %v708, 0
        %v713 = vsel %vm517, %v707, 0
        %v716 = vsel %vm524, %v703, 0
        %718 = vmatprep.subr.mxu0 0.0
        %719 = vmatpush1.msra.mxu0 0.0
        %720 = vmatprep.subr.mxu0 0.0
        %721 = vmatpush1.msra.mxu0 0.0
        %722 = vmatprep.subr.mxu0 0.0
        %723 = vmatpush1.msra.mxu0 0.0
        %724 = vmatprep.subr.mxu0 0.0
        %725 = vmatpush1.msra.mxu0 0.0
        %726 = vmatprep.subr.mxu0 0.0
        %727 = vmatpush1.msra.mxu0 0.0
        %728 = vmatprep.subr.mxu0 0.0
        %729 = vmatpush1.msra.mxu0 0.0
        %730 = vmatprep.subr.mxu0 0.0
        %731 = vmatpush1.msra.mxu0 0.0
        %732 = vmatprep.subr.mxu0 0.0
        %733 = vmatpush1.msra.mxu0 0.0
        %734 = vmatprep.subr.mxu0 0.0
        %735 = vmatpush1.msra.mxu0 0.0
        %736 = vmatprep.subr.mxu0 0.0
        %737 = vmatpush1.msra.mxu0 0.0
        %738 = vmatprep.subr.mxu0 0.0
        %739 = vmatpush1.msra.mxu0 0.0
        %740 = vmatprep.subr.mxu0 0.0
        %741 = vmatpush1.msra.mxu0 0.0
        %742 = vmatprep.subr.mxu0 0.0
        %743 = vmatpush1.msra.mxu0 0.0
        %744 = vmatprep.subr.mxu0 0.0
        %745 = vmatpush1.msra.mxu0 0.0
        %746 = vmatprep.subr.mxu0 0.0
        %747 = vmatpush1.msra.mxu0 0.0
        %748 = vmatprep.subr.mxu0 0.0
        %749 = vmatpush1.msra.mxu0 %v716
        %750 = vmatprep.subr.mxu0 0.0
        %751 = vmatpush2.msra.mxu0 0.0
        %752 = vmatprep.subr.mxu0 0.0
        %753 = vmatpush2.msra.mxu0 0.0
        %754 = vmatprep.subr.mxu0 0.0
        %755 = vmatpush2.msra.mxu0 0.0
        %756 = vmatprep.subr.mxu0 0.0
        %757 = vmatpush2.msra.mxu0 0.0
        %758 = vmatprep.subr.mxu0 0.0
        %759 = vmatpush2.msra.mxu0 0.0
        %760 = vmatprep.subr.mxu0 0.0
        %761 = vmatpush2.msra.mxu0 0.0
        %762 = vmatprep.subr.mxu0 0.0
        %763 = vmatpush2.msra.mxu0 0.0
        %764 = vmatprep.subr.mxu0 0.0
        %765 = vmatpush2.msra.mxu0 0.0
        %766 = vmatprep.subr.mxu0 0.0
        %767 = vmatpush2.msra.mxu0 0.0
        %768 = vmatprep.subr.mxu0 0.0
        %769 = vmatpush2.msra.mxu0 0.0
        %770 = vmatprep.subr.mxu0 0.0
        %771 = vmatpush2.msra.mxu0 0.0
        %772 = vmatprep.subr.mxu0 0.0
        %773 = vmatpush2.msra.mxu0 0.0
        %774 = vmatprep.subr.mxu0 0.0
        %775 = vmatpush2.msra.mxu0 0.0
        %776 = vmatprep.subr.mxu0 0.0
        %777 = vmatpush2.msra.mxu0 0.0
        %778 = vmatprep.subr.mxu0 0.0
        %779 = vmatpush2.msra.mxu0 0.0
        %780 = vmatprep.subr.mxu0 0.0
        %781 = vmatpush2.msra.mxu0 0.0
        %782 = vmatprep.mubr.f32.mxu0 0.0
        %783 = vmatmul.mubr.f32.gmra.mxu0 %v709
        %v784 = vpop.f32.mrf.mxu0
        %v785 = vadd.f32 0.0, %v784
        %v786 = vpop.f32.mrf.mxu0
        %787 = vmatprep.mubr.f32.mxu0 0.0
        %788 = vmatmul.mubr.f32.gmra.mxu0 %v711
        %v789 = vpop.f32.mrf.mxu0
        %v790 = vadd.f32 0.0, %v789
        %v791 = vpop.f32.mrf.mxu0
        %792 = vmatprep.mubr.f32.mxu0 0.0
        %793 = vmatmul.mubr.f32.gmra.mxu0 %v713
        %v794 = vpop.f32.mrf.mxu0
        %v795 = vadd.f32 0.0, %v794
        %v796 = vpop.f32.mrf.mxu0
        %797 = vdwg.mxu0
        %v798 = vadd.f32 %v690, %v785
        %v799 = vadd.f32 %v695, %v790
        %v800 = vadd.f32 %v700, %v795
        %vm801 = vcmask 64512
        %v802 = vsel %vm801, %v798, -inf
        %v803 = vsel %vm801, %v799, -inf
        %vm804 = vcmask 58368
        %v805 = vsel %vm804, %v800, -inf
        %v806 = vmax.f32 %v802, %v803
        %v807 = vmax.f32 %v806, %v805
        %v808 = vrot.slane %v807, 4
        %v809 = vmax.f32 %v807, %v808
        %v810 = vrot.slane %v809, 2
        %v811 = vmax.f32 %v809, %v810
        %v812 = vrot.slane %v811, 1
        %v813 = vmax.f32 %v811, %v812
        %v814 = vadd.f32 %v813, %v505
        %v815 = vmax.f32 %v814, 0.0
        %v819 = vrot.slane %v502, 3
        %v820 = vrot.slane %v503, 3
        %v821 = vsel %vm511, %v819, %v820
        %v822 = vrot.slane %v504, 3
        %v823 = vsel %vm511, %v820, %v822
        %v824 = vsel %vm517, %v821, 0
        %v826 = vsel %vm517, %v823, 0
        %v828 = vsel %vm517, %v822, 0
        %830 = vmatprep.subr.mxu0 0.0
        %831 = vmatpush1.msra.mxu0 0.0
        %832 = vmatprep.subr.mxu0 0.0
        %833 = vmatpush1.msra.mxu0 0.0
        %834 = vmatprep.subr.mxu0 0.0
        %835 = vmatpush1.msra.mxu0 0.0
        %836 = vmatprep.subr.mxu0 0.0
        %837 = vmatpush1.msra.mxu0 0.0
        %838 = vmatprep.subr.mxu0 0.0
        %839 = vmatpush1.msra.mxu0 0.0
        %840 = vmatprep.subr.mxu0 0.0
        %841 = vmatpush1.msra.mxu0 0.0
        %842 = vmatprep.subr.mxu0 0.0
        %843 = vmatpush1.msra.mxu0 0.0
        %844 = vmatprep.subr.mxu0 0.0
        %845 = vmatpush1.msra.mxu0 0.0
        %846 = vmatprep.subr.mxu0 0.0
        %847 = vmatpush1.msra.mxu0 0.0
        %848 = vmatprep.subr.mxu0 0.0
        %849 = vmatpush1.msra.mxu0 0.0
        %850 = vmatprep.subr.mxu0 0.0
        %851 = vmatpush1.msra.mxu0 0.0
        %852 = vmatprep.subr.mxu0 0.0
        %853 = vmatpush1.msra.mxu0 0.0
        %854 = vmatprep.subr.mxu0 0.0
        %855 = vmatpush1.msra.mxu0 0.0
        %856 = vmatprep.subr.mxu0 0.0
        %857 = vmatpush1.msra.mxu0 0.0
        %858 = vmatprep.subr.mxu0 0.0
        %859 = vmatpush1.msra.mxu0 0.0
        %860 = vmatprep.subr.mxu0 0.0
        %861 = vmatpush1.msra.mxu0 %v526
        %862 = vmatprep.subr.mxu0 0.0
        %863 = vmatpush2.msra.mxu0 0.0
        %864 = vmatprep.subr.mxu0 0.0
        %865 = vmatpush2.msra.mxu0 0.0
        %866 = vmatprep.subr.mxu0 0.0
        %867 = vmatpush2.msra.mxu0 0.0
        %868 = vmatprep.subr.mxu0 0.0
        %869 = vmatpush2.msra.mxu0 0.0
        %870 = vmatprep.subr.mxu0 0.0
        %871 = vmatpush2.msra.mxu0 0.0
        %872 = vmatprep.subr.mxu0 0.0
        %873 = vmatpush2.msra.mxu0 0.0
        %874 = vmatprep.subr.mxu0 0.0
        %875 = vmatpush2.msra.mxu0 0.0
        %876 = vmatprep.subr.mxu0 0.0
        %877 = vmatpush2.msra.mxu0 0.0
        %878 = vmatprep.subr.mxu0 0.0
        %879 = vmatpush2.msra.mxu0 0.0
        %880 = vmatprep.subr.mxu0 0.0
        %881 = vmatpush2.msra.mxu0 0.0
        %882 = vmatprep.subr.mxu0 0.0
        %883 = vmatpush2.msra.mxu0 0.0
        %884 = vmatprep.subr.mxu0 0.0
        %885 = vmatpush2.msra.mxu0 0.0
        %886 = vmatprep.subr.mxu0 0.0
        %887 = vmatpush2.msra.mxu0 0.0
        %888 = vmatprep.subr.mxu0 0.0
        %889 = vmatpush2.msra.mxu0 0.0
        %890 = vmatprep.subr.mxu0 0.0
        %891 = vmatpush2.msra.mxu0 0.0
        %892 = vmatprep.subr.mxu0 0.0
        %893 = vmatpush2.msra.mxu0 0.0
        %894 = vmatprep.mubr.f32.mxu0 0.0
        %895 = vmatmul.mubr.f32.gmra.mxu0 %v824
        %v896 = vpop.f32.mrf.mxu0
        %v897 = vadd.f32 0.0, %v896
        %v898 = vpop.f32.mrf.mxu0
        %899 = vmatprep.mubr.f32.mxu0 0.0
        %900 = vmatmul.mubr.f32.gmra.mxu0 %v826
        %v901 = vpop.f32.mrf.mxu0
        %v902 = vadd.f32 0.0, %v901
        %v903 = vpop.f32.mrf.mxu0
        %904 = vmatprep.mubr.f32.mxu0 0.0
        %905 = vmatmul.mubr.f32.gmra.mxu0 %v828
        %v906 = vpop.f32.mrf.mxu0
        %v907 = vadd.f32 0.0, %v906
        %v908 = vpop.f32.mrf.mxu0
        %909 = vdwg.mxu0
        %v910 = vrot.slane %v502, 2
        %v911 = vrot.slane %v503, 2
        %v912 = vsel %vm608, %v910, %v911
        %v913 = vrot.slane %v504, 2
        %v914 = vsel %vm608, %v911, %v913
        %v915 = vsel %vm517, %v912, 0
        %v917 = vsel %vm517, %v914, 0
        %v919 = vsel %vm517, %v913, 0
        %921 = vmatprep.subr.mxu0 0.0
        %922 = vmatpush1.msra.mxu0 0.0
        %923 = vmatprep.subr.mxu0 0.0
        %924 = vmatpush1.msra.mxu0 0.0
        %925 = vmatprep.subr.mxu0 0.0
        %926 = vmatpush1.msra.mxu0 0.0
        %927 = vmatprep.subr.mxu0 0.0
        %928 = vmatpush1.msra.mxu0 0.0
        %929 = vmatprep.subr.mxu0 0.0
        %930 = vmatpush1.msra.mxu0 0.0
        %931 = vmatprep.subr.mxu0 0.0
        %932 = vmatpush1.msra.mxu0 0.0
        %933 = vmatprep.subr.mxu0 0.0
        %934 = vmatpush1.msra.mxu0 0.0
        %935 = vmatprep.subr.mxu0 0.0
        %936 = vmatpush1.msra.mxu0 0.0
        %937 = vmatprep.subr.mxu0 0.0
        %938 = vmatpush1.msra.mxu0 0.0
        %939 = vmatprep.subr.mxu0 0.0
        %940 = vmatpush1.msra.mxu0 0.0
        %941 = vmatprep.subr.mxu0 0.0
        %942 = vmatpush1.msra.mxu0 0.0
        %943 = vmatprep.subr.mxu0 0.0
        %944 = vmatpush1.msra.mxu0 0.0
        %945 = vmatprep.subr.mxu0 0.0
        %946 = vmatpush1.msra.mxu0 0.0
        %947 = vmatprep.subr.mxu0 0.0
        %948 = vmatpush1.msra.mxu0 0.0
        %949 = vmatprep.subr.mxu0 0.0
        %950 = vmatpush1.msra.mxu0 0.0
        %951 = vmatprep.subr.mxu0 0.0
        %952 = vmatpush1.msra.mxu0 %v621
        %953 = vmatprep.subr.mxu0 0.0
        %954 = vmatpush2.msra.mxu0 0.0
        %955 = vmatprep.subr.mxu0 0.0
        %956 = vmatpush2.msra.mxu0 0.0
        %957 = vmatprep.subr.mxu0 0.0
        %958 = vmatpush2.msra.mxu0 0.0
        %959 = vmatprep.subr.mxu0 0.0
        %960 = vmatpush2.msra.mxu0 0.0
        %961 = vmatprep.subr.mxu0 0.0
        %962 = vmatpush2.msra.mxu0 0.0
        %963 = vmatprep.subr.mxu0 0.0
        %964 = vmatpush2.msra.mxu0 0.0
        %965 = vmatprep.subr.mxu0 0.0
        %966 = vmatpush2.msra.mxu0 0.0
        %967 = vmatprep.subr.mxu0 0.0
        %968 = vmatpush2.msra.mxu0 0.0
        %969 = vmatprep.subr.mxu0 0.0
        %970 = vmatpush2.msra.mxu0 0.0
        %971 = vmatprep.subr.mxu0 0.0
        %972 = vmatpush2.msra.mxu0 0.0
        %973 = vmatprep.subr.mxu0 0.0
        %974 = vmatpush2.msra.mxu0 0.0
        %975 = vmatprep.subr.mxu0 0.0
        %976 = vmatpush2.msra.mxu0 0.0
        %977 = vmatprep.subr.mxu0 0.0
        %978 = vmatpush2.msra.mxu0 0.0
        %979 = vmatprep.subr.mxu0 0.0
        %980 = vmatpush2.msra.mxu0 0.0
        %981 = vmatprep.subr.mxu0 0.0
        %982 = vmatpush2.msra.mxu0 0.0
        %983 = vmatprep.subr.mxu0 0.0
        %984 = vmatpush2.msra.mxu0 0.0
        %985 = vmatprep.mubr.f32.mxu0 0.0
        %986 = vmatmul.mubr.f32.gmra.mxu0 %v915
        %v987 = vpop.f32.mrf.mxu0
        %v988 = vadd.f32 %v897, %v987
        %v989 = vpop.f32.mrf.mxu0
        %990 = vmatprep.mubr.f32.mxu0 0.0
        %991 = vmatmul.mubr.f32.gmra.mxu0 %v917
        %v992 = vpop.f32.mrf.mxu0
        %v993 = vadd.f32 %v902, %v992
        %v994 = vpop.f32.mrf.mxu0
        %995 = vmatprep.mubr.f32.mxu0 0.0
        %996 = vmatmul.mubr.f32.gmra.mxu0 %v919
        %v997 = vpop.f32.mrf.mxu0
        %v998 = vadd.f32 %v907, %v997
        %v999 = vpop.f32.mrf.mxu0
        %1000 = vdwg.mxu0
        %v1001 = vrot.slane %v502, 4
        %v1002 = vrot.slane %v503, 4
        %v1003 = vsel %vm524, %v1001, %v1002
        %v1004 = vrot.slane %v504, 4
        %v1005 = vsel %vm524, %v1002, %v1004
        %v1006 = vsel %vm517, %v1003, 0
        %v1008 = vsel %vm517, %v1005, 0
        %v1010 = vsel %vm517, %v1004, 0
        %1012 = vmatprep.subr.mxu0 0.0
        %1013 = vmatpush1.msra.mxu0 0.0
        %1014 = vmatprep.subr.mxu0 0.0
        %1015 = vmatpush1.msra.mxu0 0.0
        %1016 = vmatprep.subr.mxu0 0.0
        %1017 = vmatpush1.msra.mxu0 0.0
        %1018 = vmatprep.subr.mxu0 0.0
        %1019 = vmatpush1.msra.mxu0 0.0
        %1020 = vmatprep.subr.mxu0 0.0
        %1021 = vmatpush1.msra.mxu0 0.0
        %1022 = vmatprep.subr.mxu0 0.0
        %1023 = vmatpush1.msra.mxu0 0.0
        %1024 = vmatprep.subr.mxu0 0.0
        %1025 = vmatpush1.msra.mxu0 0.0
        %1026 = vmatprep.subr.mxu0 0.0
        %1027 = vmatpush1.msra.mxu0 0.0
        %1028 = vmatprep.subr.mxu0 0.0
        %1029 = vmatpush1.msra.mxu0 0.0
        %1030 = vmatprep.subr.mxu0 0.0
        %1031 = vmatpush1.msra.mxu0 0.0
        %1032 = vmatprep.subr.mxu0 0.0
        %1033 = vmatpush1.msra.mxu0 0.0
        %1034 = vmatprep.subr.mxu0 0.0
        %1035 = vmatpush1.msra.mxu0 0.0
        %1036 = vmatprep.subr.mxu0 0.0
        %1037 = vmatpush1.msra.mxu0 0.0
        %1038 = vmatprep.subr.mxu0 0.0
        %1039 = vmatpush1.msra.mxu0 0.0
        %1040 = vmatprep.subr.mxu0 0.0
        %1041 = vmatpush1.msra.mxu0 0.0
        %1042 = vmatprep.subr.mxu0 0.0
        %1043 = vmatpush1.msra.mxu0 %v716
        %1044 = vmatprep.subr.mxu0 0.0
        %1045 = vmatpush2.msra.mxu0 0.0
        %1046 = vmatprep.subr.mxu0 0.0
        %1047 = vmatpush2.msra.mxu0 0.0
        %1048 = vmatprep.subr.mxu0 0.0
        %1049 = vmatpush2.msra.mxu0 0.0
        %1050 = vmatprep.subr.mxu0 0.0
        %1051 = vmatpush2.msra.mxu0 0.0
        %1052 = vmatprep.subr.mxu0 0.0
        %1053 = vmatpush2.msra.mxu0 0.0
        %1054 = vmatprep.subr.mxu0 0.0
        %1055 = vmatpush2.msra.mxu0 0.0
        %1056 = vmatprep.subr.mxu0 0.0
        %1057 = vmatpush2.msra.mxu0 0.0
        %1058 = vmatprep.subr.mxu0 0.0
        %1059 = vmatpush2.msra.mxu0 0.0
        %1060 = vmatprep.subr.mxu0 0.0
        %1061 = vmatpush2.msra.mxu0 0.0
        %1062 = vmatprep.subr.mxu0 0.0
        %1063 = vmatpush2.msra.mxu0 0.0
        %1064 = vmatprep.subr.mxu0 0.0
        %1065 = vmatpush2.msra.mxu0 0.0
        %1066 = vmatprep.subr.mxu0 0.0
        %1067 = vmatpush2.msra.mxu0 0.0
        %1068 = vmatprep.subr.mxu0 0.0
        %1069 = vmatpush2.msra.mxu0 0.0
        %1070 = vmatprep.subr.mxu0 0.0
        %1071 = vmatpush2.msra.mxu0 0.0
        %1072 = vmatprep.subr.mxu0 0.0
        %1073 = vmatpush2.msra.mxu0 0.0
        %1074 = vmatprep.subr.mxu0 0.0
        %1075 = vmatpush2.msra.mxu0 0.0
        %1076 = vmatprep.mubr.f32.mxu0 0.0
        %1077 = vmatmul.mubr.f32.gmra.mxu0 %v1006
        %v1078 = vpop.f32.mrf.mxu0
        %v1079 = vadd.f32 0.0, %v1078
        %v1080 = vpop.f32.mrf.mxu0
        %1081 = vmatprep.mubr.f32.mxu0 0.0
        %1082 = vmatmul.mubr.f32.gmra.mxu0 %v1008
        %v1083 = vpop.f32.mrf.mxu0
        %v1084 = vadd.f32 0.0, %v1083
        %v1085 = vpop.f32.mrf.mxu0
        %1086 = vmatprep.mubr.f32.mxu0 0.0
        %1087 = vmatmul.mubr.f32.gmra.mxu0 %v1010
        %v1088 = vpop.f32.mrf.mxu0
        %v1089 = vadd.f32 0.0, %v1088
        %v1090 = vpop.f32.mrf.mxu0
        %1091 = vdwg.mxu0
        %v1092 = vadd.f32 %v988, %v1079
        %v1093 = vadd.f32 %v993, %v1084
        %v1094 = vadd.f32 %v998, %v1089
        %v1095 = vsel %vm801, %v1092, -inf
        %v1096 = vsel %vm801, %v1093, -inf
        %v1097 = vsel %vm804, %v1094, -inf
        %v1098 = vmax.f32 %v1095, %v1096
        %v1099 = vmax.f32 %v1098, %v1097
        %v1100 = vrot.slane %v1099, 4
        %v1101 = vmax.f32 %v1099, %v1100
        %v1102 = vrot.slane %v1101, 2
        %v1103 = vmax.f32 %v1101, %v1102
        %v1104 = vrot.slane %v1103, 1
        %v1105 = vmax.f32 %v1103, %v1104
        %v1106 = vadd.f32 %v1105, %v505
        %v1107 = vmax.f32 %v1106, 0.0
        %v1109 = vrot.slane %v1107, 7
        %vm1111 = vcmask 1040384
        %v1112 = vsel %vm1111, %v815, %v1109
        %v1113 = vld [vmem:[%s2 + $0x1] sm:$0x1]
        %v1114 = vld [vmem:[%s1 + $0xc] sm:$0xf]
        %v1115 = vld [vmem:[%s1 + $0x10] sm:$0xf]
        %v1117 = vsel %vm524, %v1115, 0
        %1119 = vmatprep.subr.mxu0 0.0
        %1120 = vmatpush1.msra.mxu0 0.0
        %1121 = vmatprep.subr.mxu0 0.0
        %1122 = vmatpush1.msra.mxu0 0.0
        %1123 = vmatprep.subr.mxu0 0.0
        %1124 = vmatpush1.msra.mxu0 0.0
        %1125 = vmatprep.subr.mxu0 0.0
        %1126 = vmatpush1.msra.mxu0 0.0
        %1127 = vmatprep.subr.mxu0 0.0
        %1128 = vmatpush1.msra.mxu0 0.0
        %1129 = vmatprep.subr.mxu0 0.0
        %1130 = vmatpush1.msra.mxu0 0.0
        %1131 = vmatprep.subr.mxu0 0.0
        %1132 = vmatpush1.msra.mxu0 0.0
        %1133 = vmatprep.subr.mxu0 0.0
        %1134 = vmatpush1.msra.mxu0 0.0
        %1135 = vmatprep.subr.mxu0 0.0
        %1136 = vmatpush1.msra.mxu0 0.0
        %1137 = vmatprep.subr.mxu0 0.0
        %1138 = vmatpush1.msra.mxu0 0.0
        %1139 = vmatprep.subr.mxu0 0.0
        %1140 = vmatpush1.msra.mxu0 0.0
        %1141 = vmatprep.subr.mxu0 0.0
        %1142 = vmatpush1.msra.mxu0 0.0
        %1143 = vmatprep.subr.mxu0 0.0
        %1144 = vmatpush1.msra.mxu0 0.0
        %1145 = vmatprep.subr.mxu0 0.0
        %1146 = vmatpush1.msra.mxu0 0.0
        %1147 = vmatprep.subr.mxu0 0.0
        %1148 = vmatpush1.msra.mxu0 0.0
        %1149 = vmatprep.subr.mxu0 0.0
        %1150 = vmatpush1.msra.mxu0 %v1117
        %1151 = vmatprep.subr.mxu0 0.0
        %1152 = vmatpush2.msra.mxu0 0.0
        %1153 = vmatprep.subr.mxu0 0.0
        %1154 = vmatpush2.msra.mxu0 0.0
        %1155 = vmatprep.subr.mxu0 0.0
        %1156 = vmatpush2.msra.mxu0 0.0
        %1157 = vmatprep.subr.mxu0 0.0
        %1158 = vmatpush2.msra.mxu0 0.0
        %1159 = vmatprep.subr.mxu0 0.0
        %1160 = vmatpush2.msra.mxu0 0.0
        %1161 = vmatprep.subr.mxu0 0.0
        %1162 = vmatpush2.msra.mxu0 0.0
        %1163 = vmatprep.subr.mxu0 0.0
        %1164 = vmatpush2.msra.mxu0 0.0
        %1165 = vmatprep.subr.mxu0 0.0
        %1166 = vmatpush2.msra.mxu0 0.0
        %1167 = vmatprep.subr.mxu0 0.0
        %1168 = vmatpush2.msra.mxu0 0.0
        %1169 = vmatprep.subr.mxu0 0.0
        %1170 = vmatpush2.msra.mxu0 0.0
        %1171 = vmatprep.subr.mxu0 0.0
        %1172 = vmatpush2.msra.mxu0 0.0
        %1173 = vmatprep.subr.mxu0 0.0
        %1174 = vmatpush2.msra.mxu0 0.0
        %1175 = vmatprep.subr.mxu0 0.0
        %1176 = vmatpush2.msra.mxu0 0.0
        %1177 = vmatprep.subr.mxu0 0.0
        %1178 = vmatpush2.msra.mxu0 0.0
        %1179 = vmatprep.subr.mxu0 0.0
        %1180 = vmatpush2.msra.mxu0 0.0
        %1181 = vmatprep.subr.mxu0 0.0
        %1182 = vmatpush2.msra.mxu0 0.0
        %1183 = vmatprep.mubr.f32.mxu0 0.0
        %1184 = vmatmul.mubr.f32.gmra.mxu0 %v614
        %v1185 = vpop.f32.mrf.mxu0
        %v1186 = vadd.f32 0.0, %v1185
        %v1187 = vpop.f32.mrf.mxu0
        %1188 = vmatprep.mubr.f32.mxu0 0.0
        %1189 = vmatmul.mubr.f32.gmra.mxu0 %v616
        %v1190 = vpop.f32.mrf.mxu0
        %v1191 = vadd.f32 0.0, %v1190
        %v1192 = vpop.f32.mrf.mxu0
        %1193 = vmatprep.mubr.f32.mxu0 0.0
        %1194 = vmatmul.mubr.f32.gmra.mxu0 %v618
        %v1195 = vpop.f32.mrf.mxu0
        %v1196 = vadd.f32 0.0, %v1195
        %v1197 = vpop.f32.mrf.mxu0
        %1198 = vdwg.mxu0
        %vm1199 = vcmask 1046528
        %v1200 = vrot.slane %v498, 1
        %v1201 = vrot.slane %v499, 1
        %v1202 = vsel %vm1199, %v1200, %v1201
        %v1203 = vrot.slane %v500, 1
        %v1204 = vsel %vm1199, %v1201, %v1203
        %v1205 = vsel %vm517, %v1202, 0
        %v1207 = vsel %vm517, %v1204, 0
        %v1209 = vsel %vm517, %v1203, 0
        %v1212 = vsel %vm524, %v1114, 0
        %1214 = vmatprep.subr.mxu0 0.0
        %1215 = vmatpush1.msra.mxu0 0.0
        %1216 = vmatprep.subr.mxu0 0.0
        %1217 = vmatpush1.msra.mxu0 0.0
        %1218 = vmatprep.subr.mxu0 0.0
        %1219 = vmatpush1.msra.mxu0 0.0
        %1220 = vmatprep.subr.mxu0 0.0
        %1221 = vmatpush1.msra.mxu0 0.0
        %1222 = vmatprep.subr.mxu0 0.0
        %1223 = vmatpush1.msra.mxu0 0.0
        %1224 = vmatprep.subr.mxu0 0.0
        %1225 = vmatpush1.msra.mxu0 0.0
        %1226 = vmatprep.subr.mxu0 0.0
        %1227 = vmatpush1.msra.mxu0 0.0
        %1228 = vmatprep.subr.mxu0 0.0
        %1229 = vmatpush1.msra.mxu0 0.0
        %1230 = vmatprep.subr.mxu0 0.0
        %1231 = vmatpush1.msra.mxu0 0.0
        %1232 = vmatprep.subr.mxu0 0.0
        %1233 = vmatpush1.msra.mxu0 0.0
        %1234 = vmatprep.subr.mxu0 0.0
        %1235 = vmatpush1.msra.mxu0 0.0
        %1236 = vmatprep.subr.mxu0 0.0
        %1237 = vmatpush1.msra.mxu0 0.0
        %1238 = vmatprep.subr.mxu0 0.0
        %1239 = vmatpush1.msra.mxu0 0.0
        %1240 = vmatprep.subr.mxu0 0.0
        %1241 = vmatpush1.msra.mxu0 0.0
        %1242 = vmatprep.subr.mxu0 0.0
        %1243 = vmatpush1.msra.mxu0 0.0
        %1244 = vmatprep.subr.mxu0 0.0
        %1245 = vmatpush1.msra.mxu0 %v1212
        %1246 = vmatprep.subr.mxu0 0.0
        %1247 = vmatpush2.msra.mxu0 0.0
        %1248 = vmatprep.subr.mxu0 0.0
        %1249 = vmatpush2.msra.mxu0 0.0
        %1250 = vmatprep.subr.mxu0 0.0
        %1251 = vmatpush2.msra.mxu0 0.0
        %1252 = vmatprep.subr.mxu0 0.0
        %1253 = vmatpush2.msra.mxu0 0.0
        %1254 = vmatprep.subr.mxu0 0.0
        %1255 = vmatpush2.msra.mxu0 0.0
        %1256 = vmatprep.subr.mxu0 0.0
        %1257 = vmatpush2.msra.mxu0 0.0
        %1258 = vmatprep.subr.mxu0 0.0
        %1259 = vmatpush2.msra.mxu0 0.0
        %1260 = vmatprep.subr.mxu0 0.0
        %1261 = vmatpush2.msra.mxu0 0.0
        %1262 = vmatprep.subr.mxu0 0.0
        %1263 = vmatpush2.msra.mxu0 0.0
        %1264 = vmatprep.subr.mxu0 0.0
        %1265 = vmatpush2.msra.mxu0 0.0
        %1266 = vmatprep.subr.mxu0 0.0
        %1267 = vmatpush2.msra.mxu0 0.0
        %1268 = vmatprep.subr.mxu0 0.0
        %1269 = vmatpush2.msra.mxu0 0.0
        %1270 = vmatprep.subr.mxu0 0.0
        %1271 = vmatpush2.msra.mxu0 0.0
        %1272 = vmatprep.subr.mxu0 0.0
        %1273 = vmatpush2.msra.mxu0 0.0
        %1274 = vmatprep.subr.mxu0 0.0
        %1275 = vmatpush2.msra.mxu0 0.0
        %1276 = vmatprep.subr.mxu0 0.0
        %1277 = vmatpush2.msra.mxu0 0.0
        %1278 = vmatprep.mubr.f32.mxu0 0.0
        %1279 = vmatmul.mubr.f32.gmra.mxu0 %v1205
        %v1280 = vpop.f32.mrf.mxu0
        %v1281 = vadd.f32 %v1186, %v1280
        %v1282 = vpop.f32.mrf.mxu0
        %1283 = vmatprep.mubr.f32.mxu0 0.0
        %1284 = vmatmul.mubr.f32.gmra.mxu0 %v1207
        %v1285 = vpop.f32.mrf.mxu0
        %v1286 = vadd.f32 %v1191, %v1285
        %v1287 = vpop.f32.mrf.mxu0
        %1288 = vmatprep.mubr.f32.mxu0 0.0
        %1289 = vmatmul.mubr.f32.gmra.mxu0 %v1209
        %v1290 = vpop.f32.mrf.mxu0
        %v1291 = vadd.f32 %v1196, %v1290
        %v1292 = vpop.f32.mrf.mxu0
        %1293 = vdwg.mxu0
        %v1294 = vld [vmem:[%s1 + $0x14] sm:$0xf]
        %v1296 = vsel %vm524, %v1294, 0
        %1298 = vmatprep.subr.mxu0 0.0
        %1299 = vmatpush1.msra.mxu0 0.0
        %1300 = vmatprep.subr.mxu0 0.0
        %1301 = vmatpush1.msra.mxu0 0.0
        %1302 = vmatprep.subr.mxu0 0.0
        %1303 = vmatpush1.msra.mxu0 0.0
        %1304 = vmatprep.subr.mxu0 0.0
        %1305 = vmatpush1.msra.mxu0 0.0
        %1306 = vmatprep.subr.mxu0 0.0
        %1307 = vmatpush1.msra.mxu0 0.0
        %1308 = vmatprep.subr.mxu0 0.0
        %1309 = vmatpush1.msra.mxu0 0.0
        %1310 = vmatprep.subr.mxu0 0.0
        %1311 = vmatpush1.msra.mxu0 0.0
        %1312 = vmatprep.subr.mxu0 0.0
        %1313 = vmatpush1.msra.mxu0 0.0
        %1314 = vmatprep.subr.mxu0 0.0
        %1315 = vmatpush1.msra.mxu0 0.0
        %1316 = vmatprep.subr.mxu0 0.0
        %1317 = vmatpush1.msra.mxu0 0.0
        %1318 = vmatprep.subr.mxu0 0.0
        %1319 = vmatpush1.msra.mxu0 0.0
        %1320 = vmatprep.subr.mxu0 0.0
        %1321 = vmatpush1.msra.mxu0 0.0
        %1322 = vmatprep.subr.mxu0 0.0
        %1323 = vmatpush1.msra.mxu0 0.0
        %1324 = vmatprep.subr.mxu0 0.0
        %1325 = vmatpush1.msra.mxu0 0.0
        %1326 = vmatprep.subr.mxu0 0.0
        %1327 = vmatpush1.msra.mxu0 0.0
        %1328 = vmatprep.subr.mxu0 0.0
        %1329 = vmatpush1.msra.mxu0 %v1296
        %1330 = vmatprep.subr.mxu0 0.0
        %1331 = vmatpush2.msra.mxu0 0.0
        %1332 = vmatprep.subr.mxu0 0.0
        %1333 = vmatpush2.msra.mxu0 0.0
        %1334 = vmatprep.subr.mxu0 0.0
        %1335 = vmatpush2.msra.mxu0 0.0
        %1336 = vmatprep.subr.mxu0 0.0
        %1337 = vmatpush2.msra.mxu0 0.0
        %1338 = vmatprep.subr.mxu0 0.0
        %1339 = vmatpush2.msra.mxu0 0.0
        %1340 = vmatprep.subr.mxu0 0.0
        %1341 = vmatpush2.msra.mxu0 0.0
        %1342 = vmatprep.subr.mxu0 0.0
        %1343 = vmatpush2.msra.mxu0 0.0
        %1344 = vmatprep.subr.mxu0 0.0
        %1345 = vmatpush2.msra.mxu0 0.0
        %1346 = vmatprep.subr.mxu0 0.0
        %1347 = vmatpush2.msra.mxu0 0.0
        %1348 = vmatprep.subr.mxu0 0.0
        %1349 = vmatpush2.msra.mxu0 0.0
        %1350 = vmatprep.subr.mxu0 0.0
        %1351 = vmatpush2.msra.mxu0 0.0
        %1352 = vmatprep.subr.mxu0 0.0
        %1353 = vmatpush2.msra.mxu0 0.0
        %1354 = vmatprep.subr.mxu0 0.0
        %1355 = vmatpush2.msra.mxu0 0.0
        %1356 = vmatprep.subr.mxu0 0.0
        %1357 = vmatpush2.msra.mxu0 0.0
        %1358 = vmatprep.subr.mxu0 0.0
        %1359 = vmatpush2.msra.mxu0 0.0
        %1360 = vmatprep.subr.mxu0 0.0
        %1361 = vmatpush2.msra.mxu0 0.0
        %1362 = vmatprep.mubr.f32.mxu0 0.0
        %1363 = vmatmul.mubr.f32.gmra.mxu0 %v518
        %v1364 = vpop.f32.mrf.mxu0
        %v1365 = vadd.f32 0.0, %v1364
        %v1366 = vpop.f32.mrf.mxu0
        %1367 = vmatprep.mubr.f32.mxu0 0.0
        %1368 = vmatmul.mubr.f32.gmra.mxu0 %v520
        %v1369 = vpop.f32.mrf.mxu0
        %v1370 = vadd.f32 0.0, %v1369
        %v1371 = vpop.f32.mrf.mxu0
        %1372 = vmatprep.mubr.f32.mxu0 0.0
        %1373 = vmatmul.mubr.f32.gmra.mxu0 %v522
        %v1374 = vpop.f32.mrf.mxu0
        %v1375 = vadd.f32 0.0, %v1374
        %v1376 = vpop.f32.mrf.mxu0
        %1377 = vdwg.mxu0
        %v1378 = vadd.f32 %v1281, %v1365
        %v1379 = vadd.f32 %v1286, %v1370
        %v1380 = vadd.f32 %v1291, %v1375
        %v1381 = vld [vmem:[%s1 + $0x18] sm:$0xf]
        %v1383 = vsel %vm524, %v1381, 0
        %1385 = vmatprep.subr.mxu0 0.0
        %1386 = vmatpush1.msra.mxu0 0.0
        %1387 = vmatprep.subr.mxu0 0.0
        %1388 = vmatpush1.msra.mxu0 0.0
        %1389 = vmatprep.subr.mxu0 0.0
        %1390 = vmatpush1.msra.mxu0 0.0
        %1391 = vmatprep.subr.mxu0 0.0
        %1392 = vmatpush1.msra.mxu0 0.0
        %1393 = vmatprep.subr.mxu0 0.0
        %1394 = vmatpush1.msra.mxu0 0.0
        %1395 = vmatprep.subr.mxu0 0.0
        %1396 = vmatpush1.msra.mxu0 0.0
        %1397 = vmatprep.subr.mxu0 0.0
        %1398 = vmatpush1.msra.mxu0 0.0
        %1399 = vmatprep.subr.mxu0 0.0
        %1400 = vmatpush1.msra.mxu0 0.0
        %1401 = vmatprep.subr.mxu0 0.0
        %1402 = vmatpush1.msra.mxu0 0.0
        %1403 = vmatprep.subr.mxu0 0.0
        %1404 = vmatpush1.msra.mxu0 0.0
        %1405 = vmatprep.subr.mxu0 0.0
        %1406 = vmatpush1.msra.mxu0 0.0
        %1407 = vmatprep.subr.mxu0 0.0
        %1408 = vmatpush1.msra.mxu0 0.0
        %1409 = vmatprep.subr.mxu0 0.0
        %1410 = vmatpush1.msra.mxu0 0.0
        %1411 = vmatprep.subr.mxu0 0.0
        %1412 = vmatpush1.msra.mxu0 0.0
        %1413 = vmatprep.subr.mxu0 0.0
        %1414 = vmatpush1.msra.mxu0 0.0
        %1415 = vmatprep.subr.mxu0 0.0
        %1416 = vmatpush1.msra.mxu0 %v1383
        %1417 = vmatprep.subr.mxu0 0.0
        %1418 = vmatpush2.msra.mxu0 0.0
        %1419 = vmatprep.subr.mxu0 0.0
        %1420 = vmatpush2.msra.mxu0 0.0
        %1421 = vmatprep.subr.mxu0 0.0
        %1422 = vmatpush2.msra.mxu0 0.0
        %1423 = vmatprep.subr.mxu0 0.0
        %1424 = vmatpush2.msra.mxu0 0.0
        %1425 = vmatprep.subr.mxu0 0.0
        %1426 = vmatpush2.msra.mxu0 0.0
        %1427 = vmatprep.subr.mxu0 0.0
        %1428 = vmatpush2.msra.mxu0 0.0
        %1429 = vmatprep.subr.mxu0 0.0
        %1430 = vmatpush2.msra.mxu0 0.0
        %1431 = vmatprep.subr.mxu0 0.0
        %1432 = vmatpush2.msra.mxu0 0.0
        %1433 = vmatprep.subr.mxu0 0.0
        %1434 = vmatpush2.msra.mxu0 0.0
        %1435 = vmatprep.subr.mxu0 0.0
        %1436 = vmatpush2.msra.mxu0 0.0
        %1437 = vmatprep.subr.mxu0 0.0
        %1438 = vmatpush2.msra.mxu0 0.0
        %1439 = vmatprep.subr.mxu0 0.0
        %1440 = vmatpush2.msra.mxu0 0.0
        %1441 = vmatprep.subr.mxu0 0.0
        %1442 = vmatpush2.msra.mxu0 0.0
        %1443 = vmatprep.subr.mxu0 0.0
        %1444 = vmatpush2.msra.mxu0 0.0
        %1445 = vmatprep.subr.mxu0 0.0
        %1446 = vmatpush2.msra.mxu0 0.0
        %1447 = vmatprep.subr.mxu0 0.0
        %1448 = vmatpush2.msra.mxu0 0.0
        %1449 = vmatprep.mubr.f32.mxu0 0.0
        %1450 = vmatmul.mubr.f32.gmra.mxu0 %v709
        %v1451 = vpop.f32.mrf.mxu0
        %v1452 = vadd.f32 0.0, %v1451
        %v1453 = vpop.f32.mrf.mxu0
        %1454 = vmatprep.mubr.f32.mxu0 0.0
        %1455 = vmatmul.mubr.f32.gmra.mxu0 %v711
        %v1456 = vpop.f32.mrf.mxu0
        %v1457 = vadd.f32 0.0, %v1456
        %v1458 = vpop.f32.mrf.mxu0
        %1459 = vmatprep.mubr.f32.mxu0 0.0
        %1460 = vmatmul.mubr.f32.gmra.mxu0 %v713
        %v1461 = vpop.f32.mrf.mxu0
        %v1462 = vadd.f32 0.0, %v1461
        %v1463 = vpop.f32.mrf.mxu0
        %1464 = vdwg.mxu0
        %v1465 = vadd.f32 %v1378, %v1452
        %v1466 = vadd.f32 %v1379, %v1457
        %v1467 = vadd.f32 %v1380, %v1462
        %v1468 = vsel %vm801, %v1465, -inf
        %v1469 = vsel %vm801, %v1466, -inf
        %vm1470 = vcmask 59392
        %v1471 = vsel %vm1470, %v1467, -inf
        %v1472 = vmax.f32 %v1468, %v1469
        %v1473 = vmax.f32 %v1472, %v1471
        %v1474 = vrot.slane %v1473, 4
        %v1475 = vmax.f32 %v1473, %v1474
        %v1476 = vrot.slane %v1475, 2
        %v1477 = vmax.f32 %v1475, %v1476
        %v1478 = vrot.slane %v1477, 1
        %v1479 = vmax.f32 %v1477, %v1478
        %v1480 = vadd.f32 %v1479, %v1113
        %v1481 = vmax.f32 %v1480, 0.0
        %1482 = vmatprep.subr.mxu0 0.0
        %1483 = vmatpush1.msra.mxu0 0.0
        %1484 = vmatprep.subr.mxu0 0.0
        %1485 = vmatpush1.msra.mxu0 0.0
        %1486 = vmatprep.subr.mxu0 0.0
        %1487 = vmatpush1.msra.mxu0 0.0
        %1488 = vmatprep.subr.mxu0 0.0
        %1489 = vmatpush1.msra.mxu0 0.0
        %1490 = vmatprep.subr.mxu0 0.0
        %1491 = vmatpush1.msra.mxu0 0.0
        %1492 = vmatprep.subr.mxu0 0.0
        %1493 = vmatpush1.msra.mxu0 0.0
        %1494 = vmatprep.subr.mxu0 0.0
        %1495 = vmatpush1.msra.mxu0 0.0
        %1496 = vmatprep.subr.mxu0 0.0
        %1497 = vmatpush1.msra.mxu0 0.0
        %1498 = vmatprep.subr.mxu0 0.0
        %1499 = vmatpush1.msra.mxu0 0.0
        %1500 = vmatprep.subr.mxu0 0.0
        %1501 = vmatpush1.msra.mxu0 0.0
        %1502 = vmatprep.subr.mxu0 0.0
        %1503 = vmatpush1.msra.mxu0 0.0
        %1504 = vmatprep.subr.mxu0 0.0
        %1505 = vmatpush1.msra.mxu0 0.0
        %1506 = vmatprep.subr.mxu0 0.0
        %1507 = vmatpush1.msra.mxu0 0.0
        %1508 = vmatprep.subr.mxu0 0.0
        %1509 = vmatpush1.msra.mxu0 0.0
        %1510 = vmatprep.subr.mxu0 0.0
        %1511 = vmatpush1.msra.mxu0 0.0
        %1512 = vmatprep.subr.mxu0 0.0
        %1513 = vmatpush1.msra.mxu0 %v1117
        %1514 = vmatprep.subr.mxu0 0.0
        %1515 = vmatpush2.msra.mxu0 0.0
        %1516 = vmatprep.subr.mxu0 0.0
        %1517 = vmatpush2.msra.mxu0 0.0
        %1518 = vmatprep.subr.mxu0 0.0
        %1519 = vmatpush2.msra.mxu0 0.0
        %1520 = vmatprep.subr.mxu0 0.0
        %1521 = vmatpush2.msra.mxu0 0.0
        %1522 = vmatprep.subr.mxu0 0.0
        %1523 = vmatpush2.msra.mxu0 0.0
        %1524 = vmatprep.subr.mxu0 0.0
        %1525 = vmatpush2.msra.mxu0 0.0
        %1526 = vmatprep.subr.mxu0 0.0
        %1527 = vmatpush2.msra.mxu0 0.0
        %1528 = vmatprep.subr.mxu0 0.0
        %1529 = vmatpush2.msra.mxu0 0.0
        %1530 = vmatprep.subr.mxu0 0.0
        %1531 = vmatpush2.msra.mxu0 0.0
        %1532 = vmatprep.subr.mxu0 0.0
        %1533 = vmatpush2.msra.mxu0 0.0
        %1534 = vmatprep.subr.mxu0 0.0
        %1535 = vmatpush2.msra.mxu0 0.0
        %1536 = vmatprep.subr.mxu0 0.0
        %1537 = vmatpush2.msra.mxu0 0.0
        %1538 = vmatprep.subr.mxu0 0.0
        %1539 = vmatpush2.msra.mxu0 0.0
        %1540 = vmatprep.subr.mxu0 0.0
        %1541 = vmatpush2.msra.mxu0 0.0
        %1542 = vmatprep.subr.mxu0 0.0
        %1543 = vmatpush2.msra.mxu0 0.0
        %1544 = vmatprep.subr.mxu0 0.0
        %1545 = vmatpush2.msra.mxu0 0.0
        %1546 = vmatprep.mubr.f32.mxu0 0.0
        %1547 = vmatmul.mubr.f32.gmra.mxu0 %v915
        %v1548 = vpop.f32.mrf.mxu0
        %v1549 = vadd.f32 0.0, %v1548
        %v1550 = vpop.f32.mrf.mxu0
        %1551 = vmatprep.mubr.f32.mxu0 0.0
        %1552 = vmatmul.mubr.f32.gmra.mxu0 %v917
        %v1553 = vpop.f32.mrf.mxu0
        %v1554 = vadd.f32 0.0, %v1553
        %v1555 = vpop.f32.mrf.mxu0
        %1556 = vmatprep.mubr.f32.mxu0 0.0
        %1557 = vmatmul.mubr.f32.gmra.mxu0 %v919
        %v1558 = vpop.f32.mrf.mxu0
        %v1559 = vadd.f32 0.0, %v1558
        %v1560 = vpop.f32.mrf.mxu0
        %1561 = vdwg.mxu0
        %v1562 = vrot.slane %v502, 1
        %v1563 = vrot.slane %v503, 1
        %v1564 = vsel %vm1199, %v1562, %v1563
        %v1565 = vrot.slane %v504, 1
        %v1566 = vsel %vm1199, %v1563, %v1565
        %v1567 = vsel %vm517, %v1564, 0
        %v1569 = vsel %vm517, %v1566, 0
        %v1571 = vsel %vm517, %v1565, 0
        %1573 = vmatprep.subr.mxu0 0.0
        %1574 = vmatpush1.msra.mxu0 0.0
        %1575 = vmatprep.subr.mxu0 0.0
        %1576 = vmatpush1.msra.mxu0 0.0
        %1577 = vmatprep.subr.mxu0 0.0
        %1578 = vmatpush1.msra.mxu0 0.0
        %1579 = vmatprep.subr.mxu0 0.0
        %1580 = vmatpush1.msra.mxu0 0.0
        %1581 = vmatprep.subr.mxu0 0.0
        %1582 = vmatpush1.msra.mxu0 0.0
        %1583 = vmatprep.subr.mxu0 0.0
        %1584 = vmatpush1.msra.mxu0 0.0
        %1585 = vmatprep.subr.mxu0 0.0
        %1586 = vmatpush1.msra.mxu0 0.0
        %1587 = vmatprep.subr.mxu0 0.0
        %1588 = vmatpush1.msra.mxu0 0.0
        %1589 = vmatprep.subr.mxu0 0.0
        %1590 = vmatpush1.msra.mxu0 0.0
        %1591 = vmatprep.subr.mxu0 0.0
        %1592 = vmatpush1.msra.mxu0 0.0
        %1593 = vmatprep.subr.mxu0 0.0
        %1594 = vmatpush1.msra.mxu0 0.0
        %1595 = vmatprep.subr.mxu0 0.0
        %1596 = vmatpush1.msra.mxu0 0.0
        %1597 = vmatprep.subr.mxu0 0.0
        %1598 = vmatpush1.msra.mxu0 0.0
        %1599 = vmatprep.subr.mxu0 0.0
        %1600 = vmatpush1.msra.mxu0 0.0
        %1601 = vmatprep.subr.mxu0 0.0
        %1602 = vmatpush1.msra.mxu0 0.0
        %1603 = vmatprep.subr.mxu0 0.0
        %1604 = vmatpush1.msra.mxu0 %v1212
        %1605 = vmatprep.subr.mxu0 0.0
        %1606 = vmatpush2.msra.mxu0 0.0
        %1607 = vmatprep.subr.mxu0 0.0
        %1608 = vmatpush2.msra.mxu0 0.0
        %1609 = vmatprep.subr.mxu0 0.0
        %1610 = vmatpush2.msra.mxu0 0.0
        %1611 = vmatprep.subr.mxu0 0.0
        %1612 = vmatpush2.msra.mxu0 0.0
        %1613 = vmatprep.subr.mxu0 0.0
        %1614 = vmatpush2.msra.mxu0 0.0
        %1615 = vmatprep.subr.mxu0 0.0
        %1616 = vmatpush2.msra.mxu0 0.0
        %1617 = vmatprep.subr.mxu0 0.0
        %1618 = vmatpush2.msra.mxu0 0.0
        %1619 = vmatprep.subr.mxu0 0.0
        %1620 = vmatpush2.msra.mxu0 0.0
        %1621 = vmatprep.subr.mxu0 0.0
        %1622 = vmatpush2.msra.mxu0 0.0
        %1623 = vmatprep.subr.mxu0 0.0
        %1624 = vmatpush2.msra.mxu0 0.0
        %1625 = vmatprep.subr.mxu0 0.0
        %1626 = vmatpush2.msra.mxu0 0.0
        %1627 = vmatprep.subr.mxu0 0.0
        %1628 = vmatpush2.msra.mxu0 0.0
        %1629 = vmatprep.subr.mxu0 0.0
        %1630 = vmatpush2.msra.mxu0 0.0
        %1631 = vmatprep.subr.mxu0 0.0
        %1632 = vmatpush2.msra.mxu0 0.0
        %1633 = vmatprep.subr.mxu0 0.0
        %1634 = vmatpush2.msra.mxu0 0.0
        %1635 = vmatprep.subr.mxu0 0.0
        %1636 = vmatpush2.msra.mxu0 0.0
        %1637 = vmatprep.mubr.f32.mxu0 0.0
        %1638 = vmatmul.mubr.f32.gmra.mxu0 %v1567
        %v1639 = vpop.f32.mrf.mxu0
        %v1640 = vadd.f32 %v1549, %v1639
        %v1641 = vpop.f32.mrf.mxu0
        %1642 = vmatprep.mubr.f32.mxu0 0.0
        %1643 = vmatmul.mubr.f32.gmra.mxu0 %v1569
        %v1644 = vpop.f32.mrf.mxu0
        %v1645 = vadd.f32 %v1554, %v1644
        %v1646 = vpop.f32.mrf.mxu0
        %1647 = vmatprep.mubr.f32.mxu0 0.0
        %1648 = vmatmul.mubr.f32.gmra.mxu0 %v1571
        %v1649 = vpop.f32.mrf.mxu0
        %v1650 = vadd.f32 %v1559, %v1649
        %v1651 = vpop.f32.mrf.mxu0
        %1652 = vdwg.mxu0
        %1653 = vmatprep.subr.mxu0 0.0
        %1654 = vmatpush1.msra.mxu0 0.0
        %1655 = vmatprep.subr.mxu0 0.0
        %1656 = vmatpush1.msra.mxu0 0.0
        %1657 = vmatprep.subr.mxu0 0.0
        %1658 = vmatpush1.msra.mxu0 0.0
        %1659 = vmatprep.subr.mxu0 0.0
        %1660 = vmatpush1.msra.mxu0 0.0
        %1661 = vmatprep.subr.mxu0 0.0
        %1662 = vmatpush1.msra.mxu0 0.0
        %1663 = vmatprep.subr.mxu0 0.0
        %1664 = vmatpush1.msra.mxu0 0.0
        %1665 = vmatprep.subr.mxu0 0.0
        %1666 = vmatpush1.msra.mxu0 0.0
        %1667 = vmatprep.subr.mxu0 0.0
        %1668 = vmatpush1.msra.mxu0 0.0
        %1669 = vmatprep.subr.mxu0 0.0
        %1670 = vmatpush1.msra.mxu0 0.0
        %1671 = vmatprep.subr.mxu0 0.0
        %1672 = vmatpush1.msra.mxu0 0.0
        %1673 = vmatprep.subr.mxu0 0.0
        %1674 = vmatpush1.msra.mxu0 0.0
        %1675 = vmatprep.subr.mxu0 0.0
        %1676 = vmatpush1.msra.mxu0 0.0
        %1677 = vmatprep.subr.mxu0 0.0
        %1678 = vmatpush1.msra.mxu0 0.0
        %1679 = vmatprep.subr.mxu0 0.0
        %1680 = vmatpush1.msra.mxu0 0.0
        %1681 = vmatprep.subr.mxu0 0.0
        %1682 = vmatpush1.msra.mxu0 0.0
        %1683 = vmatprep.subr.mxu0 0.0
        %1684 = vmatpush1.msra.mxu0 %v1296
        %1685 = vmatprep.subr.mxu0 0.0
        %1686 = vmatpush2.msra.mxu0 0.0
        %1687 = vmatprep.subr.mxu0 0.0
        %1688 = vmatpush2.msra.mxu0 0.0
        %1689 = vmatprep.subr.mxu0 0.0
        %1690 = vmatpush2.msra.mxu0 0.0
        %1691 = vmatprep.subr.mxu0 0.0
        %1692 = vmatpush2.msra.mxu0 0.0
        %1693 = vmatprep.subr.mxu0 0.0
        %1694 = vmatpush2.msra.mxu0 0.0
        %1695 = vmatprep.subr.mxu0 0.0
        %1696 = vmatpush2.msra.mxu0 0.0
        %1697 = vmatprep.subr.mxu0 0.0
        %1698 = vmatpush2.msra.mxu0 0.0
        %1699 = vmatprep.subr.mxu0 0.0
        %1700 = vmatpush2.msra.mxu0 0.0
        %1701 = vmatprep.subr.mxu0 0.0
        %1702 = vmatpush2.msra.mxu0 0.0
        %1703 = vmatprep.subr.mxu0 0.0
        %1704 = vmatpush2.msra.mxu0 0.0
        %1705 = vmatprep.subr.mxu0 0.0
        %1706 = vmatpush2.msra.mxu0 0.0
        %1707 = vmatprep.subr.mxu0 0.0
        %1708 = vmatpush2.msra.mxu0 0.0
        %1709 = vmatprep.subr.mxu0 0.0
        %1710 = vmatpush2.msra.mxu0 0.0
        %1711 = vmatprep.subr.mxu0 0.0
        %1712 = vmatpush2.msra.mxu0 0.0
        %1713 = vmatprep.subr.mxu0 0.0
        %1714 = vmatpush2.msra.mxu0 0.0
        %1715 = vmatprep.subr.mxu0 0.0
        %1716 = vmatpush2.msra.mxu0 0.0
        %1717 = vmatprep.mubr.f32.mxu0 0.0
        %1718 = vmatmul.mubr.f32.gmra.mxu0 %v824
        %v1719 = vpop.f32.mrf.mxu0
        %v1720 = vadd.f32 0.0, %v1719
        %v1721 = vpop.f32.mrf.mxu0
        %1722 = vmatprep.mubr.f32.mxu0 0.0
        %1723 = vmatmul.mubr.f32.gmra.mxu0 %v826
        %v1724 = vpop.f32.mrf.mxu0
        %v1725 = vadd.f32 0.0, %v1724
        %v1726 = vpop.f32.mrf.mxu0
        %1727 = vmatprep.mubr.f32.mxu0 0.0
        %1728 = vmatmul.mubr.f32.gmra.mxu0 %v828
        %v1729 = vpop.f32.mrf.mxu0
        %v1730 = vadd.f32 0.0, %v1729
        %v1731 = vpop.f32.mrf.mxu0
        %1732 = vdwg.mxu0
        %v1733 = vadd.f32 %v1640, %v1720
        %v1734 = vadd.f32 %v1645, %v1725
        %v1735 = vadd.f32 %v1650, %v1730
        %1736 = vmatprep.subr.mxu0 0.0
        %1737 = vmatpush1.msra.mxu0 0.0
        %1738 = vmatprep.subr.mxu0 0.0
        %1739 = vmatpush1.msra.mxu0 0.0
        %1740 = vmatprep.subr.mxu0 0.0
        %1741 = vmatpush1.msra.mxu0 0.0
        %1742 = vmatprep.subr.mxu0 0.0
        %1743 = vmatpush1.msra.mxu0 0.0
        %1744 = vmatprep.subr.mxu0 0.0
        %1745 = vmatpush1.msra.mxu0 0.0
        %1746 = vmatprep.subr.mxu0 0.0
        %1747 = vmatpush1.msra.mxu0 0.0
        %1748 = vmatprep.subr.mxu0 0.0
        %1749 = vmatpush1.msra.mxu0 0.0
        %1750 = vmatprep.subr.mxu0 0.0
        %1751 = vmatpush1.msra.mxu0 0.0
        %1752 = vmatprep.subr.mxu0 0.0
        %1753 = vmatpush1.msra.mxu0 0.0
        %1754 = vmatprep.subr.mxu0 0.0
        %1755 = vmatpush1.msra.mxu0 0.0
        %1756 = vmatprep.subr.mxu0 0.0
        %1757 = vmatpush1.msra.mxu0 0.0
        %1758 = vmatprep.subr.mxu0 0.0
        %1759 = vmatpush1.msra.mxu0 0.0
        %1760 = vmatprep.subr.mxu0 0.0
        %1761 = vmatpush1.msra.mxu0 0.0
        %1762 = vmatprep.subr.mxu0 0.0
        %1763 = vmatpush1.msra.mxu0 0.0
        %1764 = vmatprep.subr.mxu0 0.0
        %1765 = vmatpush1.msra.mxu0 0.0
        %1766 = vmatprep.subr.mxu0 0.0
        %1767 = vmatpush1.msra.mxu0 %v1383
        %1768 = vmatprep.subr.mxu0 0.0
        %1769 = vmatpush2.msra.mxu0 0.0
        %1770 = vmatprep.subr.mxu0 0.0
        %1771 = vmatpush2.msra.mxu0 0.0
        %1772 = vmatprep.subr.mxu0 0.0
        %1773 = vmatpush2.msra.mxu0 0.0
        %1774 = vmatprep.subr.mxu0 0.0
        %1775 = vmatpush2.msra.mxu0 0.0
        %1776 = vmatprep.subr.mxu0 0.0
        %1777 = vmatpush2.msra.mxu0 0.0
        %1778 = vmatprep.subr.mxu0 0.0
        %1779 = vmatpush2.msra.mxu0 0.0
        %1780 = vmatprep.subr.mxu0 0.0
        %1781 = vmatpush2.msra.mxu0 0.0
        %1782 = vmatprep.subr.mxu0 0.0
        %1783 = vmatpush2.msra.mxu0 0.0
        %1784 = vmatprep.subr.mxu0 0.0
        %1785 = vmatpush2.msra.mxu0 0.0
        %1786 = vmatprep.subr.mxu0 0.0
        %1787 = vmatpush2.msra.mxu0 0.0
        %1788 = vmatprep.subr.mxu0 0.0
        %1789 = vmatpush2.msra.mxu0 0.0
        %1790 = vmatprep.subr.mxu0 0.0
        %1791 = vmatpush2.msra.mxu0 0.0
        %1792 = vmatprep.subr.mxu0 0.0
        %1793 = vmatpush2.msra.mxu0 0.0
        %1794 = vmatprep.subr.mxu0 0.0
        %1795 = vmatpush2.msra.mxu0 0.0
        %1796 = vmatprep.subr.mxu0 0.0
        %1797 = vmatpush2.msra.mxu0 0.0
        %1798 = vmatprep.subr.mxu0 0.0
        %1799 = vmatpush2.msra.mxu0 0.0
        %1800 = vmatprep.mubr.f32.mxu0 0.0
        %1801 = vmatmul.mubr.f32.gmra.mxu0 %v1006
        %v1802 = vpop.f32.mrf.mxu0
        %v1803 = vadd.f32 0.0, %v1802
        %v1804 = vpop.f32.mrf.mxu0
        %1805 = vmatprep.mubr.f32.mxu0 0.0
        %1806 = vmatmul.mubr.f32.gmra.mxu0 %v1008
        %v1807 = vpop.f32.mrf.mxu0
        %v1808 = vadd.f32 0.0, %v1807
        %v1809 = vpop.f32.mrf.mxu0
        %1810 = vmatprep.mubr.f32.mxu0 0.0
        %1811 = vmatmul.mubr.f32.gmra.mxu0 %v1010
        %v1812 = vpop.f32.mrf.mxu0
        %v1813 = vadd.f32 0.0, %v1812
        %v1814 = vpop.f32.mrf.mxu0
        %1815 = vdwg.mxu0
        %v1816 = vadd.f32 %v1733, %v1803
        %v1817 = vadd.f32 %v1734, %v1808
        %v1818 = vadd.f32 %v1735, %v1813
        %v1819 = vsel %vm801, %v1816, -inf
        %v1820 = vsel %vm801, %v1817, -inf
        %v1821 = vsel %vm1470, %v1818, -inf
        %v1822 = vmax.f32 %v1819, %v1820
        %v1823 = vmax.f32 %v1822, %v1821
        %v1824 = vrot.slane %v1823, 4
        %v1825 = vmax.f32 %v1823, %v1824
        %v1826 = vrot.slane %v1825, 2
        %v1827 = vmax.f32 %v1825, %v1826
        %v1828 = vrot.slane %v1827, 1
        %v1829 = vmax.f32 %v1827, %v1828
        %v1830 = vadd.f32 %v1829, %v1113
        %v1831 = vmax.f32 %v1830, 0.0
        %v1833 = vrot.slane %v1831, 7
        %v1835 = vsel %vm1111, %v1481, %v1833
        %v1836 = vld [vmem:[%s2 + $0x2] sm:$0x1]
        %v1837 = vld [vmem:[%s1 + $0x1c] sm:$0xf]
        %v1838 = vld [vmem:[%s1 + $0x20] sm:$0xf]
        %v1840 = vsel %vm524, %v1838, 0
        %1842 = vmatprep.subr.mxu0 0.0
        %1843 = vmatpush1.msra.mxu0 0.0
        %1844 = vmatprep.subr.mxu0 0.0
        %1845 = vmatpush1.msra.mxu0 0.0
        %1846 = vmatprep.subr.mxu0 0.0
        %1847 = vmatpush1.msra.mxu0 0.0
        %1848 = vmatprep.subr.mxu0 0.0
        %1849 = vmatpush1.msra.mxu0 0.0
        %1850 = vmatprep.subr.mxu0 0.0
        %1851 = vmatpush1.msra.mxu0 0.0
        %1852 = vmatprep.subr.mxu0 0.0
        %1853 = vmatpush1.msra.mxu0 0.0
        %1854 = vmatprep.subr.mxu0 0.0
        %1855 = vmatpush1.msra.mxu0 0.0
        %1856 = vmatprep.subr.mxu0 0.0
        %1857 = vmatpush1.msra.mxu0 0.0
        %1858 = vmatprep.subr.mxu0 0.0
        %1859 = vmatpush1.msra.mxu0 0.0
        %1860 = vmatprep.subr.mxu0 0.0
        %1861 = vmatpush1.msra.mxu0 0.0
        %1862 = vmatprep.subr.mxu0 0.0
        %1863 = vmatpush1.msra.mxu0 0.0
        %1864 = vmatprep.subr.mxu0 0.0
        %1865 = vmatpush1.msra.mxu0 0.0
        %1866 = vmatprep.subr.mxu0 0.0
        %1867 = vmatpush1.msra.mxu0 0.0
        %1868 = vmatprep.subr.mxu0 0.0
        %1869 = vmatpush1.msra.mxu0 0.0
        %1870 = vmatprep.subr.mxu0 0.0
        %1871 = vmatpush1.msra.mxu0 0.0
        %1872 = vmatprep.subr.mxu0 0.0
        %1873 = vmatpush1.msra.mxu0 %v1840
        %1874 = vmatprep.subr.mxu0 0.0
        %1875 = vmatpush2.msra.mxu0 0.0
        %1876 = vmatprep.subr.mxu0 0.0
        %1877 = vmatpush2.msra.mxu0 0.0
        %1878 = vmatprep.subr.mxu0 0.0
        %1879 = vmatpush2.msra.mxu0 0.0
        %1880 = vmatprep.subr.mxu0 0.0
        %1881 = vmatpush2.msra.mxu0 0.0
        %1882 = vmatprep.subr.mxu0 0.0
        %1883 = vmatpush2.msra.mxu0 0.0
        %1884 = vmatprep.subr.mxu0 0.0
        %1885 = vmatpush2.msra.mxu0 0.0
        %1886 = vmatprep.subr.mxu0 0.0
        %1887 = vmatpush2.msra.mxu0 0.0
        %1888 = vmatprep.subr.mxu0 0.0
        %1889 = vmatpush2.msra.mxu0 0.0
        %1890 = vmatprep.subr.mxu0 0.0
        %1891 = vmatpush2.msra.mxu0 0.0
        %1892 = vmatprep.subr.mxu0 0.0
        %1893 = vmatpush2.msra.mxu0 0.0
        %1894 = vmatprep.subr.mxu0 0.0
        %1895 = vmatpush2.msra.mxu0 0.0
        %1896 = vmatprep.subr.mxu0 0.0
        %1897 = vmatpush2.msra.mxu0 0.0
        %1898 = vmatprep.subr.mxu0 0.0
        %1899 = vmatpush2.msra.mxu0 0.0
        %1900 = vmatprep.subr.mxu0 0.0
        %1901 = vmatpush2.msra.mxu0 0.0
        %1902 = vmatprep.subr.mxu0 0.0
        %1903 = vmatpush2.msra.mxu0 0.0
        %1904 = vmatprep.subr.mxu0 0.0
        %1905 = vmatpush2.msra.mxu0 0.0
        %1906 = vmatprep.mubr.f32.mxu0 0.0
        %1907 = vmatmul.mubr.f32.gmra.mxu0 %v1205
        %v1908 = vpop.f32.mrf.mxu0
        %v1909 = vadd.f32 0.0, %v1908
        %v1910 = vpop.f32.mrf.mxu0
        %1911 = vmatprep.mubr.f32.mxu0 0.0
        %1912 = vmatmul.mubr.f32.gmra.mxu0 %v1207
        %v1913 = vpop.f32.mrf.mxu0
        %v1914 = vadd.f32 0.0, %v1913
        %v1915 = vpop.f32.mrf.mxu0
        %1916 = vmatprep.mubr.f32.mxu0 0.0
        %1917 = vmatmul.mubr.f32.gmra.mxu0 %v1209
        %v1918 = vpop.f32.mrf.mxu0
        %v1919 = vadd.f32 0.0, %v1918
        %v1920 = vpop.f32.mrf.mxu0
        %1921 = vdwg.mxu0
        %v1922 = vsel %vm517, %v498, 0
        %v1924 = vsel %vm517, %v499, 0
        %v1926 = vsel %vm517, %v500, 0
        %v1929 = vsel %vm524, %v1837, 0
        %1931 = vmatprep.subr.mxu0 0.0
        %1932 = vmatpush1.msra.mxu0 0.0
        %1933 = vmatprep.subr.mxu0 0.0
        %1934 = vmatpush1.msra.mxu0 0.0
        %1935 = vmatprep.subr.mxu0 0.0
        %1936 = vmatpush1.msra.mxu0 0.0
        %1937 = vmatprep.subr.mxu0 0.0
        %1938 = vmatpush1.msra.mxu0 0.0
        %1939 = vmatprep.subr.mxu0 0.0
        %1940 = vmatpush1.msra.mxu0 0.0
        %1941 = vmatprep.subr.mxu0 0.0
        %1942 = vmatpush1.msra.mxu0 0.0
        %1943 = vmatprep.subr.mxu0 0.0
        %1944 = vmatpush1.msra.mxu0 0.0
        %1945 = vmatprep.subr.mxu0 0.0
        %1946 = vmatpush1.msra.mxu0 0.0
        %1947 = vmatprep.subr.mxu0 0.0
        %1948 = vmatpush1.msra.mxu0 0.0
        %1949 = vmatprep.subr.mxu0 0.0
        %1950 = vmatpush1.msra.mxu0 0.0
        %1951 = vmatprep.subr.mxu0 0.0
        %1952 = vmatpush1.msra.mxu0 0.0
        %1953 = vmatprep.subr.mxu0 0.0
        %1954 = vmatpush1.msra.mxu0 0.0
        %1955 = vmatprep.subr.mxu0 0.0
        %1956 = vmatpush1.msra.mxu0 0.0
        %1957 = vmatprep.subr.mxu0 0.0
        %1958 = vmatpush1.msra.mxu0 0.0
        %1959 = vmatprep.subr.mxu0 0.0
        %1960 = vmatpush1.msra.mxu0 0.0
        %1961 = vmatprep.subr.mxu0 0.0
        %1962 = vmatpush1.msra.mxu0 %v1929
        %1963 = vmatprep.subr.mxu0 0.0
        %1964 = vmatpush2.msra.mxu0 0.0
        %1965 = vmatprep.subr.mxu0 0.0
        %1966 = vmatpush2.msra.mxu0 0.0
        %1967 = vmatprep.subr.mxu0 0.0
        %1968 = vmatpush2.msra.mxu0 0.0
        %1969 = vmatprep.subr.mxu0 0.0
        %1970 = vmatpush2.msra.mxu0 0.0
        %1971 = vmatprep.subr.mxu0 0.0
        %1972 = vmatpush2.msra.mxu0 0.0
        %1973 = vmatprep.subr.mxu0 0.0
        %1974 = vmatpush2.msra.mxu0 0.0
        %1975 = vmatprep.subr.mxu0 0.0
        %1976 = vmatpush2.msra.mxu0 0.0
        %1977 = vmatprep.subr.mxu0 0.0
        %1978 = vmatpush2.msra.mxu0 0.0
        %1979 = vmatprep.subr.mxu0 0.0
        %1980 = vmatpush2.msra.mxu0 0.0
        %1981 = vmatprep.subr.mxu0 0.0
        %1982 = vmatpush2.msra.mxu0 0.0
        %1983 = vmatprep.subr.mxu0 0.0
        %1984 = vmatpush2.msra.mxu0 0.0
        %1985 = vmatprep.subr.mxu0 0.0
        %1986 = vmatpush2.msra.mxu0 0.0
        %1987 = vmatprep.subr.mxu0 0.0
        %1988 = vmatpush2.msra.mxu0 0.0
        %1989 = vmatprep.subr.mxu0 0.0
        %1990 = vmatpush2.msra.mxu0 0.0
        %1991 = vmatprep.subr.mxu0 0.0
        %1992 = vmatpush2.msra.mxu0 0.0
        %1993 = vmatprep.subr.mxu0 0.0
        %1994 = vmatpush2.msra.mxu0 0.0
        %1995 = vmatprep.mubr.f32.mxu0 0.0
        %1996 = vmatmul.mubr.f32.gmra.mxu0 %v1922
        %v1997 = vpop.f32.mrf.mxu0
        %v1998 = vadd.f32 %v1909, %v1997
        %v1999 = vpop.f32.mrf.mxu0
        %2000 = vmatprep.mubr.f32.mxu0 0.0
        %2001 = vmatmul.mubr.f32.gmra.mxu0 %v1924
        %v2002 = vpop.f32.mrf.mxu0
        %v2003 = vadd.f32 %v1914, %v2002
        %v2004 = vpop.f32.mrf.mxu0
        %2005 = vmatprep.mubr.f32.mxu0 0.0
        %2006 = vmatmul.mubr.f32.gmra.mxu0 %v1926
        %v2007 = vpop.f32.mrf.mxu0
        %v2008 = vadd.f32 %v1919, %v2007
        %v2009 = vpop.f32.mrf.mxu0
        %2010 = vdwg.mxu0
        %v2011 = vld [vmem:[%s1 + $0x24] sm:$0xf]
        %v2013 = vsel %vm524, %v2011, 0
        %2015 = vmatprep.subr.mxu0 0.0
        %2016 = vmatpush1.msra.mxu0 0.0
        %2017 = vmatprep.subr.mxu0 0.0
        %2018 = vmatpush1.msra.mxu0 0.0
        %2019 = vmatprep.subr.mxu0 0.0
        %2020 = vmatpush1.msra.mxu0 0.0
        %2021 = vmatprep.subr.mxu0 0.0
        %2022 = vmatpush1.msra.mxu0 0.0
        %2023 = vmatprep.subr.mxu0 0.0
        %2024 = vmatpush1.msra.mxu0 0.0
        %2025 = vmatprep.subr.mxu0 0.0
        %2026 = vmatpush1.msra.mxu0 0.0
        %2027 = vmatprep.subr.mxu0 0.0
        %2028 = vmatpush1.msra.mxu0 0.0
        %2029 = vmatprep.subr.mxu0 0.0
        %2030 = vmatpush1.msra.mxu0 0.0
        %2031 = vmatprep.subr.mxu0 0.0
        %2032 = vmatpush1.msra.mxu0 0.0
        %2033 = vmatprep.subr.mxu0 0.0
        %2034 = vmatpush1.msra.mxu0 0.0
        %2035 = vmatprep.subr.mxu0 0.0
        %2036 = vmatpush1.msra.mxu0 0.0
        %2037 = vmatprep.subr.mxu0 0.0
        %2038 = vmatpush1.msra.mxu0 0.0
        %2039 = vmatprep.subr.mxu0 0.0
        %2040 = vmatpush1.msra.mxu0 0.0
        %2041 = vmatprep.subr.mxu0 0.0
        %2042 = vmatpush1.msra.mxu0 0.0
        %2043 = vmatprep.subr.mxu0 0.0
        %2044 = vmatpush1.msra.mxu0 0.0
        %2045 = vmatprep.subr.mxu0 0.0
        %2046 = vmatpush1.msra.mxu0 %v2013
        %2047 = vmatprep.subr.mxu0 0.0
        %2048 = vmatpush2.msra.mxu0 0.0
        %2049 = vmatprep.subr.mxu0 0.0
        %2050 = vmatpush2.msra.mxu0 0.0
        %2051 = vmatprep.subr.mxu0 0.0
        %2052 = vmatpush2.msra.mxu0 0.0
        %2053 = vmatprep.subr.mxu0 0.0
        %2054 = vmatpush2.msra.mxu0 0.0
        %2055 = vmatprep.subr.mxu0 0.0
        %2056 = vmatpush2.msra.mxu0 0.0
        %2057 = vmatprep.subr.mxu0 0.0
        %2058 = vmatpush2.msra.mxu0 0.0
        %2059 = vmatprep.subr.mxu0 0.0
        %2060 = vmatpush2.msra.mxu0 0.0
        %2061 = vmatprep.subr.mxu0 0.0
        %2062 = vmatpush2.msra.mxu0 0.0
        %2063 = vmatprep.subr.mxu0 0.0
        %2064 = vmatpush2.msra.mxu0 0.0
        %2065 = vmatprep.subr.mxu0 0.0
        %2066 = vmatpush2.msra.mxu0 0.0
        %2067 = vmatprep.subr.mxu0 0.0
        %2068 = vmatpush2.msra.mxu0 0.0
        %2069 = vmatprep.subr.mxu0 0.0
        %2070 = vmatpush2.msra.mxu0 0.0
        %2071 = vmatprep.subr.mxu0 0.0
        %2072 = vmatpush2.msra.mxu0 0.0
        %2073 = vmatprep.subr.mxu0 0.0
        %2074 = vmatpush2.msra.mxu0 0.0
        %2075 = vmatprep.subr.mxu0 0.0
        %2076 = vmatpush2.msra.mxu0 0.0
        %2077 = vmatprep.subr.mxu0 0.0
        %2078 = vmatpush2.msra.mxu0 0.0
        %2079 = vmatprep.mubr.f32.mxu0 0.0
        %2080 = vmatmul.mubr.f32.gmra.mxu0 %v614
        %v2081 = vpop.f32.mrf.mxu0
        %v2082 = vadd.f32 0.0, %v2081
        %v2083 = vpop.f32.mrf.mxu0
        %2084 = vmatprep.mubr.f32.mxu0 0.0
        %2085 = vmatmul.mubr.f32.gmra.mxu0 %v616
        %v2086 = vpop.f32.mrf.mxu0
        %v2087 = vadd.f32 0.0, %v2086
        %v2088 = vpop.f32.mrf.mxu0
        %2089 = vmatprep.mubr.f32.mxu0 0.0
        %2090 = vmatmul.mubr.f32.gmra.mxu0 %v618
        %v2091 = vpop.f32.mrf.mxu0
        %v2092 = vadd.f32 0.0, %v2091
        %v2093 = vpop.f32.mrf.mxu0
        %2094 = vdwg.mxu0
        %v2095 = vadd.f32 %v1998, %v2082
        %v2096 = vadd.f32 %v2003, %v2087
        %v2097 = vadd.f32 %v2008, %v2092
        %v2098 = vld [vmem:[%s1 + $0x28] sm:$0xf]
        %v2100 = vsel %vm524, %v2098, 0
        %2102 = vmatprep.subr.mxu0 0.0
        %2103 = vmatpush1.msra.mxu0 0.0
        %2104 = vmatprep.subr.mxu0 0.0
        %2105 = vmatpush1.msra.mxu0 0.0
        %2106 = vmatprep.subr.mxu0 0.0
        %2107 = vmatpush1.msra.mxu0 0.0
        %2108 = vmatprep.subr.mxu0 0.0
        %2109 = vmatpush1.msra.mxu0 0.0
        %2110 = vmatprep.subr.mxu0 0.0
        %2111 = vmatpush1.msra.mxu0 0.0
        %2112 = vmatprep.subr.mxu0 0.0
        %2113 = vmatpush1.msra.mxu0 0.0
        %2114 = vmatprep.subr.mxu0 0.0
        %2115 = vmatpush1.msra.mxu0 0.0
        %2116 = vmatprep.subr.mxu0 0.0
        %2117 = vmatpush1.msra.mxu0 0.0
        %2118 = vmatprep.subr.mxu0 0.0
        %2119 = vmatpush1.msra.mxu0 0.0
        %2120 = vmatprep.subr.mxu0 0.0
        %2121 = vmatpush1.msra.mxu0 0.0
        %2122 = vmatprep.subr.mxu0 0.0
        %2123 = vmatpush1.msra.mxu0 0.0
        %2124 = vmatprep.subr.mxu0 0.0
        %2125 = vmatpush1.msra.mxu0 0.0
        %2126 = vmatprep.subr.mxu0 0.0
        %2127 = vmatpush1.msra.mxu0 0.0
        %2128 = vmatprep.subr.mxu0 0.0
        %2129 = vmatpush1.msra.mxu0 0.0
        %2130 = vmatprep.subr.mxu0 0.0
        %2131 = vmatpush1.msra.mxu0 0.0
        %2132 = vmatprep.subr.mxu0 0.0
        %2133 = vmatpush1.msra.mxu0 %v2100
        %2134 = vmatprep.subr.mxu0 0.0
        %2135 = vmatpush2.msra.mxu0 0.0
        %2136 = vmatprep.subr.mxu0 0.0
        %2137 = vmatpush2.msra.mxu0 0.0
        %2138 = vmatprep.subr.mxu0 0.0
        %2139 = vmatpush2.msra.mxu0 0.0
        %2140 = vmatprep.subr.mxu0 0.0
        %2141 = vmatpush2.msra.mxu0 0.0
        %2142 = vmatprep.subr.mxu0 0.0
        %2143 = vmatpush2.msra.mxu0 0.0
        %2144 = vmatprep.subr.mxu0 0.0
        %2145 = vmatpush2.msra.mxu0 0.0
        %2146 = vmatprep.subr.mxu0 0.0
        %2147 = vmatpush2.msra.mxu0 0.0
        %2148 = vmatprep.subr.mxu0 0.0
        %2149 = vmatpush2.msra.mxu0 0.0
        %2150 = vmatprep.subr.mxu0 0.0
        %2151 = vmatpush2.msra.mxu0 0.0
        %2152 = vmatprep.subr.mxu0 0.0
        %2153 = vmatpush2.msra.mxu0 0.0
        %2154 = vmatprep.subr.mxu0 0.0
        %2155 = vmatpush2.msra.mxu0 0.0
        %2156 = vmatprep.subr.mxu0 0.0
        %2157 = vmatpush2.msra.mxu0 0.0
        %2158 = vmatprep.subr.mxu0 0.0
        %2159 = vmatpush2.msra.mxu0 0.0
        %2160 = vmatprep.subr.mxu0 0.0
        %2161 = vmatpush2.msra.mxu0 0.0
        %2162 = vmatprep.subr.mxu0 0.0
        %2163 = vmatpush2.msra.mxu0 0.0
        %2164 = vmatprep.subr.mxu0 0.0
        %2165 = vmatpush2.msra.mxu0 0.0
        %2166 = vmatprep.mubr.f32.mxu0 0.0
        %2167 = vmatmul.mubr.f32.gmra.mxu0 %v518
        %v2168 = vpop.f32.mrf.mxu0
        %v2169 = vadd.f32 0.0, %v2168
        %v2170 = vpop.f32.mrf.mxu0
        %2171 = vmatprep.mubr.f32.mxu0 0.0
        %2172 = vmatmul.mubr.f32.gmra.mxu0 %v520
        %v2173 = vpop.f32.mrf.mxu0
        %v2174 = vadd.f32 0.0, %v2173
        %v2175 = vpop.f32.mrf.mxu0
        %2176 = vmatprep.mubr.f32.mxu0 0.0
        %2177 = vmatmul.mubr.f32.gmra.mxu0 %v522
        %v2178 = vpop.f32.mrf.mxu0
        %v2179 = vadd.f32 0.0, %v2178
        %v2180 = vpop.f32.mrf.mxu0
        %2181 = vdwg.mxu0
        %v2182 = vadd.f32 %v2095, %v2169
        %v2183 = vadd.f32 %v2096, %v2174
        %v2184 = vadd.f32 %v2097, %v2179
        %v2185 = vld [vmem:[%s1 + $0x2c] sm:$0xf]
        %v2187 = vsel %vm524, %v2185, 0
        %2189 = vmatprep.subr.mxu0 0.0
        %2190 = vmatpush1.msra.mxu0 0.0
        %2191 = vmatprep.subr.mxu0 0.0
        %2192 = vmatpush1.msra.mxu0 0.0
        %2193 = vmatprep.subr.mxu0 0.0
        %2194 = vmatpush1.msra.mxu0 0.0
        %2195 = vmatprep.subr.mxu0 0.0
        %2196 = vmatpush1.msra.mxu0 0.0
        %2197 = vmatprep.subr.mxu0 0.0
        %2198 = vmatpush1.msra.mxu0 0.0
        %2199 = vmatprep.subr.mxu0 0.0
        %2200 = vmatpush1.msra.mxu0 0.0
        %2201 = vmatprep.subr.mxu0 0.0
        %2202 = vmatpush1.msra.mxu0 0.0
        %2203 = vmatprep.subr.mxu0 0.0
        %2204 = vmatpush1.msra.mxu0 0.0
        %2205 = vmatprep.subr.mxu0 0.0
        %2206 = vmatpush1.msra.mxu0 0.0
        %2207 = vmatprep.subr.mxu0 0.0
        %2208 = vmatpush1.msra.mxu0 0.0
        %2209 = vmatprep.subr.mxu0 0.0
        %2210 = vmatpush1.msra.mxu0 0.0
        %2211 = vmatprep.subr.mxu0 0.0
        %2212 = vmatpush1.msra.mxu0 0.0
        %2213 = vmatprep.subr.mxu0 0.0
        %2214 = vmatpush1.msra.mxu0 0.0
        %2215 = vmatprep.subr.mxu0 0.0
        %2216 = vmatpush1.msra.mxu0 0.0
        %2217 = vmatprep.subr.mxu0 0.0
        %2218 = vmatpush1.msra.mxu0 0.0
        %2219 = vmatprep.subr.mxu0 0.0
        %2220 = vmatpush1.msra.mxu0 %v2187
        %2221 = vmatprep.subr.mxu0 0.0
        %2222 = vmatpush2.msra.mxu0 0.0
        %2223 = vmatprep.subr.mxu0 0.0
        %2224 = vmatpush2.msra.mxu0 0.0
        %2225 = vmatprep.subr.mxu0 0.0
        %2226 = vmatpush2.msra.mxu0 0.0
        %2227 = vmatprep.subr.mxu0 0.0
        %2228 = vmatpush2.msra.mxu0 0.0
        %2229 = vmatprep.subr.mxu0 0.0
        %2230 = vmatpush2.msra.mxu0 0.0
        %2231 = vmatprep.subr.mxu0 0.0
        %2232 = vmatpush2.msra.mxu0 0.0
        %2233 = vmatprep.subr.mxu0 0.0
        %2234 = vmatpush2.msra.mxu0 0.0
        %2235 = vmatprep.subr.mxu0 0.0
        %2236 = vmatpush2.msra.mxu0 0.0
        %2237 = vmatprep.subr.mxu0 0.0
        %2238 = vmatpush2.msra.mxu0 0.0
        %2239 = vmatprep.subr.mxu0 0.0
        %2240 = vmatpush2.msra.mxu0 0.0
        %2241 = vmatprep.subr.mxu0 0.0
        %2242 = vmatpush2.msra.mxu0 0.0
        %2243 = vmatprep.subr.mxu0 0.0
        %2244 = vmatpush2.msra.mxu0 0.0
        %2245 = vmatprep.subr.mxu0 0.0
        %2246 = vmatpush2.msra.mxu0 0.0
        %2247 = vmatprep.subr.mxu0 0.0
        %2248 = vmatpush2.msra.mxu0 0.0
        %2249 = vmatprep.subr.mxu0 0.0
        %2250 = vmatpush2.msra.mxu0 0.0
        %2251 = vmatprep.subr.mxu0 0.0
        %2252 = vmatpush2.msra.mxu0 0.0
        %2253 = vmatprep.mubr.f32.mxu0 0.0
        %2254 = vmatmul.mubr.f32.gmra.mxu0 %v709
        %v2255 = vpop.f32.mrf.mxu0
        %v2256 = vadd.f32 0.0, %v2255
        %v2257 = vpop.f32.mrf.mxu0
        %2258 = vmatprep.mubr.f32.mxu0 0.0
        %2259 = vmatmul.mubr.f32.gmra.mxu0 %v711
        %v2260 = vpop.f32.mrf.mxu0
        %v2261 = vadd.f32 0.0, %v2260
        %v2262 = vpop.f32.mrf.mxu0
        %2263 = vmatprep.mubr.f32.mxu0 0.0
        %2264 = vmatmul.mubr.f32.gmra.mxu0 %v713
        %v2265 = vpop.f32.mrf.mxu0
        %v2266 = vadd.f32 0.0, %v2265
        %v2267 = vpop.f32.mrf.mxu0
        %2268 = vdwg.mxu0
        %v2269 = vadd.f32 %v2182, %v2256
        %v2270 = vadd.f32 %v2183, %v2261
        %v2271 = vadd.f32 %v2184, %v2266
        %v2272 = vsel %vm801, %v2269, -inf
        %v2273 = vsel %vm801, %v2270, -inf
        %vm2274 = vcmask 60416
        %v2275 = vsel %vm2274, %v2271, -inf
        %v2276 = vmax.f32 %v2272, %v2273
        %v2277 = vmax.f32 %v2276, %v2275
        %v2278 = vrot.slane %v2277, 4
        %v2279 = vmax.f32 %v2277, %v2278
        %v2280 = vrot.slane %v2279, 2
        %v2281 = vmax.f32 %v2279, %v2280
        %v2282 = vrot.slane %v2281, 1
        %v2283 = vmax.f32 %v2281, %v2282
        %v2284 = vadd.f32 %v2283, %v1836
        %v2285 = vmax.f32 %v2284, 0.0
        %2286 = vmatprep.subr.mxu0 0.0
        %2287 = vmatpush1.msra.mxu0 0.0
        %2288 = vmatprep.subr.mxu0 0.0
        %2289 = vmatpush1.msra.mxu0 0.0
        %2290 = vmatprep.subr.mxu0 0.0
        %2291 = vmatpush1.msra.mxu0 0.0
        %2292 = vmatprep.subr.mxu0 0.0
        %2293 = vmatpush1.msra.mxu0 0.0
        %2294 = vmatprep.subr.mxu0 0.0
        %2295 = vmatpush1.msra.mxu0 0.0
        %2296 = vmatprep.subr.mxu0 0.0
        %2297 = vmatpush1.msra.mxu0 0.0
        %2298 = vmatprep.subr.mxu0 0.0
        %2299 = vmatpush1.msra.mxu0 0.0
        %2300 = vmatprep.subr.mxu0 0.0
        %2301 = vmatpush1.msra.mxu0 0.0
        %2302 = vmatprep.subr.mxu0 0.0
        %2303 = vmatpush1.msra.mxu0 0.0
        %2304 = vmatprep.subr.mxu0 0.0
        %2305 = vmatpush1.msra.mxu0 0.0
        %2306 = vmatprep.subr.mxu0 0.0
        %2307 = vmatpush1.msra.mxu0 0.0
        %2308 = vmatprep.subr.mxu0 0.0
        %2309 = vmatpush1.msra.mxu0 0.0
        %2310 = vmatprep.subr.mxu0 0.0
        %2311 = vmatpush1.msra.mxu0 0.0
        %2312 = vmatprep.subr.mxu0 0.0
        %2313 = vmatpush1.msra.mxu0 0.0
        %2314 = vmatprep.subr.mxu0 0.0
        %2315 = vmatpush1.msra.mxu0 0.0
        %2316 = vmatprep.subr.mxu0 0.0
        %2317 = vmatpush1.msra.mxu0 %v1840
        %2318 = vmatprep.subr.mxu0 0.0
        %2319 = vmatpush2.msra.mxu0 0.0
        %2320 = vmatprep.subr.mxu0 0.0
        %2321 = vmatpush2.msra.mxu0 0.0
        %2322 = vmatprep.subr.mxu0 0.0
        %2323 = vmatpush2.msra.mxu0 0.0
        %2324 = vmatprep.subr.mxu0 0.0
        %2325 = vmatpush2.msra.mxu0 0.0
        %2326 = vmatprep.subr.mxu0 0.0
        %2327 = vmatpush2.msra.mxu0 0.0
        %2328 = vmatprep.subr.mxu0 0.0
        %2329 = vmatpush2.msra.mxu0 0.0
        %2330 = vmatprep.subr.mxu0 0.0
        %2331 = vmatpush2.msra.mxu0 0.0
        %2332 = vmatprep.subr.mxu0 0.0
        %2333 = vmatpush2.msra.mxu0 0.0
        %2334 = vmatprep.subr.mxu0 0.0
        %2335 = vmatpush2.msra.mxu0 0.0
        %2336 = vmatprep.subr.mxu0 0.0
        %2337 = vmatpush2.msra.mxu0 0.0
        %2338 = vmatprep.subr.mxu0 0.0
        %2339 = vmatpush2.msra.mxu0 0.0
        %2340 = vmatprep.subr.mxu0 0.0
        %2341 = vmatpush2.msra.mxu0 0.0
        %2342 = vmatprep.subr.mxu0 0.0
        %2343 = vmatpush2.msra.mxu0 0.0
        %2344 = vmatprep.subr.mxu0 0.0
        %2345 = vmatpush2.msra.mxu0 0.0
        %2346 = vmatprep.subr.mxu0 0.0
        %2347 = vmatpush2.msra.mxu0 0.0
        %2348 = vmatprep.subr.mxu0 0.0
        %2349 = vmatpush2.msra.mxu0 0.0
        %2350 = vmatprep.mubr.f32.mxu0 0.0
        %2351 = vmatmul.mubr.f32.gmra.mxu0 %v1567
        %v2352 = vpop.f32.mrf.mxu0
        %v2353 = vadd.f32 0.0, %v2352
        %v2354 = vpop.f32.mrf.mxu0
        %2355 = vmatprep.mubr.f32.mxu0 0.0
        %2356 = vmatmul.mubr.f32.gmra.mxu0 %v1569
        %v2357 = vpop.f32.mrf.mxu0
        %v2358 = vadd.f32 0.0, %v2357
        %v2359 = vpop.f32.mrf.mxu0
        %2360 = vmatprep.mubr.f32.mxu0 0.0
        %2361 = vmatmul.mubr.f32.gmra.mxu0 %v1571
        %v2362 = vpop.f32.mrf.mxu0
        %v2363 = vadd.f32 0.0, %v2362
        %v2364 = vpop.f32.mrf.mxu0
        %2365 = vdwg.mxu0
        %v2366 = vsel %vm517, %v502, 0
        %v2368 = vsel %vm517, %v503, 0
        %v2370 = vsel %vm517, %v504, 0
        %2372 = vmatprep.subr.mxu0 0.0
        %2373 = vmatpush1.msra.mxu0 0.0
        %2374 = vmatprep.subr.mxu0 0.0
        %2375 = vmatpush1.msra.mxu0 0.0
        %2376 = vmatprep.subr.mxu0 0.0
        %2377 = vmatpush1.msra.mxu0 0.0
        %2378 = vmatprep.subr.mxu0 0.0
        %2379 = vmatpush1.msra.mxu0 0.0
        %2380 = vmatprep.subr.mxu0 0.0
        %2381 = vmatpush1.msra.mxu0 0.0
        %2382 = vmatprep.subr.mxu0 0.0
        %2383 = vmatpush1.msra.mxu0 0.0
        %2384 = vmatprep.subr.mxu0 0.0
        %2385 = vmatpush1.msra.mxu0 0.0
        %2386 = vmatprep.subr.mxu0 0.0
        %2387 = vmatpush1.msra.mxu0 0.0
        %2388 = vmatprep.subr.mxu0 0.0
        %2389 = vmatpush1.msra.mxu0 0.0
        %2390 = vmatprep.subr.mxu0 0.0
        %2391 = vmatpush1.msra.mxu0 0.0
        %2392 = vmatprep.subr.mxu0 0.0
        %2393 = vmatpush1.msra.mxu0 0.0
        %2394 = vmatprep.subr.mxu0 0.0
        %2395 = vmatpush1.msra.mxu0 0.0
        %2396 = vmatprep.subr.mxu0 0.0
        %2397 = vmatpush1.msra.mxu0 0.0
        %2398 = vmatprep.subr.mxu0 0.0
        %2399 = vmatpush1.msra.mxu0 0.0
        %2400 = vmatprep.subr.mxu0 0.0
        %2401 = vmatpush1.msra.mxu0 0.0
        %2402 = vmatprep.subr.mxu0 0.0
        %2403 = vmatpush1.msra.mxu0 %v1929
        %2404 = vmatprep.subr.mxu0 0.0
        %2405 = vmatpush2.msra.mxu0 0.0
        %2406 = vmatprep.subr.mxu0 0.0
        %2407 = vmatpush2.msra.mxu0 0.0
        %2408 = vmatprep.subr.mxu0 0.0
        %2409 = vmatpush2.msra.mxu0 0.0
        %2410 = vmatprep.subr.mxu0 0.0
        %2411 = vmatpush2.msra.mxu0 0.0
        %2412 = vmatprep.subr.mxu0 0.0
        %2413 = vmatpush2.msra.mxu0 0.0
        %2414 = vmatprep.subr.mxu0 0.0
        %2415 = vmatpush2.msra.mxu0 0.0
        %2416 = vmatprep.subr.mxu0 0.0
        %2417 = vmatpush2.msra.mxu0 0.0
        %2418 = vmatprep.subr.mxu0 0.0
        %2419 = vmatpush2.msra.mxu0 0.0
        %2420 = vmatprep.subr.mxu0 0.0
        %2421 = vmatpush2.msra.mxu0 0.0
        %2422 = vmatprep.subr.mxu0 0.0
        %2423 = vmatpush2.msra.mxu0 0.0
        %2424 = vmatprep.subr.mxu0 0.0
        %2425 = vmatpush2.msra.mxu0 0.0
        %2426 = vmatprep.subr.mxu0 0.0
        %2427 = vmatpush2.msra.mxu0 0.0
        %2428 = vmatprep.subr.mxu0 0.0
        %2429 = vmatpush2.msra.mxu0 0.0
        %2430 = vmatprep.subr.mxu0 0.0
        %2431 = vmatpush2.msra.mxu0 0.0
        %2432 = vmatprep.subr.mxu0 0.0
        %2433 = vmatpush2.msra.mxu0 0.0
        %2434 = vmatprep.subr.mxu0 0.0
        %2435 = vmatpush2.msra.mxu0 0.0
        %2436 = vmatprep.mubr.f32.mxu0 0.0
        %2437 = vmatmul.mubr.f32.gmra.mxu0 %v2366
        %v2438 = vpop.f32.mrf.mxu0
        %v2439 = vadd.f32 %v2353, %v2438
        %v2440 = vpop.f32.mrf.mxu0
        %2441 = vmatprep.mubr.f32.mxu0 0.0
        %2442 = vmatmul.mubr.f32.gmra.mxu0 %v2368
        %v2443 = vpop.f32.mrf.mxu0
        %v2444 = vadd.f32 %v2358, %v2443
        %v2445 = vpop.f32.mrf.mxu0
        %2446 = vmatprep.mubr.f32.mxu0 0.0
        %2447 = vmatmul.mubr.f32.gmra.mxu0 %v2370
        %v2448 = vpop.f32.mrf.mxu0
        %v2449 = vadd.f32 %v2363, %v2448
        %v2450 = vpop.f32.mrf.mxu0
        %2451 = vdwg.mxu0
        %2452 = vmatprep.subr.mxu0 0.0
        %2453 = vmatpush1.msra.mxu0 0.0
        %2454 = vmatprep.subr.mxu0 0.0
        %2455 = vmatpush1.msra.mxu0 0.0
        %2456 = vmatprep.subr.mxu0 0.0
        %2457 = vmatpush1.msra.mxu0 0.0
        %2458 = vmatprep.subr.mxu0 0.0
        %2459 = vmatpush1.msra.mxu0 0.0
        %2460 = vmatprep.subr.mxu0 0.0
        %2461 = vmatpush1.msra.mxu0 0.0
        %2462 = vmatprep.subr.mxu0 0.0
        %2463 = vmatpush1.msra.mxu0 0.0
        %2464 = vmatprep.subr.mxu0 0.0
        %2465 = vmatpush1.msra.mxu0 0.0
        %2466 = vmatprep.subr.mxu0 0.0
        %2467 = vmatpush1.msra.mxu0 0.0
        %2468 = vmatprep.subr.mxu0 0.0
        %2469 = vmatpush1.msra.mxu0 0.0
        %2470 = vmatprep.subr.mxu0 0.0
        %2471 = vmatpush1.msra.mxu0 0.0
        %2472 = vmatprep.subr.mxu0 0.0
        %2473 = vmatpush1.msra.mxu0 0.0
        %2474 = vmatprep.subr.mxu0 0.0
        %2475 = vmatpush1.msra.mxu0 0.0
        %2476 = vmatprep.subr.mxu0 0.0
        %2477 = vmatpush1.msra.mxu0 0.0
        %2478 = vmatprep.subr.mxu0 0.0
        %2479 = vmatpush1.msra.mxu0 0.0
        %2480 = vmatprep.subr.mxu0 0.0
        %2481 = vmatpush1.msra.mxu0 0.0
        %2482 = vmatprep.subr.mxu0 0.0
        %2483 = vmatpush1.msra.mxu0 %v2013
        %2484 = vmatprep.subr.mxu0 0.0
        %2485 = vmatpush2.msra.mxu0 0.0
        %2486 = vmatprep.subr.mxu0 0.0
        %2487 = vmatpush2.msra.mxu0 0.0
        %2488 = vmatprep.subr.mxu0 0.0
        %2489 = vmatpush2.msra.mxu0 0.0
        %2490 = vmatprep.subr.mxu0 0.0
        %2491 = vmatpush2.msra.mxu0 0.0
        %2492 = vmatprep.subr.mxu0 0.0
        %2493 = vmatpush2.msra.mxu0 0.0
        %2494 = vmatprep.subr.mxu0 0.0
        %2495 = vmatpush2.msra.mxu0 0.0
        %2496 = vmatprep.subr.mxu0 0.0
        %2497 = vmatpush2.msra.mxu0 0.0
        %2498 = vmatprep.subr.mxu0 0.0
        %2499 = vmatpush2.msra.mxu0 0.0
        %2500 = vmatprep.subr.mxu0 0.0
        %2501 = vmatpush2.msra.mxu0 0.0
        %2502 = vmatprep.subr.mxu0 0.0
        %2503 = vmatpush2.msra.mxu0 0.0
        %2504 = vmatprep.subr.mxu0 0.0
        %2505 = vmatpush2.msra.mxu0 0.0
        %2506 = vmatprep.subr.mxu0 0.0
        %2507 = vmatpush2.msra.mxu0 0.0
        %2508 = vmatprep.subr.mxu0 0.0
        %2509 = vmatpush2.msra.mxu0 0.0
        %2510 = vmatprep.subr.mxu0 0.0
        %2511 = vmatpush2.msra.mxu0 0.0
        %2512 = vmatprep.subr.mxu0 0.0
        %2513 = vmatpush2.msra.mxu0 0.0
        %2514 = vmatprep.subr.mxu0 0.0
        %2515 = vmatpush2.msra.mxu0 0.0
        %2516 = vmatprep.mubr.f32.mxu0 0.0
        %2517 = vmatmul.mubr.f32.gmra.mxu0 %v915
        %v2518 = vpop.f32.mrf.mxu0
        %v2519 = vadd.f32 0.0, %v2518
        %v2520 = vpop.f32.mrf.mxu0
        %2521 = vmatprep.mubr.f32.mxu0 0.0
        %2522 = vmatmul.mubr.f32.gmra.mxu0 %v917
        %v2523 = vpop.f32.mrf.mxu0
        %v2524 = vadd.f32 0.0, %v2523
        %v2525 = vpop.f32.mrf.mxu0
        %2526 = vmatprep.mubr.f32.mxu0 0.0
        %2527 = vmatmul.mubr.f32.gmra.mxu0 %v919
        %v2528 = vpop.f32.mrf.mxu0
        %v2529 = vadd.f32 0.0, %v2528
        %v2530 = vpop.f32.mrf.mxu0
        %2531 = vdwg.mxu0
        %v2532 = vadd.f32 %v2439, %v2519
        %v2533 = vadd.f32 %v2444, %v2524
        %v2534 = vadd.f32 %v2449, %v2529
        %2535 = vmatprep.subr.mxu0 0.0
        %2536 = vmatpush1.msra.mxu0 0.0
        %2537 = vmatprep.subr.mxu0 0.0
        %2538 = vmatpush1.msra.mxu0 0.0
        %2539 = vmatprep.subr.mxu0 0.0
        %2540 = vmatpush1.msra.mxu0 0.0
        %2541 = vmatprep.subr.mxu0 0.0
        %2542 = vmatpush1.msra.mxu0 0.0
        %2543 = vmatprep.subr.mxu0 0.0
        %2544 = vmatpush1.msra.mxu0 0.0
        %2545 = vmatprep.subr.mxu0 0.0
        %2546 = vmatpush1.msra.mxu0 0.0
        %2547 = vmatprep.subr.mxu0 0.0
        %2548 = vmatpush1.msra.mxu0 0.0
        %2549 = vmatprep.subr.mxu0 0.0
        %2550 = vmatpush1.msra.mxu0 0.0
        %2551 = vmatprep.subr.mxu0 0.0
        %2552 = vmatpush1.msra.mxu0 0.0
        %2553 = vmatprep.subr.mxu0 0.0
        %2554 = vmatpush1.msra.mxu0 0.0
        %2555 = vmatprep.subr.mxu0 0.0
        %2556 = vmatpush1.msra.mxu0 0.0
        %2557 = vmatprep.subr.mxu0 0.0
        %2558 = vmatpush1.msra.mxu0 0.0
        %2559 = vmatprep.subr.mxu0 0.0
        %2560 = vmatpush1.msra.mxu0 0.0
        %2561 = vmatprep.subr.mxu0 0.0
        %2562 = vmatpush1.msra.mxu0 0.0
        %2563 = vmatprep.subr.mxu0 0.0
        %2564 = vmatpush1.msra.mxu0 0.0
        %2565 = vmatprep.subr.mxu0 0.0
        %2566 = vmatpush1.msra.mxu0 %v2100
        %2567 = vmatprep.subr.mxu0 0.0
        %2568 = vmatpush2.msra.mxu0 0.0
        %2569 = vmatprep.subr.mxu0 0.0
        %2570 = vmatpush2.msra.mxu0 0.0
        %2571 = vmatprep.subr.mxu0 0.0
        %2572 = vmatpush2.msra.mxu0 0.0
        %2573 = vmatprep.subr.mxu0 0.0
        %2574 = vmatpush2.msra.mxu0 0.0
        %2575 = vmatprep.subr.mxu0 0.0
        %2576 = vmatpush2.msra.mxu0 0.0
        %2577 = vmatprep.subr.mxu0 0.0
        %2578 = vmatpush2.msra.mxu0 0.0
        %2579 = vmatprep.subr.mxu0 0.0
        %2580 = vmatpush2.msra.mxu0 0.0
        %2581 = vmatprep.subr.mxu0 0.0
        %2582 = vmatpush2.msra.mxu0 0.0
        %2583 = vmatprep.subr.mxu0 0.0
        %2584 = vmatpush2.msra.mxu0 0.0
        %2585 = vmatprep.subr.mxu0 0.0
        %2586 = vmatpush2.msra.mxu0 0.0
        %2587 = vmatprep.subr.mxu0 0.0
        %2588 = vmatpush2.msra.mxu0 0.0
        %2589 = vmatprep.subr.mxu0 0.0
        %2590 = vmatpush2.msra.mxu0 0.0
        %2591 = vmatprep.subr.mxu0 0.0
        %2592 = vmatpush2.msra.mxu0 0.0
        %2593 = vmatprep.subr.mxu0 0.0
        %2594 = vmatpush2.msra.mxu0 0.0
        %2595 = vmatprep.subr.mxu0 0.0
        %2596 = vmatpush2.msra.mxu0 0.0
        %2597 = vmatprep.subr.mxu0 0.0
        %2598 = vmatpush2.msra.mxu0 0.0
        %2599 = vmatprep.mubr.f32.mxu0 0.0
        %2600 = vmatmul.mubr.f32.gmra.mxu0 %v824
        %v2601 = vpop.f32.mrf.mxu0
        %v2602 = vadd.f32 0.0, %v2601
        %v2603 = vpop.f32.mrf.mxu0
        %2604 = vmatprep.mubr.f32.mxu0 0.0
        %2605 = vmatmul.mubr.f32.gmra.mxu0 %v826
        %v2606 = vpop.f32.mrf.mxu0
        %v2607 = vadd.f32 0.0, %v2606
        %v2608 = vpop.f32.mrf.mxu0
        %2609 = vmatprep.mubr.f32.mxu0 0.0
        %2610 = vmatmul.mubr.f32.gmra.mxu0 %v828
        %v2611 = vpop.f32.mrf.mxu0
        %v2612 = vadd.f32 0.0, %v2611
        %v2613 = vpop.f32.mrf.mxu0
        %2614 = vdwg.mxu0
        %v2615 = vadd.f32 %v2532, %v2602
        %v2616 = vadd.f32 %v2533, %v2607
        %v2617 = vadd.f32 %v2534, %v2612
        %2618 = vmatprep.subr.mxu0 0.0
        %2619 = vmatpush1.msra.mxu0 0.0
        %2620 = vmatprep.subr.mxu0 0.0
        %2621 = vmatpush1.msra.mxu0 0.0
        %2622 = vmatprep.subr.mxu0 0.0
        %2623 = vmatpush1.msra.mxu0 0.0
        %2624 = vmatprep.subr.mxu0 0.0
        %2625 = vmatpush1.msra.mxu0 0.0
        %2626 = vmatprep.subr.mxu0 0.0
        %2627 = vmatpush1.msra.mxu0 0.0
        %2628 = vmatprep.subr.mxu0 0.0
        %2629 = vmatpush1.msra.mxu0 0.0
        %2630 = vmatprep.subr.mxu0 0.0
        %2631 = vmatpush1.msra.mxu0 0.0
        %2632 = vmatprep.subr.mxu0 0.0
        %2633 = vmatpush1.msra.mxu0 0.0
        %2634 = vmatprep.subr.mxu0 0.0
        %2635 = vmatpush1.msra.mxu0 0.0
        %2636 = vmatprep.subr.mxu0 0.0
        %2637 = vmatpush1.msra.mxu0 0.0
        %2638 = vmatprep.subr.mxu0 0.0
        %2639 = vmatpush1.msra.mxu0 0.0
        %2640 = vmatprep.subr.mxu0 0.0
        %2641 = vmatpush1.msra.mxu0 0.0
        %2642 = vmatprep.subr.mxu0 0.0
        %2643 = vmatpush1.msra.mxu0 0.0
        %2644 = vmatprep.subr.mxu0 0.0
        %2645 = vmatpush1.msra.mxu0 0.0
        %2646 = vmatprep.subr.mxu0 0.0
        %2647 = vmatpush1.msra.mxu0 0.0
        %2648 = vmatprep.subr.mxu0 0.0
        %2649 = vmatpush1.msra.mxu0 %v2187
        %2650 = vmatprep.subr.mxu0 0.0
        %2651 = vmatpush2.msra.mxu0 0.0
        %2652 = vmatprep.subr.mxu0 0.0
        %2653 = vmatpush2.msra.mxu0 0.0
        %2654 = vmatprep.subr.mxu0 0.0
        %2655 = vmatpush2.msra.mxu0 0.0
        %2656 = vmatprep.subr.mxu0 0.0
        %2657 = vmatpush2.msra.mxu0 0.0
        %2658 = vmatprep.subr.mxu0 0.0
        %2659 = vmatpush2.msra.mxu0 0.0
        %2660 = vmatprep.subr.mxu0 0.0
        %2661 = vmatpush2.msra.mxu0 0.0
        %2662 = vmatprep.subr.mxu0 0.0
        %2663 = vmatpush2.msra.mxu0 0.0
        %2664 = vmatprep.subr.mxu0 0.0
        %2665 = vmatpush2.msra.mxu0 0.0
        %2666 = vmatprep.subr.mxu0 0.0
        %2667 = vmatpush2.msra.mxu0 0.0
        %2668 = vmatprep.subr.mxu0 0.0
        %2669 = vmatpush2.msra.mxu0 0.0
        %2670 = vmatprep.subr.mxu0 0.0
        %2671 = vmatpush2.msra.mxu0 0.0
        %2672 = vmatprep.subr.mxu0 0.0
        %2673 = vmatpush2.msra.mxu0 0.0
        %2674 = vmatprep.subr.mxu0 0.0
        %2675 = vmatpush2.msra.mxu0 0.0
        %2676 = vmatprep.subr.mxu0 0.0
        %2677 = vmatpush2.msra.mxu0 0.0
        %2678 = vmatprep.subr.mxu0 0.0
        %2679 = vmatpush2.msra.mxu0 0.0
        %2680 = vmatprep.subr.mxu0 0.0
        %2681 = vmatpush2.msra.mxu0 0.0
        %2682 = vmatprep.mubr.f32.mxu0 0.0
        %2683 = vmatmul.mubr.f32.gmra.mxu0 %v1006
        %v2684 = vpop.f32.mrf.mxu0
        %v2685 = vadd.f32 0.0, %v2684
        %v2686 = vpop.f32.mrf.mxu0
        %2687 = vmatprep.mubr.f32.mxu0 0.0
        %2688 = vmatmul.mubr.f32.gmra.mxu0 %v1008
        %v2689 = vpop.f32.mrf.mxu0
        %v2690 = vadd.f32 0.0, %v2689
        %v2691 = vpop.f32.mrf.mxu0
        %2692 = vmatprep.mubr.f32.mxu0 0.0
        %2693 = vmatmul.mubr.f32.gmra.mxu0 %v1010
        %v2694 = vpop.f32.mrf.mxu0
        %v2695 = vadd.f32 0.0, %v2694
        %v2696 = vpop.f32.mrf.mxu0
        %2697 = vdwg.mxu0
        %v2698 = vadd.f32 %v2615, %v2685
        %v2699 = vadd.f32 %v2616, %v2690
        %v2700 = vadd.f32 %v2617, %v2695
        %v2701 = vsel %vm801, %v2698, -inf
        %v2702 = vsel %vm801, %v2699, -inf
        %v2703 = vsel %vm2274, %v2700, -inf
        %v2704 = vmax.f32 %v2701, %v2702
        %v2705 = vmax.f32 %v2704, %v2703
        %v2706 = vrot.slane %v2705, 4
        %v2707 = vmax.f32 %v2705, %v2706
        %v2708 = vrot.slane %v2707, 2
        %v2709 = vmax.f32 %v2707, %v2708
        %v2710 = vrot.slane %v2709, 1
        %v2711 = vmax.f32 %v2709, %v2710
        %v2712 = vadd.f32 %v2711, %v1836
        %v2713 = vmax.f32 %v2712, 0.0
        %v2715 = vrot.slane %v2713, 7
        %v2717 = vsel %vm1111, %v2285, %v2715
        %v2718 = vld [vmem:[%s425] sm:$0xff]
        %v2719 = vld [vmem:[%s425 + $0x8] sm:$0xff]
        %v2720 = vld [vmem:[%s425 + $0x10] sm:$0xff]
        %v2721 = vld [vmem:[%s425 + $0x18] sm:$0xff]
        %v2722 = vld [vmem:[%s425 + $0x80] sm:$0xff]
        %v2723 = vld [vmem:[%s425 + $0x88] sm:$0xff]
        %v2724 = vld [vmem:[%s425 + $0x90] sm:$0xff]
        %v2725 = vld [vmem:[%s425 + $0x98] sm:$0xff]
        %v2727 = vsel %vm801, %v1835, 0
        %2729 = vmatprep.subr.mxu0 0.0
        %2730 = vmatpush1.msra.mxu0 0.0
        %2731 = vmatprep.subr.mxu0 0.0
        %2732 = vmatpush1.msra.mxu0 0.0
        %2733 = vmatprep.subr.mxu0 0.0
        %2734 = vmatpush1.msra.mxu0 0.0
        %2735 = vmatprep.subr.mxu0 0.0
        %2736 = vmatpush1.msra.mxu0 0.0
        %2737 = vmatprep.subr.mxu0 0.0
        %2738 = vmatpush1.msra.mxu0 0.0
        %2739 = vmatprep.subr.mxu0 0.0
        %2740 = vmatpush1.msra.mxu0 0.0
        %2741 = vmatprep.subr.mxu0 0.0
        %2742 = vmatpush1.msra.mxu0 0.0
        %2743 = vmatprep.subr.mxu0 0.0
        %2744 = vmatpush1.msra.mxu0 0.0
        %2745 = vmatprep.subr.mxu0 0.0
        %2746 = vmatpush1.msra.mxu0 0.0
        %2747 = vmatprep.subr.mxu0 0.0
        %2748 = vmatpush1.msra.mxu0 0.0
        %2749 = vmatprep.subr.mxu0 0.0
        %2750 = vmatpush1.msra.mxu0 0.0
        %2751 = vmatprep.subr.mxu0 0.0
        %2752 = vmatpush1.msra.mxu0 0.0
        %2753 = vmatprep.subr.mxu0 0.0
        %2754 = vmatpush1.msra.mxu0 0.0
        %2755 = vmatprep.subr.mxu0 0.0
        %2756 = vmatpush1.msra.mxu0 0.0
        %2757 = vmatprep.subr.mxu0 0.0
        %2758 = vmatpush1.msra.mxu0 0.0
        %2759 = vmatprep.subr.mxu0 %v2723
        %2760 = vmatpush1.msra.mxu0 %v2722
        %2761 = vmatprep.subr.mxu0 0.0
        %2762 = vmatpush2.msra.mxu0 0.0
        %2763 = vmatprep.subr.mxu0 0.0
        %2764 = vmatpush2.msra.mxu0 0.0
        %2765 = vmatprep.subr.mxu0 0.0
        %2766 = vmatpush2.msra.mxu0 0.0
        %2767 = vmatprep.subr.mxu0 0.0
        %2768 = vmatpush2.msra.mxu0 0.0
        %2769 = vmatprep.subr.mxu0 0.0
        %2770 = vmatpush2.msra.mxu0 0.0
        %2771 = vmatprep.subr.mxu0 0.0
        %2772 = vmatpush2.msra.mxu0 0.0
        %2773 = vmatprep.subr.mxu0 0.0
        %2774 = vmatpush2.msra.mxu0 0.0
        %2775 = vmatprep.subr.mxu0 0.0
        %2776 = vmatpush2.msra.mxu0 0.0
        %2777 = vmatprep.subr.mxu0 0.0
        %2778 = vmatpush2.msra.mxu0 0.0
        %2779 = vmatprep.subr.mxu0 0.0
        %2780 = vmatpush2.msra.mxu0 0.0
        %2781 = vmatprep.subr.mxu0 0.0
        %2782 = vmatpush2.msra.mxu0 0.0
        %2783 = vmatprep.subr.mxu0 0.0
        %2784 = vmatpush2.msra.mxu0 0.0
        %2785 = vmatprep.subr.mxu0 0.0
        %2786 = vmatpush2.msra.mxu0 0.0
        %2787 = vmatprep.subr.mxu0 0.0
        %2788 = vmatpush2.msra.mxu0 0.0
        %2789 = vmatprep.subr.mxu0 0.0
        %2790 = vmatpush2.msra.mxu0 0.0
        %2791 = vmatprep.subr.mxu0 0.0
        %2792 = vmatpush2.msra.mxu0 0.0
        %2793 = vmatprep.mubr.f32.mxu0 0.0
        %2794 = vmatmul.mubr.f32.gmra.mxu0 %v2727
        %v2795 = vpop.f32.mrf.mxu0
        %v2796 = vadd.f32 0.0, %v2795
        %v2797 = vpop.f32.mrf.mxu0
        %v2798 = vadd.f32 0.0, %v2797
        %2799 = vdwg.mxu0
        %2800 = vmatprep.subr.mxu0 0.0
        %2801 = vmatpush1.msra.mxu0 0.0
        %2802 = vmatprep.subr.mxu0 0.0
        %2803 = vmatpush1.msra.mxu0 0.0
        %2804 = vmatprep.subr.mxu0 0.0
        %2805 = vmatpush1.msra.mxu0 0.0
        %2806 = vmatprep.subr.mxu0 0.0
        %2807 = vmatpush1.msra.mxu0 0.0
        %2808 = vmatprep.subr.mxu0 0.0
        %2809 = vmatpush1.msra.mxu0 0.0
        %2810 = vmatprep.subr.mxu0 0.0
        %2811 = vmatpush1.msra.mxu0 0.0
        %2812 = vmatprep.subr.mxu0 0.0
        %2813 = vmatpush1.msra.mxu0 0.0
        %2814 = vmatprep.subr.mxu0 0.0
        %2815 = vmatpush1.msra.mxu0 0.0
        %2816 = vmatprep.subr.mxu0 0.0
        %2817 = vmatpush1.msra.mxu0 0.0
        %2818 = vmatprep.subr.mxu0 0.0
        %2819 = vmatpush1.msra.mxu0 0.0
        %2820 = vmatprep.subr.mxu0 0.0
        %2821 = vmatpush1.msra.mxu0 0.0
        %2822 = vmatprep.subr.mxu0 0.0
        %2823 = vmatpush1.msra.mxu0 0.0
        %2824 = vmatprep.subr.mxu0 0.0
        %2825 = vmatpush1.msra.mxu0 0.0
        %2826 = vmatprep.subr.mxu0 0.0
        %2827 = vmatpush1.msra.mxu0 0.0
        %2828 = vmatprep.subr.mxu0 0.0
        %2829 = vmatpush1.msra.mxu0 0.0
        %2830 = vmatprep.subr.mxu0 %v2725
        %2831 = vmatpush1.msra.mxu0 %v2724
        %2832 = vmatprep.subr.mxu0 0.0
        %2833 = vmatpush2.msra.mxu0 0.0
        %2834 = vmatprep.subr.mxu0 0.0
        %2835 = vmatpush2.msra.mxu0 0.0
        %2836 = vmatprep.subr.mxu0 0.0
        %2837 = vmatpush2.msra.mxu0 0.0
        %2838 = vmatprep.subr.mxu0 0.0
        %2839 = vmatpush2.msra.mxu0 0.0
        %2840 = vmatprep.subr.mxu0 0.0
        %2841 = vmatpush2.msra.mxu0 0.0
        %2842 = vmatprep.subr.mxu0 0.0
        %2843 = vmatpush2.msra.mxu0 0.0
        %2844 = vmatprep.subr.mxu0 0.0
        %2845 = vmatpush2.msra.mxu0 0.0
        %2846 = vmatprep.subr.mxu0 0.0
        %2847 = vmatpush2.msra.mxu0 0.0
        %2848 = vmatprep.subr.mxu0 0.0
        %2849 = vmatpush2.msra.mxu0 0.0
        %2850 = vmatprep.subr.mxu0 0.0
        %2851 = vmatpush2.msra.mxu0 0.0
        %2852 = vmatprep.subr.mxu0 0.0
        %2853 = vmatpush2.msra.mxu0 0.0
        %2854 = vmatprep.subr.mxu0 0.0
        %2855 = vmatpush2.msra.mxu0 0.0
        %2856 = vmatprep.subr.mxu0 0.0
        %2857 = vmatpush2.msra.mxu0 0.0
        %2858 = vmatprep.subr.mxu0 0.0
        %2859 = vmatpush2.msra.mxu0 0.0
        %2860 = vmatprep.subr.mxu0 0.0
        %2861 = vmatpush2.msra.mxu0 0.0
        %2862 = vmatprep.subr.mxu0 0.0
        %2863 = vmatpush2.msra.mxu0 0.0
        %2864 = vmatprep.mubr.f32.mxu0 0.0
        %2865 = vmatmul.mubr.f32.gmra.mxu0 %v2727
        %v2866 = vpop.f32.mrf.mxu0
        %v2867 = vadd.f32 0.0, %v2866
        %v2868 = vpop.f32.mrf.mxu0
        %v2869 = vadd.f32 0.0, %v2868
        %2870 = vdwg.mxu0
        %v2872 = vsel %vm801, %v1112, 0
        %2874 = vmatprep.subr.mxu0 0.0
        %2875 = vmatpush1.msra.mxu0 0.0
        %2876 = vmatprep.subr.mxu0 0.0
        %2877 = vmatpush1.msra.mxu0 0.0
        %2878 = vmatprep.subr.mxu0 0.0
        %2879 = vmatpush1.msra.mxu0 0.0
        %2880 = vmatprep.subr.mxu0 0.0
        %2881 = vmatpush1.msra.mxu0 0.0
        %2882 = vmatprep.subr.mxu0 0.0
        %2883 = vmatpush1.msra.mxu0 0.0
        %2884 = vmatprep.subr.mxu0 0.0
        %2885 = vmatpush1.msra.mxu0 0.0
        %2886 = vmatprep.subr.mxu0 0.0
        %2887 = vmatpush1.msra.mxu0 0.0
        %2888 = vmatprep.subr.mxu0 0.0
        %2889 = vmatpush1.msra.mxu0 0.0
        %2890 = vmatprep.subr.mxu0 0.0
        %2891 = vmatpush1.msra.mxu0 0.0
        %2892 = vmatprep.subr.mxu0 0.0
        %2893 = vmatpush1.msra.mxu0 0.0
        %2894 = vmatprep.subr.mxu0 0.0
        %2895 = vmatpush1.msra.mxu0 0.0
        %2896 = vmatprep.subr.mxu0 0.0
        %2897 = vmatpush1.msra.mxu0 0.0
        %2898 = vmatprep.subr.mxu0 0.0
        %2899 = vmatpush1.msra.mxu0 0.0
        %2900 = vmatprep.subr.mxu0 0.0
        %2901 = vmatpush1.msra.mxu0 0.0
        %2902 = vmatprep.subr.mxu0 0.0
        %2903 = vmatpush1.msra.mxu0 0.0
        %2904 = vmatprep.subr.mxu0 %v2719
        %2905 = vmatpush1.msra.mxu0 %v2718
        %2906 = vmatprep.subr.mxu0 0.0
        %2907 = vmatpush2.msra.mxu0 0.0
        %2908 = vmatprep.subr.mxu0 0.0
        %2909 = vmatpush2.msra.mxu0 0.0
        %2910 = vmatprep.subr.mxu0 0.0
        %2911 = vmatpush2.msra.mxu0 0.0
        %2912 = vmatprep.subr.mxu0 0.0
        %2913 = vmatpush2.msra.mxu0 0.0
        %2914 = vmatprep.subr.mxu0 0.0
        %2915 = vmatpush2.msra.mxu0 0.0
        %2916 = vmatprep.subr.mxu0 0.0
        %2917 = vmatpush2.msra.mxu0 0.0
        %2918 = vmatprep.subr.mxu0 0.0
        %2919 = vmatpush2.msra.mxu0 0.0
        %2920 = vmatprep.subr.mxu0 0.0
        %2921 = vmatpush2.msra.mxu0 0.0
        %2922 = vmatprep.subr.mxu0 0.0
        %2923 = vmatpush2.msra.mxu0 0.0
        %2924 = vmatprep.subr.mxu0 0.0
        %2925 = vmatpush2.msra.mxu0 0.0
        %2926 = vmatprep.subr.mxu0 0.0
        %2927 = vmatpush2.msra.mxu0 0.0
        %2928 = vmatprep.subr.mxu0 0.0
        %2929 = vmatpush2.msra.mxu0 0.0
        %2930 = vmatprep.subr.mxu0 0.0
        %2931 = vmatpush2.msra.mxu0 0.0
        %2932 = vmatprep.subr.mxu0 0.0
        %2933 = vmatpush2.msra.mxu0 0.0
        %2934 = vmatprep.subr.mxu0 0.0
        %2935 = vmatpush2.msra.mxu0 0.0
        %2936 = vmatprep.subr.mxu0 0.0
        %2937 = vmatpush2.msra.mxu0 0.0
        %2938 = vmatprep.mubr.f32.mxu0 0.0
        %2939 = vmatmul.mubr.f32.gmra.mxu0 %v2872
        %v2940 = vpop.f32.mrf.mxu0
        %v2941 = vadd.f32 %v2796, %v2940
        %v2942 = vpop.f32.mrf.mxu0
        %v2943 = vadd.f32 %v2798, %v2942
        %2944 = vdwg.mxu0
        %2945 = vmatprep.subr.mxu0 0.0
        %2946 = vmatpush1.msra.mxu0 0.0
        %2947 = vmatprep.subr.mxu0 0.0
        %2948 = vmatpush1.msra.mxu0 0.0
        %2949 = vmatprep.subr.mxu0 0.0
        %2950 = vmatpush1.msra.mxu0 0.0
        %2951 = vmatprep.subr.mxu0 0.0
        %2952 = vmatpush1.msra.mxu0 0.0
        %2953 = vmatprep.subr.mxu0 0.0
        %2954 = vmatpush1.msra.mxu0 0.0
        %2955 = vmatprep.subr.mxu0 0.0
        %2956 = vmatpush1.msra.mxu0 0.0
        %2957 = vmatprep.subr.mxu0 0.0
        %2958 = vmatpush1.msra.mxu0 0.0
        %2959 = vmatprep.subr.mxu0 0.0
        %2960 = vmatpush1.msra.mxu0 0.0
        %2961 = vmatprep.subr.mxu0 0.0
        %2962 = vmatpush1.msra.mxu0 0.0
        %2963 = vmatprep.subr.mxu0 0.0
        %2964 = vmatpush1.msra.mxu0 0.0
        %2965 = vmatprep.subr.mxu0 0.0
        %2966 = vmatpush1.msra.mxu0 0.0
        %2967 = vmatprep.subr.mxu0 0.0
        %2968 = vmatpush1.msra.mxu0 0.0
        %2969 = vmatprep.subr.mxu0 0.0
        %2970 = vmatpush1.msra.mxu0 0.0
        %2971 = vmatprep.subr.mxu0 0.0
        %2972 = vmatpush1.msra.mxu0 0.0
        %2973 = vmatprep.subr.mxu0 0.0
        %2974 = vmatpush1.msra.mxu0 0.0
        %2975 = vmatprep.subr.mxu0 %v2721
        %2976 = vmatpush1.msra.mxu0 %v2720
        %2977 = vmatprep.subr.mxu0 0.0
        %2978 = vmatpush2.msra.mxu0 0.0
        %2979 = vmatprep.subr.mxu0 0.0
        %2980 = vmatpush2.msra.mxu0 0.0
        %2981 = vmatprep.subr.mxu0 0.0
        %2982 = vmatpush2.msra.mxu0 0.0
        %2983 = vmatprep.subr.mxu0 0.0
        %2984 = vmatpush2.msra.mxu0 0.0
        %2985 = vmatprep.subr.mxu0 0.0
        %2986 = vmatpush2.msra.mxu0 0.0
        %2987 = vmatprep.subr.mxu0 0.0
        %2988 = vmatpush2.msra.mxu0 0.0
        %2989 = vmatprep.subr.mxu0 0.0
        %2990 = vmatpush2.msra.mxu0 0.0
        %2991 = vmatprep.subr.mxu0 0.0
        %2992 = vmatpush2.msra.mxu0 0.0
        %2993 = vmatprep.subr.mxu0 0.0
        %2994 = vmatpush2.msra.mxu0 0.0
        %2995 = vmatprep.subr.mxu0 0.0
        %2996 = vmatpush2.msra.mxu0 0.0
        %2997 = vmatprep.subr.mxu0 0.0
        %2998 = vmatpush2.msra.mxu0 0.0
        %2999 = vmatprep.subr.mxu0 0.0
        %3000 = vmatpush2.msra.mxu0 0.0
        %3001 = vmatprep.subr.mxu0 0.0
        %3002 = vmatpush2.msra.mxu0 0.0
        %3003 = vmatprep.subr.mxu0 0.0
        %3004 = vmatpush2.msra.mxu0 0.0
        %3005 = vmatprep.subr.mxu0 0.0
        %3006 = vmatpush2.msra.mxu0 0.0
        %3007 = vmatprep.subr.mxu0 0.0
        %3008 = vmatpush2.msra.mxu0 0.0
        %3009 = vmatprep.mubr.f32.mxu0 0.0
        %3010 = vmatmul.mubr.f32.gmra.mxu0 %v2872
        %v3011 = vpop.f32.mrf.mxu0
        %v3012 = vadd.f32 %v2867, %v3011
        %v3013 = vpop.f32.mrf.mxu0
        %v3014 = vadd.f32 %v2869, %v3013
        %3015 = vdwg.mxu0
        %v3016 = vld [vmem:[%s425 + $0x100] sm:$0xff]
        %v3017 = vld [vmem:[%s425 + $0x108] sm:$0xff]
        %v3018 = vld [vmem:[%s425 + $0x110] sm:$0xff]
        %v3019 = vld [vmem:[%s425 + $0x118] sm:$0xff]
        %v3021 = vsel %vm801, %v2717, 0
        %3023 = vmatprep.subr.mxu0 0.0
        %3024 = vmatpush1.msra.mxu0 0.0
        %3025 = vmatprep.subr.mxu0 0.0
        %3026 = vmatpush1.msra.mxu0 0.0
        %3027 = vmatprep.subr.mxu0 0.0
        %3028 = vmatpush1.msra.mxu0 0.0
        %3029 = vmatprep.subr.mxu0 0.0
        %3030 = vmatpush1.msra.mxu0 0.0
        %3031 = vmatprep.subr.mxu0 0.0
        %3032 = vmatpush1.msra.mxu0 0.0
        %3033 = vmatprep.subr.mxu0 0.0
        %3034 = vmatpush1.msra.mxu0 0.0
        %3035 = vmatprep.subr.mxu0 0.0
        %3036 = vmatpush1.msra.mxu0 0.0
        %3037 = vmatprep.subr.mxu0 0.0
        %3038 = vmatpush1.msra.mxu0 0.0
        %3039 = vmatprep.subr.mxu0 0.0
        %3040 = vmatpush1.msra.mxu0 0.0
        %3041 = vmatprep.subr.mxu0 0.0
        %3042 = vmatpush1.msra.mxu0 0.0
        %3043 = vmatprep.subr.mxu0 0.0
        %3044 = vmatpush1.msra.mxu0 0.0
        %3045 = vmatprep.subr.mxu0 0.0
        %3046 = vmatpush1.msra.mxu0 0.0
        %3047 = vmatprep.subr.mxu0 0.0
        %3048 = vmatpush1.msra.mxu0 0.0
        %3049 = vmatprep.subr.mxu0 0.0
        %3050 = vmatpush1.msra.mxu0 0.0
        %3051 = vmatprep.subr.mxu0 0.0
        %3052 = vmatpush1.msra.mxu0 0.0
        %3053 = vmatprep.subr.mxu0 %v3017
        %3054 = vmatpush1.msra.mxu0 %v3016
        %3055 = vmatprep.subr.mxu0 0.0
        %3056 = vmatpush2.msra.mxu0 0.0
        %3057 = vmatprep.subr.mxu0 0.0
        %3058 = vmatpush2.msra.mxu0 0.0
        %3059 = vmatprep.subr.mxu0 0.0
        %3060 = vmatpush2.msra.mxu0 0.0
        %3061 = vmatprep.subr.mxu0 0.0
        %3062 = vmatpush2.msra.mxu0 0.0
        %3063 = vmatprep.subr.mxu0 0.0
        %3064 = vmatpush2.msra.mxu0 0.0
        %3065 = vmatprep.subr.mxu0 0.0
        %3066 = vmatpush2.msra.mxu0 0.0
        %3067 = vmatprep.subr.mxu0 0.0
        %3068 = vmatpush2.msra.mxu0 0.0
        %3069 = vmatprep.subr.mxu0 0.0
        %3070 = vmatpush2.msra.mxu0 0.0
        %3071 = vmatprep.subr.mxu0 0.0
        %3072 = vmatpush2.msra.mxu0 0.0
        %3073 = vmatprep.subr.mxu0 0.0
        %3074 = vmatpush2.msra.mxu0 0.0
        %3075 = vmatprep.subr.mxu0 0.0
        %3076 = vmatpush2.msra.mxu0 0.0
        %3077 = vmatprep.subr.mxu0 0.0
        %3078 = vmatpush2.msra.mxu0 0.0
        %3079 = vmatprep.subr.mxu0 0.0
        %3080 = vmatpush2.msra.mxu0 0.0
        %3081 = vmatprep.subr.mxu0 0.0
        %3082 = vmatpush2.msra.mxu0 0.0
        %3083 = vmatprep.subr.mxu0 0.0
        %3084 = vmatpush2.msra.mxu0 0.0
        %3085 = vmatprep.subr.mxu0 0.0
        %3086 = vmatpush2.msra.mxu0 0.0
        %3087 = vmatprep.mubr.f32.mxu0 0.0
        %3088 = vmatmul.mubr.f32.gmra.mxu0 %v3021
        %v3089 = vpop.f32.mrf.mxu0
        %v3090 = vadd.f32 0.0, %v3089
        %v3091 = vpop.f32.mrf.mxu0
        %v3092 = vadd.f32 0.0, %v3091
        %3093 = vdwg.mxu0
        %3094 = vmatprep.subr.mxu0 0.0
        %3095 = vmatpush1.msra.mxu0 0.0
        %3096 = vmatprep.subr.mxu0 0.0
        %3097 = vmatpush1.msra.mxu0 0.0
        %3098 = vmatprep.subr.mxu0 0.0
        %3099 = vmatpush1.msra.mxu0 0.0
        %3100 = vmatprep.subr.mxu0 0.0
        %3101 = vmatpush1.msra.mxu0 0.0
        %3102 = vmatprep.subr.mxu0 0.0
        %3103 = vmatpush1.msra.mxu0 0.0
        %3104 = vmatprep.subr.mxu0 0.0
        %3105 = vmatpush1.msra.mxu0 0.0
        %3106 = vmatprep.subr.mxu0 0.0
        %3107 = vmatpush1.msra.mxu0 0.0
        %3108 = vmatprep.subr.mxu0 0.0
        %3109 = vmatpush1.msra.mxu0 0.0
        %3110 = vmatprep.subr.mxu0 0.0
        %3111 = vmatpush1.msra.mxu0 0.0
        %3112 = vmatprep.subr.mxu0 0.0
        %3113 = vmatpush1.msra.mxu0 0.0
        %3114 = vmatprep.subr.mxu0 0.0
        %3115 = vmatpush1.msra.mxu0 0.0
        %3116 = vmatprep.subr.mxu0 0.0
        %3117 = vmatpush1.msra.mxu0 0.0
        %3118 = vmatprep.subr.mxu0 0.0
        %3119 = vmatpush1.msra.mxu0 0.0
        %3120 = vmatprep.subr.mxu0 0.0
        %3121 = vmatpush1.msra.mxu0 0.0
        %3122 = vmatprep.subr.mxu0 0.0
        %3123 = vmatpush1.msra.mxu0 0.0
        %3124 = vmatprep.subr.mxu0 %v3019
        %3125 = vmatpush1.msra.mxu0 %v3018
        %3126 = vmatprep.subr.mxu0 0.0
        %3127 = vmatpush2.msra.mxu0 0.0
        %3128 = vmatprep.subr.mxu0 0.0
        %3129 = vmatpush2.msra.mxu0 0.0
        %3130 = vmatprep.subr.mxu0 0.0
        %3131 = vmatpush2.msra.mxu0 0.0
        %3132 = vmatprep.subr.mxu0 0.0
        %3133 = vmatpush2.msra.mxu0 0.0
        %3134 = vmatprep.subr.mxu0 0.0
        %3135 = vmatpush2.msra.mxu0 0.0
        %3136 = vmatprep.subr.mxu0 0.0
        %3137 = vmatpush2.msra.mxu0 0.0
        %3138 = vmatprep.subr.mxu0 0.0
        %3139 = vmatpush2.msra.mxu0 0.0
        %3140 = vmatprep.subr.mxu0 0.0
        %3141 = vmatpush2.msra.mxu0 0.0
        %3142 = vmatprep.subr.mxu0 0.0
        %3143 = vmatpush2.msra.mxu0 0.0
        %3144 = vmatprep.subr.mxu0 0.0
        %3145 = vmatpush2.msra.mxu0 0.0
        %3146 = vmatprep.subr.mxu0 0.0
        %3147 = vmatpush2.msra.mxu0 0.0
        %3148 = vmatprep.subr.mxu0 0.0
        %3149 = vmatpush2.msra.mxu0 0.0
        %3150 = vmatprep.subr.mxu0 0.0
        %3151 = vmatpush2.msra.mxu0 0.0
        %3152 = vmatprep.subr.mxu0 0.0
        %3153 = vmatpush2.msra.mxu0 0.0
        %3154 = vmatprep.subr.mxu0 0.0
        %3155 = vmatpush2.msra.mxu0 0.0
        %3156 = vmatprep.subr.mxu0 0.0
        %3157 = vmatpush2.msra.mxu0 0.0
        %3158 = vmatprep.mubr.f32.mxu0 0.0
        %3159 = vmatmul.mubr.f32.gmra.mxu0 %v3021
        %v3160 = vpop.f32.mrf.mxu0
        %v3161 = vadd.f32 0.0, %v3160
        %v3162 = vpop.f32.mrf.mxu0
        %v3163 = vadd.f32 0.0, %v3162
        %3164 = vdwg.mxu0
        %v3165 = vadd.f32 %v2941, %v3090
        %v3166 = vadd.f32 %v2943, %v3092
        %v3167 = vadd.f32 %v3012, %v3161
        %v3168 = vadd.f32 %v3014, %v3163
        %v3169 = vld [vmem:[%s476] sm:$0xf]
        %v3171 = vlaneseq
        %v3172 = vshrl.u32 %v3171, 7
        %v3173 = vsub.s32 0, %v3172
        %v3174 = vrot.slane %v3169, %v3173
        %v3175 = vlaneseq
        %v3176 = vshrl.u32 %v3175, 7
        %v3177 = vsub.s32 1, %v3176
        %v3178 = vrot.slane %v3169, %v3177
        %v3179 = vlaneseq
        %v3180 = vshrl.u32 %v3179, 7
        %v3181 = vsub.s32 2, %v3180
        %v3182 = vrot.slane %v3169, %v3181
        %v3183 = vlaneseq
        %v3184 = vshrl.u32 %v3183, 7
        %v3185 = vsub.s32 3, %v3184
        %v3186 = vrot.slane %v3169, %v3185
        %v3191 = vadd.f32 %v3165, %v3174
        %v3192 = vadd.f32 %v3166, %v3178
        %v3193 = vadd.f32 %v3167, %v3182
        %v3194 = vadd.f32 %v3168, %v3186
        %vm3195 = vcmask 1041408
        %v3196 = vsel %vm3195, %v3191, 0.0
        %v3197 = vrot.slane %v3196, 4
        %v3198 = vadd.f32 %v3196, %v3197
        %v3199 = vrot.slane %v3198, 2
        %v3200 = vadd.f32 %v3198, %v3199
        %v3201 = vrot.slane %v3200, 1
        %v3202 = vadd.f32 %v3200, %v3201
        %v3203 = vsel %vm3195, %v3192, 0.0
        %v3204 = vrot.slane %v3203, 4
        %v3205 = vadd.f32 %v3203, %v3204
        %v3206 = vrot.slane %v3205, 2
        %v3207 = vadd.f32 %v3205, %v3206
        %v3208 = vrot.slane %v3207, 1
        %v3209 = vadd.f32 %v3207, %v3208
        %v3210 = vsel %vm3195, %v3193, 0.0
        %v3211 = vrot.slane %v3210, 4
        %v3212 = vadd.f32 %v3210, %v3211
        %v3213 = vrot.slane %v3212, 2
        %v3214 = vadd.f32 %v3212, %v3213
        %v3215 = vrot.slane %v3214, 1
        %v3216 = vadd.f32 %v3214, %v3215
        %v3217 = vsel %vm3195, %v3194, 0.0
        %v3218 = vrot.slane %v3217, 4
        %v3219 = vadd.f32 %v3217, %v3218
        %v3220 = vrot.slane %v3219, 2
        %v3221 = vadd.f32 %v3219, %v3220
        %v3222 = vrot.slane %v3221, 1
        %v3223 = vadd.f32 %v3221, %v3222
        %v3224 = vrcp.pop 2.0
        %v3225 = vmul.f32 %v3202, %v3224
        %v3226 = vmul.f32 %v3209, %v3224
        %v3227 = vmul.f32 %v3216, %v3224
        %v3228 = vmul.f32 %v3223, %v3224
        %v3229 = vsub.f32 %v3191, %v3225
        %v3230 = vsub.f32 %v3192, %v3226
        %v3231 = vsub.f32 %v3193, %v3227
        %v3232 = vsub.f32 %v3194, %v3228
        %v3233 = vmul.f32 %v3229, %v3229
        %v3234 = vmul.f32 %v3230, %v3230
        %v3235 = vmul.f32 %v3231, %v3231
        %v3236 = vmul.f32 %v3232, %v3232
        %v3237 = vsel %vm3195, %v3233, 0.0
        %v3238 = vrot.slane %v3237, 4
        %v3239 = vadd.f32 %v3237, %v3238
        %v3240 = vrot.slane %v3239, 2
        %v3241 = vadd.f32 %v3239, %v3240
        %v3242 = vrot.slane %v3241, 1
        %v3243 = vadd.f32 %v3241, %v3242
        %v3244 = vsel %vm3195, %v3234, 0.0
        %v3245 = vrot.slane %v3244, 4
        %v3246 = vadd.f32 %v3244, %v3245
        %v3247 = vrot.slane %v3246, 2
        %v3248 = vadd.f32 %v3246, %v3247
        %v3249 = vrot.slane %v3248, 1
        %v3250 = vadd.f32 %v3248, %v3249
        %v3251 = vsel %vm3195, %v3235, 0.0
        %v3252 = vrot.slane %v3251, 4
        %v3253 = vadd.f32 %v3251, %v3252
        %v3254 = vrot.slane %v3253, 2
        %v3255 = vadd.f32 %v3253, %v3254
        %v3256 = vrot.slane %v3255, 1
        %v3257 = vadd.f32 %v3255, %v3256
        %v3258 = vsel %vm3195, %v3236, 0.0
        %v3259 = vrot.slane %v3258, 4
        %v3260 = vadd.f32 %v3258, %v3259
        %v3261 = vrot.slane %v3260, 2
        %v3262 = vadd.f32 %v3260, %v3261
        %v3263 = vrot.slane %v3262, 1
        %v3264 = vadd.f32 %v3262, %v3263
        %v3265 = vmul.f32 %v3243, %v3224
        %v3266 = vmul.f32 %v3250, %v3224
        %v3267 = vmul.f32 %v3257, %v3224
        %v3268 = vmul.f32 %v3264, %v3224
        %v3269 = vadd.f32 %v3265, 1e-05
        %v3270 = vadd.f32 %v3266, 1e-05
        %v3271 = vadd.f32 %v3267, 1e-05
        %v3272 = vadd.f32 %v3268, 1e-05
        %v3273 = vrsqrt.pop %v3269
        %v3274 = vrsqrt.pop %v3270
        %v3275 = vrsqrt.pop %v3271
        %v3276 = vrsqrt.pop %v3272
        %v3277 = vmul.f32 %v3229, %v3273
        %v3278 = vmul.f32 %v3230, %v3274
        %v3279 = vmul.f32 %v3231, %v3275
        %v3280 = vmul.f32 %v3232, %v3276
        %v3281 = vld [vmem:[%s481] sm:$0xf]
        %v3283 = vlaneseq
        %v3284 = vshrl.u32 %v3283, 7
        %v3285 = vsub.s32 0, %v3284
        %v3286 = vrot.slane %v3281, %v3285
        %v3287 = vlaneseq
        %v3288 = vshrl.u32 %v3287, 7
        %v3289 = vsub.s32 1, %v3288
        %v3290 = vrot.slane %v3281, %v3289
        %v3291 = vlaneseq
        %v3292 = vshrl.u32 %v3291, 7
        %v3293 = vsub.s32 2, %v3292
        %v3294 = vrot.slane %v3281, %v3293
        %v3295 = vlaneseq
        %v3296 = vshrl.u32 %v3295, 7
        %v3297 = vsub.s32 3, %v3296
        %v3298 = vrot.slane %v3281, %v3297
        %v3303 = vmul.f32 %v3277, %v3286
        %v3304 = vmul.f32 %v3278, %v3290
        %v3305 = vmul.f32 %v3279, %v3294
        %v3306 = vmul.f32 %v3280, %v3298
        %v3307 = vld [vmem:[%s486] sm:$0xf]
        %v3309 = vlaneseq
        %v3310 = vshrl.u32 %v3309, 7
        %v3311 = vsub.s32 0, %v3310
        %v3312 = vrot.slane %v3307, %v3311
        %v3313 = vlaneseq
        %v3314 = vshrl.u32 %v3313, 7
        %v3315 = vsub.s32 1, %v3314
        %v3316 = vrot.slane %v3307, %v3315
        %v3317 = vlaneseq
        %v3318 = vshrl.u32 %v3317, 7
        %v3319 = vsub.s32 2, %v3318
        %v3320 = vrot.slane %v3307, %v3319
        %v3321 = vlaneseq
        %v3322 = vshrl.u32 %v3321, 7
        %v3323 = vsub.s32 3, %v3322
        %v3324 = vrot.slane %v3307, %v3323
        %v3329 = vadd.f32 %v3303, %v3312
        %v3330 = vadd.f32 %v3304, %v3316
        %v3331 = vadd.f32 %v3305, %v3320
        %v3332 = vadd.f32 %v3306, %v3324
        %v3333 = vmax.f32 %v3329, 0.0
        %v3334 = vmax.f32 %v3330, 0.0
        %v3335 = vmax.f32 %v3331, 0.0
        %v3336 = vmax.f32 %v3332, 0.0
        %v3337 = vld [vmem:[%s492] sm:$0xff]
        %v3338 = vld [vmem:[%s492 + $0x8] sm:$0xff]
        %v3339 = vld [vmem:[%s492 + $0x10] sm:$0xff]
        %v3340 = vld [vmem:[%s492 + $0x18] sm:$0xff]
        %v3341 = vld [vmem:[%s492 + $0x20] sm:$0xff]
        %v3342 = vld [vmem:[%s492 + $0x28] sm:$0xff]
        %v3343 = vld [vmem:[%s492 + $0x30] sm:$0xff]
        %v3344 = vld [vmem:[%s492 + $0x38] sm:$0xff]
        %v3345 = vld [vmem:[%s492 + $0x40] sm:$0xff]
        %v3346 = vld [vmem:[%s492 + $0x48] sm:$0xff]
        %v3347 = vld [vmem:[%s492 + $0x50] sm:$0xff]
        %v3348 = vld [vmem:[%s492 + $0x58] sm:$0xff]
        %v3349 = vld [vmem:[%s492 + $0x60] sm:$0xff]
        %v3350 = vld [vmem:[%s492 + $0x68] sm:$0xff]
        %v3351 = vld [vmem:[%s492 + $0x70] sm:$0xff]
        %v3352 = vld [vmem:[%s492 + $0x78] sm:$0xff]
        %v3353 = vld [vmem:[%s492 + $0x80] sm:$0xff]
        %v3354 = vld [vmem:[%s492 + $0x88] sm:$0xff]
        %v3355 = vld [vmem:[%s492 + $0x90] sm:$0xff]
        %v3356 = vld [vmem:[%s492 + $0x98] sm:$0xff]
        %v3357 = vld [vmem:[%s492 + $0xa0] sm:$0xff]
        %v3358 = vld [vmem:[%s492 + $0xa8] sm:$0xff]
        %v3359 = vld [vmem:[%s492 + $0xb0] sm:$0xff]
        %v3360 = vld [vmem:[%s492 + $0xb8] sm:$0xff]
        %v3361 = vld [vmem:[%s492 + $0xc0] sm:$0xff]
        %v3362 = vld [vmem:[%s492 + $0xc8] sm:$0xff]
        %v3363 = vld [vmem:[%s492 + $0xd0] sm:$0xff]
        %v3364 = vld [vmem:[%s492 + $0xd8] sm:$0xff]
        %v3365 = vld [vmem:[%s492 + $0xe0] sm:$0xff]
        %v3366 = vld [vmem:[%s492 + $0xe8] sm:$0xff]
        %v3367 = vld [vmem:[%s492 + $0xf0] sm:$0xff]
        %v3368 = vld [vmem:[%s492 + $0xf8] sm:$0xff]
        %v3369 = vld [vmem:[%s492 + $0x100] sm:$0xff]
        %v3370 = vld [vmem:[%s492 + $0x108] sm:$0xff]
        %v3371 = vld [vmem:[%s492 + $0x110] sm:$0xff]
        %v3372 = vld [vmem:[%s492 + $0x118] sm:$0xff]
        %v3373 = vld [vmem:[%s492 + $0x120] sm:$0xff]
        %v3374 = vld [vmem:[%s492 + $0x128] sm:$0xff]
        %v3375 = vld [vmem:[%s492 + $0x130] sm:$0xff]
        %v3376 = vld [vmem:[%s492 + $0x138] sm:$0xff]
        %v3377 = vld [vmem:[%s492 + $0x140] sm:$0xff]
        %v3378 = vld [vmem:[%s492 + $0x148] sm:$0xff]
        %v3379 = vld [vmem:[%s492 + $0x150] sm:$0xff]
        %v3380 = vld [vmem:[%s492 + $0x158] sm:$0xff]
        %v3381 = vld [vmem:[%s492 + $0x160] sm:$0xff]
        %v3382 = vld [vmem:[%s492 + $0x168] sm:$0xff]
        %v3383 = vld [vmem:[%s492 + $0x170] sm:$0xff]
        %v3384 = vld [vmem:[%s492 + $0x178] sm:$0xff]
        %v3385 = vld [vmem:[%s492 + $0x180] sm:$0xff]
        %v3386 = vld [vmem:[%s492 + $0x188] sm:$0xff]
        %v3387 = vld [vmem:[%s492 + $0x190] sm:$0xff]
        %v3388 = vld [vmem:[%s492 + $0x198] sm:$0xff]
        %v3389 = vld [vmem:[%s492 + $0x1a0] sm:$0xff]
        %v3390 = vld [vmem:[%s492 + $0x1a8] sm:$0xff]
        %v3391 = vld [vmem:[%s492 + $0x1b0] sm:$0xff]
        %v3392 = vld [vmem:[%s492 + $0x1b8] sm:$0xff]
        %v3393 = vld [vmem:[%s492 + $0x1c0] sm:$0xff]
        %v3394 = vld [vmem:[%s492 + $0x1c8] sm:$0xff]
        %v3395 = vld [vmem:[%s492 + $0x1d0] sm:$0xff]
        %v3396 = vld [vmem:[%s492 + $0x1d8] sm:$0xff]
        %v3397 = vld [vmem:[%s492 + $0x1e0] sm:$0xff]
        %v3398 = vld [vmem:[%s492 + $0x1e8] sm:$0xff]
        %v3399 = vld [vmem:[%s492 + $0x1f0] sm:$0xff]
        %v3400 = vld [vmem:[%s492 + $0x1f8] sm:$0xff]
        %v3401 = vld [vmem:[%s425 + $0x20] sm:$0xff]
        %v3402 = vld [vmem:[%s425 + $0x28] sm:$0xff]
        %v3403 = vld [vmem:[%s425 + $0x30] sm:$0xff]
        %v3404 = vld [vmem:[%s425 + $0x38] sm:$0xff]
        %v3405 = vld [vmem:[%s425 + $0xa0] sm:$0xff]
        %v3406 = vld [vmem:[%s425 + $0xa8] sm:$0xff]
        %v3407 = vld [vmem:[%s425 + $0xb0] sm:$0xff]
        %v3408 = vld [vmem:[%s425 + $0xb8] sm:$0xff]
        %3409 = vmatprep.subr.mxu0 0.0
        %3410 = vmatpush1.msra.mxu0 0.0
        %3411 = vmatprep.subr.mxu0 0.0
        %3412 = vmatpush1.msra.mxu0 0.0
        %3413 = vmatprep.subr.mxu0 0.0
        %3414 = vmatpush1.msra.mxu0 0.0
        %3415 = vmatprep.subr.mxu0 0.0
        %3416 = vmatpush1.msra.mxu0 0.0
        %3417 = vmatprep.subr.mxu0 0.0
        %3418 = vmatpush1.msra.mxu0 0.0
        %3419 = vmatprep.subr.mxu0 0.0
        %3420 = vmatpush1.msra.mxu0 0.0
        %3421 = vmatprep.subr.mxu0 0.0
        %3422 = vmatpush1.msra.mxu0 0.0
        %3423 = vmatprep.subr.mxu0 0.0
        %3424 = vmatpush1.msra.mxu0 0.0
        %3425 = vmatprep.subr.mxu0 0.0
        %3426 = vmatpush1.msra.mxu0 0.0
        %3427 = vmatprep.subr.mxu0 0.0
        %3428 = vmatpush1.msra.mxu0 0.0
        %3429 = vmatprep.subr.mxu0 0.0
        %3430 = vmatpush1.msra.mxu0 0.0
        %3431 = vmatprep.subr.mxu0 0.0
        %3432 = vmatpush1.msra.mxu0 0.0
        %3433 = vmatprep.subr.mxu0 0.0
        %3434 = vmatpush1.msra.mxu0 0.0
        %3435 = vmatprep.subr.mxu0 0.0
        %3436 = vmatpush1.msra.mxu0 0.0
        %3437 = vmatprep.subr.mxu0 0.0
        %3438 = vmatpush1.msra.mxu0 0.0
        %3439 = vmatprep.subr.mxu0 %v3406
        %3440 = vmatpush1.msra.mxu0 %v3405
        %3441 = vmatprep.subr.mxu0 0.0
        %3442 = vmatpush2.msra.mxu0 0.0
        %3443 = vmatprep.subr.mxu0 0.0
        %3444 = vmatpush2.msra.mxu0 0.0
        %3445 = vmatprep.subr.mxu0 0.0
        %3446 = vmatpush2.msra.mxu0 0.0
        %3447 = vmatprep.subr.mxu0 0.0
        %3448 = vmatpush2.msra.mxu0 0.0
        %3449 = vmatprep.subr.mxu0 0.0
        %3450 = vmatpush2.msra.mxu0 0.0
        %3451 = vmatprep.subr.mxu0 0.0
        %3452 = vmatpush2.msra.mxu0 0.0
        %3453 = vmatprep.subr.mxu0 0.0
        %3454 = vmatpush2.msra.mxu0 0.0
        %3455 = vmatprep.subr.mxu0 0.0
        %3456 = vmatpush2.msra.mxu0 0.0
        %3457 = vmatprep.subr.mxu0 0.0
        %3458 = vmatpush2.msra.mxu0 0.0
        %3459 = vmatprep.subr.mxu0 0.0
        %3460 = vmatpush2.msra.mxu0 0.0
        %3461 = vmatprep.subr.mxu0 0.0
        %3462 = vmatpush2.msra.mxu0 0.0
        %3463 = vmatprep.subr.mxu0 0.0
        %3464 = vmatpush2.msra.mxu0 0.0
        %3465 = vmatprep.subr.mxu0 0.0
        %3466 = vmatpush2.msra.mxu0 0.0
        %3467 = vmatprep.subr.mxu0 0.0
        %3468 = vmatpush2.msra.mxu0 0.0
        %3469 = vmatprep.subr.mxu0 0.0
        %3470 = vmatpush2.msra.mxu0 0.0
        %3471 = vmatprep.subr.mxu0 0.0
        %3472 = vmatpush2.msra.mxu0 0.0
        %3473 = vmatprep.mubr.f32.mxu0 0.0
        %3474 = vmatmul.mubr.f32.gmra.mxu0 %v2727
        %v3475 = vpop.f32.mrf.mxu0
        %v3476 = vadd.f32 0.0, %v3475
        %v3477 = vpop.f32.mrf.mxu0
        %v3478 = vadd.f32 0.0, %v3477
        %3479 = vdwg.mxu0
        %3480 = vmatprep.subr.mxu0 0.0
        %3481 = vmatpush1.msra.mxu0 0.0
        %3482 = vmatprep.subr.mxu0 0.0
        %3483 = vmatpush1.msra.mxu0 0.0
        %3484 = vmatprep.subr.mxu0 0.0
        %3485 = vmatpush1.msra.mxu0 0.0
        %3486 = vmatprep.subr.mxu0 0.0
        %3487 = vmatpush1.msra.mxu0 0.0
        %3488 = vmatprep.subr.mxu0 0.0
        %3489 = vmatpush1.msra.mxu0 0.0
        %3490 = vmatprep.subr.mxu0 0.0
        %3491 = vmatpush1.msra.mxu0 0.0
        %3492 = vmatprep.subr.mxu0 0.0
        %3493 = vmatpush1.msra.mxu0 0.0
        %3494 = vmatprep.subr.mxu0 0.0
        %3495 = vmatpush1.msra.mxu0 0.0
        %3496 = vmatprep.subr.mxu0 0.0
        %3497 = vmatpush1.msra.mxu0 0.0
        %3498 = vmatprep.subr.mxu0 0.0
        %3499 = vmatpush1.msra.mxu0 0.0
        %3500 = vmatprep.subr.mxu0 0.0
        %3501 = vmatpush1.msra.mxu0 0.0
        %3502 = vmatprep.subr.mxu0 0.0
        %3503 = vmatpush1.msra.mxu0 0.0
        %3504 = vmatprep.subr.mxu0 0.0
        %3505 = vmatpush1.msra.mxu0 0.0
        %3506 = vmatprep.subr.mxu0 0.0
        %3507 = vmatpush1.msra.mxu0 0.0
        %3508 = vmatprep.subr.mxu0 0.0
        %3509 = vmatpush1.msra.mxu0 0.0
        %3510 = vmatprep.subr.mxu0 %v3408
        %3511 = vmatpush1.msra.mxu0 %v3407
        %3512 = vmatprep.subr.mxu0 0.0
        %3513 = vmatpush2.msra.mxu0 0.0
        %3514 = vmatprep.subr.mxu0 0.0
        %3515 = vmatpush2.msra.mxu0 0.0
        %3516 = vmatprep.subr.mxu0 0.0
        %3517 = vmatpush2.msra.mxu0 0.0
        %3518 = vmatprep.subr.mxu0 0.0
        %3519 = vmatpush2.msra.mxu0 0.0
        %3520 = vmatprep.subr.mxu0 0.0
        %3521 = vmatpush2.msra.mxu0 0.0
        %3522 = vmatprep.subr.mxu0 0.0
        %3523 = vmatpush2.msra.mxu0 0.0
        %3524 = vmatprep.subr.mxu0 0.0
        %3525 = vmatpush2.msra.mxu0 0.0
        %3526 = vmatprep.subr.mxu0 0.0
        %3527 = vmatpush2.msra.mxu0 0.0
        %3528 = vmatprep.subr.mxu0 0.0
        %3529 = vmatpush2.msra.mxu0 0.0
        %3530 = vmatprep.subr.mxu0 0.0
        %3531 = vmatpush2.msra.mxu0 0.0
        %3532 = vmatprep.subr.mxu0 0.0
        %3533 = vmatpush2.msra.mxu0 0.0
        %3534 = vmatprep.subr.mxu0 0.0
        %3535 = vmatpush2.msra.mxu0 0.0
        %3536 = vmatprep.subr.mxu0 0.0
        %3537 = vmatpush2.msra.mxu0 0.0
        %3538 = vmatprep.subr.mxu0 0.0
        %3539 = vmatpush2.msra.mxu0 0.0
        %3540 = vmatprep.subr.mxu0 0.0
        %3541 = vmatpush2.msra.mxu0 0.0
        %3542 = vmatprep.subr.mxu0 0.0
        %3543 = vmatpush2.msra.mxu0 0.0
        %3544 = vmatprep.mubr.f32.mxu0 0.0
        %3545 = vmatmul.mubr.f32.gmra.mxu0 %v2727
        %v3546 = vpop.f32.mrf.mxu0
        %v3547 = vadd.f32 0.0, %v3546
        %v3548 = vpop.f32.mrf.mxu0
        %v3549 = vadd.f32 0.0, %v3548
        %3550 = vdwg.mxu0
        %3551 = vmatprep.subr.mxu0 0.0
        %3552 = vmatpush1.msra.mxu0 0.0
        %3553 = vmatprep.subr.mxu0 0.0
        %3554 = vmatpush1.msra.mxu0 0.0
        %3555 = vmatprep.subr.mxu0 0.0
        %3556 = vmatpush1.msra.mxu0 0.0
        %3557 = vmatprep.subr.mxu0 0.0
        %3558 = vmatpush1.msra.mxu0 0.0
        %3559 = vmatprep.subr.mxu0 0.0
        %3560 = vmatpush1.msra.mxu0 0.0
        %3561 = vmatprep.subr.mxu0 0.0
        %3562 = vmatpush1.msra.mxu0 0.0
        %3563 = vmatprep.subr.mxu0 0.0
        %3564 = vmatpush1.msra.mxu0 0.0
        %3565 = vmatprep.subr.mxu0 0.0
        %3566 = vmatpush1.msra.mxu0 0.0
        %3567 = vmatprep.subr.mxu0 0.0
        %3568 = vmatpush1.msra.mxu0 0.0
        %3569 = vmatprep.subr.mxu0 0.0
        %3570 = vmatpush1.msra.mxu0 0.0
        %3571 = vmatprep.subr.mxu0 0.0
        %3572 = vmatpush1.msra.mxu0 0.0
        %3573 = vmatprep.subr.mxu0 0.0
        %3574 = vmatpush1.msra.mxu0 0.0
        %3575 = vmatprep.subr.mxu0 0.0
        %3576 = vmatpush1.msra.mxu0 0.0
        %3577 = vmatprep.subr.mxu0 0.0
        %3578 = vmatpush1.msra.mxu0 0.0
        %3579 = vmatprep.subr.mxu0 0.0
        %3580 = vmatpush1.msra.mxu0 0.0
        %3581 = vmatprep.subr.mxu0 %v3402
        %3582 = vmatpush1.msra.mxu0 %v3401
        %3583 = vmatprep.subr.mxu0 0.0
        %3584 = vmatpush2.msra.mxu0 0.0
        %3585 = vmatprep.subr.mxu0 0.0
        %3586 = vmatpush2.msra.mxu0 0.0
        %3587 = vmatprep.subr.mxu0 0.0
        %3588 = vmatpush2.msra.mxu0 0.0
        %3589 = vmatprep.subr.mxu0 0.0
        %3590 = vmatpush2.msra.mxu0 0.0
        %3591 = vmatprep.subr.mxu0 0.0
        %3592 = vmatpush2.msra.mxu0 0.0
        %3593 = vmatprep.subr.mxu0 0.0
        %3594 = vmatpush2.msra.mxu0 0.0
        %3595 = vmatprep.subr.mxu0 0.0
        %3596 = vmatpush2.msra.mxu0 0.0
        %3597 = vmatprep.subr.mxu0 0.0
        %3598 = vmatpush2.msra.mxu0 0.0
        %3599 = vmatprep.subr.mxu0 0.0
        %3600 = vmatpush2.msra.mxu0 0.0
        %3601 = vmatprep.subr.mxu0 0.0
        %3602 = vmatpush2.msra.mxu0 0.0
        %3603 = vmatprep.subr.mxu0 0.0
        %3604 = vmatpush2.msra.mxu0 0.0
        %3605 = vmatprep.subr.mxu0 0.0
        %3606 = vmatpush2.msra.mxu0 0.0
        %3607 = vmatprep.subr.mxu0 0.0
        %3608 = vmatpush2.msra.mxu0 0.0
        %3609 = vmatprep.subr.mxu0 0.0
        %3610 = vmatpush2.msra.mxu0 0.0
        %3611 = vmatprep.subr.mxu0 0.0
        %3612 = vmatpush2.msra.mxu0 0.0
        %3613 = vmatprep.subr.mxu0 0.0
        %3614 = vmatpush2.msra.mxu0 0.0
        %3615 = vmatprep.mubr.f32.mxu0 0.0
        %3616 = vmatmul.mubr.f32.gmra.mxu0 %v2872
        %v3617 = vpop.f32.mrf.mxu0
        %v3618 = vadd.f32 %v3476, %v3617
        %v3619 = vpop.f32.mrf.mxu0
        %v3620 = vadd.f32 %v3478, %v3619
        %3621 = vdwg.mxu0
        %3622 = vmatprep.subr.mxu0 0.0
        %3623 = vmatpush1.msra.mxu0 0.0
        %3624 = vmatprep.subr.mxu0 0.0
        %3625 = vmatpush1.msra.mxu0 0.0
        %3626 = vmatprep.subr.mxu0 0.0
        %3627 = vmatpush1.msra.mxu0 0.0
        %3628 = vmatprep.subr.mxu0 0.0
        %3629 = vmatpush1.msra.mxu0 0.0
        %3630 = vmatprep.subr.mxu0 0.0
        %3631 = vmatpush1.msra.mxu0 0.0
        %3632 = vmatprep.subr.mxu0 0.0
        %3633 = vmatpush1.msra.mxu0 0.0
        %3634 = vmatprep.subr.mxu0 0.0
        %3635 = vmatpush1.msra.mxu0 0.0
        %3636 = vmatprep.subr.mxu0 0.0
        %3637 = vmatpush1.msra.mxu0 0.0
        %3638 = vmatprep.subr.mxu0 0.0
        %3639 = vmatpush1.msra.mxu0 0.0
        %3640 = vmatprep.subr.mxu0 0.0
        %3641 = vmatpush1.msra.mxu0 0.0
        %3642 = vmatprep.subr.mxu0 0.0
        %3643 = vmatpush1.msra.mxu0 0.0
        %3644 = vmatprep.subr.mxu0 0.0
        %3645 = vmatpush1.msra.mxu0 0.0
        %3646 = vmatprep.subr.mxu0 0.0
        %3647 = vmatpush1.msra.mxu0 0.0
        %3648 = vmatprep.subr.mxu0 0.0
        %3649 = vmatpush1.msra.mxu0 0.0
        %3650 = vmatprep.subr.mxu0 0.0
        %3651 = vmatpush1.msra.mxu0 0.0
        %3652 = vmatprep.subr.mxu0 %v3404
        %3653 = vmatpush1.msra.mxu0 %v3403
        %3654 = vmatprep.subr.mxu0 0.0
        %3655 = vmatpush2.msra.mxu0 0.0
        %3656 = vmatprep.subr.mxu0 0.0
        %3657 = vmatpush2.msra.mxu0 0.0
        %3658 = vmatprep.subr.mxu0 0.0
        %3659 = vmatpush2.msra.mxu0 0.0
        %3660 = vmatprep.subr.mxu0 0.0
        %3661 = vmatpush2.msra.mxu0 0.0
        %3662 = vmatprep.subr.mxu0 0.0
        %3663 = vmatpush2.msra.mxu0 0.0
        %3664 = vmatprep.subr.mxu0 0.0
        %3665 = vmatpush2.msra.mxu0 0.0
        %3666 = vmatprep.subr.mxu0 0.0
        %3667 = vmatpush2.msra.mxu0 0.0
        %3668 = vmatprep.subr.mxu0 0.0
        %3669 = vmatpush2.msra.mxu0 0.0
        %3670 = vmatprep.subr.mxu0 0.0
        %3671 = vmatpush2.msra.mxu0 0.0
        %3672 = vmatprep.subr.mxu0 0.0
        %3673 = vmatpush2.msra.mxu0 0.0
        %3674 = vmatprep.subr.mxu0 0.0
        %3675 = vmatpush2.msra.mxu0 0.0
        %3676 = vmatprep.subr.mxu0 0.0
        %3677 = vmatpush2.msra.mxu0 0.0
        %3678 = vmatprep.subr.mxu0 0.0
        %3679 = vmatpush2.msra.mxu0 0.0
        %3680 = vmatprep.subr.mxu0 0.0
        %3681 = vmatpush2.msra.mxu0 0.0
        %3682 = vmatprep.subr.mxu0 0.0
        %3683 = vmatpush2.msra.mxu0 0.0
        %3684 = vmatprep.subr.mxu0 0.0
        %3685 = vmatpush2.msra.mxu0 0.0
        %3686 = vmatprep.mubr.f32.mxu0 0.0
        %3687 = vmatmul.mubr.f32.gmra.mxu0 %v2872
        %v3688 = vpop.f32.mrf.mxu0
        %v3689 = vadd.f32 %v3547, %v3688
        %v3690 = vpop.f32.mrf.mxu0
        %v3691 = vadd.f32 %v3549, %v3690
        %3692 = vdwg.mxu0
        %v3693 = vld [vmem:[%s425 + $0x120] sm:$0xff]
        %v3694 = vld [vmem:[%s425 + $0x128] sm:$0xff]
        %v3695 = vld [vmem:[%s425 + $0x130] sm:$0xff]
        %v3696 = vld [vmem:[%s425 + $0x138] sm:$0xff]
        %3697 = vmatprep.subr.mxu0 0.0
        %3698 = vmatpush1.msra.mxu0 0.0
        %3699 = vmatprep.subr.mxu0 0.0
        %3700 = vmatpush1.msra.mxu0 0.0
        %3701 = vmatprep.subr.mxu0 0.0
        %3702 = vmatpush1.msra.mxu0 0.0
        %3703 = vmatprep.subr.mxu0 0.0
        %3704 = vmatpush1.msra.mxu0 0.0
        %3705 = vmatprep.subr.mxu0 0.0
        %3706 = vmatpush1.msra.mxu0 0.0
        %3707 = vmatprep.subr.mxu0 0.0
        %3708 = vmatpush1.msra.mxu0 0.0
        %3709 = vmatprep.subr.mxu0 0.0
        %3710 = vmatpush1.msra.mxu0 0.0
        %3711 = vmatprep.subr.mxu0 0.0
        %3712 = vmatpush1.msra.mxu0 0.0
        %3713 = vmatprep.subr.mxu0 0.0
        %3714 = vmatpush1.msra.mxu0 0.0
        %3715 = vmatprep.subr.mxu0 0.0
        %3716 = vmatpush1.msra.mxu0 0.0
        %3717 = vmatprep.subr.mxu0 0.0
        %3718 = vmatpush1.msra.mxu0 0.0
        %3719 = vmatprep.subr.mxu0 0.0
        %3720 = vmatpush1.msra.mxu0 0.0
        %3721 = vmatprep.subr.mxu0 0.0
        %3722 = vmatpush1.msra.mxu0 0.0
        %3723 = vmatprep.subr.mxu0 0.0
        %3724 = vmatpush1.msra.mxu0 0.0
        %3725 = vmatprep.subr.mxu0 0.0
        %3726 = vmatpush1.msra.mxu0 0.0
        %3727 = vmatprep.subr.mxu0 %v3694
        %3728 = vmatpush1.msra.mxu0 %v3693
        %3729 = vmatprep.subr.mxu0 0.0
        %3730 = vmatpush2.msra.mxu0 0.0
        %3731 = vmatprep.subr.mxu0 0.0
        %3732 = vmatpush2.msra.mxu0 0.0
        %3733 = vmatprep.subr.mxu0 0.0
        %3734 = vmatpush2.msra.mxu0 0.0
        %3735 = vmatprep.subr.mxu0 0.0
        %3736 = vmatpush2.msra.mxu0 0.0
        %3737 = vmatprep.subr.mxu0 0.0
        %3738 = vmatpush2.msra.mxu0 0.0
        %3739 = vmatprep.subr.mxu0 0.0
        %3740 = vmatpush2.msra.mxu0 0.0
        %3741 = vmatprep.subr.mxu0 0.0
        %3742 = vmatpush2.msra.mxu0 0.0
        %3743 = vmatprep.subr.mxu0 0.0
        %3744 = vmatpush2.msra.mxu0 0.0
        %3745 = vmatprep.subr.mxu0 0.0
        %3746 = vmatpush2.msra.mxu0 0.0
        %3747 = vmatprep.subr.mxu0 0.0
        %3748 = vmatpush2.msra.mxu0 0.0
        %3749 = vmatprep.subr.mxu0 0.0
        %3750 = vmatpush2.msra.mxu0 0.0
        %3751 = vmatprep.subr.mxu0 0.0
        %3752 = vmatpush2.msra.mxu0 0.0
        %3753 = vmatprep.subr.mxu0 0.0
        %3754 = vmatpush2.msra.mxu0 0.0
        %3755 = vmatprep.subr.mxu0 0.0
        %3756 = vmatpush2.msra.mxu0 0.0
        %3757 = vmatprep.subr.mxu0 0.0
        %3758 = vmatpush2.msra.mxu0 0.0
        %3759 = vmatprep.subr.mxu0 0.0
        %3760 = vmatpush2.msra.mxu0 0.0
        %3761 = vmatprep.mubr.f32.mxu0 0.0
        %3762 = vmatmul.mubr.f32.gmra.mxu0 %v3021
        %v3763 = vpop.f32.mrf.mxu0
        %v3764 = vadd.f32 0.0, %v3763
        %v3765 = vpop.f32.mrf.mxu0
        %v3766 = vadd.f32 0.0, %v3765
        %3767 = vdwg.mxu0
        %3768 = vmatprep.subr.mxu0 0.0
        %3769 = vmatpush1.msra.mxu0 0.0
        %3770 = vmatprep.subr.mxu0 0.0
        %3771 = vmatpush1.msra.mxu0 0.0
        %3772 = vmatprep.subr.mxu0 0.0
        %3773 = vmatpush1.msra.mxu0 0.0
        %3774 = vmatprep.subr.mxu0 0.0
        %3775 = vmatpush1.msra.mxu0 0.0
        %3776 = vmatprep.subr.mxu0 0.0
        %3777 = vmatpush1.msra.mxu0 0.0
        %3778 = vmatprep.subr.mxu0 0.0
        %3779 = vmatpush1.msra.mxu0 0.0
        %3780 = vmatprep.subr.mxu0 0.0
        %3781 = vmatpush1.msra.mxu0 0.0
        %3782 = vmatprep.subr.mxu0 0.0
        %3783 = vmatpush1.msra.mxu0 0.0
        %3784 = vmatprep.subr.mxu0 0.0
        %3785 = vmatpush1.msra.mxu0 0.0
        %3786 = vmatprep.subr.mxu0 0.0
        %3787 = vmatpush1.msra.mxu0 0.0
        %3788 = vmatprep.subr.mxu0 0.0
        %3789 = vmatpush1.msra.mxu0 0.0
        %3790 = vmatprep.subr.mxu0 0.0
        %3791 = vmatpush1.msra.mxu0 0.0
        %3792 = vmatprep.subr.mxu0 0.0
        %3793 = vmatpush1.msra.mxu0 0.0
        %3794 = vmatprep.subr.mxu0 0.0
        %3795 = vmatpush1.msra.mxu0 0.0
        %3796 = vmatprep.subr.mxu0 0.0
        %3797 = vmatpush1.msra.mxu0 0.0
        %3798 = vmatprep.subr.mxu0 %v3696
        %3799 = vmatpush1.msra.mxu0 %v3695
        %3800 = vmatprep.subr.mxu0 0.0
        %3801 = vmatpush2.msra.mxu0 0.0
        %3802 = vmatprep.subr.mxu0 0.0
        %3803 = vmatpush2.msra.mxu0 0.0
        %3804 = vmatprep.subr.mxu0 0.0
        %3805 = vmatpush2.msra.mxu0 0.0
        %3806 = vmatprep.subr.mxu0 0.0
        %3807 = vmatpush2.msra.mxu0 0.0
        %3808 = vmatprep.subr.mxu0 0.0
        %3809 = vmatpush2.msra.mxu0 0.0
        %3810 = vmatprep.subr.mxu0 0.0
        %3811 = vmatpush2.msra.mxu0 0.0
        %3812 = vmatprep.subr.mxu0 0.0
        %3813 = vmatpush2.msra.mxu0 0.0
        %3814 = vmatprep.subr.mxu0 0.0
        %3815 = vmatpush2.msra.mxu0 0.0
        %3816 = vmatprep.subr.mxu0 0.0
        %3817 = vmatpush2.msra.mxu0 0.0
        %3818 = vmatprep.subr.mxu0 0.0
        %3819 = vmatpush2.msra.mxu0 0.0
        %3820 = vmatprep.subr.mxu0 0.0
        %3821 = vmatpush2.msra.mxu0 0.0
        %3822 = vmatprep.subr.mxu0 0.0
        %3823 = vmatpush2.msra.mxu0 0.0
        %3824 = vmatprep.subr.mxu0 0.0
        %3825 = vmatpush2.msra.mxu0 0.0
        %3826 = vmatprep.subr.mxu0 0.0
        %3827 = vmatpush2.msra.mxu0 0.0
        %3828 = vmatprep.subr.mxu0 0.0
        %3829 = vmatpush2.msra.mxu0 0.0
        %3830 = vmatprep.subr.mxu0 0.0
        %3831 = vmatpush2.msra.mxu0 0.0
        %3832 = vmatprep.mubr.f32.mxu0 0.0
        %3833 = vmatmul.mubr.f32.gmra.mxu0 %v3021
        %v3834 = vpop.f32.mrf.mxu0
        %v3835 = vadd.f32 0.0, %v3834
        %v3836 = vpop.f32.mrf.mxu0
        %v3837 = vadd.f32 0.0, %v3836
        %3838 = vdwg.mxu0
        %v3839 = vadd.f32 %v3618, %v3764
        %v3840 = vadd.f32 %v3620, %v3766
        %v3841 = vadd.f32 %v3689, %v3835
        %v3842 = vadd.f32 %v3691, %v3837
        %v3843 = vld [vmem:[%s476 + $0x4] sm:$0xf]
        %v3845 = vlaneseq
        %v3846 = vshrl.u32 %v3845, 7
        %v3847 = vsub.s32 0, %v3846
        %v3848 = vrot.slane %v3843, %v3847
        %v3849 = vlaneseq
        %v3850 = vshrl.u32 %v3849, 7
        %v3851 = vsub.s32 1, %v3850
        %v3852 = vrot.slane %v3843, %v3851
        %v3853 = vlaneseq
        %v3854 = vshrl.u32 %v3853, 7
        %v3855 = vsub.s32 2, %v3854
        %v3856 = vrot.slane %v3843, %v3855
        %v3857 = vlaneseq
        %v3858 = vshrl.u32 %v3857, 7
        %v3859 = vsub.s32 3, %v3858
        %v3860 = vrot.slane %v3843, %v3859
        %v3865 = vadd.f32 %v3839, %v3848
        %v3866 = vadd.f32 %v3840, %v3852
        %v3867 = vadd.f32 %v3841, %v3856
        %v3868 = vadd.f32 %v3842, %v3860
        %v3869 = vsel %vm3195, %v3865, 0.0
        %v3870 = vrot.slane %v3869, 4
        %v3871 = vadd.f32 %v3869, %v3870
        %v3872 = vrot.slane %v3871, 2
        %v3873 = vadd.f32 %v3871, %v3872
        %v3874 = vrot.slane %v3873, 1
        %v3875 = vadd.f32 %v3873, %v3874
        %v3876 = vsel %vm3195, %v3866, 0.0
        %v3877 = vrot.slane %v3876, 4
        %v3878 = vadd.f32 %v3876, %v3877
        %v3879 = vrot.slane %v3878, 2
        %v3880 = vadd.f32 %v3878, %v3879
        %v3881 = vrot.slane %v3880, 1
        %v3882 = vadd.f32 %v3880, %v3881
        %v3883 = vsel %vm3195, %v3867, 0.0
        %v3884 = vrot.slane %v3883, 4
        %v3885 = vadd.f32 %v3883, %v3884
        %v3886 = vrot.slane %v3885, 2
        %v3887 = vadd.f32 %v3885, %v3886
        %v3888 = vrot.slane %v3887, 1
        %v3889 = vadd.f32 %v3887, %v3888
        %v3890 = vsel %vm3195, %v3868, 0.0
        %v3891 = vrot.slane %v3890, 4
        %v3892 = vadd.f32 %v3890, %v3891
        %v3893 = vrot.slane %v3892, 2
        %v3894 = vadd.f32 %v3892, %v3893
        %v3895 = vrot.slane %v3894, 1
        %v3896 = vadd.f32 %v3894, %v3895
        %v3897 = vmul.f32 %v3875, %v3224
        %v3898 = vmul.f32 %v3882, %v3224
        %v3899 = vmul.f32 %v3889, %v3224
        %v3900 = vmul.f32 %v3896, %v3224
        %v3901 = vsub.f32 %v3865, %v3897
        %v3902 = vsub.f32 %v3866, %v3898
        %v3903 = vsub.f32 %v3867, %v3899
        %v3904 = vsub.f32 %v3868, %v3900
        %v3905 = vmul.f32 %v3901, %v3901
        %v3906 = vmul.f32 %v3902, %v3902
        %v3907 = vmul.f32 %v3903, %v3903
        %v3908 = vmul.f32 %v3904, %v3904
        %v3909 = vsel %vm3195, %v3905, 0.0
        %v3910 = vrot.slane %v3909, 4
        %v3911 = vadd.f32 %v3909, %v3910
        %v3912 = vrot.slane %v3911, 2
        %v3913 = vadd.f32 %v3911, %v3912
        %v3914 = vrot.slane %v3913, 1
        %v3915 = vadd.f32 %v3913, %v3914
        %v3916 = vsel %vm3195, %v3906, 0.0
        %v3917 = vrot.slane %v3916, 4
        %v3918 = vadd.f32 %v3916, %v3917
        %v3919 = vrot.slane %v3918, 2
        %v3920 = vadd.f32 %v3918, %v3919
        %v3921 = vrot.slane %v3920, 1
        %v3922 = vadd.f32 %v3920, %v3921
        %v3923 = vsel %vm3195, %v3907, 0.0
        %v3924 = vrot.slane %v3923, 4
        %v3925 = vadd.f32 %v3923, %v3924
        %v3926 = vrot.slane %v3925, 2
        %v3927 = vadd.f32 %v3925, %v3926
        %v3928 = vrot.slane %v3927, 1
        %v3929 = vadd.f32 %v3927, %v3928
        %v3930 = vsel %vm3195, %v3908, 0.0
        %v3931 = vrot.slane %v3930, 4
        %v3932 = vadd.f32 %v3930, %v3931
        %v3933 = vrot.slane %v3932, 2
        %v3934 = vadd.f32 %v3932, %v3933
        %v3935 = vrot.slane %v3934, 1
        %v3936 = vadd.f32 %v3934, %v3935
        %v3937 = vmul.f32 %v3915, %v3224
        %v3938 = vmul.f32 %v3922, %v3224
        %v3939 = vmul.f32 %v3929, %v3224
        %v3940 = vmul.f32 %v3936, %v3224
        %v3941 = vadd.f32 %v3937, 1e-05
        %v3942 = vadd.f32 %v3938, 1e-05
        %v3943 = vadd.f32 %v3939, 1e-05
        %v3944 = vadd.f32 %v3940, 1e-05
        %v3945 = vrsqrt.pop %v3941
        %v3946 = vrsqrt.pop %v3942
        %v3947 = vrsqrt.pop %v3943
        %v3948 = vrsqrt.pop %v3944
        %v3949 = vmul.f32 %v3901, %v3945
        %v3950 = vmul.f32 %v3902, %v3946
        %v3951 = vmul.f32 %v3903, %v3947
        %v3952 = vmul.f32 %v3904, %v3948
        %v3953 = vld [vmem:[%s481 + $0x4] sm:$0xf]
        %v3955 = vlaneseq
        %v3956 = vshrl.u32 %v3955, 7
        %v3957 = vsub.s32 0, %v3956
        %v3958 = vrot.slane %v3953, %v3957
        %v3959 = vlaneseq
        %v3960 = vshrl.u32 %v3959, 7
        %v3961 = vsub.s32 1, %v3960
        %v3962 = vrot.slane %v3953, %v3961
        %v3963 = vlaneseq
        %v3964 = vshrl.u32 %v3963, 7
        %v3965 = vsub.s32 2, %v3964
        %v3966 = vrot.slane %v3953, %v3965
        %v3967 = vlaneseq
        %v3968 = vshrl.u32 %v3967, 7
        %v3969 = vsub.s32 3, %v3968
        %v3970 = vrot.slane %v3953, %v3969
        %v3975 = vmul.f32 %v3949, %v3958
        %v3976 = vmul.f32 %v3950, %v3962
        %v3977 = vmul.f32 %v3951, %v3966
        %v3978 = vmul.f32 %v3952, %v3970
        %v3979 = vld [vmem:[%s486 + $0x4] sm:$0xf]
        %v3981 = vlaneseq
        %v3982 = vshrl.u32 %v3981, 7
        %v3983 = vsub.s32 0, %v3982
        %v3984 = vrot.slane %v3979, %v3983
        %v3985 = vlaneseq
        %v3986 = vshrl.u32 %v3985, 7
        %v3987 = vsub.s32 1, %v3986
        %v3988 = vrot.slane %v3979, %v3987
        %v3989 = vlaneseq
        %v3990 = vshrl.u32 %v3989, 7
        %v3991 = vsub.s32 2, %v3990
        %v3992 = vrot.slane %v3979, %v3991
        %v3993 = vlaneseq
        %v3994 = vshrl.u32 %v3993, 7
        %v3995 = vsub.s32 3, %v3994
        %v3996 = vrot.slane %v3979, %v3995
        %v4001 = vadd.f32 %v3975, %v3984
        %v4002 = vadd.f32 %v3976, %v3988
        %v4003 = vadd.f32 %v3977, %v3992
        %v4004 = vadd.f32 %v3978, %v3996
        %v4005 = vmax.f32 %v4001, 0.0
        %v4006 = vmax.f32 %v4002, 0.0
        %v4007 = vmax.f32 %v4003, 0.0
        %v4008 = vmax.f32 %v4004, 0.0
        %v4009 = vld [vmem:[%s492 + $0x200] sm:$0xff]
        %v4010 = vld [vmem:[%s492 + $0x208] sm:$0xff]
        %v4011 = vld [vmem:[%s492 + $0x210] sm:$0xff]
        %v4012 = vld [vmem:[%s492 + $0x218] sm:$0xff]
        %v4013 = vld [vmem:[%s492 + $0x220] sm:$0xff]
        %v4014 = vld [vmem:[%s492 + $0x228] sm:$0xff]
        %v4015 = vld [vmem:[%s492 + $0x230] sm:$0xff]
        %v4016 = vld [vmem:[%s492 + $0x238] sm:$0xff]
        %v4017 = vld [vmem:[%s492 + $0x240] sm:$0xff]
        %v4018 = vld [vmem:[%s492 + $0x248] sm:$0xff]
        %v4019 = vld [vmem:[%s492 + $0x250] sm:$0xff]
        %v4020 = vld [vmem:[%s492 + $0x258] sm:$0xff]
        %v4021 = vld [vmem:[%s492 + $0x260] sm:$0xff]
        %v4022 = vld [vmem:[%s492 + $0x268] sm:$0xff]
        %v4023 = vld [vmem:[%s492 + $0x270] sm:$0xff]
        %v4024 = vld [vmem:[%s492 + $0x278] sm:$0xff]
        %v4025 = vld [vmem:[%s492 + $0x280] sm:$0xff]
        %v4026 = vld [vmem:[%s492 + $0x288] sm:$0xff]
        %v4027 = vld [vmem:[%s492 + $0x290] sm:$0xff]
        %v4028 = vld [vmem:[%s492 + $0x298] sm:$0xff]
        %v4029 = vld [vmem:[%s492 + $0x2a0] sm:$0xff]
        %v4030 = vld [vmem:[%s492 + $0x2a8] sm:$0xff]
        %v4031 = vld [vmem:[%s492 + $0x2b0] sm:$0xff]
        %v4032 = vld [vmem:[%s492 + $0x2b8] sm:$0xff]
        %v4033 = vld [vmem:[%s492 + $0x2c0] sm:$0xff]
        %v4034 = vld [vmem:[%s492 + $0x2c8] sm:$0xff]
        %v4035 = vld [vmem:[%s492 + $0x2d0] sm:$0xff]
        %v4036 = vld [vmem:[%s492 + $0x2d8] sm:$0xff]
        %v4037 = vld [vmem:[%s492 + $0x2e0] sm:$0xff]
        %v4038 = vld [vmem:[%s492 + $0x2e8] sm:$0xff]
        %v4039 = vld [vmem:[%s492 + $0x2f0] sm:$0xff]
        %v4040 = vld [vmem:[%s492 + $0x2f8] sm:$0xff]
        %v4041 = vld [vmem:[%s492 + $0x300] sm:$0xff]
        %v4042 = vld [vmem:[%s492 + $0x308] sm:$0xff]
        %v4043 = vld [vmem:[%s492 + $0x310] sm:$0xff]
        %v4044 = vld [vmem:[%s492 + $0x318] sm:$0xff]
        %v4045 = vld [vmem:[%s492 + $0x320] sm:$0xff]
        %v4046 = vld [vmem:[%s492 + $0x328] sm:$0xff]
        %v4047 = vld [vmem:[%s492 + $0x330] sm:$0xff]
        %v4048 = vld [vmem:[%s492 + $0x338] sm:$0xff]
        %v4049 = vld [vmem:[%s492 + $0x340] sm:$0xff]
        %v4050 = vld [vmem:[%s492 + $0x348] sm:$0xff]
        %v4051 = vld [vmem:[%s492 + $0x350] sm:$0xff]
        %v4052 = vld [vmem:[%s492 + $0x358] sm:$0xff]
        %v4053 = vld [vmem:[%s492 + $0x360] sm:$0xff]
        %v4054 = vld [vmem:[%s492 + $0x368] sm:$0xff]
        %v4055 = vld [vmem:[%s492 + $0x370] sm:$0xff]
        %v4056 = vld [vmem:[%s492 + $0x378] sm:$0xff]
        %v4057 = vld [vmem:[%s492 + $0x380] sm:$0xff]
        %v4058 = vld [vmem:[%s492 + $0x388] sm:$0xff]
        %v4059 = vld [vmem:[%s492 + $0x390] sm:$0xff]
        %v4060 = vld [vmem:[%s492 + $0x398] sm:$0xff]
        %v4061 = vld [vmem:[%s492 + $0x3a0] sm:$0xff]
        %v4062 = vld [vmem:[%s492 + $0x3a8] sm:$0xff]
        %v4063 = vld [vmem:[%s492 + $0x3b0] sm:$0xff]
        %v4064 = vld [vmem:[%s492 + $0x3b8] sm:$0xff]
        %v4065 = vld [vmem:[%s492 + $0x3c0] sm:$0xff]
        %v4066 = vld [vmem:[%s492 + $0x3c8] sm:$0xff]
        %v4067 = vld [vmem:[%s492 + $0x3d0] sm:$0xff]
        %v4068 = vld [vmem:[%s492 + $0x3d8] sm:$0xff]
        %v4069 = vld [vmem:[%s492 + $0x3e0] sm:$0xff]
        %v4070 = vld [vmem:[%s492 + $0x3e8] sm:$0xff]
        %v4071 = vld [vmem:[%s492 + $0x3f0] sm:$0xff]
        %v4072 = vld [vmem:[%s492 + $0x3f8] sm:$0xff]
        %4073 = vmatprep.subr.mxu0 0.0
        %4074 = vmatpush1.msra.mxu0 %v4024
        %4075 = vmatprep.subr.mxu0 0.0
        %4076 = vmatpush1.msra.mxu0 %v4023
        %4077 = vmatprep.subr.mxu0 0.0
        %4078 = vmatpush1.msra.mxu0 %v4022
        %4079 = vmatprep.subr.mxu0 0.0
        %4080 = vmatpush1.msra.mxu0 %v4021
        %4081 = vmatprep.subr.mxu0 0.0
        %4082 = vmatpush1.msra.mxu0 %v4020
        %4083 = vmatprep.subr.mxu0 0.0
        %4084 = vmatpush1.msra.mxu0 %v4019
        %4085 = vmatprep.subr.mxu0 0.0
        %4086 = vmatpush1.msra.mxu0 %v4018
        %4087 = vmatprep.subr.mxu0 0.0
        %4088 = vmatpush1.msra.mxu0 %v4017
        %4089 = vmatprep.subr.mxu0 0.0
        %4090 = vmatpush1.msra.mxu0 %v4016
        %4091 = vmatprep.subr.mxu0 0.0
        %4092 = vmatpush1.msra.mxu0 %v4015
        %4093 = vmatprep.subr.mxu0 0.0
        %4094 = vmatpush1.msra.mxu0 %v4014
        %4095 = vmatprep.subr.mxu0 0.0
        %4096 = vmatpush1.msra.mxu0 %v4013
        %4097 = vmatprep.subr.mxu0 0.0
        %4098 = vmatpush1.msra.mxu0 %v4012
        %4099 = vmatprep.subr.mxu0 0.0
        %4100 = vmatpush1.msra.mxu0 %v4011
        %4101 = vmatprep.subr.mxu0 0.0
        %4102 = vmatpush1.msra.mxu0 %v4010
        %4103 = vmatprep.subr.mxu0 0.0
        %4104 = vmatpush1.msra.mxu0 %v4009
        %4105 = vmatprep.subr.mxu0 0.0
        %4106 = vmatpush2.msra.mxu0 %v4040
        %4107 = vmatprep.subr.mxu0 0.0
        %4108 = vmatpush2.msra.mxu0 %v4039
        %4109 = vmatprep.subr.mxu0 0.0
        %4110 = vmatpush2.msra.mxu0 %v4038
        %4111 = vmatprep.subr.mxu0 0.0
        %4112 = vmatpush2.msra.mxu0 %v4037
        %4113 = vmatprep.subr.mxu0 0.0
        %4114 = vmatpush2.msra.mxu0 %v4036
        %4115 = vmatprep.subr.mxu0 0.0
        %4116 = vmatpush2.msra.mxu0 %v4035
        %4117 = vmatprep.subr.mxu0 0.0
        %4118 = vmatpush2.msra.mxu0 %v4034
        %4119 = vmatprep.subr.mxu0 0.0
        %4120 = vmatpush2.msra.mxu0 %v4033
        %4121 = vmatprep.subr.mxu0 0.0
        %4122 = vmatpush2.msra.mxu0 %v4032
        %4123 = vmatprep.subr.mxu0 0.0
        %4124 = vmatpush2.msra.mxu0 %v4031
        %4125 = vmatprep.subr.mxu0 0.0
        %4126 = vmatpush2.msra.mxu0 %v4030
        %4127 = vmatprep.subr.mxu0 0.0
        %4128 = vmatpush2.msra.mxu0 %v4029
        %4129 = vmatprep.subr.mxu0 0.0
        %4130 = vmatpush2.msra.mxu0 %v4028
        %4131 = vmatprep.subr.mxu0 0.0
        %4132 = vmatpush2.msra.mxu0 %v4027
        %4133 = vmatprep.subr.mxu0 0.0
        %4134 = vmatpush2.msra.mxu0 %v4026
        %4135 = vmatprep.subr.mxu0 0.0
        %4136 = vmatpush2.msra.mxu0 %v4025
        %4137 = vmatprep.mubr.f32.mxu0 %v4006
        %4138 = vmatmul.mubr.f32.gmra.mxu0 %v4005
        %v4139 = vpop.f32.mrf.mxu0
        %v4140 = vadd.f32 0.0, %v4139
        %v4141 = vpop.f32.mrf.mxu0
        %4142 = vdwg.mxu0
        %4143 = vmatprep.subr.mxu0 0.0
        %4144 = vmatpush1.msra.mxu0 %v4056
        %4145 = vmatprep.subr.mxu0 0.0
        %4146 = vmatpush1.msra.mxu0 %v4055
        %4147 = vmatprep.subr.mxu0 0.0
        %4148 = vmatpush1.msra.mxu0 %v4054
        %4149 = vmatprep.subr.mxu0 0.0
        %4150 = vmatpush1.msra.mxu0 %v4053
        %4151 = vmatprep.subr.mxu0 0.0
        %4152 = vmatpush1.msra.mxu0 %v4052
        %4153 = vmatprep.subr.mxu0 0.0
        %4154 = vmatpush1.msra.mxu0 %v4051
        %4155 = vmatprep.subr.mxu0 0.0
        %4156 = vmatpush1.msra.mxu0 %v4050
        %4157 = vmatprep.subr.mxu0 0.0
        %4158 = vmatpush1.msra.mxu0 %v4049
        %4159 = vmatprep.subr.mxu0 0.0
        %4160 = vmatpush1.msra.mxu0 %v4048
        %4161 = vmatprep.subr.mxu0 0.0
        %4162 = vmatpush1.msra.mxu0 %v4047
        %4163 = vmatprep.subr.mxu0 0.0
        %4164 = vmatpush1.msra.mxu0 %v4046
        %4165 = vmatprep.subr.mxu0 0.0
        %4166 = vmatpush1.msra.mxu0 %v4045
        %4167 = vmatprep.subr.mxu0 0.0
        %4168 = vmatpush1.msra.mxu0 %v4044
        %4169 = vmatprep.subr.mxu0 0.0
        %4170 = vmatpush1.msra.mxu0 %v4043
        %4171 = vmatprep.subr.mxu0 0.0
        %4172 = vmatpush1.msra.mxu0 %v4042
        %4173 = vmatprep.subr.mxu0 0.0
        %4174 = vmatpush1.msra.mxu0 %v4041
        %4175 = vmatprep.subr.mxu0 0.0
        %4176 = vmatpush2.msra.mxu0 %v4072
        %4177 = vmatprep.subr.mxu0 0.0
        %4178 = vmatpush2.msra.mxu0 %v4071
        %4179 = vmatprep.subr.mxu0 0.0
        %4180 = vmatpush2.msra.mxu0 %v4070
        %4181 = vmatprep.subr.mxu0 0.0
        %4182 = vmatpush2.msra.mxu0 %v4069
        %4183 = vmatprep.subr.mxu0 0.0
        %4184 = vmatpush2.msra.mxu0 %v4068
        %4185 = vmatprep.subr.mxu0 0.0
        %4186 = vmatpush2.msra.mxu0 %v4067
        %4187 = vmatprep.subr.mxu0 0.0
        %4188 = vmatpush2.msra.mxu0 %v4066
        %4189 = vmatprep.subr.mxu0 0.0
        %4190 = vmatpush2.msra.mxu0 %v4065
        %4191 = vmatprep.subr.mxu0 0.0
        %4192 = vmatpush2.msra.mxu0 %v4064
        %4193 = vmatprep.subr.mxu0 0.0
        %4194 = vmatpush2.msra.mxu0 %v4063
        %4195 = vmatprep.subr.mxu0 0.0
        %4196 = vmatpush2.msra.mxu0 %v4062
        %4197 = vmatprep.subr.mxu0 0.0
        %4198 = vmatpush2.msra.mxu0 %v4061
        %4199 = vmatprep.subr.mxu0 0.0
        %4200 = vmatpush2.msra.mxu0 %v4060
        %4201 = vmatprep.subr.mxu0 0.0
        %4202 = vmatpush2.msra.mxu0 %v4059
        %4203 = vmatprep.subr.mxu0 0.0
        %4204 = vmatpush2.msra.mxu0 %v4058
        %4205 = vmatprep.subr.mxu0 0.0
        %4206 = vmatpush2.msra.mxu0 %v4057
        %4207 = vmatprep.mubr.f32.mxu0 %v4008
        %4208 = vmatmul.mubr.f32.gmra.mxu0 %v4007
        %v4209 = vpop.f32.mrf.mxu0
        %v4210 = vadd.f32 %v4140, %v4209
        %v4211 = vpop.f32.mrf.mxu0
        %4212 = vdwg.mxu0
        %4213 = vmatprep.subr.mxu0 0.0
        %4214 = vmatpush1.msra.mxu0 %v3352
        %4215 = vmatprep.subr.mxu0 0.0
        %4216 = vmatpush1.msra.mxu0 %v3351
        %4217 = vmatprep.subr.mxu0 0.0
        %4218 = vmatpush1.msra.mxu0 %v3350
        %4219 = vmatprep.subr.mxu0 0.0
        %4220 = vmatpush1.msra.mxu0 %v3349
        %4221 = vmatprep.subr.mxu0 0.0
        %4222 = vmatpush1.msra.mxu0 %v3348
        %4223 = vmatprep.subr.mxu0 0.0
        %4224 = vmatpush1.msra.mxu0 %v3347
        %4225 = vmatprep.subr.mxu0 0.0
        %4226 = vmatpush1.msra.mxu0 %v3346
        %4227 = vmatprep.subr.mxu0 0.0
        %4228 = vmatpush1.msra.mxu0 %v3345
        %4229 = vmatprep.subr.mxu0 0.0
        %4230 = vmatpush1.msra.mxu0 %v3344
        %4231 = vmatprep.subr.mxu0 0.0
        %4232 = vmatpush1.msra.mxu0 %v3343
        %4233 = vmatprep.subr.mxu0 0.0
        %4234 = vmatpush1.msra.mxu0 %v3342
        %4235 = vmatprep.subr.mxu0 0.0
        %4236 = vmatpush1.msra.mxu0 %v3341
        %4237 = vmatprep.subr.mxu0 0.0
        %4238 = vmatpush1.msra.mxu0 %v3340
        %4239 = vmatprep.subr.mxu0 0.0
        %4240 = vmatpush1.msra.mxu0 %v3339
        %4241 = vmatprep.subr.mxu0 0.0
        %4242 = vmatpush1.msra.mxu0 %v3338
        %4243 = vmatprep.subr.mxu0 0.0
        %4244 = vmatpush1.msra.mxu0 %v3337
        %4245 = vmatprep.subr.mxu0 0.0
        %4246 = vmatpush2.msra.mxu0 %v3368
        %4247 = vmatprep.subr.mxu0 0.0
        %4248 = vmatpush2.msra.mxu0 %v3367
        %4249 = vmatprep.subr.mxu0 0.0
        %4250 = vmatpush2.msra.mxu0 %v3366
        %4251 = vmatprep.subr.mxu0 0.0
        %4252 = vmatpush2.msra.mxu0 %v3365
        %4253 = vmatprep.subr.mxu0 0.0
        %4254 = vmatpush2.msra.mxu0 %v3364
        %4255 = vmatprep.subr.mxu0 0.0
        %4256 = vmatpush2.msra.mxu0 %v3363
        %4257 = vmatprep.subr.mxu0 0.0
        %4258 = vmatpush2.msra.mxu0 %v3362
        %4259 = vmatprep.subr.mxu0 0.0
        %4260 = vmatpush2.msra.mxu0 %v3361
        %4261 = vmatprep.subr.mxu0 0.0
        %4262 = vmatpush2.msra.mxu0 %v3360
        %4263 = vmatprep.subr.mxu0 0.0
        %4264 = vmatpush2.msra.mxu0 %v3359
        %4265 = vmatprep.subr.mxu0 0.0
        %4266 = vmatpush2.msra.mxu0 %v3358
        %4267 = vmatprep.subr.mxu0 0.0
        %4268 = vmatpush2.msra.mxu0 %v3357
        %4269 = vmatprep.subr.mxu0 0.0
        %4270 = vmatpush2.msra.mxu0 %v3356
        %4271 = vmatprep.subr.mxu0 0.0
        %4272 = vmatpush2.msra.mxu0 %v3355
        %4273 = vmatprep.subr.mxu0 0.0
        %4274 = vmatpush2.msra.mxu0 %v3354
        %4275 = vmatprep.subr.mxu0 0.0
        %4276 = vmatpush2.msra.mxu0 %v3353
        %4277 = vmatprep.mubr.f32.mxu0 %v3334
        %4278 = vmatmul.mubr.f32.gmra.mxu0 %v3333
        %v4279 = vpop.f32.mrf.mxu0
        %v4280 = vadd.f32 %v4210, %v4279
        %v4281 = vpop.f32.mrf.mxu0
        %4282 = vdwg.mxu0
        %4283 = vmatprep.subr.mxu0 0.0
        %4284 = vmatpush1.msra.mxu0 %v3384
        %4285 = vmatprep.subr.mxu0 0.0
        %4286 = vmatpush1.msra.mxu0 %v3383
        %4287 = vmatprep.subr.mxu0 0.0
        %4288 = vmatpush1.msra.mxu0 %v3382
        %4289 = vmatprep.subr.mxu0 0.0
        %4290 = vmatpush1.msra.mxu0 %v3381
        %4291 = vmatprep.subr.mxu0 0.0
        %4292 = vmatpush1.msra.mxu0 %v3380
        %4293 = vmatprep.subr.mxu0 0.0
        %4294 = vmatpush1.msra.mxu0 %v3379
        %4295 = vmatprep.subr.mxu0 0.0
        %4296 = vmatpush1.msra.mxu0 %v3378
        %4297 = vmatprep.subr.mxu0 0.0
        %4298 = vmatpush1.msra.mxu0 %v3377
        %4299 = vmatprep.subr.mxu0 0.0
        %4300 = vmatpush1.msra.mxu0 %v3376
        %4301 = vmatprep.subr.mxu0 0.0
        %4302 = vmatpush1.msra.mxu0 %v3375
        %4303 = vmatprep.subr.mxu0 0.0
        %4304 = vmatpush1.msra.mxu0 %v3374
        %4305 = vmatprep.subr.mxu0 0.0
        %4306 = vmatpush1.msra.mxu0 %v3373
        %4307 = vmatprep.subr.mxu0 0.0
        %4308 = vmatpush1.msra.mxu0 %v3372
        %4309 = vmatprep.subr.mxu0 0.0
        %4310 = vmatpush1.msra.mxu0 %v3371
        %4311 = vmatprep.subr.mxu0 0.0
        %4312 = vmatpush1.msra.mxu0 %v3370
        %4313 = vmatprep.subr.mxu0 0.0
        %4314 = vmatpush1.msra.mxu0 %v3369
        %4315 = vmatprep.subr.mxu0 0.0
        %4316 = vmatpush2.msra.mxu0 %v3400
        %4317 = vmatprep.subr.mxu0 0.0
        %4318 = vmatpush2.msra.mxu0 %v3399
        %4319 = vmatprep.subr.mxu0 0.0
        %4320 = vmatpush2.msra.mxu0 %v3398
        %4321 = vmatprep.subr.mxu0 0.0
        %4322 = vmatpush2.msra.mxu0 %v3397
        %4323 = vmatprep.subr.mxu0 0.0
        %4324 = vmatpush2.msra.mxu0 %v3396
        %4325 = vmatprep.subr.mxu0 0.0
        %4326 = vmatpush2.msra.mxu0 %v3395
        %4327 = vmatprep.subr.mxu0 0.0
        %4328 = vmatpush2.msra.mxu0 %v3394
        %4329 = vmatprep.subr.mxu0 0.0
        %4330 = vmatpush2.msra.mxu0 %v3393
        %4331 = vmatprep.subr.mxu0 0.0
        %4332 = vmatpush2.msra.mxu0 %v3392
        %4333 = vmatprep.subr.mxu0 0.0
        %4334 = vmatpush2.msra.mxu0 %v3391
        %4335 = vmatprep.subr.mxu0 0.0
        %4336 = vmatpush2.msra.mxu0 %v3390
        %4337 = vmatprep.subr.mxu0 0.0
        %4338 = vmatpush2.msra.mxu0 %v3389
        %4339 = vmatprep.subr.mxu0 0.0
        %4340 = vmatpush2.msra.mxu0 %v3388
        %4341 = vmatprep.subr.mxu0 0.0
        %4342 = vmatpush2.msra.mxu0 %v3387
        %4343 = vmatprep.subr.mxu0 0.0
        %4344 = vmatpush2.msra.mxu0 %v3386
        %4345 = vmatprep.subr.mxu0 0.0
        %4346 = vmatpush2.msra.mxu0 %v3385
        %4347 = vmatprep.mubr.f32.mxu0 %v3336
        %4348 = vmatmul.mubr.f32.gmra.mxu0 %v3335
        %v4349 = vpop.f32.mrf.mxu0
        %v4350 = vadd.f32 %v4280, %v4349
        %v4351 = vpop.f32.mrf.mxu0
        %4352 = vdwg.mxu0
        %v4353 = vld [vmem:[%s425 + $0x40] sm:$0xff]
        %v4354 = vld [vmem:[%s425 + $0x48] sm:$0xff]
        %v4355 = vld [vmem:[%s425 + $0x50] sm:$0xff]
        %v4356 = vld [vmem:[%s425 + $0x58] sm:$0xff]
        %v4357 = vld [vmem:[%s425 + $0xc0] sm:$0xff]
        %v4358 = vld [vmem:[%s425 + $0xc8] sm:$0xff]
        %v4359 = vld [vmem:[%s425 + $0xd0] sm:$0xff]
        %v4360 = vld [vmem:[%s425 + $0xd8] sm:$0xff]
        %4361 = vmatprep.subr.mxu0 0.0
        %4362 = vmatpush1.msra.mxu0 0.0
        %4363 = vmatprep.subr.mxu0 0.0
        %4364 = vmatpush1.msra.mxu0 0.0
        %4365 = vmatprep.subr.mxu0 0.0
        %4366 = vmatpush1.msra.mxu0 0.0
        %4367 = vmatprep.subr.mxu0 0.0
        %4368 = vmatpush1.msra.mxu0 0.0
        %4369 = vmatprep.subr.mxu0 0.0
        %4370 = vmatpush1.msra.mxu0 0.0
        %4371 = vmatprep.subr.mxu0 0.0
        %4372 = vmatpush1.msra.mxu0 0.0
        %4373 = vmatprep.subr.mxu0 0.0
        %4374 = vmatpush1.msra.mxu0 0.0
        %4375 = vmatprep.subr.mxu0 0.0
        %4376 = vmatpush1.msra.mxu0 0.0
        %4377 = vmatprep.subr.mxu0 0.0
        %4378 = vmatpush1.msra.mxu0 0.0
        %4379 = vmatprep.subr.mxu0 0.0
        %4380 = vmatpush1.msra.mxu0 0.0
        %4381 = vmatprep.subr.mxu0 0.0
        %4382 = vmatpush1.msra.mxu0 0.0
        %4383 = vmatprep.subr.mxu0 0.0
        %4384 = vmatpush1.msra.mxu0 0.0
        %4385 = vmatprep.subr.mxu0 0.0
        %4386 = vmatpush1.msra.mxu0 0.0
        %4387 = vmatprep.subr.mxu0 0.0
        %4388 = vmatpush1.msra.mxu0 0.0
        %4389 = vmatprep.subr.mxu0 0.0
        %4390 = vmatpush1.msra.mxu0 0.0
        %4391 = vmatprep.subr.mxu0 %v4358
        %4392 = vmatpush1.msra.mxu0 %v4357
        %4393 = vmatprep.subr.mxu0 0.0
        %4394 = vmatpush2.msra.mxu0 0.0
        %4395 = vmatprep.subr.mxu0 0.0
        %4396 = vmatpush2.msra.mxu0 0.0
        %4397 = vmatprep.subr.mxu0 0.0
        %4398 = vmatpush2.msra.mxu0 0.0
        %4399 = vmatprep.subr.mxu0 0.0
        %4400 = vmatpush2.msra.mxu0 0.0
        %4401 = vmatprep.subr.mxu0 0.0
        %4402 = vmatpush2.msra.mxu0 0.0
        %4403 = vmatprep.subr.mxu0 0.0
        %4404 = vmatpush2.msra.mxu0 0.0
        %4405 = vmatprep.subr.mxu0 0.0
        %4406 = vmatpush2.msra.mxu0 0.0
        %4407 = vmatprep.subr.mxu0 0.0
        %4408 = vmatpush2.msra.mxu0 0.0
        %4409 = vmatprep.subr.mxu0 0.0
        %4410 = vmatpush2.msra.mxu0 0.0
        %4411 = vmatprep.subr.mxu0 0.0
        %4412 = vmatpush2.msra.mxu0 0.0
        %4413 = vmatprep.subr.mxu0 0.0
        %4414 = vmatpush2.msra.mxu0 0.0
        %4415 = vmatprep.subr.mxu0 0.0
        %4416 = vmatpush2.msra.mxu0 0.0
        %4417 = vmatprep.subr.mxu0 0.0
        %4418 = vmatpush2.msra.mxu0 0.0
        %4419 = vmatprep.subr.mxu0 0.0
        %4420 = vmatpush2.msra.mxu0 0.0
        %4421 = vmatprep.subr.mxu0 0.0
        %4422 = vmatpush2.msra.mxu0 0.0
        %4423 = vmatprep.subr.mxu0 0.0
        %4424 = vmatpush2.msra.mxu0 0.0
        %4425 = vmatprep.mubr.f32.mxu0 0.0
        %4426 = vmatmul.mubr.f32.gmra.mxu0 %v2727
        %v4427 = vpop.f32.mrf.mxu0
        %v4428 = vadd.f32 0.0, %v4427
        %v4429 = vpop.f32.mrf.mxu0
        %v4430 = vadd.f32 0.0, %v4429
        %4431 = vdwg.mxu0
        %4432 = vmatprep.subr.mxu0 0.0
        %4433 = vmatpush1.msra.mxu0 0.0
        %4434 = vmatprep.subr.mxu0 0.0
        %4435 = vmatpush1.msra.mxu0 0.0
        %4436 = vmatprep.subr.mxu0 0.0
        %4437 = vmatpush1.msra.mxu0 0.0
        %4438 = vmatprep.subr.mxu0 0.0
        %4439 = vmatpush1.msra.mxu0 0.0
        %4440 = vmatprep.subr.mxu0 0.0
        %4441 = vmatpush1.msra.mxu0 0.0
        %4442 = vmatprep.subr.mxu0 0.0
        %4443 = vmatpush1.msra.mxu0 0.0
        %4444 = vmatprep.subr.mxu0 0.0
        %4445 = vmatpush1.msra.mxu0 0.0
        %4446 = vmatprep.subr.mxu0 0.0
        %4447 = vmatpush1.msra.mxu0 0.0
        %4448 = vmatprep.subr.mxu0 0.0
        %4449 = vmatpush1.msra.mxu0 0.0
        %4450 = vmatprep.subr.mxu0 0.0
        %4451 = vmatpush1.msra.mxu0 0.0
        %4452 = vmatprep.subr.mxu0 0.0
        %4453 = vmatpush1.msra.mxu0 0.0
        %4454 = vmatprep.subr.mxu0 0.0
        %4455 = vmatpush1.msra.mxu0 0.0
        %4456 = vmatprep.subr.mxu0 0.0
        %4457 = vmatpush1.msra.mxu0 0.0
        %4458 = vmatprep.subr.mxu0 0.0
        %4459 = vmatpush1.msra.mxu0 0.0
        %4460 = vmatprep.subr.mxu0 0.0
        %4461 = vmatpush1.msra.mxu0 0.0
        %4462 = vmatprep.subr.mxu0 %v4360
        %4463 = vmatpush1.msra.mxu0 %v4359
        %4464 = vmatprep.subr.mxu0 0.0
        %4465 = vmatpush2.msra.mxu0 0.0
        %4466 = vmatprep.subr.mxu0 0.0
        %4467 = vmatpush2.msra.mxu0 0.0
        %4468 = vmatprep.subr.mxu0 0.0
        %4469 = vmatpush2.msra.mxu0 0.0
        %4470 = vmatprep.subr.mxu0 0.0
        %4471 = vmatpush2.msra.mxu0 0.0
        %4472 = vmatprep.subr.mxu0 0.0
        %4473 = vmatpush2.msra.mxu0 0.0
        %4474 = vmatprep.subr.mxu0 0.0
        %4475 = vmatpush2.msra.mxu0 0.0
        %4476 = vmatprep.subr.mxu0 0.0
        %4477 = vmatpush2.msra.mxu0 0.0
        %4478 = vmatprep.subr.mxu0 0.0
        %4479 = vmatpush2.msra.mxu0 0.0
        %4480 = vmatprep.subr.mxu0 0.0
        %4481 = vmatpush2.msra.mxu0 0.0
        %4482 = vmatprep.subr.mxu0 0.0
        %4483 = vmatpush2.msra.mxu0 0.0
        %4484 = vmatprep.subr.mxu0 0.0
        %4485 = vmatpush2.msra.mxu0 0.0
        %4486 = vmatprep.subr.mxu0 0.0
        %4487 = vmatpush2.msra.mxu0 0.0
        %4488 = vmatprep.subr.mxu0 0.0
        %4489 = vmatpush2.msra.mxu0 0.0
        %4490 = vmatprep.subr.mxu0 0.0
        %4491 = vmatpush2.msra.mxu0 0.0
        %4492 = vmatprep.subr.mxu0 0.0
        %4493 = vmatpush2.msra.mxu0 0.0
        %4494 = vmatprep.subr.mxu0 0.0
        %4495 = vmatpush2.msra.mxu0 0.0
        %4496 = vmatprep.mubr.f32.mxu0 0.0
        %4497 = vmatmul.mubr.f32.gmra.mxu0 %v2727
        %v4498 = vpop.f32.mrf.mxu0
        %v4499 = vadd.f32 0.0, %v4498
        %v4500 = vpop.f32.mrf.mxu0
        %v4501 = vadd.f32 0.0, %v4500
        %4502 = vdwg.mxu0
        %4503 = vmatprep.subr.mxu0 0.0
        %4504 = vmatpush1.msra.mxu0 0.0
        %4505 = vmatprep.subr.mxu0 0.0
        %4506 = vmatpush1.msra.mxu0 0.0
        %4507 = vmatprep.subr.mxu0 0.0
        %4508 = vmatpush1.msra.mxu0 0.0
        %4509 = vmatprep.subr.mxu0 0.0
        %4510 = vmatpush1.msra.mxu0 0.0
        %4511 = vmatprep.subr.mxu0 0.0
        %4512 = vmatpush1.msra.mxu0 0.0
        %4513 = vmatprep.subr.mxu0 0.0
        %4514 = vmatpush1.msra.mxu0 0.0
        %4515 = vmatprep.subr.mxu0 0.0
        %4516 = vmatpush1.msra.mxu0 0.0
        %4517 = vmatprep.subr.mxu0 0.0
        %4518 = vmatpush1.msra.mxu0 0.0
        %4519 = vmatprep.subr.mxu0 0.0
        %4520 = vmatpush1.msra.mxu0 0.0
        %4521 = vmatprep.subr.mxu0 0.0
        %4522 = vmatpush1.msra.mxu0 0.0
        %4523 = vmatprep.subr.mxu0 0.0
        %4524 = vmatpush1.msra.mxu0 0.0
        %4525 = vmatprep.subr.mxu0 0.0
        %4526 = vmatpush1.msra.mxu0 0.0
        %4527 = vmatprep.subr.mxu0 0.0
        %4528 = vmatpush1.msra.mxu0 0.0
        %4529 = vmatprep.subr.mxu0 0.0
        %4530 = vmatpush1.msra.mxu0 0.0
        %4531 = vmatprep.subr.mxu0 0.0
        %4532 = vmatpush1.msra.mxu0 0.0
        %4533 = vmatprep.subr.mxu0 %v4354
        %4534 = vmatpush1.msra.mxu0 %v4353
        %4535 = vmatprep.subr.mxu0 0.0
        %4536 = vmatpush2.msra.mxu0 0.0
        %4537 = vmatprep.subr.mxu0 0.0
        %4538 = vmatpush2.msra.mxu0 0.0
        %4539 = vmatprep.subr.mxu0 0.0
        %4540 = vmatpush2.msra.mxu0 0.0
        %4541 = vmatprep.subr.mxu0 0.0
        %4542 = vmatpush2.msra.mxu0 0.0
        %4543 = vmatprep.subr.mxu0 0.0
        %4544 = vmatpush2.msra.mxu0 0.0
        %4545 = vmatprep.subr.mxu0 0.0
        %4546 = vmatpush2.msra.mxu0 0.0
        %4547 = vmatprep.subr.mxu0 0.0
        %4548 = vmatpush2.msra.mxu0 0.0
        %4549 = vmatprep.subr.mxu0 0.0
        %4550 = vmatpush2.msra.mxu0 0.0
        %4551 = vmatprep.subr.mxu0 0.0
        %4552 = vmatpush2.msra.mxu0 0.0
        %4553 = vmatprep.subr.mxu0 0.0
        %4554 = vmatpush2.msra.mxu0 0.0
        %4555 = vmatprep.subr.mxu0 0.0
        %4556 = vmatpush2.msra.mxu0 0.0
        %4557 = vmatprep.subr.mxu0 0.0
        %4558 = vmatpush2.msra.mxu0 0.0
        %4559 = vmatprep.subr.mxu0 0.0
        %4560 = vmatpush2.msra.mxu0 0.0
        %4561 = vmatprep.subr.mxu0 0.0
        %4562 = vmatpush2.msra.mxu0 0.0
        %4563 = vmatprep.subr.mxu0 0.0
        %4564 = vmatpush2.msra.mxu0 0.0
        %4565 = vmatprep.subr.mxu0 0.0
        %4566 = vmatpush2.msra.mxu0 0.0
        %4567 = vmatprep.mubr.f32.mxu0 0.0
        %4568 = vmatmul.mubr.f32.gmra.mxu0 %v2872
        %v4569 = vpop.f32.mrf.mxu0
        %v4570 = vadd.f32 %v4428, %v4569
        %v4571 = vpop.f32.mrf.mxu0
        %v4572 = vadd.f32 %v4430, %v4571
        %4573 = vdwg.mxu0
        %4574 = vmatprep.subr.mxu0 0.0
        %4575 = vmatpush1.msra.mxu0 0.0
        %4576 = vmatprep.subr.mxu0 0.0
        %4577 = vmatpush1.msra.mxu0 0.0
        %4578 = vmatprep.subr.mxu0 0.0
        %4579 = vmatpush1.msra.mxu0 0.0
        %4580 = vmatprep.subr.mxu0 0.0
        %4581 = vmatpush1.msra.mxu0 0.0
        %4582 = vmatprep.subr.mxu0 0.0
        %4583 = vmatpush1.msra.mxu0 0.0
        %4584 = vmatprep.subr.mxu0 0.0
        %4585 = vmatpush1.msra.mxu0 0.0
        %4586 = vmatprep.subr.mxu0 0.0
        %4587 = vmatpush1.msra.mxu0 0.0
        %4588 = vmatprep.subr.mxu0 0.0
        %4589 = vmatpush1.msra.mxu0 0.0
        %4590 = vmatprep.subr.mxu0 0.0
        %4591 = vmatpush1.msra.mxu0 0.0
        %4592 = vmatprep.subr.mxu0 0.0
        %4593 = vmatpush1.msra.mxu0 0.0
        %4594 = vmatprep.subr.mxu0 0.0
        %4595 = vmatpush1.msra.mxu0 0.0
        %4596 = vmatprep.subr.mxu0 0.0
        %4597 = vmatpush1.msra.mxu0 0.0
        %4598 = vmatprep.subr.mxu0 0.0
        %4599 = vmatpush1.msra.mxu0 0.0
        %4600 = vmatprep.subr.mxu0 0.0
        %4601 = vmatpush1.msra.mxu0 0.0
        %4602 = vmatprep.subr.mxu0 0.0
        %4603 = vmatpush1.msra.mxu0 0.0
        %4604 = vmatprep.subr.mxu0 %v4356
        %4605 = vmatpush1.msra.mxu0 %v4355
        %4606 = vmatprep.subr.mxu0 0.0
        %4607 = vmatpush2.msra.mxu0 0.0
        %4608 = vmatprep.subr.mxu0 0.0
        %4609 = vmatpush2.msra.mxu0 0.0
        %4610 = vmatprep.subr.mxu0 0.0
        %4611 = vmatpush2.msra.mxu0 0.0
        %4612 = vmatprep.subr.mxu0 0.0
        %4613 = vmatpush2.msra.mxu0 0.0
        %4614 = vmatprep.subr.mxu0 0.0
        %4615 = vmatpush2.msra.mxu0 0.0
        %4616 = vmatprep.subr.mxu0 0.0
        %4617 = vmatpush2.msra.mxu0 0.0
        %4618 = vmatprep.subr.mxu0 0.0
        %4619 = vmatpush2.msra.mxu0 0.0
        %4620 = vmatprep.subr.mxu0 0.0
        %4621 = vmatpush2.msra.mxu0 0.0
        %4622 = vmatprep.subr.mxu0 0.0
        %4623 = vmatpush2.msra.mxu0 0.0
        %4624 = vmatprep.subr.mxu0 0.0
        %4625 = vmatpush2.msra.mxu0 0.0
        %4626 = vmatprep.subr.mxu0 0.0
        %4627 = vmatpush2.msra.mxu0 0.0
        %4628 = vmatprep.subr.mxu0 0.0
        %4629 = vmatpush2.msra.mxu0 0.0
        %4630 = vmatprep.subr.mxu0 0.0
        %4631 = vmatpush2.msra.mxu0 0.0
        %4632 = vmatprep.subr.mxu0 0.0
        %4633 = vmatpush2.msra.mxu0 0.0
        %4634 = vmatprep.subr.mxu0 0.0
        %4635 = vmatpush2.msra.mxu0 0.0
        %4636 = vmatprep.subr.mxu0 0.0
        %4637 = vmatpush2.msra.mxu0 0.0
        %4638 = vmatprep.mubr.f32.mxu0 0.0
        %4639 = vmatmul.mubr.f32.gmra.mxu0 %v2872
        %v4640 = vpop.f32.mrf.mxu0
        %v4641 = vadd.f32 %v4499, %v4640
        %v4642 = vpop.f32.mrf.mxu0
        %v4643 = vadd.f32 %v4501, %v4642
        %4644 = vdwg.mxu0
        %v4645 = vld [vmem:[%s425 + $0x140] sm:$0xff]
        %v4646 = vld [vmem:[%s425 + $0x148] sm:$0xff]
        %v4647 = vld [vmem:[%s425 + $0x150] sm:$0xff]
        %v4648 = vld [vmem:[%s425 + $0x158] sm:$0xff]
        %4649 = vmatprep.subr.mxu0 0.0
        %4650 = vmatpush1.msra.mxu0 0.0
        %4651 = vmatprep.subr.mxu0 0.0
        %4652 = vmatpush1.msra.mxu0 0.0
        %4653 = vmatprep.subr.mxu0 0.0
        %4654 = vmatpush1.msra.mxu0 0.0
        %4655 = vmatprep.subr.mxu0 0.0
        %4656 = vmatpush1.msra.mxu0 0.0
        %4657 = vmatprep.subr.mxu0 0.0
        %4658 = vmatpush1.msra.mxu0 0.0
        %4659 = vmatprep.subr.mxu0 0.0
        %4660 = vmatpush1.msra.mxu0 0.0
        %4661 = vmatprep.subr.mxu0 0.0
        %4662 = vmatpush1.msra.mxu0 0.0
        %4663 = vmatprep.subr.mxu0 0.0
        %4664 = vmatpush1.msra.mxu0 0.0
        %4665 = vmatprep.subr.mxu0 0.0
        %4666 = vmatpush1.msra.mxu0 0.0
        %4667 = vmatprep.subr.mxu0 0.0
        %4668 = vmatpush1.msra.mxu0 0.0
        %4669 = vmatprep.subr.mxu0 0.0
        %4670 = vmatpush1.msra.mxu0 0.0
        %4671 = vmatprep.subr.mxu0 0.0
        %4672 = vmatpush1.msra.mxu0 0.0
        %4673 = vmatprep.subr.mxu0 0.0
        %4674 = vmatpush1.msra.mxu0 0.0
        %4675 = vmatprep.subr.mxu0 0.0
        %4676 = vmatpush1.msra.mxu0 0.0
        %4677 = vmatprep.subr.mxu0 0.0
        %4678 = vmatpush1.msra.mxu0 0.0
        %4679 = vmatprep.subr.mxu0 %v4646
        %4680 = vmatpush1.msra.mxu0 %v4645
        %4681 = vmatprep.subr.mxu0 0.0
        %4682 = vmatpush2.msra.mxu0 0.0
        %4683 = vmatprep.subr.mxu0 0.0
        %4684 = vmatpush2.msra.mxu0 0.0
        %4685 = vmatprep.subr.mxu0 0.0
        %4686 = vmatpush2.msra.mxu0 0.0
        %4687 = vmatprep.subr.mxu0 0.0
        %4688 = vmatpush2.msra.mxu0 0.0
        %4689 = vmatprep.subr.mxu0 0.0
        %4690 = vmatpush2.msra.mxu0 0.0
        %4691 = vmatprep.subr.mxu0 0.0
        %4692 = vmatpush2.msra.mxu0 0.0
        %4693 = vmatprep.subr.mxu0 0.0
        %4694 = vmatpush2.msra.mxu0 0.0
        %4695 = vmatprep.subr.mxu0 0.0
        %4696 = vmatpush2.msra.mxu0 0.0
        %4697 = vmatprep.subr.mxu0 0.0
        %4698 = vmatpush2.msra.mxu0 0.0
        %4699 = vmatprep.subr.mxu0 0.0
        %4700 = vmatpush2.msra.mxu0 0.0
        %4701 = vmatprep.subr.mxu0 0.0
        %4702 = vmatpush2.msra.mxu0 0.0
        %4703 = vmatprep.subr.mxu0 0.0
        %4704 = vmatpush2.msra.mxu0 0.0
        %4705 = vmatprep.subr.mxu0 0.0
        %4706 = vmatpush2.msra.mxu0 0.0
        %4707 = vmatprep.subr.mxu0 0.0
        %4708 = vmatpush2.msra.mxu0 0.0
        %4709 = vmatprep.subr.mxu0 0.0
        %4710 = vmatpush2.msra.mxu0 0.0
        %4711 = vmatprep.subr.mxu0 0.0
        %4712 = vmatpush2.msra.mxu0 0.0
        %4713 = vmatprep.mubr.f32.mxu0 0.0
        %4714 = vmatmul.mubr.f32.gmra.mxu0 %v3021
        %v4715 = vpop.f32.mrf.mxu0
        %v4716 = vadd.f32 0.0, %v4715
        %v4717 = vpop.f32.mrf.mxu0
        %v4718 = vadd.f32 0.0, %v4717
        %4719 = vdwg.mxu0
        %4720 = vmatprep.subr.mxu0 0.0
        %4721 = vmatpush1.msra.mxu0 0.0
        %4722 = vmatprep.subr.mxu0 0.0
        %4723 = vmatpush1.msra.mxu0 0.0
        %4724 = vmatprep.subr.mxu0 0.0
        %4725 = vmatpush1.msra.mxu0 0.0
        %4726 = vmatprep.subr.mxu0 0.0
        %4727 = vmatpush1.msra.mxu0 0.0
        %4728 = vmatprep.subr.mxu0 0.0
        %4729 = vmatpush1.msra.mxu0 0.0
        %4730 = vmatprep.subr.mxu0 0.0
        %4731 = vmatpush1.msra.mxu0 0.0
        %4732 = vmatprep.subr.mxu0 0.0
        %4733 = vmatpush1.msra.mxu0 0.0
        %4734 = vmatprep.subr.mxu0 0.0
        %4735 = vmatpush1.msra.mxu0 0.0
        %4736 = vmatprep.subr.mxu0 0.0
        %4737 = vmatpush1.msra.mxu0 0.0
        %4738 = vmatprep.subr.mxu0 0.0
        %4739 = vmatpush1.msra.mxu0 0.0
        %4740 = vmatprep.subr.mxu0 0.0
        %4741 = vmatpush1.msra.mxu0 0.0
        %4742 = vmatprep.subr.mxu0 0.0
        %4743 = vmatpush1.msra.mxu0 0.0
        %4744 = vmatprep.subr.mxu0 0.0
        %4745 = vmatpush1.msra.mxu0 0.0
        %4746 = vmatprep.subr.mxu0 0.0
        %4747 = vmatpush1.msra.mxu0 0.0
        %4748 = vmatprep.subr.mxu0 0.0
        %4749 = vmatpush1.msra.mxu0 0.0
        %4750 = vmatprep.subr.mxu0 %v4648
        %4751 = vmatpush1.msra.mxu0 %v4647
        %4752 = vmatprep.subr.mxu0 0.0
        %4753 = vmatpush2.msra.mxu0 0.0
        %4754 = vmatprep.subr.mxu0 0.0
        %4755 = vmatpush2.msra.mxu0 0.0
        %4756 = vmatprep.subr.mxu0 0.0
        %4757 = vmatpush2.msra.mxu0 0.0
        %4758 = vmatprep.subr.mxu0 0.0
        %4759 = vmatpush2.msra.mxu0 0.0
        %4760 = vmatprep.subr.mxu0 0.0
        %4761 = vmatpush2.msra.mxu0 0.0
        %4762 = vmatprep.subr.mxu0 0.0
        %4763 = vmatpush2.msra.mxu0 0.0
        %4764 = vmatprep.subr.mxu0 0.0
        %4765 = vmatpush2.msra.mxu0 0.0
        %4766 = vmatprep.subr.mxu0 0.0
        %4767 = vmatpush2.msra.mxu0 0.0
        %4768 = vmatprep.subr.mxu0 0.0
        %4769 = vmatpush2.msra.mxu0 0.0
        %4770 = vmatprep.subr.mxu0 0.0
        %4771 = vmatpush2.msra.mxu0 0.0
        %4772 = vmatprep.subr.mxu0 0.0
        %4773 = vmatpush2.msra.mxu0 0.0
        %4774 = vmatprep.subr.mxu0 0.0
        %4775 = vmatpush2.msra.mxu0 0.0
        %4776 = vmatprep.subr.mxu0 0.0
        %4777 = vmatpush2.msra.mxu0 0.0
        %4778 = vmatprep.subr.mxu0 0.0
        %4779 = vmatpush2.msra.mxu0 0.0
        %4780 = vmatprep.subr.mxu0 0.0
        %4781 = vmatpush2.msra.mxu0 0.0
        %4782 = vmatprep.subr.mxu0 0.0
        %4783 = vmatpush2.msra.mxu0 0.0
        %4784 = vmatprep.mubr.f32.mxu0 0.0
        %4785 = vmatmul.mubr.f32.gmra.mxu0 %v3021
        %v4786 = vpop.f32.mrf.mxu0
        %v4787 = vadd.f32 0.0, %v4786
        %v4788 = vpop.f32.mrf.mxu0
        %v4789 = vadd.f32 0.0, %v4788
        %4790 = vdwg.mxu0
        %v4791 = vadd.f32 %v4570, %v4716
        %v4792 = vadd.f32 %v4572, %v4718
        %v4793 = vadd.f32 %v4641, %v4787
        %v4794 = vadd.f32 %v4643, %v4789
        %v4795 = vld [vmem:[%s476 + $0x8] sm:$0xf]
        %v4797 = vlaneseq
        %v4798 = vshrl.u32 %v4797, 7
        %v4799 = vsub.s32 0, %v4798
        %v4800 = vrot.slane %v4795, %v4799
        %v4801 = vlaneseq
        %v4802 = vshrl.u32 %v4801, 7
        %v4803 = vsub.s32 1, %v4802
        %v4804 = vrot.slane %v4795, %v4803
        %v4805 = vlaneseq
        %v4806 = vshrl.u32 %v4805, 7
        %v4807 = vsub.s32 2, %v4806
        %v4808 = vrot.slane %v4795, %v4807
        %v4809 = vlaneseq
        %v4810 = vshrl.u32 %v4809, 7
        %v4811 = vsub.s32 3, %v4810
        %v4812 = vrot.slane %v4795, %v4811
        %v4817 = vadd.f32 %v4791, %v4800
        %v4818 = vadd.f32 %v4792, %v4804
        %v4819 = vadd.f32 %v4793, %v4808
        %v4820 = vadd.f32 %v4794, %v4812
        %v4821 = vsel %vm3195, %v4817, 0.0
        %v4822 = vrot.slane %v4821, 4
        %v4823 = vadd.f32 %v4821, %v4822
        %v4824 = vrot.slane %v4823, 2
        %v4825 = vadd.f32 %v4823, %v4824
        %v4826 = vrot.slane %v4825, 1
        %v4827 = vadd.f32 %v4825, %v4826
        %v4828 = vsel %vm3195, %v4818, 0.0
        %v4829 = vrot.slane %v4828, 4
        %v4830 = vadd.f32 %v4828, %v4829
        %v4831 = vrot.slane %v4830, 2
        %v4832 = vadd.f32 %v4830, %v4831
        %v4833 = vrot.slane %v4832, 1
        %v4834 = vadd.f32 %v4832, %v4833
        %v4835 = vsel %vm3195, %v4819, 0.0
        %v4836 = vrot.slane %v4835, 4
        %v4837 = vadd.f32 %v4835, %v4836
        %v4838 = vrot.slane %v4837, 2
        %v4839 = vadd.f32 %v4837, %v4838
        %v4840 = vrot.slane %v4839, 1
        %v4841 = vadd.f32 %v4839, %v4840
        %v4842 = vsel %vm3195, %v4820, 0.0
        %v4843 = vrot.slane %v4842, 4
        %v4844 = vadd.f32 %v4842, %v4843
        %v4845 = vrot.slane %v4844, 2
        %v4846 = vadd.f32 %v4844, %v4845
        %v4847 = vrot.slane %v4846, 1
        %v4848 = vadd.f32 %v4846, %v4847
        %v4849 = vmul.f32 %v4827, %v3224
        %v4850 = vmul.f32 %v4834, %v3224
        %v4851 = vmul.f32 %v4841, %v3224
        %v4852 = vmul.f32 %v4848, %v3224
        %v4853 = vsub.f32 %v4817, %v4849
        %v4854 = vsub.f32 %v4818, %v4850
        %v4855 = vsub.f32 %v4819, %v4851
        %v4856 = vsub.f32 %v4820, %v4852
        %v4857 = vmul.f32 %v4853, %v4853
        %v4858 = vmul.f32 %v4854, %v4854
        %v4859 = vmul.f32 %v4855, %v4855
        %v4860 = vmul.f32 %v4856, %v4856
        %v4861 = vsel %vm3195, %v4857, 0.0
        %v4862 = vrot.slane %v4861, 4
        %v4863 = vadd.f32 %v4861, %v4862
        %v4864 = vrot.slane %v4863, 2
        %v4865 = vadd.f32 %v4863, %v4864
        %v4866 = vrot.slane %v4865, 1
        %v4867 = vadd.f32 %v4865, %v4866
        %v4868 = vsel %vm3195, %v4858, 0.0
        %v4869 = vrot.slane %v4868, 4
        %v4870 = vadd.f32 %v4868, %v4869
        %v4871 = vrot.slane %v4870, 2
        %v4872 = vadd.f32 %v4870, %v4871
        %v4873 = vrot.slane %v4872, 1
        %v4874 = vadd.f32 %v4872, %v4873
        %v4875 = vsel %vm3195, %v4859, 0.0
        %v4876 = vrot.slane %v4875, 4
        %v4877 = vadd.f32 %v4875, %v4876
        %v4878 = vrot.slane %v4877, 2
        %v4879 = vadd.f32 %v4877, %v4878
        %v4880 = vrot.slane %v4879, 1
        %v4881 = vadd.f32 %v4879, %v4880
        %v4882 = vsel %vm3195, %v4860, 0.0
        %v4883 = vrot.slane %v4882, 4
        %v4884 = vadd.f32 %v4882, %v4883
        %v4885 = vrot.slane %v4884, 2
        %v4886 = vadd.f32 %v4884, %v4885
        %v4887 = vrot.slane %v4886, 1
        %v4888 = vadd.f32 %v4886, %v4887
        %v4889 = vmul.f32 %v4867, %v3224
        %v4890 = vmul.f32 %v4874, %v3224
        %v4891 = vmul.f32 %v4881, %v3224
        %v4892 = vmul.f32 %v4888, %v3224
        %v4893 = vadd.f32 %v4889, 1e-05
        %v4894 = vadd.f32 %v4890, 1e-05
        %v4895 = vadd.f32 %v4891, 1e-05
        %v4896 = vadd.f32 %v4892, 1e-05
        %v4897 = vrsqrt.pop %v4893
        %v4898 = vrsqrt.pop %v4894
        %v4899 = vrsqrt.pop %v4895
        %v4900 = vrsqrt.pop %v4896
        %v4901 = vmul.f32 %v4853, %v4897
        %v4902 = vmul.f32 %v4854, %v4898
        %v4903 = vmul.f32 %v4855, %v4899
        %v4904 = vmul.f32 %v4856, %v4900
        %v4905 = vld [vmem:[%s481 + $0x8] sm:$0xf]
        %v4907 = vlaneseq
        %v4908 = vshrl.u32 %v4907, 7
        %v4909 = vsub.s32 0, %v4908
        %v4910 = vrot.slane %v4905, %v4909
        %v4911 = vlaneseq
        %v4912 = vshrl.u32 %v4911, 7
        %v4913 = vsub.s32 1, %v4912
        %v4914 = vrot.slane %v4905, %v4913
        %v4915 = vlaneseq
        %v4916 = vshrl.u32 %v4915, 7
        %v4917 = vsub.s32 2, %v4916
        %v4918 = vrot.slane %v4905, %v4917
        %v4919 = vlaneseq
        %v4920 = vshrl.u32 %v4919, 7
        %v4921 = vsub.s32 3, %v4920
        %v4922 = vrot.slane %v4905, %v4921
        %v4927 = vmul.f32 %v4901, %v4910
        %v4928 = vmul.f32 %v4902, %v4914
        %v4929 = vmul.f32 %v4903, %v4918
        %v4930 = vmul.f32 %v4904, %v4922
        %v4931 = vld [vmem:[%s486 + $0x8] sm:$0xf]
        %v4933 = vlaneseq
        %v4934 = vshrl.u32 %v4933, 7
        %v4935 = vsub.s32 0, %v4934
        %v4936 = vrot.slane %v4931, %v4935
        %v4937 = vlaneseq
        %v4938 = vshrl.u32 %v4937, 7
        %v4939 = vsub.s32 1, %v4938
        %v4940 = vrot.slane %v4931, %v4939
        %v4941 = vlaneseq
        %v4942 = vshrl.u32 %v4941, 7
        %v4943 = vsub.s32 2, %v4942
        %v4944 = vrot.slane %v4931, %v4943
        %v4945 = vlaneseq
        %v4946 = vshrl.u32 %v4945, 7
        %v4947 = vsub.s32 3, %v4946
        %v4948 = vrot.slane %v4931, %v4947
        %v4953 = vadd.f32 %v4927, %v4936
        %v4954 = vadd.f32 %v4928, %v4940
        %v4955 = vadd.f32 %v4929, %v4944
        %v4956 = vadd.f32 %v4930, %v4948
        %v4957 = vmax.f32 %v4953, 0.0
        %v4958 = vmax.f32 %v4954, 0.0
        %v4959 = vmax.f32 %v4955, 0.0
        %v4960 = vmax.f32 %v4956, 0.0
        %v4961 = vld [vmem:[%s492 + $0x400] sm:$0xff]
        %v4962 = vld [vmem:[%s492 + $0x408] sm:$0xff]
        %v4963 = vld [vmem:[%s492 + $0x410] sm:$0xff]
        %v4964 = vld [vmem:[%s492 + $0x418] sm:$0xff]
        %v4965 = vld [vmem:[%s492 + $0x420] sm:$0xff]
        %v4966 = vld [vmem:[%s492 + $0x428] sm:$0xff]
        %v4967 = vld [vmem:[%s492 + $0x430] sm:$0xff]
        %v4968 = vld [vmem:[%s492 + $0x438] sm:$0xff]
        %v4969 = vld [vmem:[%s492 + $0x440] sm:$0xff]
        %v4970 = vld [vmem:[%s492 + $0x448] sm:$0xff]
        %v4971 = vld [vmem:[%s492 + $0x450] sm:$0xff]
        %v4972 = vld [vmem:[%s492 + $0x458] sm:$0xff]
        %v4973 = vld [vmem:[%s492 + $0x460] sm:$0xff]
        %v4974 = vld [vmem:[%s492 + $0x468] sm:$0xff]
        %v4975 = vld [vmem:[%s492 + $0x470] sm:$0xff]
        %v4976 = vld [vmem:[%s492 + $0x478] sm:$0xff]
        %v4977 = vld [vmem:[%s492 + $0x480] sm:$0xff]
        %v4978 = vld [vmem:[%s492 + $0x488] sm:$0xff]
        %v4979 = vld [vmem:[%s492 + $0x490] sm:$0xff]
        %v4980 = vld [vmem:[%s492 + $0x498] sm:$0xff]
        %v4981 = vld [vmem:[%s492 + $0x4a0] sm:$0xff]
        %v4982 = vld [vmem:[%s492 + $0x4a8] sm:$0xff]
        %v4983 = vld [vmem:[%s492 + $0x4b0] sm:$0xff]
        %v4984 = vld [vmem:[%s492 + $0x4b8] sm:$0xff]
        %v4985 = vld [vmem:[%s492 + $0x4c0] sm:$0xff]
        %v4986 = vld [vmem:[%s492 + $0x4c8] sm:$0xff]
        %v4987 = vld [vmem:[%s492 + $0x4d0] sm:$0xff]
        %v4988 = vld [vmem:[%s492 + $0x4d8] sm:$0xff]
        %v4989 = vld [vmem:[%s492 + $0x4e0] sm:$0xff]
        %v4990 = vld [vmem:[%s492 + $0x4e8] sm:$0xff]
        %v4991 = vld [vmem:[%s492 + $0x4f0] sm:$0xff]
        %v4992 = vld [vmem:[%s492 + $0x4f8] sm:$0xff]
        %v4993 = vld [vmem:[%s492 + $0x500] sm:$0xff]
        %v4994 = vld [vmem:[%s492 + $0x508] sm:$0xff]
        %v4995 = vld [vmem:[%s492 + $0x510] sm:$0xff]
        %v4996 = vld [vmem:[%s492 + $0x518] sm:$0xff]
        %v4997 = vld [vmem:[%s492 + $0x520] sm:$0xff]
        %v4998 = vld [vmem:[%s492 + $0x528] sm:$0xff]
        %v4999 = vld [vmem:[%s492 + $0x530] sm:$0xff]
        %v5000 = vld [vmem:[%s492 + $0x538] sm:$0xff]
        %v5001 = vld [vmem:[%s492 + $0x540] sm:$0xff]
        %v5002 = vld [vmem:[%s492 + $0x548] sm:$0xff]
        %v5003 = vld [vmem:[%s492 + $0x550] sm:$0xff]
        %v5004 = vld [vmem:[%s492 + $0x558] sm:$0xff]
        %v5005 = vld [vmem:[%s492 + $0x560] sm:$0xff]
        %v5006 = vld [vmem:[%s492 + $0x568] sm:$0xff]
        %v5007 = vld [vmem:[%s492 + $0x570] sm:$0xff]
        %v5008 = vld [vmem:[%s492 + $0x578] sm:$0xff]
        %v5009 = vld [vmem:[%s492 + $0x580] sm:$0xff]
        %v5010 = vld [vmem:[%s492 + $0x588] sm:$0xff]
        %v5011 = vld [vmem:[%s492 + $0x590] sm:$0xff]
        %v5012 = vld [vmem:[%s492 + $0x598] sm:$0xff]
        %v5013 = vld [vmem:[%s492 + $0x5a0] sm:$0xff]
        %v5014 = vld [vmem:[%s492 + $0x5a8] sm:$0xff]
        %v5015 = vld [vmem:[%s492 + $0x5b0] sm:$0xff]
        %v5016 = vld [vmem:[%s492 + $0x5b8] sm:$0xff]
        %v5017 = vld [vmem:[%s492 + $0x5c0] sm:$0xff]
        %v5018 = vld [vmem:[%s492 + $0x5c8] sm:$0xff]
        %v5019 = vld [vmem:[%s492 + $0x5d0] sm:$0xff]
        %v5020 = vld [vmem:[%s492 + $0x5d8] sm:$0xff]
        %v5021 = vld [vmem:[%s492 + $0x5e0] sm:$0xff]
        %v5022 = vld [vmem:[%s492 + $0x5e8] sm:$0xff]
        %v5023 = vld [vmem:[%s492 + $0x5f0] sm:$0xff]
        %v5024 = vld [vmem:[%s492 + $0x5f8] sm:$0xff]
        %5025 = vmatprep.subr.mxu0 0.0
        %5026 = vmatpush1.msra.mxu0 %v4976
        %5027 = vmatprep.subr.mxu0 0.0
        %5028 = vmatpush1.msra.mxu0 %v4975
        %5029 = vmatprep.subr.mxu0 0.0
        %5030 = vmatpush1.msra.mxu0 %v4974
        %5031 = vmatprep.subr.mxu0 0.0
        %5032 = vmatpush1.msra.mxu0 %v4973
        %5033 = vmatprep.subr.mxu0 0.0
        %5034 = vmatpush1.msra.mxu0 %v4972
        %5035 = vmatprep.subr.mxu0 0.0
        %5036 = vmatpush1.msra.mxu0 %v4971
        %5037 = vmatprep.subr.mxu0 0.0
        %5038 = vmatpush1.msra.mxu0 %v4970
        %5039 = vmatprep.subr.mxu0 0.0
        %5040 = vmatpush1.msra.mxu0 %v4969
        %5041 = vmatprep.subr.mxu0 0.0
        %5042 = vmatpush1.msra.mxu0 %v4968
        %5043 = vmatprep.subr.mxu0 0.0
        %5044 = vmatpush1.msra.mxu0 %v4967
        %5045 = vmatprep.subr.mxu0 0.0
        %5046 = vmatpush1.msra.mxu0 %v4966
        %5047 = vmatprep.subr.mxu0 0.0
        %5048 = vmatpush1.msra.mxu0 %v4965
        %5049 = vmatprep.subr.mxu0 0.0
        %5050 = vmatpush1.msra.mxu0 %v4964
        %5051 = vmatprep.subr.mxu0 0.0
        %5052 = vmatpush1.msra.mxu0 %v4963
        %5053 = vmatprep.subr.mxu0 0.0
        %5054 = vmatpush1.msra.mxu0 %v4962
        %5055 = vmatprep.subr.mxu0 0.0
        %5056 = vmatpush1.msra.mxu0 %v4961
        %5057 = vmatprep.subr.mxu0 0.0
        %5058 = vmatpush2.msra.mxu0 %v4992
        %5059 = vmatprep.subr.mxu0 0.0
        %5060 = vmatpush2.msra.mxu0 %v4991
        %5061 = vmatprep.subr.mxu0 0.0
        %5062 = vmatpush2.msra.mxu0 %v4990
        %5063 = vmatprep.subr.mxu0 0.0
        %5064 = vmatpush2.msra.mxu0 %v4989
        %5065 = vmatprep.subr.mxu0 0.0
        %5066 = vmatpush2.msra.mxu0 %v4988
        %5067 = vmatprep.subr.mxu0 0.0
        %5068 = vmatpush2.msra.mxu0 %v4987
        %5069 = vmatprep.subr.mxu0 0.0
        %5070 = vmatpush2.msra.mxu0 %v4986
        %5071 = vmatprep.subr.mxu0 0.0
        %5072 = vmatpush2.msra.mxu0 %v4985
        %5073 = vmatprep.subr.mxu0 0.0
        %5074 = vmatpush2.msra.mxu0 %v4984
        %5075 = vmatprep.subr.mxu0 0.0
        %5076 = vmatpush2.msra.mxu0 %v4983
        %5077 = vmatprep.subr.mxu0 0.0
        %5078 = vmatpush2.msra.mxu0 %v4982
        %5079 = vmatprep.subr.mxu0 0.0
        %5080 = vmatpush2.msra.mxu0 %v4981
        %5081 = vmatprep.subr.mxu0 0.0
        %5082 = vmatpush2.msra.mxu0 %v4980
        %5083 = vmatprep.subr.mxu0 0.0
        %5084 = vmatpush2.msra.mxu0 %v4979
        %5085 = vmatprep.subr.mxu0 0.0
        %5086 = vmatpush2.msra.mxu0 %v4978
        %5087 = vmatprep.subr.mxu0 0.0
        %5088 = vmatpush2.msra.mxu0 %v4977
        %5089 = vmatprep.mubr.f32.mxu0 %v4958
        %5090 = vmatmul.mubr.f32.gmra.mxu0 %v4957
        %v5091 = vpop.f32.mrf.mxu0
        %v5092 = vadd.f32 0.0, %v5091
        %v5093 = vpop.f32.mrf.mxu0
        %5094 = vdwg.mxu0
        %5095 = vmatprep.subr.mxu0 0.0
        %5096 = vmatpush1.msra.mxu0 %v5008
        %5097 = vmatprep.subr.mxu0 0.0
        %5098 = vmatpush1.msra.mxu0 %v5007
        %5099 = vmatprep.subr.mxu0 0.0
        %5100 = vmatpush1.msra.mxu0 %v5006
        %5101 = vmatprep.subr.mxu0 0.0
        %5102 = vmatpush1.msra.mxu0 %v5005
        %5103 = vmatprep.subr.mxu0 0.0
        %5104 = vmatpush1.msra.mxu0 %v5004
        %5105 = vmatprep.subr.mxu0 0.0
        %5106 = vmatpush1.msra.mxu0 %v5003
        %5107 = vmatprep.subr.mxu0 0.0
        %5108 = vmatpush1.msra.mxu0 %v5002
        %5109 = vmatprep.subr.mxu0 0.0
        %5110 = vmatpush1.msra.mxu0 %v5001
        %5111 = vmatprep.subr.mxu0 0.0
        %5112 = vmatpush1.msra.mxu0 %v5000
        %5113 = vmatprep.subr.mxu0 0.0
        %5114 = vmatpush1.msra.mxu0 %v4999
        %5115 = vmatprep.subr.mxu0 0.0
        %5116 = vmatpush1.msra.mxu0 %v4998
        %5117 = vmatprep.subr.mxu0 0.0
        %5118 = vmatpush1.msra.mxu0 %v4997
        %5119 = vmatprep.subr.mxu0 0.0
        %5120 = vmatpush1.msra.mxu0 %v4996
        %5121 = vmatprep.subr.mxu0 0.0
        %5122 = vmatpush1.msra.mxu0 %v4995
        %5123 = vmatprep.subr.mxu0 0.0
        %5124 = vmatpush1.msra.mxu0 %v4994
        %5125 = vmatprep.subr.mxu0 0.0
        %5126 = vmatpush1.msra.mxu0 %v4993
        %5127 = vmatprep.subr.mxu0 0.0
        %5128 = vmatpush2.msra.mxu0 %v5024
        %5129 = vmatprep.subr.mxu0 0.0
        %5130 = vmatpush2.msra.mxu0 %v5023
        %5131 = vmatprep.subr.mxu0 0.0
        %5132 = vmatpush2.msra.mxu0 %v5022
        %5133 = vmatprep.subr.mxu0 0.0
        %5134 = vmatpush2.msra.mxu0 %v5021
        %5135 = vmatprep.subr.mxu0 0.0
        %5136 = vmatpush2.msra.mxu0 %v5020
        %5137 = vmatprep.subr.mxu0 0.0
        %5138 = vmatpush2.msra.mxu0 %v5019
        %5139 = vmatprep.subr.mxu0 0.0
        %5140 = vmatpush2.msra.mxu0 %v5018
        %5141 = vmatprep.subr.mxu0 0.0
        %5142 = vmatpush2.msra.mxu0 %v5017
        %5143 = vmatprep.subr.mxu0 0.0
        %5144 = vmatpush2.msra.mxu0 %v5016
        %5145 = vmatprep.subr.mxu0 0.0
        %5146 = vmatpush2.msra.mxu0 %v5015
        %5147 = vmatprep.subr.mxu0 0.0
        %5148 = vmatpush2.msra.mxu0 %v5014
        %5149 = vmatprep.subr.mxu0 0.0
        %5150 = vmatpush2.msra.mxu0 %v5013
        %5151 = vmatprep.subr.mxu0 0.0
        %5152 = vmatpush2.msra.mxu0 %v5012
        %5153 = vmatprep.subr.mxu0 0.0
        %5154 = vmatpush2.msra.mxu0 %v5011
        %5155 = vmatprep.subr.mxu0 0.0
        %5156 = vmatpush2.msra.mxu0 %v5010
        %5157 = vmatprep.subr.mxu0 0.0
        %5158 = vmatpush2.msra.mxu0 %v5009
        %5159 = vmatprep.mubr.f32.mxu0 %v4960
        %5160 = vmatmul.mubr.f32.gmra.mxu0 %v4959
        %v5161 = vpop.f32.mrf.mxu0
        %v5162 = vadd.f32 %v5092, %v5161
        %v5163 = vpop.f32.mrf.mxu0
        %5164 = vdwg.mxu0
        %v5165 = vadd.f32 %v4350, %v5162
        %v5166 = vld [vmem:[%s425 + $0x60] sm:$0xff]
        %v5167 = vld [vmem:[%s425 + $0x68] sm:$0xff]
        %v5168 = vld [vmem:[%s425 + $0x70] sm:$0xff]
        %v5169 = vld [vmem:[%s425 + $0x78] sm:$0xff]
        %v5170 = vld [vmem:[%s425 + $0xe0] sm:$0xff]
        %v5171 = vld [vmem:[%s425 + $0xe8] sm:$0xff]
        %v5172 = vld [vmem:[%s425 + $0xf0] sm:$0xff]
        %v5173 = vld [vmem:[%s425 + $0xf8] sm:$0xff]
        %5174 = vmatprep.subr.mxu0 0.0
        %5175 = vmatpush1.msra.mxu0 0.0
        %5176 = vmatprep.subr.mxu0 0.0
        %5177 = vmatpush1.msra.mxu0 0.0
        %5178 = vmatprep.subr.mxu0 0.0
        %5179 = vmatpush1.msra.mxu0 0.0
        %5180 = vmatprep.subr.mxu0 0.0
        %5181 = vmatpush1.msra.mxu0 0.0
        %5182 = vmatprep.subr.mxu0 0.0
        %5183 = vmatpush1.msra.mxu0 0.0
        %5184 = vmatprep.subr.mxu0 0.0
        %5185 = vmatpush1.msra.mxu0 0.0
        %5186 = vmatprep.subr.mxu0 0.0
        %5187 = vmatpush1.msra.mxu0 0.0
        %5188 = vmatprep.subr.mxu0 0.0
        %5189 = vmatpush1.msra.mxu0 0.0
        %5190 = vmatprep.subr.mxu0 0.0
        %5191 = vmatpush1.msra.mxu0 0.0
        %5192 = vmatprep.subr.mxu0 0.0
        %5193 = vmatpush1.msra.mxu0 0.0
        %5194 = vmatprep.subr.mxu0 0.0
        %5195 = vmatpush1.msra.mxu0 0.0
        %5196 = vmatprep.subr.mxu0 0.0
        %5197 = vmatpush1.msra.mxu0 0.0
        %5198 = vmatprep.subr.mxu0 0.0
        %5199 = vmatpush1.msra.mxu0 0.0
        %5200 = vmatprep.subr.mxu0 0.0
        %5201 = vmatpush1.msra.mxu0 0.0
        %5202 = vmatprep.subr.mxu0 0.0
        %5203 = vmatpush1.msra.mxu0 0.0
        %5204 = vmatprep.subr.mxu0 %v5171
        %5205 = vmatpush1.msra.mxu0 %v5170
        %5206 = vmatprep.subr.mxu0 0.0
        %5207 = vmatpush2.msra.mxu0 0.0
        %5208 = vmatprep.subr.mxu0 0.0
        %5209 = vmatpush2.msra.mxu0 0.0
        %5210 = vmatprep.subr.mxu0 0.0
        %5211 = vmatpush2.msra.mxu0 0.0
        %5212 = vmatprep.subr.mxu0 0.0
        %5213 = vmatpush2.msra.mxu0 0.0
        %5214 = vmatprep.subr.mxu0 0.0
        %5215 = vmatpush2.msra.mxu0 0.0
        %5216 = vmatprep.subr.mxu0 0.0
        %5217 = vmatpush2.msra.mxu0 0.0
        %5218 = vmatprep.subr.mxu0 0.0
        %5219 = vmatpush2.msra.mxu0 0.0
        %5220 = vmatprep.subr.mxu0 0.0
        %5221 = vmatpush2.msra.mxu0 0.0
        %5222 = vmatprep.subr.mxu0 0.0
        %5223 = vmatpush2.msra.mxu0 0.0
        %5224 = vmatprep.subr.mxu0 0.0
        %5225 = vmatpush2.msra.mxu0 0.0
        %5226 = vmatprep.subr.mxu0 0.0
        %5227 = vmatpush2.msra.mxu0 0.0
        %5228 = vmatprep.subr.mxu0 0.0
        %5229 = vmatpush2.msra.mxu0 0.0
        %5230 = vmatprep.subr.mxu0 0.0
        %5231 = vmatpush2.msra.mxu0 0.0
        %5232 = vmatprep.subr.mxu0 0.0
        %5233 = vmatpush2.msra.mxu0 0.0
        %5234 = vmatprep.subr.mxu0 0.0
        %5235 = vmatpush2.msra.mxu0 0.0
        %5236 = vmatprep.subr.mxu0 0.0
        %5237 = vmatpush2.msra.mxu0 0.0
        %5238 = vmatprep.mubr.f32.mxu0 0.0
        %5239 = vmatmul.mubr.f32.gmra.mxu0 %v2727
        %v5240 = vpop.f32.mrf.mxu0
        %v5241 = vadd.f32 0.0, %v5240
        %v5242 = vpop.f32.mrf.mxu0
        %v5243 = vadd.f32 0.0, %v5242
        %5244 = vdwg.mxu0
        %5245 = vmatprep.subr.mxu0 0.0
        %5246 = vmatpush1.msra.mxu0 0.0
        %5247 = vmatprep.subr.mxu0 0.0
        %5248 = vmatpush1.msra.mxu0 0.0
        %5249 = vmatprep.subr.mxu0 0.0
        %5250 = vmatpush1.msra.mxu0 0.0
        %5251 = vmatprep.subr.mxu0 0.0
        %5252 = vmatpush1.msra.mxu0 0.0
        %5253 = vmatprep.subr.mxu0 0.0
        %5254 = vmatpush1.msra.mxu0 0.0
        %5255 = vmatprep.subr.mxu0 0.0
        %5256 = vmatpush1.msra.mxu0 0.0
        %5257 = vmatprep.subr.mxu0 0.0
        %5258 = vmatpush1.msra.mxu0 0.0
        %5259 = vmatprep.subr.mxu0 0.0
        %5260 = vmatpush1.msra.mxu0 0.0
        %5261 = vmatprep.subr.mxu0 0.0
        %5262 = vmatpush1.msra.mxu0 0.0
        %5263 = vmatprep.subr.mxu0 0.0
        %5264 = vmatpush1.msra.mxu0 0.0
        %5265 = vmatprep.subr.mxu0 0.0
        %5266 = vmatpush1.msra.mxu0 0.0
        %5267 = vmatprep.subr.mxu0 0.0
        %5268 = vmatpush1.msra.mxu0 0.0
        %5269 = vmatprep.subr.mxu0 0.0
        %5270 = vmatpush1.msra.mxu0 0.0
        %5271 = vmatprep.subr.mxu0 0.0
        %5272 = vmatpush1.msra.mxu0 0.0
        %5273 = vmatprep.subr.mxu0 0.0
        %5274 = vmatpush1.msra.mxu0 0.0
        %5275 = vmatprep.subr.mxu0 %v5173
        %5276 = vmatpush1.msra.mxu0 %v5172
        %5277 = vmatprep.subr.mxu0 0.0
        %5278 = vmatpush2.msra.mxu0 0.0
        %5279 = vmatprep.subr.mxu0 0.0
        %5280 = vmatpush2.msra.mxu0 0.0
        %5281 = vmatprep.subr.mxu0 0.0
        %5282 = vmatpush2.msra.mxu0 0.0
        %5283 = vmatprep.subr.mxu0 0.0
        %5284 = vmatpush2.msra.mxu0 0.0
        %5285 = vmatprep.subr.mxu0 0.0
        %5286 = vmatpush2.msra.mxu0 0.0
        %5287 = vmatprep.subr.mxu0 0.0
        %5288 = vmatpush2.msra.mxu0 0.0
        %5289 = vmatprep.subr.mxu0 0.0
        %5290 = vmatpush2.msra.mxu0 0.0
        %5291 = vmatprep.subr.mxu0 0.0
        %5292 = vmatpush2.msra.mxu0 0.0
        %5293 = vmatprep.subr.mxu0 0.0
        %5294 = vmatpush2.msra.mxu0 0.0
        %5295 = vmatprep.subr.mxu0 0.0
        %5296 = vmatpush2.msra.mxu0 0.0
        %5297 = vmatprep.subr.mxu0 0.0
        %5298 = vmatpush2.msra.mxu0 0.0
        %5299 = vmatprep.subr.mxu0 0.0
        %5300 = vmatpush2.msra.mxu0 0.0
        %5301 = vmatprep.subr.mxu0 0.0
        %5302 = vmatpush2.msra.mxu0 0.0
        %5303 = vmatprep.subr.mxu0 0.0
        %5304 = vmatpush2.msra.mxu0 0.0
        %5305 = vmatprep.subr.mxu0 0.0
        %5306 = vmatpush2.msra.mxu0 0.0
        %5307 = vmatprep.subr.mxu0 0.0
        %5308 = vmatpush2.msra.mxu0 0.0
        %5309 = vmatprep.mubr.f32.mxu0 0.0
        %5310 = vmatmul.mubr.f32.gmra.mxu0 %v2727
        %v5311 = vpop.f32.mrf.mxu0
        %v5312 = vadd.f32 0.0, %v5311
        %v5313 = vpop.f32.mrf.mxu0
        %v5314 = vadd.f32 0.0, %v5313
        %5315 = vdwg.mxu0
        %5316 = vmatprep.subr.mxu0 0.0
        %5317 = vmatpush1.msra.mxu0 0.0
        %5318 = vmatprep.subr.mxu0 0.0
        %5319 = vmatpush1.msra.mxu0 0.0
        %5320 = vmatprep.subr.mxu0 0.0
        %5321 = vmatpush1.msra.mxu0 0.0
        %5322 = vmatprep.subr.mxu0 0.0
        %5323 = vmatpush1.msra.mxu0 0.0
        %5324 = vmatprep.subr.mxu0 0.0
        %5325 = vmatpush1.msra.mxu0 0.0
        %5326 = vmatprep.subr.mxu0 0.0
        %5327 = vmatpush1.msra.mxu0 0.0
        %5328 = vmatprep.subr.mxu0 0.0
        %5329 = vmatpush1.msra.mxu0 0.0
        %5330 = vmatprep.subr.mxu0 0.0
        %5331 = vmatpush1.msra.mxu0 0.0
        %5332 = vmatprep.subr.mxu0 0.0
        %5333 = vmatpush1.msra.mxu0 0.0
        %5334 = vmatprep.subr.mxu0 0.0
        %5335 = vmatpush1.msra.mxu0 0.0
        %5336 = vmatprep.subr.mxu0 0.0
        %5337 = vmatpush1.msra.mxu0 0.0
        %5338 = vmatprep.subr.mxu0 0.0
        %5339 = vmatpush1.msra.mxu0 0.0
        %5340 = vmatprep.subr.mxu0 0.0
        %5341 = vmatpush1.msra.mxu0 0.0
        %5342 = vmatprep.subr.mxu0 0.0
        %5343 = vmatpush1.msra.mxu0 0.0
        %5344 = vmatprep.subr.mxu0 0.0
        %5345 = vmatpush1.msra.mxu0 0.0
        %5346 = vmatprep.subr.mxu0 %v5167
        %5347 = vmatpush1.msra.mxu0 %v5166
        %5348 = vmatprep.subr.mxu0 0.0
        %5349 = vmatpush2.msra.mxu0 0.0
        %5350 = vmatprep.subr.mxu0 0.0
        %5351 = vmatpush2.msra.mxu0 0.0
        %5352 = vmatprep.subr.mxu0 0.0
        %5353 = vmatpush2.msra.mxu0 0.0
        %5354 = vmatprep.subr.mxu0 0.0
        %5355 = vmatpush2.msra.mxu0 0.0
        %5356 = vmatprep.subr.mxu0 0.0
        %5357 = vmatpush2.msra.mxu0 0.0
        %5358 = vmatprep.subr.mxu0 0.0
        %5359 = vmatpush2.msra.mxu0 0.0
        %5360 = vmatprep.subr.mxu0 0.0
        %5361 = vmatpush2.msra.mxu0 0.0
        %5362 = vmatprep.subr.mxu0 0.0
        %5363 = vmatpush2.msra.mxu0 0.0
        %5364 = vmatprep.subr.mxu0 0.0
        %5365 = vmatpush2.msra.mxu0 0.0
        %5366 = vmatprep.subr.mxu0 0.0
        %5367 = vmatpush2.msra.mxu0 0.0
        %5368 = vmatprep.subr.mxu0 0.0
        %5369 = vmatpush2.msra.mxu0 0.0
        %5370 = vmatprep.subr.mxu0 0.0
        %5371 = vmatpush2.msra.mxu0 0.0
        %5372 = vmatprep.subr.mxu0 0.0
        %5373 = vmatpush2.msra.mxu0 0.0
        %5374 = vmatprep.subr.mxu0 0.0
        %5375 = vmatpush2.msra.mxu0 0.0
        %5376 = vmatprep.subr.mxu0 0.0
        %5377 = vmatpush2.msra.mxu0 0.0
        %5378 = vmatprep.subr.mxu0 0.0
        %5379 = vmatpush2.msra.mxu0 0.0
        %5380 = vmatprep.mubr.f32.mxu0 0.0
        %5381 = vmatmul.mubr.f32.gmra.mxu0 %v2872
        %v5382 = vpop.f32.mrf.mxu0
        %v5383 = vadd.f32 %v5241, %v5382
        %v5384 = vpop.f32.mrf.mxu0
        %v5385 = vadd.f32 %v5243, %v5384
        %5386 = vdwg.mxu0
        %5387 = vmatprep.subr.mxu0 0.0
        %5388 = vmatpush1.msra.mxu0 0.0
        %5389 = vmatprep.subr.mxu0 0.0
        %5390 = vmatpush1.msra.mxu0 0.0
        %5391 = vmatprep.subr.mxu0 0.0
        %5392 = vmatpush1.msra.mxu0 0.0
        %5393 = vmatprep.subr.mxu0 0.0
        %5394 = vmatpush1.msra.mxu0 0.0
        %5395 = vmatprep.subr.mxu0 0.0
        %5396 = vmatpush1.msra.mxu0 0.0
        %5397 = vmatprep.subr.mxu0 0.0
        %5398 = vmatpush1.msra.mxu0 0.0
        %5399 = vmatprep.subr.mxu0 0.0
        %5400 = vmatpush1.msra.mxu0 0.0
        %5401 = vmatprep.subr.mxu0 0.0
        %5402 = vmatpush1.msra.mxu0 0.0
        %5403 = vmatprep.subr.mxu0 0.0
        %5404 = vmatpush1.msra.mxu0 0.0
        %5405 = vmatprep.subr.mxu0 0.0
        %5406 = vmatpush1.msra.mxu0 0.0
        %5407 = vmatprep.subr.mxu0 0.0
        %5408 = vmatpush1.msra.mxu0 0.0
        %5409 = vmatprep.subr.mxu0 0.0
        %5410 = vmatpush1.msra.mxu0 0.0
        %5411 = vmatprep.subr.mxu0 0.0
        %5412 = vmatpush1.msra.mxu0 0.0
        %5413 = vmatprep.subr.mxu0 0.0
        %5414 = vmatpush1.msra.mxu0 0.0
        %5415 = vmatprep.subr.mxu0 0.0
        %5416 = vmatpush1.msra.mxu0 0.0
        %5417 = vmatprep.subr.mxu0 %v5169
        %5418 = vmatpush1.msra.mxu0 %v5168
        %5419 = vmatprep.subr.mxu0 0.0
        %5420 = vmatpush2.msra.mxu0 0.0
        %5421 = vmatprep.subr.mxu0 0.0
        %5422 = vmatpush2.msra.mxu0 0.0
        %5423 = vmatprep.subr.mxu0 0.0
        %5424 = vmatpush2.msra.mxu0 0.0
        %5425 = vmatprep.subr.mxu0 0.0
        %5426 = vmatpush2.msra.mxu0 0.0
        %5427 = vmatprep.subr.mxu0 0.0
        %5428 = vmatpush2.msra.mxu0 0.0
        %5429 = vmatprep.subr.mxu0 0.0
        %5430 = vmatpush2.msra.mxu0 0.0
        %5431 = vmatprep.subr.mxu0 0.0
        %5432 = vmatpush2.msra.mxu0 0.0
        %5433 = vmatprep.subr.mxu0 0.0
        %5434 = vmatpush2.msra.mxu0 0.0
        %5435 = vmatprep.subr.mxu0 0.0
        %5436 = vmatpush2.msra.mxu0 0.0
        %5437 = vmatprep.subr.mxu0 0.0
        %5438 = vmatpush2.msra.mxu0 0.0
        %5439 = vmatprep.subr.mxu0 0.0
        %5440 = vmatpush2.msra.mxu0 0.0
        %5441 = vmatprep.subr.mxu0 0.0
        %5442 = vmatpush2.msra.mxu0 0.0
        %5443 = vmatprep.subr.mxu0 0.0
        %5444 = vmatpush2.msra.mxu0 0.0
        %5445 = vmatprep.subr.mxu0 0.0
        %5446 = vmatpush2.msra.mxu0 0.0
        %5447 = vmatprep.subr.mxu0 0.0
        %5448 = vmatpush2.msra.mxu0 0.0
        %5449 = vmatprep.subr.mxu0 0.0
        %5450 = vmatpush2.msra.mxu0 0.0
        %5451 = vmatprep.mubr.f32.mxu0 0.0
        %5452 = vmatmul.mubr.f32.gmra.mxu0 %v2872
        %v5453 = vpop.f32.mrf.mxu0
        %v5454 = vadd.f32 %v5312, %v5453
        %v5455 = vpop.f32.mrf.mxu0
        %v5456 = vadd.f32 %v5314, %v5455
        %5457 = vdwg.mxu0
        %v5458 = vld [vmem:[%s425 + $0x160] sm:$0xff]
        %v5459 = vld [vmem:[%s425 + $0x168] sm:$0xff]
        %v5460 = vld [vmem:[%s425 + $0x170] sm:$0xff]
        %v5461 = vld [vmem:[%s425 + $0x178] sm:$0xff]
        %5462 = vmatprep.subr.mxu0 0.0
        %5463 = vmatpush1.msra.mxu0 0.0
        %5464 = vmatprep.subr.mxu0 0.0
        %5465 = vmatpush1.msra.mxu0 0.0
        %5466 = vmatprep.subr.mxu0 0.0
        %5467 = vmatpush1.msra.mxu0 0.0
        %5468 = vmatprep.subr.mxu0 0.0
        %5469 = vmatpush1.msra.mxu0 0.0
        %5470 = vmatprep.subr.mxu0 0.0
        %5471 = vmatpush1.msra.mxu0 0.0
        %5472 = vmatprep.subr.mxu0 0.0
        %5473 = vmatpush1.msra.mxu0 0.0
        %5474 = vmatprep.subr.mxu0 0.0
        %5475 = vmatpush1.msra.mxu0 0.0
        %5476 = vmatprep.subr.mxu0 0.0
        %5477 = vmatpush1.msra.mxu0 0.0
        %5478 = vmatprep.subr.mxu0 0.0
        %5479 = vmatpush1.msra.mxu0 0.0
        %5480 = vmatprep.subr.mxu0 0.0
        %5481 = vmatpush1.msra.mxu0 0.0
        %5482 = vmatprep.subr.mxu0 0.0
        %5483 = vmatpush1.msra.mxu0 0.0
        %5484 = vmatprep.subr.mxu0 0.0
        %5485 = vmatpush1.msra.mxu0 0.0
        %5486 = vmatprep.subr.mxu0 0.0
        %5487 = vmatpush1.msra.mxu0 0.0
        %5488 = vmatprep.subr.mxu0 0.0
        %5489 = vmatpush1.msra.mxu0 0.0
        %5490 = vmatprep.subr.mxu0 0.0
        %5491 = vmatpush1.msra.mxu0 0.0
        %5492 = vmatprep.subr.mxu0 %v5459
        %5493 = vmatpush1.msra.mxu0 %v5458
        %5494 = vmatprep.subr.mxu0 0.0
        %5495 = vmatpush2.msra.mxu0 0.0
        %5496 = vmatprep.subr.mxu0 0.0
        %5497 = vmatpush2.msra.mxu0 0.0
        %5498 = vmatprep.subr.mxu0 0.0
        %5499 = vmatpush2.msra.mxu0 0.0
        %5500 = vmatprep.subr.mxu0 0.0
        %5501 = vmatpush2.msra.mxu0 0.0
        %5502 = vmatprep.subr.mxu0 0.0
        %5503 = vmatpush2.msra.mxu0 0.0
        %5504 = vmatprep.subr.mxu0 0.0
        %5505 = vmatpush2.msra.mxu0 0.0
        %5506 = vmatprep.subr.mxu0 0.0
        %5507 = vmatpush2.msra.mxu0 0.0
        %5508 = vmatprep.subr.mxu0 0.0
        %5509 = vmatpush2.msra.mxu0 0.0
        %5510 = vmatprep.subr.mxu0 0.0
        %5511 = vmatpush2.msra.mxu0 0.0
        %5512 = vmatprep.subr.mxu0 0.0
        %5513 = vmatpush2.msra.mxu0 0.0
        %5514 = vmatprep.subr.mxu0 0.0
        %5515 = vmatpush2.msra.mxu0 0.0
        %5516 = vmatprep.subr.mxu0 0.0
        %5517 = vmatpush2.msra.mxu0 0.0
        %5518 = vmatprep.subr.mxu0 0.0
        %5519 = vmatpush2.msra.mxu0 0.0
        %5520 = vmatprep.subr.mxu0 0.0
        %5521 = vmatpush2.msra.mxu0 0.0
        %5522 = vmatprep.subr.mxu0 0.0
        %5523 = vmatpush2.msra.mxu0 0.0
        %5524 = vmatprep.subr.mxu0 0.0
        %5525 = vmatpush2.msra.mxu0 0.0
        %5526 = vmatprep.mubr.f32.mxu0 0.0
        %5527 = vmatmul.mubr.f32.gmra.mxu0 %v3021
        %v5528 = vpop.f32.mrf.mxu0
        %v5529 = vadd.f32 0.0, %v5528
        %v5530 = vpop.f32.mrf.mxu0
        %v5531 = vadd.f32 0.0, %v5530
        %5532 = vdwg.mxu0
        %5533 = vmatprep.subr.mxu0 0.0
        %5534 = vmatpush1.msra.mxu0 0.0
        %5535 = vmatprep.subr.mxu0 0.0
        %5536 = vmatpush1.msra.mxu0 0.0
        %5537 = vmatprep.subr.mxu0 0.0
        %5538 = vmatpush1.msra.mxu0 0.0
        %5539 = vmatprep.subr.mxu0 0.0
        %5540 = vmatpush1.msra.mxu0 0.0
        %5541 = vmatprep.subr.mxu0 0.0
        %5542 = vmatpush1.msra.mxu0 0.0
        %5543 = vmatprep.subr.mxu0 0.0
        %5544 = vmatpush1.msra.mxu0 0.0
        %5545 = vmatprep.subr.mxu0 0.0
        %5546 = vmatpush1.msra.mxu0 0.0
        %5547 = vmatprep.subr.mxu0 0.0
        %5548 = vmatpush1.msra.mxu0 0.0
        %5549 = vmatprep.subr.mxu0 0.0
        %5550 = vmatpush1.msra.mxu0 0.0
        %5551 = vmatprep.subr.mxu0 0.0
        %5552 = vmatpush1.msra.mxu0 0.0
        %5553 = vmatprep.subr.mxu0 0.0
        %5554 = vmatpush1.msra.mxu0 0.0
        %5555 = vmatprep.subr.mxu0 0.0
        %5556 = vmatpush1.msra.mxu0 0.0
        %5557 = vmatprep.subr.mxu0 0.0
        %5558 = vmatpush1.msra.mxu0 0.0
        %5559 = vmatprep.subr.mxu0 0.0
        %5560 = vmatpush1.msra.mxu0 0.0
        %5561 = vmatprep.subr.mxu0 0.0
        %5562 = vmatpush1.msra.mxu0 0.0
        %5563 = vmatprep.subr.mxu0 %v5461
        %5564 = vmatpush1.msra.mxu0 %v5460
        %5565 = vmatprep.subr.mxu0 0.0
        %5566 = vmatpush2.msra.mxu0 0.0
        %5567 = vmatprep.subr.mxu0 0.0
        %5568 = vmatpush2.msra.mxu0 0.0
        %5569 = vmatprep.subr.mxu0 0.0
        %5570 = vmatpush2.msra.mxu0 0.0
        %5571 = vmatprep.subr.mxu0 0.0
        %5572 = vmatpush2.msra.mxu0 0.0
        %5573 = vmatprep.subr.mxu0 0.0
        %5574 = vmatpush2.msra.mxu0 0.0
        %5575 = vmatprep.subr.mxu0 0.0
        %5576 = vmatpush2.msra.mxu0 0.0
        %5577 = vmatprep.subr.mxu0 0.0
        %5578 = vmatpush2.msra.mxu0 0.0
        %5579 = vmatprep.subr.mxu0 0.0
        %5580 = vmatpush2.msra.mxu0 0.0
        %5581 = vmatprep.subr.mxu0 0.0
        %5582 = vmatpush2.msra.mxu0 0.0
        %5583 = vmatprep.subr.mxu0 0.0
        %5584 = vmatpush2.msra.mxu0 0.0
        %5585 = vmatprep.subr.mxu0 0.0
        %5586 = vmatpush2.msra.mxu0 0.0
        %5587 = vmatprep.subr.mxu0 0.0
        %5588 = vmatpush2.msra.mxu0 0.0
        %5589 = vmatprep.subr.mxu0 0.0
        %5590 = vmatpush2.msra.mxu0 0.0
        %5591 = vmatprep.subr.mxu0 0.0
        %5592 = vmatpush2.msra.mxu0 0.0
        %5593 = vmatprep.subr.mxu0 0.0
        %5594 = vmatpush2.msra.mxu0 0.0
        %5595 = vmatprep.subr.mxu0 0.0
        %5596 = vmatpush2.msra.mxu0 0.0
        %5597 = vmatprep.mubr.f32.mxu0 0.0
        %5598 = vmatmul.mubr.f32.gmra.mxu0 %v3021
        %v5599 = vpop.f32.mrf.mxu0
        %v5600 = vadd.f32 0.0, %v5599
        %v5601 = vpop.f32.mrf.mxu0
        %v5602 = vadd.f32 0.0, %v5601
        %5603 = vdwg.mxu0
        %v5604 = vadd.f32 %v5383, %v5529
        %v5605 = vadd.f32 %v5385, %v5531
        %v5606 = vadd.f32 %v5454, %v5600
        %v5607 = vadd.f32 %v5456, %v5602
        %v5608 = vld [vmem:[%s476 + $0xc] sm:$0xf]
        %v5610 = vlaneseq
        %v5611 = vshrl.u32 %v5610, 7
        %v5612 = vsub.s32 0, %v5611
        %v5613 = vrot.slane %v5608, %v5612
        %v5614 = vlaneseq
        %v5615 = vshrl.u32 %v5614, 7
        %v5616 = vsub.s32 1, %v5615
        %v5617 = vrot.slane %v5608, %v5616
        %v5618 = vlaneseq
        %v5619 = vshrl.u32 %v5618, 7
        %v5620 = vsub.s32 2, %v5619
        %v5621 = vrot.slane %v5608, %v5620
        %v5622 = vlaneseq
        %v5623 = vshrl.u32 %v5622, 7
        %v5624 = vsub.s32 3, %v5623
        %v5625 = vrot.slane %v5608, %v5624
        %v5630 = vadd.f32 %v5604, %v5613
        %v5631 = vadd.f32 %v5605, %v5617
        %v5632 = vadd.f32 %v5606, %v5621
        %v5633 = vadd.f32 %v5607, %v5625
        %v5634 = vsel %vm3195, %v5630, 0.0
        %v5635 = vrot.slane %v5634, 4
        %v5636 = vadd.f32 %v5634, %v5635
        %v5637 = vrot.slane %v5636, 2
        %v5638 = vadd.f32 %v5636, %v5637
        %v5639 = vrot.slane %v5638, 1
        %v5640 = vadd.f32 %v5638, %v5639
        %v5641 = vsel %vm3195, %v5631, 0.0
        %v5642 = vrot.slane %v5641, 4
        %v5643 = vadd.f32 %v5641, %v5642
        %v5644 = vrot.slane %v5643, 2
        %v5645 = vadd.f32 %v5643, %v5644
        %v5646 = vrot.slane %v5645, 1
        %v5647 = vadd.f32 %v5645, %v5646
        %v5648 = vsel %vm3195, %v5632, 0.0
        %v5649 = vrot.slane %v5648, 4
        %v5650 = vadd.f32 %v5648, %v5649
        %v5651 = vrot.slane %v5650, 2
        %v5652 = vadd.f32 %v5650, %v5651
        %v5653 = vrot.slane %v5652, 1
        %v5654 = vadd.f32 %v5652, %v5653
        %v5655 = vsel %vm3195, %v5633, 0.0
        %v5656 = vrot.slane %v5655, 4
        %v5657 = vadd.f32 %v5655, %v5656
        %v5658 = vrot.slane %v5657, 2
        %v5659 = vadd.f32 %v5657, %v5658
        %v5660 = vrot.slane %v5659, 1
        %v5661 = vadd.f32 %v5659, %v5660
        %v5662 = vmul.f32 %v5640, %v3224
        %v5663 = vmul.f32 %v5647, %v3224
        %v5664 = vmul.f32 %v5654, %v3224
        %v5665 = vmul.f32 %v5661, %v3224
        %v5666 = vsub.f32 %v5630, %v5662
        %v5667 = vsub.f32 %v5631, %v5663
        %v5668 = vsub.f32 %v5632, %v5664
        %v5669 = vsub.f32 %v5633, %v5665
        %v5670 = vmul.f32 %v5666, %v5666
        %v5671 = vmul.f32 %v5667, %v5667
        %v5672 = vmul.f32 %v5668, %v5668
        %v5673 = vmul.f32 %v5669, %v5669
        %v5674 = vsel %vm3195, %v5670, 0.0
        %v5675 = vrot.slane %v5674, 4
        %v5676 = vadd.f32 %v5674, %v5675
        %v5677 = vrot.slane %v5676, 2
        %v5678 = vadd.f32 %v5676, %v5677
        %v5679 = vrot.slane %v5678, 1
        %v5680 = vadd.f32 %v5678, %v5679
        %v5681 = vsel %vm3195, %v5671, 0.0
        %v5682 = vrot.slane %v5681, 4
        %v5683 = vadd.f32 %v5681, %v5682
        %v5684 = vrot.slane %v5683, 2
        %v5685 = vadd.f32 %v5683, %v5684
        %v5686 = vrot.slane %v5685, 1
        %v5687 = vadd.f32 %v5685, %v5686
        %v5688 = vsel %vm3195, %v5672, 0.0
        %v5689 = vrot.slane %v5688, 4
        %v5690 = vadd.f32 %v5688, %v5689
        %v5691 = vrot.slane %v5690, 2
        %v5692 = vadd.f32 %v5690, %v5691
        %v5693 = vrot.slane %v5692, 1
        %v5694 = vadd.f32 %v5692, %v5693
        %v5695 = vsel %vm3195, %v5673, 0.0
        %v5696 = vrot.slane %v5695, 4
        %v5697 = vadd.f32 %v5695, %v5696
        %v5698 = vrot.slane %v5697, 2
        %v5699 = vadd.f32 %v5697, %v5698
        %v5700 = vrot.slane %v5699, 1
        %v5701 = vadd.f32 %v5699, %v5700
        %v5702 = vmul.f32 %v5680, %v3224
        %v5703 = vmul.f32 %v5687, %v3224
        %v5704 = vmul.f32 %v5694, %v3224
        %v5705 = vmul.f32 %v5701, %v3224
        %v5706 = vadd.f32 %v5702, 1e-05
        %v5707 = vadd.f32 %v5703, 1e-05
        %v5708 = vadd.f32 %v5704, 1e-05
        %v5709 = vadd.f32 %v5705, 1e-05
        %v5710 = vrsqrt.pop %v5706
        %v5711 = vrsqrt.pop %v5707
        %v5712 = vrsqrt.pop %v5708
        %v5713 = vrsqrt.pop %v5709
        %v5714 = vmul.f32 %v5666, %v5710
        %v5715 = vmul.f32 %v5667, %v5711
        %v5716 = vmul.f32 %v5668, %v5712
        %v5717 = vmul.f32 %v5669, %v5713
        %v5718 = vld [vmem:[%s481 + $0xc] sm:$0xf]
        %v5720 = vlaneseq
        %v5721 = vshrl.u32 %v5720, 7
        %v5722 = vsub.s32 0, %v5721
        %v5723 = vrot.slane %v5718, %v5722
        %v5724 = vlaneseq
        %v5725 = vshrl.u32 %v5724, 7
        %v5726 = vsub.s32 1, %v5725
        %v5727 = vrot.slane %v5718, %v5726
        %v5728 = vlaneseq
        %v5729 = vshrl.u32 %v5728, 7
        %v5730 = vsub.s32 2, %v5729
        %v5731 = vrot.slane %v5718, %v5730
        %v5732 = vlaneseq
        %v5733 = vshrl.u32 %v5732, 7
        %v5734 = vsub.s32 3, %v5733
        %v5735 = vrot.slane %v5718, %v5734
        %v5740 = vmul.f32 %v5714, %v5723
        %v5741 = vmul.f32 %v5715, %v5727
        %v5742 = vmul.f32 %v5716, %v5731
        %v5743 = vmul.f32 %v5717, %v5735
        %v5744 = vld [vmem:[%s486 + $0xc] sm:$0xf]
        %v5746 = vlaneseq
        %v5747 = vshrl.u32 %v5746, 7
        %v5748 = vsub.s32 0, %v5747
        %v5749 = vrot.slane %v5744, %v5748
        %v5750 = vlaneseq
        %v5751 = vshrl.u32 %v5750, 7
        %v5752 = vsub.s32 1, %v5751
        %v5753 = vrot.slane %v5744, %v5752
        %v5754 = vlaneseq
        %v5755 = vshrl.u32 %v5754, 7
        %v5756 = vsub.s32 2, %v5755
        %v5757 = vrot.slane %v5744, %v5756
        %v5758 = vlaneseq
        %v5759 = vshrl.u32 %v5758, 7
        %v5760 = vsub.s32 3, %v5759
        %v5761 = vrot.slane %v5744, %v5760
        %v5766 = vadd.f32 %v5740, %v5749
        %v5767 = vadd.f32 %v5741, %v5753
        %v5768 = vadd.f32 %v5742, %v5757
        %v5769 = vadd.f32 %v5743, %v5761
        %v5770 = vmax.f32 %v5766, 0.0
        %v5771 = vmax.f32 %v5767, 0.0
        %v5772 = vmax.f32 %v5768, 0.0
        %v5773 = vmax.f32 %v5769, 0.0
        %v5774 = vld [vmem:[%s492 + $0x600] sm:$0xff]
        %v5775 = vld [vmem:[%s492 + $0x608] sm:$0xff]
        %v5776 = vld [vmem:[%s492 + $0x610] sm:$0xff]
        %v5777 = vld [vmem:[%s492 + $0x618] sm:$0xff]
        %v5778 = vld [vmem:[%s492 + $0x620] sm:$0xff]
        %v5779 = vld [vmem:[%s492 + $0x628] sm:$0xff]
        %v5780 = vld [vmem:[%s492 + $0x630] sm:$0xff]
        %v5781 = vld [vmem:[%s492 + $0x638] sm:$0xff]
        %v5782 = vld [vmem:[%s492 + $0x640] sm:$0xff]
        %v5783 = vld [vmem:[%s492 + $0x648] sm:$0xff]
        %v5784 = vld [vmem:[%s492 + $0x650] sm:$0xff]
        %v5785 = vld [vmem:[%s492 + $0x658] sm:$0xff]
        %v5786 = vld [vmem:[%s492 + $0x660] sm:$0xff]
        %v5787 = vld [vmem:[%s492 + $0x668] sm:$0xff]
        %v5788 = vld [vmem:[%s492 + $0x670] sm:$0xff]
        %v5789 = vld [vmem:[%s492 + $0x678] sm:$0xff]
        %v5790 = vld [vmem:[%s492 + $0x680] sm:$0xff]
        %v5791 = vld [vmem:[%s492 + $0x688] sm:$0xff]
        %v5792 = vld [vmem:[%s492 + $0x690] sm:$0xff]
        %v5793 = vld [vmem:[%s492 + $0x698] sm:$0xff]
        %v5794 = vld [vmem:[%s492 + $0x6a0] sm:$0xff]
        %v5795 = vld [vmem:[%s492 + $0x6a8] sm:$0xff]
        %v5796 = vld [vmem:[%s492 + $0x6b0] sm:$0xff]
        %v5797 = vld [vmem:[%s492 + $0x6b8] sm:$0xff]
        %v5798 = vld [vmem:[%s492 + $0x6c0] sm:$0xff]
        %v5799 = vld [vmem:[%s492 + $0x6c8] sm:$0xff]
        %v5800 = vld [vmem:[%s492 + $0x6d0] sm:$0xff]
        %v5801 = vld [vmem:[%s492 + $0x6d8] sm:$0xff]
        %v5802 = vld [vmem:[%s492 + $0x6e0] sm:$0xff]
        %v5803 = vld [vmem:[%s492 + $0x6e8] sm:$0xff]
        %v5804 = vld [vmem:[%s492 + $0x6f0] sm:$0xff]
        %v5805 = vld [vmem:[%s492 + $0x6f8] sm:$0xff]
        %v5806 = vld [vmem:[%s492 + $0x700] sm:$0xff]
        %v5807 = vld [vmem:[%s492 + $0x708] sm:$0xff]
        %v5808 = vld [vmem:[%s492 + $0x710] sm:$0xff]
        %v5809 = vld [vmem:[%s492 + $0x718] sm:$0xff]
        %v5810 = vld [vmem:[%s492 + $0x720] sm:$0xff]
        %v5811 = vld [vmem:[%s492 + $0x728] sm:$0xff]
        %v5812 = vld [vmem:[%s492 + $0x730] sm:$0xff]
        %v5813 = vld [vmem:[%s492 + $0x738] sm:$0xff]
        %v5814 = vld [vmem:[%s492 + $0x740] sm:$0xff]
        %v5815 = vld [vmem:[%s492 + $0x748] sm:$0xff]
        %v5816 = vld [vmem:[%s492 + $0x750] sm:$0xff]
        %v5817 = vld [vmem:[%s492 + $0x758] sm:$0xff]
        %v5818 = vld [vmem:[%s492 + $0x760] sm:$0xff]
        %v5819 = vld [vmem:[%s492 + $0x768] sm:$0xff]
        %v5820 = vld [vmem:[%s492 + $0x770] sm:$0xff]
        %v5821 = vld [vmem:[%s492 + $0x778] sm:$0xff]
        %v5822 = vld [vmem:[%s492 + $0x780] sm:$0xff]
        %v5823 = vld [vmem:[%s492 + $0x788] sm:$0xff]
        %v5824 = vld [vmem:[%s492 + $0x790] sm:$0xff]
        %v5825 = vld [vmem:[%s492 + $0x798] sm:$0xff]
        %v5826 = vld [vmem:[%s492 + $0x7a0] sm:$0xff]
        %v5827 = vld [vmem:[%s492 + $0x7a8] sm:$0xff]
        %v5828 = vld [vmem:[%s492 + $0x7b0] sm:$0xff]
        %v5829 = vld [vmem:[%s492 + $0x7b8] sm:$0xff]
        %v5830 = vld [vmem:[%s492 + $0x7c0] sm:$0xff]
        %v5831 = vld [vmem:[%s492 + $0x7c8] sm:$0xff]
        %v5832 = vld [vmem:[%s492 + $0x7d0] sm:$0xff]
        %v5833 = vld [vmem:[%s492 + $0x7d8] sm:$0xff]
        %v5834 = vld [vmem:[%s492 + $0x7e0] sm:$0xff]
        %v5835 = vld [vmem:[%s492 + $0x7e8] sm:$0xff]
        %v5836 = vld [vmem:[%s492 + $0x7f0] sm:$0xff]
        %v5837 = vld [vmem:[%s492 + $0x7f8] sm:$0xff]
        %5838 = vmatprep.subr.mxu0 0.0
        %5839 = vmatpush1.msra.mxu0 %v5789
        %5840 = vmatprep.subr.mxu0 0.0
        %5841 = vmatpush1.msra.mxu0 %v5788
        %5842 = vmatprep.subr.mxu0 0.0
        %5843 = vmatpush1.msra.mxu0 %v5787
        %5844 = vmatprep.subr.mxu0 0.0
        %5845 = vmatpush1.msra.mxu0 %v5786
        %5846 = vmatprep.subr.mxu0 0.0
        %5847 = vmatpush1.msra.mxu0 %v5785
        %5848 = vmatprep.subr.mxu0 0.0
        %5849 = vmatpush1.msra.mxu0 %v5784
        %5850 = vmatprep.subr.mxu0 0.0
        %5851 = vmatpush1.msra.mxu0 %v5783
        %5852 = vmatprep.subr.mxu0 0.0
        %5853 = vmatpush1.msra.mxu0 %v5782
        %5854 = vmatprep.subr.mxu0 0.0
        %5855 = vmatpush1.msra.mxu0 %v5781
        %5856 = vmatprep.subr.mxu0 0.0
        %5857 = vmatpush1.msra.mxu0 %v5780
        %5858 = vmatprep.subr.mxu0 0.0
        %5859 = vmatpush1.msra.mxu0 %v5779
        %5860 = vmatprep.subr.mxu0 0.0
        %5861 = vmatpush1.msra.mxu0 %v5778
        %5862 = vmatprep.subr.mxu0 0.0
        %5863 = vmatpush1.msra.mxu0 %v5777
        %5864 = vmatprep.subr.mxu0 0.0
        %5865 = vmatpush1.msra.mxu0 %v5776
        %5866 = vmatprep.subr.mxu0 0.0
        %5867 = vmatpush1.msra.mxu0 %v5775
        %5868 = vmatprep.subr.mxu0 0.0
        %5869 = vmatpush1.msra.mxu0 %v5774
        %5870 = vmatprep.subr.mxu0 0.0
        %5871 = vmatpush2.msra.mxu0 %v5805
        %5872 = vmatprep.subr.mxu0 0.0
        %5873 = vmatpush2.msra.mxu0 %v5804
        %5874 = vmatprep.subr.mxu0 0.0
        %5875 = vmatpush2.msra.mxu0 %v5803
        %5876 = vmatprep.subr.mxu0 0.0
        %5877 = vmatpush2.msra.mxu0 %v5802
        %5878 = vmatprep.subr.mxu0 0.0
        %5879 = vmatpush2.msra.mxu0 %v5801
        %5880 = vmatprep.subr.mxu0 0.0
        %5881 = vmatpush2.msra.mxu0 %v5800
        %5882 = vmatprep.subr.mxu0 0.0
        %5883 = vmatpush2.msra.mxu0 %v5799
        %5884 = vmatprep.subr.mxu0 0.0
        %5885 = vmatpush2.msra.mxu0 %v5798
        %5886 = vmatprep.subr.mxu0 0.0
        %5887 = vmatpush2.msra.mxu0 %v5797
        %5888 = vmatprep.subr.mxu0 0.0
        %5889 = vmatpush2.msra.mxu0 %v5796
        %5890 = vmatprep.subr.mxu0 0.0
        %5891 = vmatpush2.msra.mxu0 %v5795
        %5892 = vmatprep.subr.mxu0 0.0
        %5893 = vmatpush2.msra.mxu0 %v5794
        %5894 = vmatprep.subr.mxu0 0.0
        %5895 = vmatpush2.msra.mxu0 %v5793
        %5896 = vmatprep.subr.mxu0 0.0
        %5897 = vmatpush2.msra.mxu0 %v5792
        %5898 = vmatprep.subr.mxu0 0.0
        %5899 = vmatpush2.msra.mxu0 %v5791
        %5900 = vmatprep.subr.mxu0 0.0
        %5901 = vmatpush2.msra.mxu0 %v5790
        %5902 = vmatprep.mubr.f32.mxu0 %v5771
        %5903 = vmatmul.mubr.f32.gmra.mxu0 %v5770
        %v5904 = vpop.f32.mrf.mxu0
        %v5905 = vadd.f32 0.0, %v5904
        %v5906 = vpop.f32.mrf.mxu0
        %5907 = vdwg.mxu0
        %5908 = vmatprep.subr.mxu0 0.0
        %5909 = vmatpush1.msra.mxu0 %v5821
        %5910 = vmatprep.subr.mxu0 0.0
        %5911 = vmatpush1.msra.mxu0 %v5820
        %5912 = vmatprep.subr.mxu0 0.0
        %5913 = vmatpush1.msra.mxu0 %v5819
        %5914 = vmatprep.subr.mxu0 0.0
        %5915 = vmatpush1.msra.mxu0 %v5818
        %5916 = vmatprep.subr.mxu0 0.0
        %5917 = vmatpush1.msra.mxu0 %v5817
        %5918 = vmatprep.subr.mxu0 0.0
        %5919 = vmatpush1.msra.mxu0 %v5816
        %5920 = vmatprep.subr.mxu0 0.0
        %5921 = vmatpush1.msra.mxu0 %v5815
        %5922 = vmatprep.subr.mxu0 0.0
        %5923 = vmatpush1.msra.mxu0 %v5814
        %5924 = vmatprep.subr.mxu0 0.0
        %5925 = vmatpush1.msra.mxu0 %v5813
        %5926 = vmatprep.subr.mxu0 0.0
        %5927 = vmatpush1.msra.mxu0 %v5812
        %5928 = vmatprep.subr.mxu0 0.0
        %5929 = vmatpush1.msra.mxu0 %v5811
        %5930 = vmatprep.subr.mxu0 0.0
        %5931 = vmatpush1.msra.mxu0 %v5810
        %5932 = vmatprep.subr.mxu0 0.0
        %5933 = vmatpush1.msra.mxu0 %v5809
        %5934 = vmatprep.subr.mxu0 0.0
        %5935 = vmatpush1.msra.mxu0 %v5808
        %5936 = vmatprep.subr.mxu0 0.0
        %5937 = vmatpush1.msra.mxu0 %v5807
        %5938 = vmatprep.subr.mxu0 0.0
        %5939 = vmatpush1.msra.mxu0 %v5806
        %5940 = vmatprep.subr.mxu0 0.0
        %5941 = vmatpush2.msra.mxu0 %v5837
        %5942 = vmatprep.subr.mxu0 0.0
        %5943 = vmatpush2.msra.mxu0 %v5836
        %5944 = vmatprep.subr.mxu0 0.0
        %5945 = vmatpush2.msra.mxu0 %v5835
        %5946 = vmatprep.subr.mxu0 0.0
        %5947 = vmatpush2.msra.mxu0 %v5834
        %5948 = vmatprep.subr.mxu0 0.0
        %5949 = vmatpush2.msra.mxu0 %v5833
        %5950 = vmatprep.subr.mxu0 0.0
        %5951 = vmatpush2.msra.mxu0 %v5832
        %5952 = vmatprep.subr.mxu0 0.0
        %5953 = vmatpush2.msra.mxu0 %v5831
        %5954 = vmatprep.subr.mxu0 0.0
        %5955 = vmatpush2.msra.mxu0 %v5830
        %5956 = vmatprep.subr.mxu0 0.0
        %5957 = vmatpush2.msra.mxu0 %v5829
        %5958 = vmatprep.subr.mxu0 0.0
        %5959 = vmatpush2.msra.mxu0 %v5828
        %5960 = vmatprep.subr.mxu0 0.0
        %5961 = vmatpush2.msra.mxu0 %v5827
        %5962 = vmatprep.subr.mxu0 0.0
        %5963 = vmatpush2.msra.mxu0 %v5826
        %5964 = vmatprep.subr.mxu0 0.0
        %5965 = vmatpush2.msra.mxu0 %v5825
        %5966 = vmatprep.subr.mxu0 0.0
        %5967 = vmatpush2.msra.mxu0 %v5824
        %5968 = vmatprep.subr.mxu0 0.0
        %5969 = vmatpush2.msra.mxu0 %v5823
        %5970 = vmatprep.subr.mxu0 0.0
        %5971 = vmatpush2.msra.mxu0 %v5822
        %5972 = vmatprep.mubr.f32.mxu0 %v5773
        %5973 = vmatmul.mubr.f32.gmra.mxu0 %v5772
        %v5974 = vpop.f32.mrf.mxu0
        %v5975 = vadd.f32 %v5905, %v5974
        %v5976 = vpop.f32.mrf.mxu0
        %5977 = vdwg.mxu0
        %v5978 = vadd.f32 %v5165, %v5975
        %vm5979 = vcmask 74752
        %5980 = vst.msk [vmem:[%s497] sm:$0x3] %vm5979, %v5978
        %p5981 = scmp.lt.s32.totalorder %s19, 1
        %s5982 = scalar_select %p5981, %s19, 1
        %s5983 = smul.addr %s5982, 2
        %s5984 = scalar_lea.vmem %s8, %s5983
        // Predicated region
        $region76: #{_lambda_.1} parent=70 // pred_check
          %p5985 = pneg %p230
        $region77: #{_lambda_.1} parent=70 // pred_check_branch
          %5987 = sbr.rel (%p5985) target = $region79
        $region78: #{_lambda_.1} parent=70 // pred_region
          _
        $region79: #{_lambda_.1} parent=70 // pred_fallthru
          _
      $region71: #{_lambda_.1} parent=5 // pred_fallthru
        _
      %p5988 = scmp.le.s32.totalorder 2, %s14
      // Predicated region
      $region80: #{_lambda_.1} parent=5 // pred_check
        %p5989 = pneg %p5988
      $region81: #{_lambda_.1} parent=5 // pred_check_branch
        %5991 = sbr.rel (%p5989) target = $region83
      $region82: #{_lambda_.1} parent=5 // pred_region
        %s5992 = ssub.s32 %s14, 2
        // Predicated region
        $region84: #{_lambda_.1} parent=82 // pred_check
          %p5993 = pneg %p236
        $region85: #{_lambda_.1} parent=82 // pred_check_branch
          %5995 = sbr.rel (%p5993) target = $region87
        $region86: #{_lambda_.1} parent=82 // pred_region
          %p5996 = scmp.lt.s32.totalorder %s20, 1
          %s5997 = scalar_select %p5996, %s20, 1
          %s5998 = smul.addr %s5997, 2
          %s5999 = scalar_lea.vmem %s8, %s5998
        $region87: #{_lambda_.1} parent=82 // pred_fallthru
          _
      $region83: #{_lambda_.1} parent=5 // pred_fallthru
        _
    $region6: #{_lambda_.1} parent=1 // loop_footer
      %s18 = sadd.s32 1, %s14
    $region7: #{_lambda_.1} parent=1 // loop_footer_branch
      %13 = sbr.rel target = $region3
    $region8: #{_lambda_.1} parent=1 // loop_exit
      _

</llo_original>
